<compile_context>
chip_gen: v5e
topology: v5e:2x2
jax: 0.10.0
libtpu: 0.0.40
codegen_flags: <defaults>
</compile_context>

<pallas_src>
import jax
import jax.numpy as jnp
import numpy as np
from jax.experimental import pallas as pl
from jax.experimental.pallas import tpu as pltpu


# ---------------------------------------------------------------------------
# Pallas kernel: full DCRNN encoder (all layers, full sequence).  Grid = (B,).
# ---------------------------------------------------------------------------
def _make_encoder_kernel(L: int, K: int, T: int, N: int, H: int):
    """Kernel closed over the static layer count L, diffusion order K, seq
    length T, num nodes N and hidden dim H."""

    def diff_accum(A, A2, x0, w_ref):
        # sum_k T_k(x0) @ W_k with T0 = x0, T1 = A x0, Tk = 2A T_{k-1} - T_{k-2}.
        # Per-k accumulation: no lane-concat of Chebyshev terms; A2 == 2A is
        # precomputed once per time step.
        acc = jnp.dot(x0, w_ref[0], preferred_element_type=jnp.float32)
        if K >= 1:
            t1 = jnp.dot(A, x0, preferred_element_type=jnp.float32)
            acc = acc + jnp.dot(t1, w_ref[1], preferred_element_type=jnp.float32)
            tkm1, tkm2 = t1, x0
            for k in range(2, K + 1):
                tk = jnp.dot(A2, tkm1, preferred_element_type=jnp.float32) - tkm2
                acc = acc + jnp.dot(tk, w_ref[k],
                                    preferred_element_type=jnp.float32)
                tkm1, tkm2 = tk, tkm1
        return acc

    def cell(A, A2, x, h, w_ref, wh_ref, b_full):
        # Fused weight columns = [r | u | candidate-x].  The candidate-x rows
        # at hidden-feature positions are zero, so the padded contraction is
        # exactly diffusion(x) @ Wcx.
        z0 = jnp.concatenate([x, h], axis=-1)                 # (N, Din+H)
        pre = diff_accum(A, A2, z0, w_ref) + b_full           # (N, 3H)
        r = jax.nn.sigmoid(pre[:, :H])
        u = jax.nn.sigmoid(pre[:, H:2 * H])
        c = jnp.tanh(pre[:, 2 * H:] + diff_accum(A, A2, r * h, wh_ref))
        return u * h + (1.0 - u) * c

    def kernel(*refs):
        a_ref, x_ref, h0_ref = refs[0], refs[1], refs[2]
        layer_refs = [refs[3 + 3 * l: 6 + 3 * l] for l in range(L)]
        hseq_ref, hlast_ref = refs[3 + 3 * L], refs[4 + 3 * L]

        # Hoist bias broadcasts out of the (unrolled) time loop.
        biases = [jnp.broadcast_to(layer_refs[l][2][...], (N, 3 * H))
                  for l in range(L)]
        h_init = tuple(h0_ref[l] for l in range(L))

        def step(t, carry):
            A = a_ref[t]                 # (N, N) support for this time step
            A2 = A + A                   # hoisted "2 * A", reused by all chains
            xin = x_ref[t]               # (N, Din)
            new_h = []
            for l in range(L):
                w_ref, wh_ref, _ = layer_refs[l]
                hn = cell(A, A2, xin, carry[l], w_ref, wh_ref, biases[l])
                new_h.append(hn)
                xin = hn                 # layer fusion: feed the next layer
            hseq_ref[t] = xin            # last layer's output for this t
            return tuple(new_h)

        # NOTE: the time recurrence must stay sequential (carry dependence);
        # the grid only parallelizes over B.
        h_final = jax.lax.fori_loop(0, T, step, h_init, unroll=True)
        for l in range(L):
            hlast_ref[l] = h_final[l]

    return kernel


def dcrnn_encoder_forward(inputs, init_hidden, supports, layer_kparams, K):
    """Fused encoder forward.

    inputs (B,T,N,Din), init_hidden (L,B,N,H), supports (B,T,N,N),
    layer_kparams[l] = (w_fused (K+1,F_l,3H), w_ch (K+1,H,H), b_fused (1,3H)).

    Returns (output_hidden (L,B,N*H), output_seq (T,B,N*H)) — same shapes /
    flattening as the PyTorch module's (output_hidden, current_inputs)."""
    B, T, N, Din = inputs.shape
    L, _, _, H = init_hidden.shape
    M = K + 1

    # (L,B,N,H) -> (B,L,N,H) so the batch axis is the leading (grid) axis.
    h0_blnh = jnp.transpose(init_hidden, (1, 0, 2, 3))

    in_specs = [
        pl.BlockSpec((None, T, N, N), lambda b: (b, 0, 0, 0)),    # supports[b]
        pl.BlockSpec((None, T, N, Din), lambda b: (b, 0, 0, 0)),  # x[b]
        pl.BlockSpec((None, L, N, H), lambda b: (b, 0, 0, 0)),    # h0[b]
    ]
    args = [supports, inputs, h0_blnh]
    for (w, wh, bias) in layer_kparams:
        F_l = w.shape[1]
        in_specs += [
            pl.BlockSpec((M, F_l, 3 * H), lambda b: (0, 0, 0)),   # W fused (per-k)
            pl.BlockSpec((M, H, H), lambda b: (0, 0, 0)),         # W cand-h (per-k)
            pl.BlockSpec((1, 3 * H), lambda b: (0, 0)),           # fused bias
        ]
        args += [w, wh, bias]

    out_specs = [
        pl.BlockSpec((None, T, N, H), lambda b: (b, 0, 0, 0)),    # last-layer seq
        pl.BlockSpec((None, L, N, H), lambda b: (b, 0, 0, 0)),    # final hidden/layer
    ]
    out_shape = (jax.ShapeDtypeStruct((B, T, N, H), jnp.float32),
                 jax.ShapeDtypeStruct((B, L, N, H), jnp.float32))

    grid_spec = pltpu.PrefetchScalarGridSpec(
        num_scalar_prefetch=0,
        grid=(B,),
        in_specs=in_specs,
        out_specs=out_specs,
    )

    hseq, hlast = pl.pallas_call(
        _make_encoder_kernel(L, K, T, N, H),
        out_shape=out_shape,
        grid_spec=grid_spec,
        compiler_params=pltpu.CompilerParams(
            dimension_semantics=("parallel",)),   # B -> 2 TCs on v7x
    )(*args)

    # Plain-JAX glue to match the PyTorch module's output layout.
    output_hidden = jnp.transpose(hlast, (1, 0, 2, 3)).reshape(L, B, N * H)
    output_seq = jnp.transpose(hseq, (1, 0, 2, 3)).reshape(T, B, N * H)
    return output_hidden, output_seq


# ---------------------------------------------------------------------------
# Parameter init (deterministic, mimics DiffusionGraphConv xavier_normal init)
# plus the host-side re-layout into per-k kernel weights.
# ---------------------------------------------------------------------------
def init_dcgru_params(key, input_dim, hid_dim, K):
    F = input_dim + hid_dim
    M = K + 1
    k1, k2 = jax.random.split(key)

    def xavier(k, shape):
        fan_in, fan_out = shape
        std = 1.414 * np.sqrt(2.0 / (fan_in + fan_out))
        return (std * jax.random.normal(k, shape)).astype(jnp.float32)

    # PyTorch layout: rows indexed by feature*M + k, features = [input | hidden].
    w_gate = xavier(k1, (F * M, 2 * hid_dim))
    w_cand = xavier(k2, (F * M, hid_dim))
    b_gate = jnp.full((2 * hid_dim,), 1.0, jnp.float32)   # "bias 1.0"
    b_cand = jnp.zeros((hid_dim,), jnp.float32)

    # --- host-side re-layout (glue, plain JAX) -------------------------------
    # Kernel accumulates per diffusion order k:  pre += T_k @ W_k, so reorder
    # rows from feature-major/k-minor to k-major: (K+1, F, out).
    wg_km = jnp.transpose(w_gate.reshape(F, M, 2 * hid_dim), (1, 0, 2))
    wc = w_cand.reshape(F, M, hid_dim)
    # Candidate x-part: zero rows at hidden-feature positions (identical math).
    wcx = jnp.zeros((F, M, hid_dim), jnp.float32).at[:input_dim].set(
        wc[:input_dim])
    wcx_km = jnp.transpose(wcx, (1, 0, 2))                       # (M, F, H)
    wch_km = jnp.transpose(wc[input_dim:], (1, 0, 2))            # (M, H, H)

    w_fused = jnp.concatenate([wg_km, wcx_km], axis=-1)          # (M, F, 3H)
    b_fused = jnp.concatenate([b_gate, b_cand]).reshape(1, 3 * hid_dim)

    return {"pt": (w_gate, b_gate, w_cand, b_cand),
            "kernel": (w_fused, wch_km, b_fused)}


# ---------------------------------------------------------------------------
# Pure-JAX reference (mirrors the PyTorch DiffusionGraphConv / DCGRUCell code).
# ---------------------------------------------------------------------------
def _ref_dconv(A, x, state, W, b, K):
    B, N, _ = x.shape
    x0 = jnp.concatenate([x, state], axis=-1)
    Fdim = x0.shape[-1]
    hp = jax.lax.Precision.HIGHEST
    terms = [x0]
    if K >= 1:
        x1 = jnp.einsum("bij,bjf->bif", A, x0, precision=hp)
        terms.append(x1)
        xk_1, xk_2 = x1, x0
        for _ in range(2, K + 1):
            x2 = 2.0 * jnp.einsum("bij,bjf->bif", A, xk_1, precision=hp) - xk_2
            terms.append(x2)
            xk_1, xk_2 = x2, xk_1
    xs = jnp.stack(terms, axis=0)                       # (M, B, N, F)
    xs = jnp.transpose(xs, (1, 2, 3, 0)).reshape(B, N, Fdim * (K + 1))
    return jnp.einsum("bnf,fo->bno", xs, W, precision=hp) + b


def _ref_cell(A, x, h, pt_params, K, H):
    Wg, bg, Wc, bc = pt_params
    z = jax.nn.sigmoid(_ref_dconv(A, x, h, Wg, bg, K))
    r, u = z[..., :H], z[..., H:]
    c = jnp.tanh(_ref_dconv(A, x, r * h, Wc, bc, K))
    return u * h + (1.0 - u) * c


def ref_encoder_forward(inputs, init_hidden, supports, layer_pt_params, K):
    B, T, N, _ = inputs.shape
    L, _, _, H = init_hidden.shape
    current = inputs
    out_hidden = []
    for layer in range(L):
        h = init_hidden[layer]
        outs = []
        for t in range(T):
            h = _ref_cell(supports[:, t], current[:, t], h,
                          layer_pt_params[layer], K, H)
            outs.append(h)
        out_hidden.append(h)
        current = jnp.stack(outs, axis=1)
    return (jnp.stack(out_hidden, axis=0).reshape(L, B, N * H),
            jnp.transpose(current, (1, 0, 2, 3)).reshape(T, B, N * H))


# ---------------------------------------------------------------------------
if __name__ == "__main__":
    B, T, N = 2, 8, 16            # batch, seq_length, num_nodes
    Din, H = 4, 32                # input_dim, hid_dim
    L, K = 2, 2                   # num_rnn_layers, max_diffusion_step

    key = jax.random.PRNGKey(0)
    k_in, k_sup, *k_layers = jax.random.split(key, 2 + L)

    inputs = jax.random.normal(k_in, (B, T, N, Din), jnp.float32)
    supports = 0.1 * jax.random.normal(k_sup, (B, T, N, N), jnp.float32)
    init_hidden = jnp.zeros((L, B, N, H), jnp.float32)   # == encoder.init_hidden()

    params = [init_dcgru_params(k_layers[l], Din if l == 0 else H, H, K)
              for l in range(L)]
    kparams = [p["kernel"] for p in params]
    ptparams = [p["pt"] for p in params]

    fwd = jax.jit(lambda i, h, s: dcrnn_encoder_forward(i, h, s, kparams, K))
    out_hidden, out_seq = fwd(inputs, init_hidden, supports)
    jax.block_until_ready((out_hidden, out_seq))

    ref_hidden, ref_seq = ref_encoder_forward(inputs, init_hidden, supports,
                                              ptparams, K)
    assert out_hidden.shape == (L, B, N * H) and out_seq.shape == (T, B, N * H)
    np.testing.assert_allclose(np.asarray(out_hidden), np.asarray(ref_hidden),
                               rtol=1e-2, atol=1e-2)
    np.testing.assert_allclose(np.asarray(out_seq), np.asarray(ref_seq),
                               rtol=1e-2, atol=1e-2)
    print("KERNEL_OK")
</pallas_src>

<mosaic_0001>
module attributes {stable_mosaic.version = 11 : i64} {
  func.func @kernel(%arg0: i32, %arg1: memref<1x8x16x16xf32, #tpu.memory_space<vmem>>, %arg2: memref<1x8x16x4xf32, #tpu.memory_space<vmem>>, %arg3: memref<1x2x16x32xf32, #tpu.memory_space<vmem>>, %arg4: memref<3x36x96xf32, #tpu.memory_space<vmem>>, %arg5: memref<3x32x32xf32, #tpu.memory_space<vmem>>, %arg6: memref<1x96xf32, #tpu.memory_space<vmem>>, %arg7: memref<3x64x96xf32, #tpu.memory_space<vmem>>, %arg8: memref<3x32x32xf32, #tpu.memory_space<vmem>>, %arg9: memref<1x96xf32, #tpu.memory_space<vmem>>, %arg10: memref<1x8x16x32xf32, #tpu.memory_space<vmem>>, %arg11: memref<1x2x16x32xf32, #tpu.memory_space<vmem>>) attributes {dimension_semantics = [#tpu.dimension_semantics<parallel>], iteration_bounds = array<i64: 2>, scalar_prefetch = 0 : i64, scratch_operands = 0 : i64, tpu.core_type = #tpu.core_type<tc>, window_params = [{transform_indices = @transform_0, window_bounds = array<i64: 1, 8, 16, 16>}, {transform_indices = @transform_1, window_bounds = array<i64: 1, 8, 16, 4>}, {transform_indices = @transform_2, window_bounds = array<i64: 1, 2, 16, 32>}, {pipeline_mode = #tpu.pipeline_mode<synchronous>, transform_indices = @transform_3, window_bounds = array<i64: 3, 36, 96>}, {pipeline_mode = #tpu.pipeline_mode<synchronous>, transform_indices = @transform_4, window_bounds = array<i64: 3, 32, 32>}, {pipeline_mode = #tpu.pipeline_mode<synchronous>, transform_indices = @transform_5, window_bounds = array<i64: 1, 96>}, {pipeline_mode = #tpu.pipeline_mode<synchronous>, transform_indices = @transform_6, window_bounds = array<i64: 3, 64, 96>}, {pipeline_mode = #tpu.pipeline_mode<synchronous>, transform_indices = @transform_7, window_bounds = array<i64: 3, 32, 32>}, {pipeline_mode = #tpu.pipeline_mode<synchronous>, transform_indices = @transform_8, window_bounds = array<i64: 1, 96>}, {transform_indices = @transform_9, window_bounds = array<i64: 1, 8, 16, 32>}, {transform_indices = @transform_10, window_bounds = array<i64: 1, 2, 16, 32>}]} {
    %c0 = arith.constant 0 : index
    %c0_0 = arith.constant 0 : index
    %0 = vector.load %arg6[%c0, %c0_0] : memref<1x96xf32, #tpu.memory_space<vmem>>, vector<1x96xf32>
    %1 = vector.shape_cast %0 : vector<1x96xf32> to vector<1x96xf32>
    %2 = vector.broadcast %1 : vector<1x96xf32> to vector<16x96xf32>
    %c0_1 = arith.constant 0 : index
    %c0_2 = arith.constant 0 : index
    %3 = vector.load %arg9[%c0_1, %c0_2] : memref<1x96xf32, #tpu.memory_space<vmem>>, vector<1x96xf32>
    %4 = vector.shape_cast %3 : vector<1x96xf32> to vector<1x96xf32>
    %5 = vector.broadcast %4 : vector<1x96xf32> to vector<16x96xf32>
    %c0_3 = arith.constant 0 : index
    %c0_4 = arith.constant 0 : index
    %c0_5 = arith.constant 0 : index
    %c0_6 = arith.constant 0 : index
    %6 = vector.load %arg3[%c0_3, %c0_4, %c0_5, %c0_6] : memref<1x2x16x32xf32, #tpu.memory_space<vmem>>, vector<1x1x16x32xf32>
    %7 = vector.shape_cast %6 : vector<1x1x16x32xf32> to vector<16x32xf32>
    %c0_7 = arith.constant 0 : index
    %c1 = arith.constant 1 : index
    %c0_8 = arith.constant 0 : index
    %c0_9 = arith.constant 0 : index
    %8 = vector.load %arg3[%c0_7, %c1, %c0_8, %c0_9] : memref<1x2x16x32xf32, #tpu.memory_space<vmem>>, vector<1x1x16x32xf32>
    %9 = vector.shape_cast %8 : vector<1x1x16x32xf32> to vector<16x32xf32>
    %c0_i32 = arith.constant 0 : i32
    %c0_10 = arith.constant 0 : index
    %10 = arith.index_cast %c0_i32 : i32 to index
    %c0_11 = arith.constant 0 : index
    %c0_12 = arith.constant 0 : index
    %11 = vector.load %arg1[%c0_10, %10, %c0_11, %c0_12] : memref<1x8x16x16xf32, #tpu.memory_space<vmem>>, vector<1x1x16x16xf32>
    %12 = vector.shape_cast %11 : vector<1x1x16x16xf32> to vector<16x16xf32>
    %13 = arith.addf %12, %12 : vector<16x16xf32>
    %c0_13 = arith.constant 0 : index
    %14 = arith.index_cast %c0_i32 : i32 to index
    %c0_14 = arith.constant 0 : index
    %c0_15 = arith.constant 0 : index
    %15 = vector.load %arg2[%c0_13, %14, %c0_14, %c0_15] : memref<1x8x16x4xf32, #tpu.memory_space<vmem>>, vector<1x1x16x4xf32>
    %16 = vector.shape_cast %15 : vector<1x1x16x4xf32> to vector<16x4xf32>
    %17 = tpu.concatenate %16, %7 in 1 : vector<16x4xf32>, vector<16x32xf32> -> vector<16x36xf32>
    %c0_16 = arith.constant 0 : index
    %c0_17 = arith.constant 0 : index
    %c0_18 = arith.constant 0 : index
    %18 = vector.load %arg4[%c0_16, %c0_17, %c0_18] : memref<3x36x96xf32, #tpu.memory_space<vmem>>, vector<1x36x96xf32>
    %19 = vector.shape_cast %18 : vector<1x36x96xf32> to vector<36x96xf32>
    %cst = arith.constant dense<0.000000e+00> : vector<16x96xf32>
    %20 = tpu.matmul %17, %19, %cst {dimension_numbers = #tpu.dot_dimension_numbers<[1], [0], [0], [1], [0, 0, 1, 1], [], []>} : vector<16x36xf32>, vector<36x96xf32>, vector<16x96xf32> -> vector<16x96xf32>
    %cst_19 = arith.constant dense<0.000000e+00> : vector<16x36xf32>
    %21 = tpu.matmul %12, %17, %cst_19 {dimension_numbers = #tpu.dot_dimension_numbers<[1], [0], [0], [1], [0, 0, 1, 1], [], []>} : vector<16x16xf32>, vector<16x36xf32>, vector<16x36xf32> -> vector<16x36xf32>
    %c1_20 = arith.constant 1 : index
    %c0_21 = arith.constant 0 : index
    %c0_22 = arith.constant 0 : index
    %22 = vector.load %arg4[%c1_20, %c0_21, %c0_22] : memref<3x36x96xf32, #tpu.memory_space<vmem>>, vector<1x36x96xf32>
    %23 = vector.shape_cast %22 : vector<1x36x96xf32> to vector<36x96xf32>
    %cst_23 = arith.constant dense<0.000000e+00> : vector<16x96xf32>
    %24 = tpu.matmul %21, %23, %cst_23 {dimension_numbers = #tpu.dot_dimension_numbers<[1], [0], [0], [1], [0, 0, 1, 1], [], []>} : vector<16x36xf32>, vector<36x96xf32>, vector<16x96xf32> -> vector<16x96xf32>
    %25 = arith.addf %20, %24 : vector<16x96xf32>
    %cst_24 = arith.constant dense<0.000000e+00> : vector<16x36xf32>
    %26 = tpu.matmul %13, %21, %cst_24 {dimension_numbers = #tpu.dot_dimension_numbers<[1], [0], [0], [1], [0, 0, 1, 1], [], []>} : vector<16x16xf32>, vector<16x36xf32>, vector<16x36xf32> -> vector<16x36xf32>
    %27 = arith.subf %26, %17 : vector<16x36xf32>
    %c2 = arith.constant 2 : index
    %c0_25 = arith.constant 0 : index
    %c0_26 = arith.constant 0 : index
    %28 = vector.load %arg4[%c2, %c0_25, %c0_26] : memref<3x36x96xf32, #tpu.memory_space<vmem>>, vector<1x36x96xf32>
    %29 = vector.shape_cast %28 : vector<1x36x96xf32> to vector<36x96xf32>
    %cst_27 = arith.constant dense<0.000000e+00> : vector<16x96xf32>
    %30 = tpu.matmul %27, %29, %cst_27 {dimension_numbers = #tpu.dot_dimension_numbers<[1], [0], [0], [1], [0, 0, 1, 1], [], []>} : vector<16x36xf32>, vector<36x96xf32>, vector<16x96xf32> -> vector<16x96xf32>
    %31 = arith.addf %25, %30 : vector<16x96xf32>
    %32 = arith.addf %31, %2 : vector<16x96xf32>
    %33 = vector.extract_strided_slice %32 {offsets = [0, 0], sizes = [16, 32], strides = [1, 1]} : vector<16x96xf32> to vector<16x32xf32>
    %34 = arith.negf %33 : vector<16x32xf32>
    %35 = math.exp %34 : vector<16x32xf32>
    %cst_28 = arith.constant 1.000000e+00 : f32
    %36 = vector.broadcast %cst_28 : f32 to vector<16x32xf32>
    %37 = arith.addf %36, %35 : vector<16x32xf32>
    %38 = arith.divf %36, %37 : vector<16x32xf32>
    %39 = vector.extract_strided_slice %32 {offsets = [0, 32], sizes = [16, 32], strides = [1, 1]} : vector<16x96xf32> to vector<16x32xf32>
    %40 = arith.negf %39 : vector<16x32xf32>
    %41 = math.exp %40 : vector<16x32xf32>
    %cst_29 = arith.constant 1.000000e+00 : f32
    %42 = vector.broadcast %cst_29 : f32 to vector<16x32xf32>
    %43 = arith.addf %42, %41 : vector<16x32xf32>
    %44 = arith.divf %42, %43 : vector<16x32xf32>
    %45 = vector.extract_strided_slice %32 {offsets = [0, 64], sizes = [16, 32], strides = [1, 1]} : vector<16x96xf32> to vector<16x32xf32>
    %46 = arith.mulf %38, %7 : vector<16x32xf32>
    %c0_30 = arith.constant 0 : index
    %c0_31 = arith.constant 0 : index
    %c0_32 = arith.constant 0 : index
    %47 = vector.load %arg5[%c0_30, %c0_31, %c0_32] : memref<3x32x32xf32, #tpu.memory_space<vmem>>, vector<1x32x32xf32>
    %48 = vector.shape_cast %47 : vector<1x32x32xf32> to vector<32x32xf32>
    %cst_33 = arith.constant dense<0.000000e+00> : vector<16x32xf32>
    %49 = tpu.matmul %46, %48, %cst_33 {dimension_numbers = #tpu.dot_dimension_numbers<[1], [0], [0], [1], [0, 0, 1, 1], [], []>} : vector<16x32xf32>, vector<32x32xf32>, vector<16x32xf32> -> vector<16x32xf32>
    %cst_34 = arith.constant dense<0.000000e+00> : vector<16x32xf32>
    %50 = tpu.matmul %12, %46, %cst_34 {dimension_numbers = #tpu.dot_dimension_numbers<[1], [0], [0], [1], [0, 0, 1, 1], [], []>} : vector<16x16xf32>, vector<16x32xf32>, vector<16x32xf32> -> vector<16x32xf32>
    %c1_35 = arith.constant 1 : index
    %c0_36 = arith.constant 0 : index
    %c0_37 = arith.constant 0 : index
    %51 = vector.load %arg5[%c1_35, %c0_36, %c0_37] : memref<3x32x32xf32, #tpu.memory_space<vmem>>, vector<1x32x32xf32>
    %52 = vector.shape_cast %51 : vector<1x32x32xf32> to vector<32x32xf32>
    %cst_38 = arith.constant dense<0.000000e+00> : vector<16x32xf32>
    %53 = tpu.matmul %50, %52, %cst_38 {dimension_numbers = #tpu.dot_dimension_numbers<[1], [0], [0], [1], [0, 0, 1, 1], [], []>} : vector<16x32xf32>, vector<32x32xf32>, vector<16x32xf32> -> vector<16x32xf32>
    %54 = arith.addf %49, %53 : vector<16x32xf32>
    %cst_39 = arith.constant dense<0.000000e+00> : vector<16x32xf32>
    %55 = tpu.matmul %13, %50, %cst_39 {dimension_numbers = #tpu.dot_dimension_numbers<[1], [0], [0], [1], [0, 0, 1, 1], [], []>} : vector<16x16xf32>, vector<16x32xf32>, vector<16x32xf32> -> vector<16x32xf32>
    %56 = arith.subf %55, %46 : vector<16x32xf32>
    %c2_40 = arith.constant 2 : index
    %c0_41 = arith.constant 0 : index
    %c0_42 = arith.constant 0 : index
    %57 = vector.load %arg5[%c2_40, %c0_41, %c0_42] : memref<3x32x32xf32, #tpu.memory_space<vmem>>, vector<1x32x32xf32>
    %58 = vector.shape_cast %57 : vector<1x32x32xf32> to vector<32x32xf32>
    %cst_43 = arith.constant dense<0.000000e+00> : vector<16x32xf32>
    %59 = tpu.matmul %56, %58, %cst_43 {dimension_numbers = #tpu.dot_dimension_numbers<[1], [0], [0], [1], [0, 0, 1, 1], [], []>} : vector<16x32xf32>, vector<32x32xf32>, vector<16x32xf32> -> vector<16x32xf32>
    %60 = arith.addf %54, %59 : vector<16x32xf32>
    %61 = arith.addf %45, %60 : vector<16x32xf32>
    %62 = math.tanh %61 : vector<16x32xf32>
    %63 = arith.mulf %44, %7 : vector<16x32xf32>
    %cst_44 = arith.constant 1.000000e+00 : f32
    %64 = vector.broadcast %cst_44 : f32 to vector<16x32xf32>
    %65 = arith.subf %64, %44 : vector<16x32xf32>
    %66 = arith.mulf %65, %62 : vector<16x32xf32>
    %67 = arith.addf %63, %66 : vector<16x32xf32>
    %68 = tpu.concatenate %67, %9 in 1 : vector<16x32xf32>, vector<16x32xf32> -> vector<16x64xf32>
    %c0_45 = arith.constant 0 : index
    %c0_46 = arith.constant 0 : index
    %c0_47 = arith.constant 0 : index
    %69 = vector.load %arg7[%c0_45, %c0_46, %c0_47] : memref<3x64x96xf32, #tpu.memory_space<vmem>>, vector<1x64x96xf32>
    %70 = vector.shape_cast %69 : vector<1x64x96xf32> to vector<64x96xf32>
    %cst_48 = arith.constant dense<0.000000e+00> : vector<16x96xf32>
    %71 = tpu.matmul %68, %70, %cst_48 {dimension_numbers = #tpu.dot_dimension_numbers<[1], [0], [0], [1], [0, 0, 1, 1], [], []>} : vector<16x64xf32>, vector<64x96xf32>, vector<16x96xf32> -> vector<16x96xf32>
    %cst_49 = arith.constant dense<0.000000e+00> : vector<16x64xf32>
    %72 = tpu.matmul %12, %68, %cst_49 {dimension_numbers = #tpu.dot_dimension_numbers<[1], [0], [0], [1], [0, 0, 1, 1], [], []>} : vector<16x16xf32>, vector<16x64xf32>, vector<16x64xf32> -> vector<16x64xf32>
    %c1_50 = arith.constant 1 : index
    %c0_51 = arith.constant 0 : index
    %c0_52 = arith.constant 0 : index
    %73 = vector.load %arg7[%c1_50, %c0_51, %c0_52] : memref<3x64x96xf32, #tpu.memory_space<vmem>>, vector<1x64x96xf32>
    %74 = vector.shape_cast %73 : vector<1x64x96xf32> to vector<64x96xf32>
    %cst_53 = arith.constant dense<0.000000e+00> : vector<16x96xf32>
    %75 = tpu.matmul %72, %74, %cst_53 {dimension_numbers = #tpu.dot_dimension_numbers<[1], [0], [0], [1], [0, 0, 1, 1], [], []>} : vector<16x64xf32>, vector<64x96xf32>, vector<16x96xf32> -> vector<16x96xf32>
    %76 = arith.addf %71, %75 : vector<16x96xf32>
    %cst_54 = arith.constant dense<0.000000e+00> : vector<16x64xf32>
    %77 = tpu.matmul %13, %72, %cst_54 {dimension_numbers = #tpu.dot_dimension_numbers<[1], [0], [0], [1], [0, 0, 1, 1], [], []>} : vector<16x16xf32>, vector<16x64xf32>, vector<16x64xf32> -> vector<16x64xf32>
    %78 = arith.subf %77, %68 : vector<16x64xf32>
    %c2_55 = arith.constant 2 : index
    %c0_56 = arith.constant 0 : index
    %c0_57 = arith.constant 0 : index
    %79 = vector.load %arg7[%c2_55, %c0_56, %c0_57] : memref<3x64x96xf32, #tpu.memory_space<vmem>>, vector<1x64x96xf32>
    %80 = vector.shape_cast %79 : vector<1x64x96xf32> to vector<64x96xf32>
    %cst_58 = arith.constant dense<0.000000e+00> : vector<16x96xf32>
    %81 = tpu.matmul %78, %80, %cst_58 {dimension_numbers = #tpu.dot_dimension_numbers<[1], [0], [0], [1], [0, 0, 1, 1], [], []>} : vector<16x64xf32>, vector<64x96xf32>, vector<16x96xf32> -> vector<16x96xf32>
    %82 = arith.addf %76, %81 : vector<16x96xf32>
    %83 = arith.addf %82, %5 : vector<16x96xf32>
    %84 = vector.extract_strided_slice %83 {offsets = [0, 0], sizes = [16, 32], strides = [1, 1]} : vector<16x96xf32> to vector<16x32xf32>
    %85 = arith.negf %84 : vector<16x32xf32>
    %86 = math.exp %85 : vector<16x32xf32>
    %cst_59 = arith.constant 1.000000e+00 : f32
    %87 = vector.broadcast %cst_59 : f32 to vector<16x32xf32>
    %88 = arith.addf %87, %86 : vector<16x32xf32>
    %89 = arith.divf %87, %88 : vector<16x32xf32>
    %90 = vector.extract_strided_slice %83 {offsets = [0, 32], sizes = [16, 32], strides = [1, 1]} : vector<16x96xf32> to vector<16x32xf32>
    %91 = arith.negf %90 : vector<16x32xf32>
    %92 = math.exp %91 : vector<16x32xf32>
    %cst_60 = arith.constant 1.000000e+00 : f32
    %93 = vector.broadcast %cst_60 : f32 to vector<16x32xf32>
    %94 = arith.addf %93, %92 : vector<16x32xf32>
    %95 = arith.divf %93, %94 : vector<16x32xf32>
    %96 = vector.extract_strided_slice %83 {offsets = [0, 64], sizes = [16, 32], strides = [1, 1]} : vector<16x96xf32> to vector<16x32xf32>
    %97 = arith.mulf %89, %9 : vector<16x32xf32>
    %c0_61 = arith.constant 0 : index
    %c0_62 = arith.constant 0 : index
    %c0_63 = arith.constant 0 : index
    %98 = vector.load %arg8[%c0_61, %c0_62, %c0_63] : memref<3x32x32xf32, #tpu.memory_space<vmem>>, vector<1x32x32xf32>
    %99 = vector.shape_cast %98 : vector<1x32x32xf32> to vector<32x32xf32>
    %cst_64 = arith.constant dense<0.000000e+00> : vector<16x32xf32>
    %100 = tpu.matmul %97, %99, %cst_64 {dimension_numbers = #tpu.dot_dimension_numbers<[1], [0], [0], [1], [0, 0, 1, 1], [], []>} : vector<16x32xf32>, vector<32x32xf32>, vector<16x32xf32> -> vector<16x32xf32>
    %cst_65 = arith.constant dense<0.000000e+00> : vector<16x32xf32>
    %101 = tpu.matmul %12, %97, %cst_65 {dimension_numbers = #tpu.dot_dimension_numbers<[1], [0], [0], [1], [0, 0, 1, 1], [], []>} : vector<16x16xf32>, vector<16x32xf32>, vector<16x32xf32> -> vector<16x32xf32>
    %c1_66 = arith.constant 1 : index
    %c0_67 = arith.constant 0 : index
    %c0_68 = arith.constant 0 : index
    %102 = vector.load %arg8[%c1_66, %c0_67, %c0_68] : memref<3x32x32xf32, #tpu.memory_space<vmem>>, vector<1x32x32xf32>
    %103 = vector.shape_cast %102 : vector<1x32x32xf32> to vector<32x32xf32>
    %cst_69 = arith.constant dense<0.000000e+00> : vector<16x32xf32>
    %104 = tpu.matmul %101, %103, %cst_69 {dimension_numbers = #tpu.dot_dimension_numbers<[1], [0], [0], [1], [0, 0, 1, 1], [], []>} : vector<16x32xf32>, vector<32x32xf32>, vector<16x32xf32> -> vector<16x32xf32>
    %105 = arith.addf %100, %104 : vector<16x32xf32>
    %cst_70 = arith.constant dense<0.000000e+00> : vector<16x32xf32>
    %106 = tpu.matmul %13, %101, %cst_70 {dimension_numbers = #tpu.dot_dimension_numbers<[1], [0], [0], [1], [0, 0, 1, 1], [], []>} : vector<16x16xf32>, vector<16x32xf32>, vector<16x32xf32> -> vector<16x32xf32>
    %107 = arith.subf %106, %97 : vector<16x32xf32>
    %c2_71 = arith.constant 2 : index
    %c0_72 = arith.constant 0 : index
    %c0_73 = arith.constant 0 : index
    %108 = vector.load %arg8[%c2_71, %c0_72, %c0_73] : memref<3x32x32xf32, #tpu.memory_space<vmem>>, vector<1x32x32xf32>
    %109 = vector.shape_cast %108 : vector<1x32x32xf32> to vector<32x32xf32>
    %cst_74 = arith.constant dense<0.000000e+00> : vector<16x32xf32>
    %110 = tpu.matmul %107, %109, %cst_74 {dimension_numbers = #tpu.dot_dimension_numbers<[1], [0], [0], [1], [0, 0, 1, 1], [], []>} : vector<16x32xf32>, vector<32x32xf32>, vector<16x32xf32> -> vector<16x32xf32>
    %111 = arith.addf %105, %110 : vector<16x32xf32>
    %112 = arith.addf %96, %111 : vector<16x32xf32>
    %113 = math.tanh %112 : vector<16x32xf32>
    %114 = arith.mulf %95, %9 : vector<16x32xf32>
    %cst_75 = arith.constant 1.000000e+00 : f32
    %115 = vector.broadcast %cst_75 : f32 to vector<16x32xf32>
    %116 = arith.subf %115, %95 : vector<16x32xf32>
    %117 = arith.mulf %116, %113 : vector<16x32xf32>
    %118 = arith.addf %114, %117 : vector<16x32xf32>
    %c0_76 = arith.constant 0 : index
    %119 = arith.index_cast %c0_i32 : i32 to index
    %c0_77 = arith.constant 0 : index
    %c0_78 = arith.constant 0 : index
    %120 = vector.load %arg10[%c0_76, %119, %c0_77, %c0_78] : memref<1x8x16x32xf32, #tpu.memory_space<vmem>>, vector<1x1x16x32xf32>
    %121 = vector.shape_cast %120 : vector<1x1x16x32xf32> to vector<16x32xf32>
    %122 = vector.shape_cast %118 : vector<16x32xf32> to vector<1x1x16x32xf32>
    tpu.vector_store %arg10[%c0_76, %119, %c0_77, %c0_78], %122 {strides = array<i32>} : memref<1x8x16x32xf32, #tpu.memory_space<vmem>>, vector<1x1x16x32xf32>,
    %c1_i32 = arith.constant 1 : i32
    %c0_79 = arith.constant 0 : index
    %123 = arith.index_cast %c1_i32 : i32 to index
    %c0_80 = arith.constant 0 : index
    %c0_81 = arith.constant 0 : index
    %124 = vector.load %arg1[%c0_79, %123, %c0_80, %c0_81] : memref<1x8x16x16xf32, #tpu.memory_space<vmem>>, vector<1x1x16x16xf32>
    %125 = vector.shape_cast %124 : vector<1x1x16x16xf32> to vector<16x16xf32>
    %126 = arith.addf %125, %125 : vector<16x16xf32>
    %c0_82 = arith.constant 0 : index
    %127 = arith.index_cast %c1_i32 : i32 to index
    %c0_83 = arith.constant 0 : index
    %c0_84 = arith.constant 0 : index
    %128 = vector.load %arg2[%c0_82, %127, %c0_83, %c0_84] : memref<1x8x16x4xf32, #tpu.memory_space<vmem>>, vector<1x1x16x4xf32>
    %129 = vector.shape_cast %128 : vector<1x1x16x4xf32> to vector<16x4xf32>
    %130 = tpu.concatenate %129, %67 in 1 : vector<16x4xf32>, vector<16x32xf32> -> vector<16x36xf32>
    %c0_85 = arith.constant 0 : index
    %c0_86 = arith.constant 0 : index
    %c0_87 = arith.constant 0 : index
    %131 = vector.load %arg4[%c0_85, %c0_86, %c0_87] : memref<3x36x96xf32, #tpu.memory_space<vmem>>, vector<1x36x96xf32>
    %132 = vector.shape_cast %131 : vector<1x36x96xf32> to vector<36x96xf32>
    %cst_88 = arith.constant dense<0.000000e+00> : vector<16x96xf32>
    %133 = tpu.matmul %130, %132, %cst_88 {dimension_numbers = #tpu.dot_dimension_numbers<[1], [0], [0], [1], [0, 0, 1, 1], [], []>} : vector<16x36xf32>, vector<36x96xf32>, vector<16x96xf32> -> vector<16x96xf32>
    %cst_89 = arith.constant dense<0.000000e+00> : vector<16x36xf32>
    %134 = tpu.matmul %125, %130, %cst_89 {dimension_numbers = #tpu.dot_dimension_numbers<[1], [0], [0], [1], [0, 0, 1, 1], [], []>} : vector<16x16xf32>, vector<16x36xf32>, vector<16x36xf32> -> vector<16x36xf32>
    %c1_90 = arith.constant 1 : index
    %c0_91 = arith.constant 0 : index
    %c0_92 = arith.constant 0 : index
    %135 = vector.load %arg4[%c1_90, %c0_91, %c0_92] : memref<3x36x96xf32, #tpu.memory_space<vmem>>, vector<1x36x96xf32>
    %136 = vector.shape_cast %135 : vector<1x36x96xf32> to vector<36x96xf32>
    %cst_93 = arith.constant dense<0.000000e+00> : vector<16x96xf32>
    %137 = tpu.matmul %134, %136, %cst_93 {dimension_numbers = #tpu.dot_dimension_numbers<[1], [0], [0], [1], [0, 0, 1, 1], [], []>} : vector<16x36xf32>, vector<36x96xf32>, vector<16x96xf32> -> vector<16x96xf32>
    %138 = arith.addf %133, %137 : vector<16x96xf32>
    %cst_94 = arith.constant dense<0.000000e+00> : vector<16x36xf32>
    %139 = tpu.matmul %126, %134, %cst_94 {dimension_numbers = #tpu.dot_dimension_numbers<[1], [0], [0], [1], [0, 0, 1, 1], [], []>} : vector<16x16xf32>, vector<16x36xf32>, vector<16x36xf32> -> vector<16x36xf32>
    %140 = arith.subf %139, %130 : vector<16x36xf32>
    %c2_95 = arith.constant 2 : index
    %c0_96 = arith.constant 0 : index
    %c0_97 = arith.constant 0 : index
    %141 = vector.load %arg4[%c2_95, %c0_96, %c0_97] : memref<3x36x96xf32, #tpu.memory_space<vmem>>, vector<1x36x96xf32>
    %142 = vector.shape_cast %141 : vector<1x36x96xf32> to vector<36x96xf32>
    %cst_98 = arith.constant dense<0.000000e+00> : vector<16x96xf32>
    %143 = tpu.matmul %140, %142, %cst_98 {dimension_numbers = #tpu.dot_dimension_numbers<[1], [0], [0], [1], [0, 0, 1, 1], [], []>} : vector<16x36xf32>, vector<36x96xf32>, vector<16x96xf32> -> vector<16x96xf32>
    %144 = arith.addf %138, %143 : vector<16x96xf32>
    %145 = arith.addf %144, %2 : vector<16x96xf32>
    %146 = vector.extract_strided_slice %145 {offsets = [0, 0], sizes = [16, 32], strides = [1, 1]} : vector<16x96xf32> to vector<16x32xf32>
    %147 = arith.negf %146 : vector<16x32xf32>
    %148 = math.exp %147 : vector<16x32xf32>
    %cst_99 = arith.constant 1.000000e+00 : f32
    %149 = vector.broadcast %cst_99 : f32 to vector<16x32xf32>
    %150 = arith.addf %149, %148 : vector<16x32xf32>
    %151 = arith.divf %149, %150 : vector<16x32xf32>
    %152 = vector.extract_strided_slice %145 {offsets = [0, 32], sizes = [16, 32], strides = [1, 1]} : vector<16x96xf32> to vector<16x32xf32>
    %153 = arith.negf %152 : vector<16x32xf32>
    %154 = math.exp %153 : vector<16x32xf32>
    %cst_100 = arith.constant 1.000000e+00 : f32
    %155 = vector.broadcast %cst_100 : f32 to vector<16x32xf32>
    %156 = arith.addf %155, %154 : vector<16x32xf32>
    %157 = arith.divf %155, %156 : vector<16x32xf32>
    %158 = vector.extract_strided_slice %145 {offsets = [0, 64], sizes = [16, 32], strides = [1, 1]} : vector<16x96xf32> to vector<16x32xf32>
    %159 = arith.mulf %151, %67 : vector<16x32xf32>
    %c0_101 = arith.constant 0 : index
    %c0_102 = arith.constant 0 : index
    %c0_103 = arith.constant 0 : index
    %160 = vector.load %arg5[%c0_101, %c0_102, %c0_103] : memref<3x32x32xf32, #tpu.memory_space<vmem>>, vector<1x32x32xf32>
    %161 = vector.shape_cast %160 : vector<1x32x32xf32> to vector<32x32xf32>
    %cst_104 = arith.constant dense<0.000000e+00> : vector<16x32xf32>
    %162 = tpu.matmul %159, %161, %cst_104 {dimension_numbers = #tpu.dot_dimension_numbers<[1], [0], [0], [1], [0, 0, 1, 1], [], []>} : vector<16x32xf32>, vector<32x32xf32>, vector<16x32xf32> -> vector<16x32xf32>
    %cst_105 = arith.constant dense<0.000000e+00> : vector<16x32xf32>
    %163 = tpu.matmul %125, %159, %cst_105 {dimension_numbers = #tpu.dot_dimension_numbers<[1], [0], [0], [1], [0, 0, 1, 1], [], []>} : vector<16x16xf32>, vector<16x32xf32>, vector<16x32xf32> -> vector<16x32xf32>
    %c1_106 = arith.constant 1 : index
    %c0_107 = arith.constant 0 : index
    %c0_108 = arith.constant 0 : index
    %164 = vector.load %arg5[%c1_106, %c0_107, %c0_108] : memref<3x32x32xf32, #tpu.memory_space<vmem>>, vector<1x32x32xf32>
    %165 = vector.shape_cast %164 : vector<1x32x32xf32> to vector<32x32xf32>
    %cst_109 = arith.constant dense<0.000000e+00> : vector<16x32xf32>
    %166 = tpu.matmul %163, %165, %cst_109 {dimension_numbers = #tpu.dot_dimension_numbers<[1], [0], [0], [1], [0, 0, 1, 1], [], []>} : vector<16x32xf32>, vector<32x32xf32>, vector<16x32xf32> -> vector<16x32xf32>
    %167 = arith.addf %162, %166 : vector<16x32xf32>
    %cst_110 = arith.constant dense<0.000000e+00> : vector<16x32xf32>
    %168 = tpu.matmul %126, %163, %cst_110 {dimension_numbers = #tpu.dot_dimension_numbers<[1], [0], [0], [1], [0, 0, 1, 1], [], []>} : vector<16x16xf32>, vector<16x32xf32>, vector<16x32xf32> -> vector<16x32xf32>
    %169 = arith.subf %168, %159 : vector<16x32xf32>
    %c2_111 = arith.constant 2 : index
    %c0_112 = arith.constant 0 : index
    %c0_113 = arith.constant 0 : index
    %170 = vector.load %arg5[%c2_111, %c0_112, %c0_113] : memref<3x32x32xf32, #tpu.memory_space<vmem>>, vector<1x32x32xf32>
    %171 = vector.shape_cast %170 : vector<1x32x32xf32> to vector<32x32xf32>
    %cst_114 = arith.constant dense<0.000000e+00> : vector<16x32xf32>
    %172 = tpu.matmul %169, %171, %cst_114 {dimension_numbers = #tpu.dot_dimension_numbers<[1], [0], [0], [1], [0, 0, 1, 1], [], []>} : vector<16x32xf32>, vector<32x32xf32>, vector<16x32xf32> -> vector<16x32xf32>
    %173 = arith.addf %167, %172 : vector<16x32xf32>
    %174 = arith.addf %158, %173 : vector<16x32xf32>
    %175 = math.tanh %174 : vector<16x32xf32>
    %176 = arith.mulf %157, %67 : vector<16x32xf32>
    %cst_115 = arith.constant 1.000000e+00 : f32
    %177 = vector.broadcast %cst_115 : f32 to vector<16x32xf32>
    %178 = arith.subf %177, %157 : vector<16x32xf32>
    %179 = arith.mulf %178, %175 : vector<16x32xf32>
    %180 = arith.addf %176, %179 : vector<16x32xf32>
    %181 = tpu.concatenate %180, %118 in 1 : vector<16x32xf32>, vector<16x32xf32> -> vector<16x64xf32>
    %c0_116 = arith.constant 0 : index
    %c0_117 = arith.constant 0 : index
    %c0_118 = arith.constant 0 : index
    %182 = vector.load %arg7[%c0_116, %c0_117, %c0_118] : memref<3x64x96xf32, #tpu.memory_space<vmem>>, vector<1x64x96xf32>
    %183 = vector.shape_cast %182 : vector<1x64x96xf32> to vector<64x96xf32>
    %cst_119 = arith.constant dense<0.000000e+00> : vector<16x96xf32>
    %184 = tpu.matmul %181, %183, %cst_119 {dimension_numbers = #tpu.dot_dimension_numbers<[1], [0], [0], [1], [0, 0, 1, 1], [], []>} : vector<16x64xf32>, vector<64x96xf32>, vector<16x96xf32> -> vector<16x96xf32>
    %cst_120 = arith.constant dense<0.000000e+00> : vector<16x64xf32>
    %185 = tpu.matmul %125, %181, %cst_120 {dimension_numbers = #tpu.dot_dimension_numbers<[1], [0], [0], [1], [0, 0, 1, 1], [], []>} : vector<16x16xf32>, vector<16x64xf32>, vector<16x64xf32> -> vector<16x64xf32>
    %c1_121 = arith.constant 1 : index
    %c0_122 = arith.constant 0 : index
    %c0_123 = arith.constant 0 : index
    %186 = vector.load %arg7[%c1_121, %c0_122, %c0_123] : memref<3x64x96xf32, #tpu.memory_space<vmem>>, vector<1x64x96xf32>
    %187 = vector.shape_cast %186 : vector<1x64x96xf32> to vector<64x96xf32>
    %cst_124 = arith.constant dense<0.000000e+00> : vector<16x96xf32>
    %188 = tpu.matmul %185, %187, %cst_124 {dimension_numbers = #tpu.dot_dimension_numbers<[1], [0], [0], [1], [0, 0, 1, 1], [], []>} : vector<16x64xf32>, vector<64x96xf32>, vector<16x96xf32> -> vector<16x96xf32>
    %189 = arith.addf %184, %188 : vector<16x96xf32>
    %cst_125 = arith.constant dense<0.000000e+00> : vector<16x64xf32>
    %190 = tpu.matmul %126, %185, %cst_125 {dimension_numbers = #tpu.dot_dimension_numbers<[1], [0], [0], [1], [0, 0, 1, 1], [], []>} : vector<16x16xf32>, vector<16x64xf32>, vector<16x64xf32> -> vector<16x64xf32>
    %191 = arith.subf %190, %181 : vector<16x64xf32>
    %c2_126 = arith.constant 2 : index
    %c0_127 = arith.constant 0 : index
    %c0_128 = arith.constant 0 : index
    %192 = vector.load %arg7[%c2_126, %c0_127, %c0_128] : memref<3x64x96xf32, #tpu.memory_space<vmem>>, vector<1x64x96xf32>
    %193 = vector.shape_cast %192 : vector<1x64x96xf32> to vector<64x96xf32>
    %cst_129 = arith.constant dense<0.000000e+00> : vector<16x96xf32>
    %194 = tpu.matmul %191, %193, %cst_129 {dimension_numbers = #tpu.dot_dimension_numbers<[1], [0], [0], [1], [0, 0, 1, 1], [], []>} : vector<16x64xf32>, vector<64x96xf32>, vector<16x96xf32> -> vector<16x96xf32>
    %195 = arith.addf %189, %194 : vector<16x96xf32>
    %196 = arith.addf %195, %5 : vector<16x96xf32>
    %197 = vector.extract_strided_slice %196 {offsets = [0, 0], sizes = [16, 32], strides = [1, 1]} : vector<16x96xf32> to vector<16x32xf32>
    %198 = arith.negf %197 : vector<16x32xf32>
    %199 = math.exp %198 : vector<16x32xf32>
    %cst_130 = arith.constant 1.000000e+00 : f32
    %200 = vector.broadcast %cst_130 : f32 to vector<16x32xf32>
    %201 = arith.addf %200, %199 : vector<16x32xf32>
    %202 = arith.divf %200, %201 : vector<16x32xf32>
    %203 = vector.extract_strided_slice %196 {offsets = [0, 32], sizes = [16, 32], strides = [1, 1]} : vector<16x96xf32> to vector<16x32xf32>
    %204 = arith.negf %203 : vector<16x32xf32>
    %205 = math.exp %204 : vector<16x32xf32>
    %cst_131 = arith.constant 1.000000e+00 : f32
    %206 = vector.broadcast %cst_131 : f32 to vector<16x32xf32>
    %207 = arith.addf %206, %205 : vector<16x32xf32>
    %208 = arith.divf %206, %207 : vector<16x32xf32>
    %209 = vector.extract_strided_slice %196 {offsets = [0, 64], sizes = [16, 32], strides = [1, 1]} : vector<16x96xf32> to vector<16x32xf32>
    %210 = arith.mulf %202, %118 : vector<16x32xf32>
    %c0_132 = arith.constant 0 : index
    %c0_133 = arith.constant 0 : index
    %c0_134 = arith.constant 0 : index
    %211 = vector.load %arg8[%c0_132, %c0_133, %c0_134] : memref<3x32x32xf32, #tpu.memory_space<vmem>>, vector<1x32x32xf32>
    %212 = vector.shape_cast %211 : vector<1x32x32xf32> to vector<32x32xf32>
    %cst_135 = arith.constant dense<0.000000e+00> : vector<16x32xf32>
    %213 = tpu.matmul %210, %212, %cst_135 {dimension_numbers = #tpu.dot_dimension_numbers<[1], [0], [0], [1], [0, 0, 1, 1], [], []>} : vector<16x32xf32>, vector<32x32xf32>, vector<16x32xf32> -> vector<16x32xf32>
    %cst_136 = arith.constant dense<0.000000e+00> : vector<16x32xf32>
    %214 = tpu.matmul %125, %210, %cst_136 {dimension_numbers = #tpu.dot_dimension_numbers<[1], [0], [0], [1], [0, 0, 1, 1], [], []>} : vector<16x16xf32>, vector<16x32xf32>, vector<16x32xf32> -> vector<16x32xf32>
    %c1_137 = arith.constant 1 : index
    %c0_138 = arith.constant 0 : index
    %c0_139 = arith.constant 0 : index
    %215 = vector.load %arg8[%c1_137, %c0_138, %c0_139] : memref<3x32x32xf32, #tpu.memory_space<vmem>>, vector<1x32x32xf32>
    %216 = vector.shape_cast %215 : vector<1x32x32xf32> to vector<32x32xf32>
    %cst_140 = arith.constant dense<0.000000e+00> : vector<16x32xf32>
    %217 = tpu.matmul %214, %216, %cst_140 {dimension_numbers = #tpu.dot_dimension_numbers<[1], [0], [0], [1], [0, 0, 1, 1], [], []>} : vector<16x32xf32>, vector<32x32xf32>, vector<16x32xf32> -> vector<16x32xf32>
    %218 = arith.addf %213, %217 : vector<16x32xf32>
    %cst_141 = arith.constant dense<0.000000e+00> : vector<16x32xf32>
    %219 = tpu.matmul %126, %214, %cst_141 {dimension_numbers = #tpu.dot_dimension_numbers<[1], [0], [0], [1], [0, 0, 1, 1], [], []>} : vector<16x16xf32>, vector<16x32xf32>, vector<16x32xf32> -> vector<16x32xf32>
    %220 = arith.subf %219, %210 : vector<16x32xf32>
    %c2_142 = arith.constant 2 : index
    %c0_143 = arith.constant 0 : index
    %c0_144 = arith.constant 0 : index
    %221 = vector.load %arg8[%c2_142, %c0_143, %c0_144] : memref<3x32x32xf32, #tpu.memory_space<vmem>>, vector<1x32x32xf32>
    %222 = vector.shape_cast %221 : vector<1x32x32xf32> to vector<32x32xf32>
    %cst_145 = arith.constant dense<0.000000e+00> : vector<16x32xf32>
    %223 = tpu.matmul %220, %222, %cst_145 {dimension_numbers = #tpu.dot_dimension_numbers<[1], [0], [0], [1], [0, 0, 1, 1], [], []>} : vector<16x32xf32>, vector<32x32xf32>, vector<16x32xf32> -> vector<16x32xf32>
    %224 = arith.addf %218, %223 : vector<16x32xf32>
    %225 = arith.addf %209, %224 : vector<16x32xf32>
    %226 = math.tanh %225 : vector<16x32xf32>
    %227 = arith.mulf %208, %118 : vector<16x32xf32>
    %cst_146 = arith.constant 1.000000e+00 : f32
    %228 = vector.broadcast %cst_146 : f32 to vector<16x32xf32>
    %229 = arith.subf %228, %208 : vector<16x32xf32>
    %230 = arith.mulf %229, %226 : vector<16x32xf32>
    %231 = arith.addf %227, %230 : vector<16x32xf32>
    %c0_147 = arith.constant 0 : index
    %232 = arith.index_cast %c1_i32 : i32 to index
    %c0_148 = arith.constant 0 : index
    %c0_149 = arith.constant 0 : index
    %233 = vector.load %arg10[%c0_147, %232, %c0_148, %c0_149] : memref<1x8x16x32xf32, #tpu.memory_space<vmem>>, vector<1x1x16x32xf32>
    %234 = vector.shape_cast %233 : vector<1x1x16x32xf32> to vector<16x32xf32>
    %235 = vector.shape_cast %231 : vector<16x32xf32> to vector<1x1x16x32xf32>
    tpu.vector_store %arg10[%c0_147, %232, %c0_148, %c0_149], %235 {strides = array<i32>} : memref<1x8x16x32xf32, #tpu.memory_space<vmem>>, vector<1x1x16x32xf32>,
    %c2_i32 = arith.constant 2 : i32
    %c0_150 = arith.constant 0 : index
    %236 = arith.index_cast %c2_i32 : i32 to index
    %c0_151 = arith.constant 0 : index
    %c0_152 = arith.constant 0 : index
    %237 = vector.load %arg1[%c0_150, %236, %c0_151, %c0_152] : memref<1x8x16x16xf32, #tpu.memory_space<vmem>>, vector<1x1x16x16xf32>
    %238 = vector.shape_cast %237 : vector<1x1x16x16xf32> to vector<16x16xf32>
    %239 = arith.addf %238, %238 : vector<16x16xf32>
    %c0_153 = arith.constant 0 : index
    %240 = arith.index_cast %c2_i32 : i32 to index
    %c0_154 = arith.constant 0 : index
    %c0_155 = arith.constant 0 : index
    %241 = vector.load %arg2[%c0_153, %240, %c0_154, %c0_155] : memref<1x8x16x4xf32, #tpu.memory_space<vmem>>, vector<1x1x16x4xf32>
    %242 = vector.shape_cast %241 : vector<1x1x16x4xf32> to vector<16x4xf32>
    %243 = tpu.concatenate %242, %180 in 1 : vector<16x4xf32>, vector<16x32xf32> -> vector<16x36xf32>
    %c0_156 = arith.constant 0 : index
    %c0_157 = arith.constant 0 : index
    %c0_158 = arith.constant 0 : index
    %244 = vector.load %arg4[%c0_156, %c0_157, %c0_158] : memref<3x36x96xf32, #tpu.memory_space<vmem>>, vector<1x36x96xf32>
    %245 = vector.shape_cast %244 : vector<1x36x96xf32> to vector<36x96xf32>
    %cst_159 = arith.constant dense<0.000000e+00> : vector<16x96xf32>
    %246 = tpu.matmul %243, %245, %cst_159 {dimension_numbers = #tpu.dot_dimension_numbers<[1], [0], [0], [1], [0, 0, 1, 1], [], []>} : vector<16x36xf32>, vector<36x96xf32>, vector<16x96xf32> -> vector<16x96xf32>
    %cst_160 = arith.constant dense<0.000000e+00> : vector<16x36xf32>
    %247 = tpu.matmul %238, %243, %cst_160 {dimension_numbers = #tpu.dot_dimension_numbers<[1], [0], [0], [1], [0, 0, 1, 1], [], []>} : vector<16x16xf32>, vector<16x36xf32>, vector<16x36xf32> -> vector<16x36xf32>
    %c1_161 = arith.constant 1 : index
    %c0_162 = arith.constant 0 : index
    %c0_163 = arith.constant 0 : index
    %248 = vector.load %arg4[%c1_161, %c0_162, %c0_163] : memref<3x36x96xf32, #tpu.memory_space<vmem>>, vector<1x36x96xf32>
    %249 = vector.shape_cast %248 : vector<1x36x96xf32> to vector<36x96xf32>
    %cst_164 = arith.constant dense<0.000000e+00> : vector<16x96xf32>
    %250 = tpu.matmul %247, %249, %cst_164 {dimension_numbers = #tpu.dot_dimension_numbers<[1], [0], [0], [1], [0, 0, 1, 1], [], []>} : vector<16x36xf32>, vector<36x96xf32>, vector<16x96xf32> -> vector<16x96xf32>
    %251 = arith.addf %246, %250 : vector<16x96xf32>
    %cst_165 = arith.constant dense<0.000000e+00> : vector<16x36xf32>
    %252 = tpu.matmul %239, %247, %cst_165 {dimension_numbers = #tpu.dot_dimension_numbers<[1], [0], [0], [1], [0, 0, 1, 1], [], []>} : vector<16x16xf32>, vector<16x36xf32>, vector<16x36xf32> -> vector<16x36xf32>
    %253 = arith.subf %252, %243 : vector<16x36xf32>
    %c2_166 = arith.constant 2 : index
    %c0_167 = arith.constant 0 : index
    %c0_168 = arith.constant 0 : index
    %254 = vector.load %arg4[%c2_166, %c0_167, %c0_168] : memref<3x36x96xf32, #tpu.memory_space<vmem>>, vector<1x36x96xf32>
    %255 = vector.shape_cast %254 : vector<1x36x96xf32> to vector<36x96xf32>
    %cst_169 = arith.constant dense<0.000000e+00> : vector<16x96xf32>
    %256 = tpu.matmul %253, %255, %cst_169 {dimension_numbers = #tpu.dot_dimension_numbers<[1], [0], [0], [1], [0, 0, 1, 1], [], []>} : vector<16x36xf32>, vector<36x96xf32>, vector<16x96xf32> -> vector<16x96xf32>
    %257 = arith.addf %251, %256 : vector<16x96xf32>
    %258 = arith.addf %257, %2 : vector<16x96xf32>
    %259 = vector.extract_strided_slice %258 {offsets = [0, 0], sizes = [16, 32], strides = [1, 1]} : vector<16x96xf32> to vector<16x32xf32>
    %260 = arith.negf %259 : vector<16x32xf32>
    %261 = math.exp %260 : vector<16x32xf32>
    %cst_170 = arith.constant 1.000000e+00 : f32
    %262 = vector.broadcast %cst_170 : f32 to vector<16x32xf32>
    %263 = arith.addf %262, %261 : vector<16x32xf32>
    %264 = arith.divf %262, %263 : vector<16x32xf32>
    %265 = vector.extract_strided_slice %258 {offsets = [0, 32], sizes = [16, 32], strides = [1, 1]} : vector<16x96xf32> to vector<16x32xf32>
    %266 = arith.negf %265 : vector<16x32xf32>
    %267 = math.exp %266 : vector<16x32xf32>
    %cst_171 = arith.constant 1.000000e+00 : f32
    %268 = vector.broadcast %cst_171 : f32 to vector<16x32xf32>
    %269 = arith.addf %268, %267 : vector<16x32xf32>
    %270 = arith.divf %268, %269 : vector<16x32xf32>
    %271 = vector.extract_strided_slice %258 {offsets = [0, 64], sizes = [16, 32], strides = [1, 1]} : vector<16x96xf32> to vector<16x32xf32>
    %272 = arith.mulf %264, %180 : vector<16x32xf32>
    %c0_172 = arith.constant 0 : index
    %c0_173 = arith.constant 0 : index
    %c0_174 = arith.constant 0 : index
    %273 = vector.load %arg5[%c0_172, %c0_173, %c0_174] : memref<3x32x32xf32, #tpu.memory_space<vmem>>, vector<1x32x32xf32>
    %274 = vector.shape_cast %273 : vector<1x32x32xf32> to vector<32x32xf32>
    %cst_175 = arith.constant dense<0.000000e+00> : vector<16x32xf32>
    %275 = tpu.matmul %272, %274, %cst_175 {dimension_numbers = #tpu.dot_dimension_numbers<[1], [0], [0], [1], [0, 0, 1, 1], [], []>} : vector<16x32xf32>, vector<32x32xf32>, vector<16x32xf32> -> vector<16x32xf32>
    %cst_176 = arith.constant dense<0.000000e+00> : vector<16x32xf32>
    %276 = tpu.matmul %238, %272, %cst_176 {dimension_numbers = #tpu.dot_dimension_numbers<[1], [0], [0], [1], [0, 0, 1, 1], [], []>} : vector<16x16xf32>, vector<16x32xf32>, vector<16x32xf32> -> vector<16x32xf32>
    %c1_177 = arith.constant 1 : index
    %c0_178 = arith.constant 0 : index
    %c0_179 = arith.constant 0 : index
    %277 = vector.load %arg5[%c1_177, %c0_178, %c0_179] : memref<3x32x32xf32, #tpu.memory_space<vmem>>, vector<1x32x32xf32>
    %278 = vector.shape_cast %277 : vector<1x32x32xf32> to vector<32x32xf32>
    %cst_180 = arith.constant dense<0.000000e+00> : vector<16x32xf32>
    %279 = tpu.matmul %276, %278, %cst_180 {dimension_numbers = #tpu.dot_dimension_numbers<[1], [0], [0], [1], [0, 0, 1, 1], [], []>} : vector<16x32xf32>, vector<32x32xf32>, vector<16x32xf32> -> vector<16x32xf32>
    %280 = arith.addf %275, %279 : vector<16x32xf32>
    %cst_181 = arith.constant dense<0.000000e+00> : vector<16x32xf32>
    %281 = tpu.matmul %239, %276, %cst_181 {dimension_numbers = #tpu.dot_dimension_numbers<[1], [0], [0], [1], [0, 0, 1, 1], [], []>} : vector<16x16xf32>, vector<16x32xf32>, vector<16x32xf32> -> vector<16x32xf32>
    %282 = arith.subf %281, %272 : vector<16x32xf32>
    %c2_182 = arith.constant 2 : index
    %c0_183 = arith.constant 0 : index
    %c0_184 = arith.constant 0 : index
    %283 = vector.load %arg5[%c2_182, %c0_183, %c0_184] : memref<3x32x32xf32, #tpu.memory_space<vmem>>, vector<1x32x32xf32>
    %284 = vector.shape_cast %283 : vector<1x32x32xf32> to vector<32x32xf32>
    %cst_185 = arith.constant dense<0.000000e+00> : vector<16x32xf32>
    %285 = tpu.matmul %282, %284, %cst_185 {dimension_numbers = #tpu.dot_dimension_numbers<[1], [0], [0], [1], [0, 0, 1, 1], [], []>} : vector<16x32xf32>, vector<32x32xf32>, vector<16x32xf32> -> vector<16x32xf32>
    %286 = arith.addf %280, %285 : vector<16x32xf32>
    %287 = arith.addf %271, %286 : vector<16x32xf32>
    %288 = math.tanh %287 : vector<16x32xf32>
    %289 = arith.mulf %270, %180 : vector<16x32xf32>
    %cst_186 = arith.constant 1.000000e+00 : f32
    %290 = vector.broadcast %cst_186 : f32 to vector<16x32xf32>
    %291 = arith.subf %290, %270 : vector<16x32xf32>
    %292 = arith.mulf %291, %288 : vector<16x32xf32>
    %293 = arith.addf %289, %292 : vector<16x32xf32>
    %294 = tpu.concatenate %293, %231 in 1 : vector<16x32xf32>, vector<16x32xf32> -> vector<16x64xf32>
    %c0_187 = arith.constant 0 : index
    %c0_188 = arith.constant 0 : index
    %c0_189 = arith.constant 0 : index
    %295 = vector.load %arg7[%c0_187, %c0_188, %c0_189] : memref<3x64x96xf32, #tpu.memory_space<vmem>>, vector<1x64x96xf32>
    %296 = vector.shape_cast %295 : vector<1x64x96xf32> to vector<64x96xf32>
    %cst_190 = arith.constant dense<0.000000e+00> : vector<16x96xf32>
    %297 = tpu.matmul %294, %296, %cst_190 {dimension_numbers = #tpu.dot_dimension_numbers<[1], [0], [0], [1], [0, 0, 1, 1], [], []>} : vector<16x64xf32>, vector<64x96xf32>, vector<16x96xf32> -> vector<16x96xf32>
    %cst_191 = arith.constant dense<0.000000e+00> : vector<16x64xf32>
    %298 = tpu.matmul %238, %294, %cst_191 {dimension_numbers = #tpu.dot_dimension_numbers<[1], [0], [0], [1], [0, 0, 1, 1], [], []>} : vector<16x16xf32>, vector<16x64xf32>, vector<16x64xf32> -> vector<16x64xf32>
    %c1_192 = arith.constant 1 : index
    %c0_193 = arith.constant 0 : index
    %c0_194 = arith.constant 0 : index
    %299 = vector.load %arg7[%c1_192, %c0_193, %c0_194] : memref<3x64x96xf32, #tpu.memory_space<vmem>>, vector<1x64x96xf32>
    %300 = vector.shape_cast %299 : vector<1x64x96xf32> to vector<64x96xf32>
    %cst_195 = arith.constant dense<0.000000e+00> : vector<16x96xf32>
    %301 = tpu.matmul %298, %300, %cst_195 {dimension_numbers = #tpu.dot_dimension_numbers<[1], [0], [0], [1], [0, 0, 1, 1], [], []>} : vector<16x64xf32>, vector<64x96xf32>, vector<16x96xf32> -> vector<16x96xf32>
    %302 = arith.addf %297, %301 : vector<16x96xf32>
    %cst_196 = arith.constant dense<0.000000e+00> : vector<16x64xf32>
    %303 = tpu.matmul %239, %298, %cst_196 {dimension_numbers = #tpu.dot_dimension_numbers<[1], [0], [0], [1], [0, 0, 1, 1], [], []>} : vector<16x16xf32>, vector<16x64xf32>, vector<16x64xf32> -> vector<16x64xf32>
    %304 = arith.subf %303, %294 : vector<16x64xf32>
    %c2_197 = arith.constant 2 : index
    %c0_198 = arith.constant 0 : index
    %c0_199 = arith.constant 0 : index
    %305 = vector.load %arg7[%c2_197, %c0_198, %c0_199] : memref<3x64x96xf32, #tpu.memory_space<vmem>>, vector<1x64x96xf32>
    %306 = vector.shape_cast %305 : vector<1x64x96xf32> to vector<64x96xf32>
    %cst_200 = arith.constant dense<0.000000e+00> : vector<16x96xf32>
    %307 = tpu.matmul %304, %306, %cst_200 {dimension_numbers = #tpu.dot_dimension_numbers<[1], [0], [0], [1], [0, 0, 1, 1], [], []>} : vector<16x64xf32>, vector<64x96xf32>, vector<16x96xf32> -> vector<16x96xf32>
    %308 = arith.addf %302, %307 : vector<16x96xf32>
    %309 = arith.addf %308, %5 : vector<16x96xf32>
    %310 = vector.extract_strided_slice %309 {offsets = [0, 0], sizes = [16, 32], strides = [1, 1]} : vector<16x96xf32> to vector<16x32xf32>
    %311 = arith.negf %310 : vector<16x32xf32>
    %312 = math.exp %311 : vector<16x32xf32>
    %cst_201 = arith.constant 1.000000e+00 : f32
    %313 = vector.broadcast %cst_201 : f32 to vector<16x32xf32>
    %314 = arith.addf %313, %312 : vector<16x32xf32>
    %315 = arith.divf %313, %314 : vector<16x32xf32>
    %316 = vector.extract_strided_slice %309 {offsets = [0, 32], sizes = [16, 32], strides = [1, 1]} : vector<16x96xf32> to vector<16x32xf32>
    %317 = arith.negf %316 : vector<16x32xf32>
    %318 = math.exp %317 : vector<16x32xf32>
    %cst_202 = arith.constant 1.000000e+00 : f32
    %319 = vector.broadcast %cst_202 : f32 to vector<16x32xf32>
    %320 = arith.addf %319, %318 : vector<16x32xf32>
    %321 = arith.divf %319, %320 : vector<16x32xf32>
    %322 = vector.extract_strided_slice %309 {offsets = [0, 64], sizes = [16, 32], strides = [1, 1]} : vector<16x96xf32> to vector<16x32xf32>
    %323 = arith.mulf %315, %231 : vector<16x32xf32>
    %c0_203 = arith.constant 0 : index
    %c0_204 = arith.constant 0 : index
    %c0_205 = arith.constant 0 : index
    %324 = vector.load %arg8[%c0_203, %c0_204, %c0_205] : memref<3x32x32xf32, #tpu.memory_space<vmem>>, vector<1x32x32xf32>
    %325 = vector.shape_cast %324 : vector<1x32x32xf32> to vector<32x32xf32>
    %cst_206 = arith.constant dense<0.000000e+00> : vector<16x32xf32>
    %326 = tpu.matmul %323, %325, %cst_206 {dimension_numbers = #tpu.dot_dimension_numbers<[1], [0], [0], [1], [0, 0, 1, 1], [], []>} : vector<16x32xf32>, vector<32x32xf32>, vector<16x32xf32> -> vector<16x32xf32>
    %cst_207 = arith.constant dense<0.000000e+00> : vector<16x32xf32>
    %327 = tpu.matmul %238, %323, %cst_207 {dimension_numbers = #tpu.dot_dimension_numbers<[1], [0], [0], [1], [0, 0, 1, 1], [], []>} : vector<16x16xf32>, vector<16x32xf32>, vector<16x32xf32> -> vector<16x32xf32>
    %c1_208 = arith.constant 1 : index
    %c0_209 = arith.constant 0 : index
    %c0_210 = arith.constant 0 : index
    %328 = vector.load %arg8[%c1_208, %c0_209, %c0_210] : memref<3x32x32xf32, #tpu.memory_space<vmem>>, vector<1x32x32xf32>
    %329 = vector.shape_cast %328 : vector<1x32x32xf32> to vector<32x32xf32>
    %cst_211 = arith.constant dense<0.000000e+00> : vector<16x32xf32>
    %330 = tpu.matmul %327, %329, %cst_211 {dimension_numbers = #tpu.dot_dimension_numbers<[1], [0], [0], [1], [0, 0, 1, 1], [], []>} : vector<16x32xf32>, vector<32x32xf32>, vector<16x32xf32> -> vector<16x32xf32>
    %331 = arith.addf %326, %330 : vector<16x32xf32>
    %cst_212 = arith.constant dense<0.000000e+00> : vector<16x32xf32>
    %332 = tpu.matmul %239, %327, %cst_212 {dimension_numbers = #tpu.dot_dimension_numbers<[1], [0], [0], [1], [0, 0, 1, 1], [], []>} : vector<16x16xf32>, vector<16x32xf32>, vector<16x32xf32> -> vector<16x32xf32>
    %333 = arith.subf %332, %323 : vector<16x32xf32>
    %c2_213 = arith.constant 2 : index
    %c0_214 = arith.constant 0 : index
    %c0_215 = arith.constant 0 : index
    %334 = vector.load %arg8[%c2_213, %c0_214, %c0_215] : memref<3x32x32xf32, #tpu.memory_space<vmem>>, vector<1x32x32xf32>
    %335 = vector.shape_cast %334 : vector<1x32x32xf32> to vector<32x32xf32>
    %cst_216 = arith.constant dense<0.000000e+00> : vector<16x32xf32>
    %336 = tpu.matmul %333, %335, %cst_216 {dimension_numbers = #tpu.dot_dimension_numbers<[1], [0], [0], [1], [0, 0, 1, 1], [], []>} : vector<16x32xf32>, vector<32x32xf32>, vector<16x32xf32> -> vector<16x32xf32>
    %337 = arith.addf %331, %336 : vector<16x32xf32>
    %338 = arith.addf %322, %337 : vector<16x32xf32>
    %339 = math.tanh %338 : vector<16x32xf32>
    %340 = arith.mulf %321, %231 : vector<16x32xf32>
    %cst_217 = arith.constant 1.000000e+00 : f32
    %341 = vector.broadcast %cst_217 : f32 to vector<16x32xf32>
    %342 = arith.subf %341, %321 : vector<16x32xf32>
    %343 = arith.mulf %342, %339 : vector<16x32xf32>
    %344 = arith.addf %340, %343 : vector<16x32xf32>
    %c0_218 = arith.constant 0 : index
    %345 = arith.index_cast %c2_i32 : i32 to index
    %c0_219 = arith.constant 0 : index
    %c0_220 = arith.constant 0 : index
    %346 = vector.load %arg10[%c0_218, %345, %c0_219, %c0_220] : memref<1x8x16x32xf32, #tpu.memory_space<vmem>>, vector<1x1x16x32xf32>
    %347 = vector.shape_cast %346 : vector<1x1x16x32xf32> to vector<16x32xf32>
    %348 = vector.shape_cast %344 : vector<16x32xf32> to vector<1x1x16x32xf32>
    tpu.vector_store %arg10[%c0_218, %345, %c0_219, %c0_220], %348 {strides = array<i32>} : memref<1x8x16x32xf32, #tpu.memory_space<vmem>>, vector<1x1x16x32xf32>,
    %c3_i32 = arith.constant 3 : i32
    %c0_221 = arith.constant 0 : index
    %349 = arith.index_cast %c3_i32 : i32 to index
    %c0_222 = arith.constant 0 : index
    %c0_223 = arith.constant 0 : index
    %350 = vector.load %arg1[%c0_221, %349, %c0_222, %c0_223] : memref<1x8x16x16xf32, #tpu.memory_space<vmem>>, vector<1x1x16x16xf32>
    %351 = vector.shape_cast %350 : vector<1x1x16x16xf32> to vector<16x16xf32>
    %352 = arith.addf %351, %351 : vector<16x16xf32>
    %c0_224 = arith.constant 0 : index
    %353 = arith.index_cast %c3_i32 : i32 to index
    %c0_225 = arith.constant 0 : index
    %c0_226 = arith.constant 0 : index
    %354 = vector.load %arg2[%c0_224, %353, %c0_225, %c0_226] : memref<1x8x16x4xf32, #tpu.memory_space<vmem>>, vector<1x1x16x4xf32>
    %355 = vector.shape_cast %354 : vector<1x1x16x4xf32> to vector<16x4xf32>
    %356 = tpu.concatenate %355, %293 in 1 : vector<16x4xf32>, vector<16x32xf32> -> vector<16x36xf32>
    %c0_227 = arith.constant 0 : index
    %c0_228 = arith.constant 0 : index
    %c0_229 = arith.constant 0 : index
    %357 = vector.load %arg4[%c0_227, %c0_228, %c0_229] : memref<3x36x96xf32, #tpu.memory_space<vmem>>, vector<1x36x96xf32>
    %358 = vector.shape_cast %357 : vector<1x36x96xf32> to vector<36x96xf32>
    %cst_230 = arith.constant dense<0.000000e+00> : vector<16x96xf32>
    %359 = tpu.matmul %356, %358, %cst_230 {dimension_numbers = #tpu.dot_dimension_numbers<[1], [0], [0], [1], [0, 0, 1, 1], [], []>} : vector<16x36xf32>, vector<36x96xf32>, vector<16x96xf32> -> vector<16x96xf32>
    %cst_231 = arith.constant dense<0.000000e+00> : vector<16x36xf32>
    %360 = tpu.matmul %351, %356, %cst_231 {dimension_numbers = #tpu.dot_dimension_numbers<[1], [0], [0], [1], [0, 0, 1, 1], [], []>} : vector<16x16xf32>, vector<16x36xf32>, vector<16x36xf32> -> vector<16x36xf32>
    %c1_232 = arith.constant 1 : index
    %c0_233 = arith.constant 0 : index
    %c0_234 = arith.constant 0 : index
    %361 = vector.load %arg4[%c1_232, %c0_233, %c0_234] : memref<3x36x96xf32, #tpu.memory_space<vmem>>, vector<1x36x96xf32>
    %362 = vector.shape_cast %361 : vector<1x36x96xf32> to vector<36x96xf32>
    %cst_235 = arith.constant dense<0.000000e+00> : vector<16x96xf32>
    %363 = tpu.matmul %360, %362, %cst_235 {dimension_numbers = #tpu.dot_dimension_numbers<[1], [0], [0], [1], [0, 0, 1, 1], [], []>} : vector<16x36xf32>, vector<36x96xf32>, vector<16x96xf32> -> vector<16x96xf32>
    %364 = arith.addf %359, %363 : vector<16x96xf32>
    %cst_236 = arith.constant dense<0.000000e+00> : vector<16x36xf32>
    %365 = tpu.matmul %352, %360, %cst_236 {dimension_numbers = #tpu.dot_dimension_numbers<[1], [0], [0], [1], [0, 0, 1, 1], [], []>} : vector<16x16xf32>, vector<16x36xf32>, vector<16x36xf32> -> vector<16x36xf32>
    %366 = arith.subf %365, %356 : vector<16x36xf32>
    %c2_237 = arith.constant 2 : index
    %c0_238 = arith.constant 0 : index
    %c0_239 = arith.constant 0 : index
    %367 = vector.load %arg4[%c2_237, %c0_238, %c0_239] : memref<3x36x96xf32, #tpu.memory_space<vmem>>, vector<1x36x96xf32>
    %368 = vector.shape_cast %367 : vector<1x36x96xf32> to vector<36x96xf32>
    %cst_240 = arith.constant dense<0.000000e+00> : vector<16x96xf32>
    %369 = tpu.matmul %366, %368, %cst_240 {dimension_numbers = #tpu.dot_dimension_numbers<[1], [0], [0], [1], [0, 0, 1, 1], [], []>} : vector<16x36xf32>, vector<36x96xf32>, vector<16x96xf32> -> vector<16x96xf32>
    %370 = arith.addf %364, %369 : vector<16x96xf32>
    %371 = arith.addf %370, %2 : vector<16x96xf32>
    %372 = vector.extract_strided_slice %371 {offsets = [0, 0], sizes = [16, 32], strides = [1, 1]} : vector<16x96xf32> to vector<16x32xf32>
    %373 = arith.negf %372 : vector<16x32xf32>
    %374 = math.exp %373 : vector<16x32xf32>
    %cst_241 = arith.constant 1.000000e+00 : f32
    %375 = vector.broadcast %cst_241 : f32 to vector<16x32xf32>
    %376 = arith.addf %375, %374 : vector<16x32xf32>
    %377 = arith.divf %375, %376 : vector<16x32xf32>
    %378 = vector.extract_strided_slice %371 {offsets = [0, 32], sizes = [16, 32], strides = [1, 1]} : vector<16x96xf32> to vector<16x32xf32>
    %379 = arith.negf %378 : vector<16x32xf32>
    %380 = math.exp %379 : vector<16x32xf32>
    %cst_242 = arith.constant 1.000000e+00 : f32
    %381 = vector.broadcast %cst_242 : f32 to vector<16x32xf32>
    %382 = arith.addf %381, %380 : vector<16x32xf32>
    %383 = arith.divf %381, %382 : vector<16x32xf32>
    %384 = vector.extract_strided_slice %371 {offsets = [0, 64], sizes = [16, 32], strides = [1, 1]} : vector<16x96xf32> to vector<16x32xf32>
    %385 = arith.mulf %377, %293 : vector<16x32xf32>
    %c0_243 = arith.constant 0 : index
    %c0_244 = arith.constant 0 : index
    %c0_245 = arith.constant 0 : index
    %386 = vector.load %arg5[%c0_243, %c0_244, %c0_245] : memref<3x32x32xf32, #tpu.memory_space<vmem>>, vector<1x32x32xf32>
    %387 = vector.shape_cast %386 : vector<1x32x32xf32> to vector<32x32xf32>
    %cst_246 = arith.constant dense<0.000000e+00> : vector<16x32xf32>
    %388 = tpu.matmul %385, %387, %cst_246 {dimension_numbers = #tpu.dot_dimension_numbers<[1], [0], [0], [1], [0, 0, 1, 1], [], []>} : vector<16x32xf32>, vector<32x32xf32>, vector<16x32xf32> -> vector<16x32xf32>
    %cst_247 = arith.constant dense<0.000000e+00> : vector<16x32xf32>
    %389 = tpu.matmul %351, %385, %cst_247 {dimension_numbers = #tpu.dot_dimension_numbers<[1], [0], [0], [1], [0, 0, 1, 1], [], []>} : vector<16x16xf32>, vector<16x32xf32>, vector<16x32xf32> -> vector<16x32xf32>
    %c1_248 = arith.constant 1 : index
    %c0_249 = arith.constant 0 : index
    %c0_250 = arith.constant 0 : index
    %390 = vector.load %arg5[%c1_248, %c0_249, %c0_250] : memref<3x32x32xf32, #tpu.memory_space<vmem>>, vector<1x32x32xf32>
    %391 = vector.shape_cast %390 : vector<1x32x32xf32> to vector<32x32xf32>
    %cst_251 = arith.constant dense<0.000000e+00> : vector<16x32xf32>
    %392 = tpu.matmul %389, %391, %cst_251 {dimension_numbers = #tpu.dot_dimension_numbers<[1], [0], [0], [1], [0, 0, 1, 1], [], []>} : vector<16x32xf32>, vector<32x32xf32>, vector<16x32xf32> -> vector<16x32xf32>
    %393 = arith.addf %388, %392 : vector<16x32xf32>
    %cst_252 = arith.constant dense<0.000000e+00> : vector<16x32xf32>
    %394 = tpu.matmul %352, %389, %cst_252 {dimension_numbers = #tpu.dot_dimension_numbers<[1], [0], [0], [1], [0, 0, 1, 1], [], []>} : vector<16x16xf32>, vector<16x32xf32>, vector<16x32xf32> -> vector<16x32xf32>
    %395 = arith.subf %394, %385 : vector<16x32xf32>
    %c2_253 = arith.constant 2 : index
    %c0_254 = arith.constant 0 : index
    %c0_255 = arith.constant 0 : index
    %396 = vector.load %arg5[%c2_253, %c0_254, %c0_255] : memref<3x32x32xf32, #tpu.memory_space<vmem>>, vector<1x32x32xf32>
    %397 = vector.shape_cast %396 : vector<1x32x32xf32> to vector<32x32xf32>
    %cst_256 = arith.constant dense<0.000000e+00> : vector<16x32xf32>
    %398 = tpu.matmul %395, %397, %cst_256 {dimension_numbers = #tpu.dot_dimension_numbers<[1], [0], [0], [1], [0, 0, 1, 1], [], []>} : vector<16x32xf32>, vector<32x32xf32>, vector<16x32xf32> -> vector<16x32xf32>
    %399 = arith.addf %393, %398 : vector<16x32xf32>
    %400 = arith.addf %384, %399 : vector<16x32xf32>
    %401 = math.tanh %400 : vector<16x32xf32>
    %402 = arith.mulf %383, %293 : vector<16x32xf32>
    %cst_257 = arith.constant 1.000000e+00 : f32
    %403 = vector.broadcast %cst_257 : f32 to vector<16x32xf32>
    %404 = arith.subf %403, %383 : vector<16x32xf32>
    %405 = arith.mulf %404, %401 : vector<16x32xf32>
    %406 = arith.addf %402, %405 : vector<16x32xf32>
    %407 = tpu.concatenate %406, %344 in 1 : vector<16x32xf32>, vector<16x32xf32> -> vector<16x64xf32>
    %c0_258 = arith.constant 0 : index
    %c0_259 = arith.constant 0 : index
    %c0_260 = arith.constant 0 : index
    %408 = vector.load %arg7[%c0_258, %c0_259, %c0_260] : memref<3x64x96xf32, #tpu.memory_space<vmem>>, vector<1x64x96xf32>
    %409 = vector.shape_cast %408 : vector<1x64x96xf32> to vector<64x96xf32>
    %cst_261 = arith.constant dense<0.000000e+00> : vector<16x96xf32>
    %410 = tpu.matmul %407, %409, %cst_261 {dimension_numbers = #tpu.dot_dimension_numbers<[1], [0], [0], [1], [0, 0, 1, 1], [], []>} : vector<16x64xf32>, vector<64x96xf32>, vector<16x96xf32> -> vector<16x96xf32>
    %cst_262 = arith.constant dense<0.000000e+00> : vector<16x64xf32>
    %411 = tpu.matmul %351, %407, %cst_262 {dimension_numbers = #tpu.dot_dimension_numbers<[1], [0], [0], [1], [0, 0, 1, 1], [], []>} : vector<16x16xf32>, vector<16x64xf32>, vector<16x64xf32> -> vector<16x64xf32>
    %c1_263 = arith.constant 1 : index
    %c0_264 = arith.constant 0 : index
    %c0_265 = arith.constant 0 : index
    %412 = vector.load %arg7[%c1_263, %c0_264, %c0_265] : memref<3x64x96xf32, #tpu.memory_space<vmem>>, vector<1x64x96xf32>
    %413 = vector.shape_cast %412 : vector<1x64x96xf32> to vector<64x96xf32>
    %cst_266 = arith.constant dense<0.000000e+00> : vector<16x96xf32>
    %414 = tpu.matmul %411, %413, %cst_266 {dimension_numbers = #tpu.dot_dimension_numbers<[1], [0], [0], [1], [0, 0, 1, 1], [], []>} : vector<16x64xf32>, vector<64x96xf32>, vector<16x96xf32> -> vector<16x96xf32>
    %415 = arith.addf %410, %414 : vector<16x96xf32>
    %cst_267 = arith.constant dense<0.000000e+00> : vector<16x64xf32>
    %416 = tpu.matmul %352, %411, %cst_267 {dimension_numbers = #tpu.dot_dimension_numbers<[1], [0], [0], [1], [0, 0, 1, 1], [], []>} : vector<16x16xf32>, vector<16x64xf32>, vector<16x64xf32> -> vector<16x64xf32>
    %417 = arith.subf %416, %407 : vector<16x64xf32>
    %c2_268 = arith.constant 2 : index
    %c0_269 = arith.constant 0 : index
    %c0_270 = arith.constant 0 : index
    %418 = vector.load %arg7[%c2_268, %c0_269, %c0_270] : memref<3x64x96xf32, #tpu.memory_space<vmem>>, vector<1x64x96xf32>
    %419 = vector.shape_cast %418 : vector<1x64x96xf32> to vector<64x96xf32>
    %cst_271 = arith.constant dense<0.000000e+00> : vector<16x96xf32>
    %420 = tpu.matmul %417, %419, %cst_271 {dimension_numbers = #tpu.dot_dimension_numbers<[1], [0], [0], [1], [0, 0, 1, 1], [], []>} : vector<16x64xf32>, vector<64x96xf32>, vector<16x96xf32> -> vector<16x96xf32>
    %421 = arith.addf %415, %420 : vector<16x96xf32>
    %422 = arith.addf %421, %5 : vector<16x96xf32>
    %423 = vector.extract_strided_slice %422 {offsets = [0, 0], sizes = [16, 32], strides = [1, 1]} : vector<16x96xf32> to vector<16x32xf32>
    %424 = arith.negf %423 : vector<16x32xf32>
    %425 = math.exp %424 : vector<16x32xf32>
    %cst_272 = arith.constant 1.000000e+00 : f32
    %426 = vector.broadcast %cst_272 : f32 to vector<16x32xf32>
    %427 = arith.addf %426, %425 : vector<16x32xf32>
    %428 = arith.divf %426, %427 : vector<16x32xf32>
    %429 = vector.extract_strided_slice %422 {offsets = [0, 32], sizes = [16, 32], strides = [1, 1]} : vector<16x96xf32> to vector<16x32xf32>
    %430 = arith.negf %429 : vector<16x32xf32>
    %431 = math.exp %430 : vector<16x32xf32>
    %cst_273 = arith.constant 1.000000e+00 : f32
    %432 = vector.broadcast %cst_273 : f32 to vector<16x32xf32>
    %433 = arith.addf %432, %431 : vector<16x32xf32>
    %434 = arith.divf %432, %433 : vector<16x32xf32>
    %435 = vector.extract_strided_slice %422 {offsets = [0, 64], sizes = [16, 32], strides = [1, 1]} : vector<16x96xf32> to vector<16x32xf32>
    %436 = arith.mulf %428, %344 : vector<16x32xf32>
    %c0_274 = arith.constant 0 : index
    %c0_275 = arith.constant 0 : index
    %c0_276 = arith.constant 0 : index
    %437 = vector.load %arg8[%c0_274, %c0_275, %c0_276] : memref<3x32x32xf32, #tpu.memory_space<vmem>>, vector<1x32x32xf32>
    %438 = vector.shape_cast %437 : vector<1x32x32xf32> to vector<32x32xf32>
    %cst_277 = arith.constant dense<0.000000e+00> : vector<16x32xf32>
    %439 = tpu.matmul %436, %438, %cst_277 {dimension_numbers = #tpu.dot_dimension_numbers<[1], [0], [0], [1], [0, 0, 1, 1], [], []>} : vector<16x32xf32>, vector<32x32xf32>, vector<16x32xf32> -> vector<16x32xf32>
    %cst_278 = arith.constant dense<0.000000e+00> : vector<16x32xf32>
    %440 = tpu.matmul %351, %436, %cst_278 {dimension_numbers = #tpu.dot_dimension_numbers<[1], [0], [0], [1], [0, 0, 1, 1], [], []>} : vector<16x16xf32>, vector<16x32xf32>, vector<16x32xf32> -> vector<16x32xf32>
    %c1_279 = arith.constant 1 : index
    %c0_280 = arith.constant 0 : index
    %c0_281 = arith.constant 0 : index
    %441 = vector.load %arg8[%c1_279, %c0_280, %c0_281] : memref<3x32x32xf32, #tpu.memory_space<vmem>>, vector<1x32x32xf32>
    %442 = vector.shape_cast %441 : vector<1x32x32xf32> to vector<32x32xf32>
    %cst_282 = arith.constant dense<0.000000e+00> : vector<16x32xf32>
    %443 = tpu.matmul %440, %442, %cst_282 {dimension_numbers = #tpu.dot_dimension_numbers<[1], [0], [0], [1], [0, 0, 1, 1], [], []>} : vector<16x32xf32>, vector<32x32xf32>, vector<16x32xf32> -> vector<16x32xf32>
    %444 = arith.addf %439, %443 : vector<16x32xf32>
    %cst_283 = arith.constant dense<0.000000e+00> : vector<16x32xf32>
    %445 = tpu.matmul %352, %440, %cst_283 {dimension_numbers = #tpu.dot_dimension_numbers<[1], [0], [0], [1], [0, 0, 1, 1], [], []>} : vector<16x16xf32>, vector<16x32xf32>, vector<16x32xf32> -> vector<16x32xf32>
    %446 = arith.subf %445, %436 : vector<16x32xf32>
    %c2_284 = arith.constant 2 : index
    %c0_285 = arith.constant 0 : index
    %c0_286 = arith.constant 0 : index
    %447 = vector.load %arg8[%c2_284, %c0_285, %c0_286] : memref<3x32x32xf32, #tpu.memory_space<vmem>>, vector<1x32x32xf32>
    %448 = vector.shape_cast %447 : vector<1x32x32xf32> to vector<32x32xf32>
    %cst_287 = arith.constant dense<0.000000e+00> : vector<16x32xf32>
    %449 = tpu.matmul %446, %448, %cst_287 {dimension_numbers = #tpu.dot_dimension_numbers<[1], [0], [0], [1], [0, 0, 1, 1], [], []>} : vector<16x32xf32>, vector<32x32xf32>, vector<16x32xf32> -> vector<16x32xf32>
    %450 = arith.addf %444, %449 : vector<16x32xf32>
    %451 = arith.addf %435, %450 : vector<16x32xf32>
    %452 = math.tanh %451 : vector<16x32xf32>
    %453 = arith.mulf %434, %344 : vector<16x32xf32>
    %cst_288 = arith.constant 1.000000e+00 : f32
    %454 = vector.broadcast %cst_288 : f32 to vector<16x32xf32>
    %455 = arith.subf %454, %434 : vector<16x32xf32>
    %456 = arith.mulf %455, %452 : vector<16x32xf32>
    %457 = arith.addf %453, %456 : vector<16x32xf32>
    %c0_289 = arith.constant 0 : index
    %458 = arith.index_cast %c3_i32 : i32 to index
    %c0_290 = arith.constant 0 : index
    %c0_291 = arith.constant 0 : index
    %459 = vector.load %arg10[%c0_289, %458, %c0_290, %c0_291] : memref<1x8x16x32xf32, #tpu.memory_space<vmem>>, vector<1x1x16x32xf32>
    %460 = vector.shape_cast %459 : vector<1x1x16x32xf32> to vector<16x32xf32>
    %461 = vector.shape_cast %457 : vector<16x32xf32> to vector<1x1x16x32xf32>
    tpu.vector_store %arg10[%c0_289, %458, %c0_290, %c0_291], %461 {strides = array<i32>} : memref<1x8x16x32xf32, #tpu.memory_space<vmem>>, vector<1x1x16x32xf32>,
    %c4_i32 = arith.constant 4 : i32
    %c0_292 = arith.constant 0 : index
    %462 = arith.index_cast %c4_i32 : i32 to index
    %c0_293 = arith.constant 0 : index
    %c0_294 = arith.constant 0 : index
    %463 = vector.load %arg1[%c0_292, %462, %c0_293, %c0_294] : memref<1x8x16x16xf32, #tpu.memory_space<vmem>>, vector<1x1x16x16xf32>
    %464 = vector.shape_cast %463 : vector<1x1x16x16xf32> to vector<16x16xf32>
    %465 = arith.addf %464, %464 : vector<16x16xf32>
    %c0_295 = arith.constant 0 : index
    %466 = arith.index_cast %c4_i32 : i32 to index
    %c0_296 = arith.constant 0 : index
    %c0_297 = arith.constant 0 : index
    %467 = vector.load %arg2[%c0_295, %466, %c0_296, %c0_297] : memref<1x8x16x4xf32, #tpu.memory_space<vmem>>, vector<1x1x16x4xf32>
    %468 = vector.shape_cast %467 : vector<1x1x16x4xf32> to vector<16x4xf32>
    %469 = tpu.concatenate %468, %406 in 1 : vector<16x4xf32>, vector<16x32xf32> -> vector<16x36xf32>
    %c0_298 = arith.constant 0 : index
    %c0_299 = arith.constant 0 : index
    %c0_300 = arith.constant 0 : index
    %470 = vector.load %arg4[%c0_298, %c0_299, %c0_300] : memref<3x36x96xf32, #tpu.memory_space<vmem>>, vector<1x36x96xf32>
    %471 = vector.shape_cast %470 : vector<1x36x96xf32> to vector<36x96xf32>
    %cst_301 = arith.constant dense<0.000000e+00> : vector<16x96xf32>
    %472 = tpu.matmul %469, %471, %cst_301 {dimension_numbers = #tpu.dot_dimension_numbers<[1], [0], [0], [1], [0, 0, 1, 1], [], []>} : vector<16x36xf32>, vector<36x96xf32>, vector<16x96xf32> -> vector<16x96xf32>
    %cst_302 = arith.constant dense<0.000000e+00> : vector<16x36xf32>
    %473 = tpu.matmul %464, %469, %cst_302 {dimension_numbers = #tpu.dot_dimension_numbers<[1], [0], [0], [1], [0, 0, 1, 1], [], []>} : vector<16x16xf32>, vector<16x36xf32>, vector<16x36xf32> -> vector<16x36xf32>
    %c1_303 = arith.constant 1 : index
    %c0_304 = arith.constant 0 : index
    %c0_305 = arith.constant 0 : index
    %474 = vector.load %arg4[%c1_303, %c0_304, %c0_305] : memref<3x36x96xf32, #tpu.memory_space<vmem>>, vector<1x36x96xf32>
    %475 = vector.shape_cast %474 : vector<1x36x96xf32> to vector<36x96xf32>
    %cst_306 = arith.constant dense<0.000000e+00> : vector<16x96xf32>
    %476 = tpu.matmul %473, %475, %cst_306 {dimension_numbers = #tpu.dot_dimension_numbers<[1], [0], [0], [1], [0, 0, 1, 1], [], []>} : vector<16x36xf32>, vector<36x96xf32>, vector<16x96xf32> -> vector<16x96xf32>
    %477 = arith.addf %472, %476 : vector<16x96xf32>
    %cst_307 = arith.constant dense<0.000000e+00> : vector<16x36xf32>
    %478 = tpu.matmul %465, %473, %cst_307 {dimension_numbers = #tpu.dot_dimension_numbers<[1], [0], [0], [1], [0, 0, 1, 1], [], []>} : vector<16x16xf32>, vector<16x36xf32>, vector<16x36xf32> -> vector<16x36xf32>
    %479 = arith.subf %478, %469 : vector<16x36xf32>
    %c2_308 = arith.constant 2 : index
    %c0_309 = arith.constant 0 : index
    %c0_310 = arith.constant 0 : index
    %480 = vector.load %arg4[%c2_308, %c0_309, %c0_310] : memref<3x36x96xf32, #tpu.memory_space<vmem>>, vector<1x36x96xf32>
    %481 = vector.shape_cast %480 : vector<1x36x96xf32> to vector<36x96xf32>
    %cst_311 = arith.constant dense<0.000000e+00> : vector<16x96xf32>
    %482 = tpu.matmul %479, %481, %cst_311 {dimension_numbers = #tpu.dot_dimension_numbers<[1], [0], [0], [1], [0, 0, 1, 1], [], []>} : vector<16x36xf32>, vector<36x96xf32>, vector<16x96xf32> -> vector<16x96xf32>
    %483 = arith.addf %477, %482 : vector<16x96xf32>
    %484 = arith.addf %483, %2 : vector<16x96xf32>
    %485 = vector.extract_strided_slice %484 {offsets = [0, 0], sizes = [16, 32], strides = [1, 1]} : vector<16x96xf32> to vector<16x32xf32>
    %486 = arith.negf %485 : vector<16x32xf32>
    %487 = math.exp %486 : vector<16x32xf32>
    %cst_312 = arith.constant 1.000000e+00 : f32
    %488 = vector.broadcast %cst_312 : f32 to vector<16x32xf32>
    %489 = arith.addf %488, %487 : vector<16x32xf32>
    %490 = arith.divf %488, %489 : vector<16x32xf32>
    %491 = vector.extract_strided_slice %484 {offsets = [0, 32], sizes = [16, 32], strides = [1, 1]} : vector<16x96xf32> to vector<16x32xf32>
    %492 = arith.negf %491 : vector<16x32xf32>
    %493 = math.exp %492 : vector<16x32xf32>
    %cst_313 = arith.constant 1.000000e+00 : f32
    %494 = vector.broadcast %cst_313 : f32 to vector<16x32xf32>
    %495 = arith.addf %494, %493 : vector<16x32xf32>
    %496 = arith.divf %494, %495 : vector<16x32xf32>
    %497 = vector.extract_strided_slice %484 {offsets = [0, 64], sizes = [16, 32], strides = [1, 1]} : vector<16x96xf32> to vector<16x32xf32>
    %498 = arith.mulf %490, %406 : vector<16x32xf32>
    %c0_314 = arith.constant 0 : index
    %c0_315 = arith.constant 0 : index
    %c0_316 = arith.constant 0 : index
    %499 = vector.load %arg5[%c0_314, %c0_315, %c0_316] : memref<3x32x32xf32, #tpu.memory_space<vmem>>, vector<1x32x32xf32>
    %500 = vector.shape_cast %499 : vector<1x32x32xf32> to vector<32x32xf32>
    %cst_317 = arith.constant dense<0.000000e+00> : vector<16x32xf32>
    %501 = tpu.matmul %498, %500, %cst_317 {dimension_numbers = #tpu.dot_dimension_numbers<[1], [0], [0], [1], [0, 0, 1, 1], [], []>} : vector<16x32xf32>, vector<32x32xf32>, vector<16x32xf32> -> vector<16x32xf32>
    %cst_318 = arith.constant dense<0.000000e+00> : vector<16x32xf32>
    %502 = tpu.matmul %464, %498, %cst_318 {dimension_numbers = #tpu.dot_dimension_numbers<[1], [0], [0], [1], [0, 0, 1, 1], [], []>} : vector<16x16xf32>, vector<16x32xf32>, vector<16x32xf32> -> vector<16x32xf32>
    %c1_319 = arith.constant 1 : index
    %c0_320 = arith.constant 0 : index
    %c0_321 = arith.constant 0 : index
    %503 = vector.load %arg5[%c1_319, %c0_320, %c0_321] : memref<3x32x32xf32, #tpu.memory_space<vmem>>, vector<1x32x32xf32>
    %504 = vector.shape_cast %503 : vector<1x32x32xf32> to vector<32x32xf32>
    %cst_322 = arith.constant dense<0.000000e+00> : vector<16x32xf32>
    %505 = tpu.matmul %502, %504, %cst_322 {dimension_numbers = #tpu.dot_dimension_numbers<[1], [0], [0], [1], [0, 0, 1, 1], [], []>} : vector<16x32xf32>, vector<32x32xf32>, vector<16x32xf32> -> vector<16x32xf32>
    %506 = arith.addf %501, %505 : vector<16x32xf32>
    %cst_323 = arith.constant dense<0.000000e+00> : vector<16x32xf32>
    %507 = tpu.matmul %465, %502, %cst_323 {dimension_numbers = #tpu.dot_dimension_numbers<[1], [0], [0], [1], [0, 0, 1, 1], [], []>} : vector<16x16xf32>, vector<16x32xf32>, vector<16x32xf32> -> vector<16x32xf32>
    %508 = arith.subf %507, %498 : vector<16x32xf32>
    %c2_324 = arith.constant 2 : index
    %c0_325 = arith.constant 0 : index
    %c0_326 = arith.constant 0 : index
    %509 = vector.load %arg5[%c2_324, %c0_325, %c0_326] : memref<3x32x32xf32, #tpu.memory_space<vmem>>, vector<1x32x32xf32>
    %510 = vector.shape_cast %509 : vector<1x32x32xf32> to vector<32x32xf32>
    %cst_327 = arith.constant dense<0.000000e+00> : vector<16x32xf32>
    %511 = tpu.matmul %508, %510, %cst_327 {dimension_numbers = #tpu.dot_dimension_numbers<[1], [0], [0], [1], [0, 0, 1, 1], [], []>} : vector<16x32xf32>, vector<32x32xf32>, vector<16x32xf32> -> vector<16x32xf32>
    %512 = arith.addf %506, %511 : vector<16x32xf32>
    %513 = arith.addf %497, %512 : vector<16x32xf32>
    %514 = math.tanh %513 : vector<16x32xf32>
    %515 = arith.mulf %496, %406 : vector<16x32xf32>
    %cst_328 = arith.constant 1.000000e+00 : f32
    %516 = vector.broadcast %cst_328 : f32 to vector<16x32xf32>
    %517 = arith.subf %516, %496 : vector<16x32xf32>
    %518 = arith.mulf %517, %514 : vector<16x32xf32>
    %519 = arith.addf %515, %518 : vector<16x32xf32>
    %520 = tpu.concatenate %519, %457 in 1 : vector<16x32xf32>, vector<16x32xf32> -> vector<16x64xf32>
    %c0_329 = arith.constant 0 : index
    %c0_330 = arith.constant 0 : index
    %c0_331 = arith.constant 0 : index
    %521 = vector.load %arg7[%c0_329, %c0_330, %c0_331] : memref<3x64x96xf32, #tpu.memory_space<vmem>>, vector<1x64x96xf32>
    %522 = vector.shape_cast %521 : vector<1x64x96xf32> to vector<64x96xf32>
    %cst_332 = arith.constant dense<0.000000e+00> : vector<16x96xf32>
    %523 = tpu.matmul %520, %522, %cst_332 {dimension_numbers = #tpu.dot_dimension_numbers<[1], [0], [0], [1], [0, 0, 1, 1], [], []>} : vector<16x64xf32>, vector<64x96xf32>, vector<16x96xf32> -> vector<16x96xf32>
    %cst_333 = arith.constant dense<0.000000e+00> : vector<16x64xf32>
    %524 = tpu.matmul %464, %520, %cst_333 {dimension_numbers = #tpu.dot_dimension_numbers<[1], [0], [0], [1], [0, 0, 1, 1], [], []>} : vector<16x16xf32>, vector<16x64xf32>, vector<16x64xf32> -> vector<16x64xf32>
    %c1_334 = arith.constant 1 : index
    %c0_335 = arith.constant 0 : index
    %c0_336 = arith.constant 0 : index
    %525 = vector.load %arg7[%c1_334, %c0_335, %c0_336] : memref<3x64x96xf32, #tpu.memory_space<vmem>>, vector<1x64x96xf32>
    %526 = vector.shape_cast %525 : vector<1x64x96xf32> to vector<64x96xf32>
    %cst_337 = arith.constant dense<0.000000e+00> : vector<16x96xf32>
    %527 = tpu.matmul %524, %526, %cst_337 {dimension_numbers = #tpu.dot_dimension_numbers<[1], [0], [0], [1], [0, 0, 1, 1], [], []>} : vector<16x64xf32>, vector<64x96xf32>, vector<16x96xf32> -> vector<16x96xf32>
    %528 = arith.addf %523, %527 : vector<16x96xf32>
    %cst_338 = arith.constant dense<0.000000e+00> : vector<16x64xf32>
    %529 = tpu.matmul %465, %524, %cst_338 {dimension_numbers = #tpu.dot_dimension_numbers<[1], [0], [0], [1], [0, 0, 1, 1], [], []>} : vector<16x16xf32>, vector<16x64xf32>, vector<16x64xf32> -> vector<16x64xf32>
    %530 = arith.subf %529, %520 : vector<16x64xf32>
    %c2_339 = arith.constant 2 : index
    %c0_340 = arith.constant 0 : index
    %c0_341 = arith.constant 0 : index
    %531 = vector.load %arg7[%c2_339, %c0_340, %c0_341] : memref<3x64x96xf32, #tpu.memory_space<vmem>>, vector<1x64x96xf32>
    %532 = vector.shape_cast %531 : vector<1x64x96xf32> to vector<64x96xf32>
    %cst_342 = arith.constant dense<0.000000e+00> : vector<16x96xf32>
    %533 = tpu.matmul %530, %532, %cst_342 {dimension_numbers = #tpu.dot_dimension_numbers<[1], [0], [0], [1], [0, 0, 1, 1], [], []>} : vector<16x64xf32>, vector<64x96xf32>, vector<16x96xf32> -> vector<16x96xf32>
    %534 = arith.addf %528, %533 : vector<16x96xf32>
    %535 = arith.addf %534, %5 : vector<16x96xf32>
    %536 = vector.extract_strided_slice %535 {offsets = [0, 0], sizes = [16, 32], strides = [1, 1]} : vector<16x96xf32> to vector<16x32xf32>
    %537 = arith.negf %536 : vector<16x32xf32>
    %538 = math.exp %537 : vector<16x32xf32>
    %cst_343 = arith.constant 1.000000e+00 : f32
    %539 = vector.broadcast %cst_343 : f32 to vector<16x32xf32>
    %540 = arith.addf %539, %538 : vector<16x32xf32>
    %541 = arith.divf %539, %540 : vector<16x32xf32>
    %542 = vector.extract_strided_slice %535 {offsets = [0, 32], sizes = [16, 32], strides = [1, 1]} : vector<16x96xf32> to vector<16x32xf32>
    %543 = arith.negf %542 : vector<16x32xf32>
    %544 = math.exp %543 : vector<16x32xf32>
    %cst_344 = arith.constant 1.000000e+00 : f32
    %545 = vector.broadcast %cst_344 : f32 to vector<16x32xf32>
    %546 = arith.addf %545, %544 : vector<16x32xf32>
    %547 = arith.divf %545, %546 : vector<16x32xf32>
    %548 = vector.extract_strided_slice %535 {offsets = [0, 64], sizes = [16, 32], strides = [1, 1]} : vector<16x96xf32> to vector<16x32xf32>
    %549 = arith.mulf %541, %457 : vector<16x32xf32>
    %c0_345 = arith.constant 0 : index
    %c0_346 = arith.constant 0 : index
    %c0_347 = arith.constant 0 : index
    %550 = vector.load %arg8[%c0_345, %c0_346, %c0_347] : memref<3x32x32xf32, #tpu.memory_space<vmem>>, vector<1x32x32xf32>
    %551 = vector.shape_cast %550 : vector<1x32x32xf32> to vector<32x32xf32>
    %cst_348 = arith.constant dense<0.000000e+00> : vector<16x32xf32>
    %552 = tpu.matmul %549, %551, %cst_348 {dimension_numbers = #tpu.dot_dimension_numbers<[1], [0], [0], [1], [0, 0, 1, 1], [], []>} : vector<16x32xf32>, vector<32x32xf32>, vector<16x32xf32> -> vector<16x32xf32>
    %cst_349 = arith.constant dense<0.000000e+00> : vector<16x32xf32>
    %553 = tpu.matmul %464, %549, %cst_349 {dimension_numbers = #tpu.dot_dimension_numbers<[1], [0], [0], [1], [0, 0, 1, 1], [], []>} : vector<16x16xf32>, vector<16x32xf32>, vector<16x32xf32> -> vector<16x32xf32>
    %c1_350 = arith.constant 1 : index
    %c0_351 = arith.constant 0 : index
    %c0_352 = arith.constant 0 : index
    %554 = vector.load %arg8[%c1_350, %c0_351, %c0_352] : memref<3x32x32xf32, #tpu.memory_space<vmem>>, vector<1x32x32xf32>
    %555 = vector.shape_cast %554 : vector<1x32x32xf32> to vector<32x32xf32>
    %cst_353 = arith.constant dense<0.000000e+00> : vector<16x32xf32>
    %556 = tpu.matmul %553, %555, %cst_353 {dimension_numbers = #tpu.dot_dimension_numbers<[1], [0], [0], [1], [0, 0, 1, 1], [], []>} : vector<16x32xf32>, vector<32x32xf32>, vector<16x32xf32> -> vector<16x32xf32>
    %557 = arith.addf %552, %556 : vector<16x32xf32>
    %cst_354 = arith.constant dense<0.000000e+00> : vector<16x32xf32>
    %558 = tpu.matmul %465, %553, %cst_354 {dimension_numbers = #tpu.dot_dimension_numbers<[1], [0], [0], [1], [0, 0, 1, 1], [], []>} : vector<16x16xf32>, vector<16x32xf32>, vector<16x32xf32> -> vector<16x32xf32>
    %559 = arith.subf %558, %549 : vector<16x32xf32>
    %c2_355 = arith.constant 2 : index
    %c0_356 = arith.constant 0 : index
    %c0_357 = arith.constant 0 : index
    %560 = vector.load %arg8[%c2_355, %c0_356, %c0_357] : memref<3x32x32xf32, #tpu.memory_space<vmem>>, vector<1x32x32xf32>
    %561 = vector.shape_cast %560 : vector<1x32x32xf32> to vector<32x32xf32>
    %cst_358 = arith.constant dense<0.000000e+00> : vector<16x32xf32>
    %562 = tpu.matmul %559, %561, %cst_358 {dimension_numbers = #tpu.dot_dimension_numbers<[1], [0], [0], [1], [0, 0, 1, 1], [], []>} : vector<16x32xf32>, vector<32x32xf32>, vector<16x32xf32> -> vector<16x32xf32>
    %563 = arith.addf %557, %562 : vector<16x32xf32>
    %564 = arith.addf %548, %563 : vector<16x32xf32>
    %565 = math.tanh %564 : vector<16x32xf32>
    %566 = arith.mulf %547, %457 : vector<16x32xf32>
    %cst_359 = arith.constant 1.000000e+00 : f32
    %567 = vector.broadcast %cst_359 : f32 to vector<16x32xf32>
    %568 = arith.subf %567, %547 : vector<16x32xf32>
    %569 = arith.mulf %568, %565 : vector<16x32xf32>
    %570 = arith.addf %566, %569 : vector<16x32xf32>
    %c0_360 = arith.constant 0 : index
    %571 = arith.index_cast %c4_i32 : i32 to index
    %c0_361 = arith.constant 0 : index
    %c0_362 = arith.constant 0 : index
    %572 = vector.load %arg10[%c0_360, %571, %c0_361, %c0_362] : memref<1x8x16x32xf32, #tpu.memory_space<vmem>>, vector<1x1x16x32xf32>
    %573 = vector.shape_cast %572 : vector<1x1x16x32xf32> to vector<16x32xf32>
    %574 = vector.shape_cast %570 : vector<16x32xf32> to vector<1x1x16x32xf32>
    tpu.vector_store %arg10[%c0_360, %571, %c0_361, %c0_362], %574 {strides = array<i32>} : memref<1x8x16x32xf32, #tpu.memory_space<vmem>>, vector<1x1x16x32xf32>,
    %c5_i32 = arith.constant 5 : i32
    %c0_363 = arith.constant 0 : index
    %575 = arith.index_cast %c5_i32 : i32 to index
    %c0_364 = arith.constant 0 : index
    %c0_365 = arith.constant 0 : index
    %576 = vector.load %arg1[%c0_363, %575, %c0_364, %c0_365] : memref<1x8x16x16xf32, #tpu.memory_space<vmem>>, vector<1x1x16x16xf32>
    %577 = vector.shape_cast %576 : vector<1x1x16x16xf32> to vector<16x16xf32>
    %578 = arith.addf %577, %577 : vector<16x16xf32>
    %c0_366 = arith.constant 0 : index
    %579 = arith.index_cast %c5_i32 : i32 to index
    %c0_367 = arith.constant 0 : index
    %c0_368 = arith.constant 0 : index
    %580 = vector.load %arg2[%c0_366, %579, %c0_367, %c0_368] : memref<1x8x16x4xf32, #tpu.memory_space<vmem>>, vector<1x1x16x4xf32>
    %581 = vector.shape_cast %580 : vector<1x1x16x4xf32> to vector<16x4xf32>
    %582 = tpu.concatenate %581, %519 in 1 : vector<16x4xf32>, vector<16x32xf32> -> vector<16x36xf32>
    %c0_369 = arith.constant 0 : index
    %c0_370 = arith.constant 0 : index
    %c0_371 = arith.constant 0 : index
    %583 = vector.load %arg4[%c0_369, %c0_370, %c0_371] : memref<3x36x96xf32, #tpu.memory_space<vmem>>, vector<1x36x96xf32>
    %584 = vector.shape_cast %583 : vector<1x36x96xf32> to vector<36x96xf32>
    %cst_372 = arith.constant dense<0.000000e+00> : vector<16x96xf32>
    %585 = tpu.matmul %582, %584, %cst_372 {dimension_numbers = #tpu.dot_dimension_numbers<[1], [0], [0], [1], [0, 0, 1, 1], [], []>} : vector<16x36xf32>, vector<36x96xf32>, vector<16x96xf32> -> vector<16x96xf32>
    %cst_373 = arith.constant dense<0.000000e+00> : vector<16x36xf32>
    %586 = tpu.matmul %577, %582, %cst_373 {dimension_numbers = #tpu.dot_dimension_numbers<[1], [0], [0], [1], [0, 0, 1, 1], [], []>} : vector<16x16xf32>, vector<16x36xf32>, vector<16x36xf32> -> vector<16x36xf32>
    %c1_374 = arith.constant 1 : index
    %c0_375 = arith.constant 0 : index
    %c0_376 = arith.constant 0 : index
    %587 = vector.load %arg4[%c1_374, %c0_375, %c0_376] : memref<3x36x96xf32, #tpu.memory_space<vmem>>, vector<1x36x96xf32>
    %588 = vector.shape_cast %587 : vector<1x36x96xf32> to vector<36x96xf32>
    %cst_377 = arith.constant dense<0.000000e+00> : vector<16x96xf32>
    %589 = tpu.matmul %586, %588, %cst_377 {dimension_numbers = #tpu.dot_dimension_numbers<[1], [0], [0], [1], [0, 0, 1, 1], [], []>} : vector<16x36xf32>, vector<36x96xf32>, vector<16x96xf32> -> vector<16x96xf32>
    %590 = arith.addf %585, %589 : vector<16x96xf32>
    %cst_378 = arith.constant dense<0.000000e+00> : vector<16x36xf32>
    %591 = tpu.matmul %578, %586, %cst_378 {dimension_numbers = #tpu.dot_dimension_numbers<[1], [0], [0], [1], [0, 0, 1, 1], [], []>} : vector<16x16xf32>, vector<16x36xf32>, vector<16x36xf32> -> vector<16x36xf32>
    %592 = arith.subf %591, %582 : vector<16x36xf32>
    %c2_379 = arith.constant 2 : index
    %c0_380 = arith.constant 0 : index
    %c0_381 = arith.constant 0 : index
    %593 = vector.load %arg4[%c2_379, %c0_380, %c0_381] : memref<3x36x96xf32, #tpu.memory_space<vmem>>, vector<1x36x96xf32>
    %594 = vector.shape_cast %593 : vector<1x36x96xf32> to vector<36x96xf32>
    %cst_382 = arith.constant dense<0.000000e+00> : vector<16x96xf32>
    %595 = tpu.matmul %592, %594, %cst_382 {dimension_numbers = #tpu.dot_dimension_numbers<[1], [0], [0], [1], [0, 0, 1, 1], [], []>} : vector<16x36xf32>, vector<36x96xf32>, vector<16x96xf32> -> vector<16x96xf32>
    %596 = arith.addf %590, %595 : vector<16x96xf32>
    %597 = arith.addf %596, %2 : vector<16x96xf32>
    %598 = vector.extract_strided_slice %597 {offsets = [0, 0], sizes = [16, 32], strides = [1, 1]} : vector<16x96xf32> to vector<16x32xf32>
    %599 = arith.negf %598 : vector<16x32xf32>
    %600 = math.exp %599 : vector<16x32xf32>
    %cst_383 = arith.constant 1.000000e+00 : f32
    %601 = vector.broadcast %cst_383 : f32 to vector<16x32xf32>
    %602 = arith.addf %601, %600 : vector<16x32xf32>
    %603 = arith.divf %601, %602 : vector<16x32xf32>
    %604 = vector.extract_strided_slice %597 {offsets = [0, 32], sizes = [16, 32], strides = [1, 1]} : vector<16x96xf32> to vector<16x32xf32>
    %605 = arith.negf %604 : vector<16x32xf32>
    %606 = math.exp %605 : vector<16x32xf32>
    %cst_384 = arith.constant 1.000000e+00 : f32
    %607 = vector.broadcast %cst_384 : f32 to vector<16x32xf32>
    %608 = arith.addf %607, %606 : vector<16x32xf32>
    %609 = arith.divf %607, %608 : vector<16x32xf32>
    %610 = vector.extract_strided_slice %597 {offsets = [0, 64], sizes = [16, 32], strides = [1, 1]} : vector<16x96xf32> to vector<16x32xf32>
    %611 = arith.mulf %603, %519 : vector<16x32xf32>
    %c0_385 = arith.constant 0 : index
    %c0_386 = arith.constant 0 : index
    %c0_387 = arith.constant 0 : index
    %612 = vector.load %arg5[%c0_385, %c0_386, %c0_387] : memref<3x32x32xf32, #tpu.memory_space<vmem>>, vector<1x32x32xf32>
    %613 = vector.shape_cast %612 : vector<1x32x32xf32> to vector<32x32xf32>
    %cst_388 = arith.constant dense<0.000000e+00> : vector<16x32xf32>
    %614 = tpu.matmul %611, %613, %cst_388 {dimension_numbers = #tpu.dot_dimension_numbers<[1], [0], [0], [1], [0, 0, 1, 1], [], []>} : vector<16x32xf32>, vector<32x32xf32>, vector<16x32xf32> -> vector<16x32xf32>
    %cst_389 = arith.constant dense<0.000000e+00> : vector<16x32xf32>
    %615 = tpu.matmul %577, %611, %cst_389 {dimension_numbers = #tpu.dot_dimension_numbers<[1], [0], [0], [1], [0, 0, 1, 1], [], []>} : vector<16x16xf32>, vector<16x32xf32>, vector<16x32xf32> -> vector<16x32xf32>
    %c1_390 = arith.constant 1 : index
    %c0_391 = arith.constant 0 : index
    %c0_392 = arith.constant 0 : index
    %616 = vector.load %arg5[%c1_390, %c0_391, %c0_392] : memref<3x32x32xf32, #tpu.memory_space<vmem>>, vector<1x32x32xf32>
    %617 = vector.shape_cast %616 : vector<1x32x32xf32> to vector<32x32xf32>
    %cst_393 = arith.constant dense<0.000000e+00> : vector<16x32xf32>
    %618 = tpu.matmul %615, %617, %cst_393 {dimension_numbers = #tpu.dot_dimension_numbers<[1], [0], [0], [1], [0, 0, 1, 1], [], []>} : vector<16x32xf32>, vector<32x32xf32>, vector<16x32xf32> -> vector<16x32xf32>
    %619 = arith.addf %614, %618 : vector<16x32xf32>
    %cst_394 = arith.constant dense<0.000000e+00> : vector<16x32xf32>
    %620 = tpu.matmul %578, %615, %cst_394 {dimension_numbers = #tpu.dot_dimension_numbers<[1], [0], [0], [1], [0, 0, 1, 1], [], []>} : vector<16x16xf32>, vector<16x32xf32>, vector<16x32xf32> -> vector<16x32xf32>
    %621 = arith.subf %620, %611 : vector<16x32xf32>
    %c2_395 = arith.constant 2 : index
    %c0_396 = arith.constant 0 : index
    %c0_397 = arith.constant 0 : index
    %622 = vector.load %arg5[%c2_395, %c0_396, %c0_397] : memref<3x32x32xf32, #tpu.memory_space<vmem>>, vector<1x32x32xf32>
    %623 = vector.shape_cast %622 : vector<1x32x32xf32> to vector<32x32xf32>
    %cst_398 = arith.constant dense<0.000000e+00> : vector<16x32xf32>
    %624 = tpu.matmul %621, %623, %cst_398 {dimension_numbers = #tpu.dot_dimension_numbers<[1], [0], [0], [1], [0, 0, 1, 1], [], []>} : vector<16x32xf32>, vector<32x32xf32>, vector<16x32xf32> -> vector<16x32xf32>
    %625 = arith.addf %619, %624 : vector<16x32xf32>
    %626 = arith.addf %610, %625 : vector<16x32xf32>
    %627 = math.tanh %626 : vector<16x32xf32>
    %628 = arith.mulf %609, %519 : vector<16x32xf32>
    %cst_399 = arith.constant 1.000000e+00 : f32
    %629 = vector.broadcast %cst_399 : f32 to vector<16x32xf32>
    %630 = arith.subf %629, %609 : vector<16x32xf32>
    %631 = arith.mulf %630, %627 : vector<16x32xf32>
    %632 = arith.addf %628, %631 : vector<16x32xf32>
    %633 = tpu.concatenate %632, %570 in 1 : vector<16x32xf32>, vector<16x32xf32> -> vector<16x64xf32>
    %c0_400 = arith.constant 0 : index
    %c0_401 = arith.constant 0 : index
    %c0_402 = arith.constant 0 : index
    %634 = vector.load %arg7[%c0_400, %c0_401, %c0_402] : memref<3x64x96xf32, #tpu.memory_space<vmem>>, vector<1x64x96xf32>
    %635 = vector.shape_cast %634 : vector<1x64x96xf32> to vector<64x96xf32>
    %cst_403 = arith.constant dense<0.000000e+00> : vector<16x96xf32>
    %636 = tpu.matmul %633, %635, %cst_403 {dimension_numbers = #tpu.dot_dimension_numbers<[1], [0], [0], [1], [0, 0, 1, 1], [], []>} : vector<16x64xf32>, vector<64x96xf32>, vector<16x96xf32> -> vector<16x96xf32>
    %cst_404 = arith.constant dense<0.000000e+00> : vector<16x64xf32>
    %637 = tpu.matmul %577, %633, %cst_404 {dimension_numbers = #tpu.dot_dimension_numbers<[1], [0], [0], [1], [0, 0, 1, 1], [], []>} : vector<16x16xf32>, vector<16x64xf32>, vector<16x64xf32> -> vector<16x64xf32>
    %c1_405 = arith.constant 1 : index
    %c0_406 = arith.constant 0 : index
    %c0_407 = arith.constant 0 : index
    %638 = vector.load %arg7[%c1_405, %c0_406, %c0_407] : memref<3x64x96xf32, #tpu.memory_space<vmem>>, vector<1x64x96xf32>
    %639 = vector.shape_cast %638 : vector<1x64x96xf32> to vector<64x96xf32>
    %cst_408 = arith.constant dense<0.000000e+00> : vector<16x96xf32>
    %640 = tpu.matmul %637, %639, %cst_408 {dimension_numbers = #tpu.dot_dimension_numbers<[1], [0], [0], [1], [0, 0, 1, 1], [], []>} : vector<16x64xf32>, vector<64x96xf32>, vector<16x96xf32> -> vector<16x96xf32>
    %641 = arith.addf %636, %640 : vector<16x96xf32>
    %cst_409 = arith.constant dense<0.000000e+00> : vector<16x64xf32>
    %642 = tpu.matmul %578, %637, %cst_409 {dimension_numbers = #tpu.dot_dimension_numbers<[1], [0], [0], [1], [0, 0, 1, 1], [], []>} : vector<16x16xf32>, vector<16x64xf32>, vector<16x64xf32> -> vector<16x64xf32>
    %643 = arith.subf %642, %633 : vector<16x64xf32>
    %c2_410 = arith.constant 2 : index
    %c0_411 = arith.constant 0 : index
    %c0_412 = arith.constant 0 : index
    %644 = vector.load %arg7[%c2_410, %c0_411, %c0_412] : memref<3x64x96xf32, #tpu.memory_space<vmem>>, vector<1x64x96xf32>
    %645 = vector.shape_cast %644 : vector<1x64x96xf32> to vector<64x96xf32>
    %cst_413 = arith.constant dense<0.000000e+00> : vector<16x96xf32>
    %646 = tpu.matmul %643, %645, %cst_413 {dimension_numbers = #tpu.dot_dimension_numbers<[1], [0], [0], [1], [0, 0, 1, 1], [], []>} : vector<16x64xf32>, vector<64x96xf32>, vector<16x96xf32> -> vector<16x96xf32>
    %647 = arith.addf %641, %646 : vector<16x96xf32>
    %648 = arith.addf %647, %5 : vector<16x96xf32>
    %649 = vector.extract_strided_slice %648 {offsets = [0, 0], sizes = [16, 32], strides = [1, 1]} : vector<16x96xf32> to vector<16x32xf32>
    %650 = arith.negf %649 : vector<16x32xf32>
    %651 = math.exp %650 : vector<16x32xf32>
    %cst_414 = arith.constant 1.000000e+00 : f32
    %652 = vector.broadcast %cst_414 : f32 to vector<16x32xf32>
    %653 = arith.addf %652, %651 : vector<16x32xf32>
    %654 = arith.divf %652, %653 : vector<16x32xf32>
    %655 = vector.extract_strided_slice %648 {offsets = [0, 32], sizes = [16, 32], strides = [1, 1]} : vector<16x96xf32> to vector<16x32xf32>
    %656 = arith.negf %655 : vector<16x32xf32>
    %657 = math.exp %656 : vector<16x32xf32>
    %cst_415 = arith.constant 1.000000e+00 : f32
    %658 = vector.broadcast %cst_415 : f32 to vector<16x32xf32>
    %659 = arith.addf %658, %657 : vector<16x32xf32>
    %660 = arith.divf %658, %659 : vector<16x32xf32>
    %661 = vector.extract_strided_slice %648 {offsets = [0, 64], sizes = [16, 32], strides = [1, 1]} : vector<16x96xf32> to vector<16x32xf32>
    %662 = arith.mulf %654, %570 : vector<16x32xf32>
    %c0_416 = arith.constant 0 : index
    %c0_417 = arith.constant 0 : index
    %c0_418 = arith.constant 0 : index
    %663 = vector.load %arg8[%c0_416, %c0_417, %c0_418] : memref<3x32x32xf32, #tpu.memory_space<vmem>>, vector<1x32x32xf32>
    %664 = vector.shape_cast %663 : vector<1x32x32xf32> to vector<32x32xf32>
    %cst_419 = arith.constant dense<0.000000e+00> : vector<16x32xf32>
    %665 = tpu.matmul %662, %664, %cst_419 {dimension_numbers = #tpu.dot_dimension_numbers<[1], [0], [0], [1], [0, 0, 1, 1], [], []>} : vector<16x32xf32>, vector<32x32xf32>, vector<16x32xf32> -> vector<16x32xf32>
    %cst_420 = arith.constant dense<0.000000e+00> : vector<16x32xf32>
    %666 = tpu.matmul %577, %662, %cst_420 {dimension_numbers = #tpu.dot_dimension_numbers<[1], [0], [0], [1], [0, 0, 1, 1], [], []>} : vector<16x16xf32>, vector<16x32xf32>, vector<16x32xf32> -> vector<16x32xf32>
    %c1_421 = arith.constant 1 : index
    %c0_422 = arith.constant 0 : index
    %c0_423 = arith.constant 0 : index
    %667 = vector.load %arg8[%c1_421, %c0_422, %c0_423] : memref<3x32x32xf32, #tpu.memory_space<vmem>>, vector<1x32x32xf32>
    %668 = vector.shape_cast %667 : vector<1x32x32xf32> to vector<32x32xf32>
    %cst_424 = arith.constant dense<0.000000e+00> : vector<16x32xf32>
    %669 = tpu.matmul %666, %668, %cst_424 {dimension_numbers = #tpu.dot_dimension_numbers<[1], [0], [0], [1], [0, 0, 1, 1], [], []>} : vector<16x32xf32>, vector<32x32xf32>, vector<16x32xf32> -> vector<16x32xf32>
    %670 = arith.addf %665, %669 : vector<16x32xf32>
    %cst_425 = arith.constant dense<0.000000e+00> : vector<16x32xf32>
    %671 = tpu.matmul %578, %666, %cst_425 {dimension_numbers = #tpu.dot_dimension_numbers<[1], [0], [0], [1], [0, 0, 1, 1], [], []>} : vector<16x16xf32>, vector<16x32xf32>, vector<16x32xf32> -> vector<16x32xf32>
    %672 = arith.subf %671, %662 : vector<16x32xf32>
    %c2_426 = arith.constant 2 : index
    %c0_427 = arith.constant 0 : index
    %c0_428 = arith.constant 0 : index
    %673 = vector.load %arg8[%c2_426, %c0_427, %c0_428] : memref<3x32x32xf32, #tpu.memory_space<vmem>>, vector<1x32x32xf32>
    %674 = vector.shape_cast %673 : vector<1x32x32xf32> to vector<32x32xf32>
    %cst_429 = arith.constant dense<0.000000e+00> : vector<16x32xf32>
    %675 = tpu.matmul %672, %674, %cst_429 {dimension_numbers = #tpu.dot_dimension_numbers<[1], [0], [0], [1], [0, 0, 1, 1], [], []>} : vector<16x32xf32>, vector<32x32xf32>, vector<16x32xf32> -> vector<16x32xf32>
    %676 = arith.addf %670, %675 : vector<16x32xf32>
    %677 = arith.addf %661, %676 : vector<16x32xf32>
    %678 = math.tanh %677 : vector<16x32xf32>
    %679 = arith.mulf %660, %570 : vector<16x32xf32>
    %cst_430 = arith.constant 1.000000e+00 : f32
    %680 = vector.broadcast %cst_430 : f32 to vector<16x32xf32>
    %681 = arith.subf %680, %660 : vector<16x32xf32>
    %682 = arith.mulf %681, %678 : vector<16x32xf32>
    %683 = arith.addf %679, %682 : vector<16x32xf32>
    %c0_431 = arith.constant 0 : index
    %684 = arith.index_cast %c5_i32 : i32 to index
    %c0_432 = arith.constant 0 : index
    %c0_433 = arith.constant 0 : index
    %685 = vector.load %arg10[%c0_431, %684, %c0_432, %c0_433] : memref<1x8x16x32xf32, #tpu.memory_space<vmem>>, vector<1x1x16x32xf32>
    %686 = vector.shape_cast %685 : vector<1x1x16x32xf32> to vector<16x32xf32>
    %687 = vector.shape_cast %683 : vector<16x32xf32> to vector<1x1x16x32xf32>
    tpu.vector_store %arg10[%c0_431, %684, %c0_432, %c0_433], %687 {strides = array<i32>} : memref<1x8x16x32xf32, #tpu.memory_space<vmem>>, vector<1x1x16x32xf32>,
    %c6_i32 = arith.constant 6 : i32
    %c0_434 = arith.constant 0 : index
    %688 = arith.index_cast %c6_i32 : i32 to index
    %c0_435 = arith.constant 0 : index
    %c0_436 = arith.constant 0 : index
    %689 = vector.load %arg1[%c0_434, %688, %c0_435, %c0_436] : memref<1x8x16x16xf32, #tpu.memory_space<vmem>>, vector<1x1x16x16xf32>
    %690 = vector.shape_cast %689 : vector<1x1x16x16xf32> to vector<16x16xf32>
    %691 = arith.addf %690, %690 : vector<16x16xf32>
    %c0_437 = arith.constant 0 : index
    %692 = arith.index_cast %c6_i32 : i32 to index
    %c0_438 = arith.constant 0 : index
    %c0_439 = arith.constant 0 : index
    %693 = vector.load %arg2[%c0_437, %692, %c0_438, %c0_439] : memref<1x8x16x4xf32, #tpu.memory_space<vmem>>, vector<1x1x16x4xf32>
    %694 = vector.shape_cast %693 : vector<1x1x16x4xf32> to vector<16x4xf32>
    %695 = tpu.concatenate %694, %632 in 1 : vector<16x4xf32>, vector<16x32xf32> -> vector<16x36xf32>
    %c0_440 = arith.constant 0 : index
    %c0_441 = arith.constant 0 : index
    %c0_442 = arith.constant 0 : index
    %696 = vector.load %arg4[%c0_440, %c0_441, %c0_442] : memref<3x36x96xf32, #tpu.memory_space<vmem>>, vector<1x36x96xf32>
    %697 = vector.shape_cast %696 : vector<1x36x96xf32> to vector<36x96xf32>
    %cst_443 = arith.constant dense<0.000000e+00> : vector<16x96xf32>
    %698 = tpu.matmul %695, %697, %cst_443 {dimension_numbers = #tpu.dot_dimension_numbers<[1], [0], [0], [1], [0, 0, 1, 1], [], []>} : vector<16x36xf32>, vector<36x96xf32>, vector<16x96xf32> -> vector<16x96xf32>
    %cst_444 = arith.constant dense<0.000000e+00> : vector<16x36xf32>
    %699 = tpu.matmul %690, %695, %cst_444 {dimension_numbers = #tpu.dot_dimension_numbers<[1], [0], [0], [1], [0, 0, 1, 1], [], []>} : vector<16x16xf32>, vector<16x36xf32>, vector<16x36xf32> -> vector<16x36xf32>
    %c1_445 = arith.constant 1 : index
    %c0_446 = arith.constant 0 : index
    %c0_447 = arith.constant 0 : index
    %700 = vector.load %arg4[%c1_445, %c0_446, %c0_447] : memref<3x36x96xf32, #tpu.memory_space<vmem>>, vector<1x36x96xf32>
    %701 = vector.shape_cast %700 : vector<1x36x96xf32> to vector<36x96xf32>
    %cst_448 = arith.constant dense<0.000000e+00> : vector<16x96xf32>
    %702 = tpu.matmul %699, %701, %cst_448 {dimension_numbers = #tpu.dot_dimension_numbers<[1], [0], [0], [1], [0, 0, 1, 1], [], []>} : vector<16x36xf32>, vector<36x96xf32>, vector<16x96xf32> -> vector<16x96xf32>
    %703 = arith.addf %698, %702 : vector<16x96xf32>
    %cst_449 = arith.constant dense<0.000000e+00> : vector<16x36xf32>
    %704 = tpu.matmul %691, %699, %cst_449 {dimension_numbers = #tpu.dot_dimension_numbers<[1], [0], [0], [1], [0, 0, 1, 1], [], []>} : vector<16x16xf32>, vector<16x36xf32>, vector<16x36xf32> -> vector<16x36xf32>
    %705 = arith.subf %704, %695 : vector<16x36xf32>
    %c2_450 = arith.constant 2 : index
    %c0_451 = arith.constant 0 : index
    %c0_452 = arith.constant 0 : index
    %706 = vector.load %arg4[%c2_450, %c0_451, %c0_452] : memref<3x36x96xf32, #tpu.memory_space<vmem>>, vector<1x36x96xf32>
    %707 = vector.shape_cast %706 : vector<1x36x96xf32> to vector<36x96xf32>
    %cst_453 = arith.constant dense<0.000000e+00> : vector<16x96xf32>
    %708 = tpu.matmul %705, %707, %cst_453 {dimension_numbers = #tpu.dot_dimension_numbers<[1], [0], [0], [1], [0, 0, 1, 1], [], []>} : vector<16x36xf32>, vector<36x96xf32>, vector<16x96xf32> -> vector<16x96xf32>
    %709 = arith.addf %703, %708 : vector<16x96xf32>
    %710 = arith.addf %709, %2 : vector<16x96xf32>
    %711 = vector.extract_strided_slice %710 {offsets = [0, 0], sizes = [16, 32], strides = [1, 1]} : vector<16x96xf32> to vector<16x32xf32>
    %712 = arith.negf %711 : vector<16x32xf32>
    %713 = math.exp %712 : vector<16x32xf32>
    %cst_454 = arith.constant 1.000000e+00 : f32
    %714 = vector.broadcast %cst_454 : f32 to vector<16x32xf32>
    %715 = arith.addf %714, %713 : vector<16x32xf32>
    %716 = arith.divf %714, %715 : vector<16x32xf32>
    %717 = vector.extract_strided_slice %710 {offsets = [0, 32], sizes = [16, 32], strides = [1, 1]} : vector<16x96xf32> to vector<16x32xf32>
    %718 = arith.negf %717 : vector<16x32xf32>
    %719 = math.exp %718 : vector<16x32xf32>
    %cst_455 = arith.constant 1.000000e+00 : f32
    %720 = vector.broadcast %cst_455 : f32 to vector<16x32xf32>
    %721 = arith.addf %720, %719 : vector<16x32xf32>
    %722 = arith.divf %720, %721 : vector<16x32xf32>
    %723 = vector.extract_strided_slice %710 {offsets = [0, 64], sizes = [16, 32], strides = [1, 1]} : vector<16x96xf32> to vector<16x32xf32>
    %724 = arith.mulf %716, %632 : vector<16x32xf32>
    %c0_456 = arith.constant 0 : index
    %c0_457 = arith.constant 0 : index
    %c0_458 = arith.constant 0 : index
    %725 = vector.load %arg5[%c0_456, %c0_457, %c0_458] : memref<3x32x32xf32, #tpu.memory_space<vmem>>, vector<1x32x32xf32>
    %726 = vector.shape_cast %725 : vector<1x32x32xf32> to vector<32x32xf32>
    %cst_459 = arith.constant dense<0.000000e+00> : vector<16x32xf32>
    %727 = tpu.matmul %724, %726, %cst_459 {dimension_numbers = #tpu.dot_dimension_numbers<[1], [0], [0], [1], [0, 0, 1, 1], [], []>} : vector<16x32xf32>, vector<32x32xf32>, vector<16x32xf32> -> vector<16x32xf32>
    %cst_460 = arith.constant dense<0.000000e+00> : vector<16x32xf32>
    %728 = tpu.matmul %690, %724, %cst_460 {dimension_numbers = #tpu.dot_dimension_numbers<[1], [0], [0], [1], [0, 0, 1, 1], [], []>} : vector<16x16xf32>, vector<16x32xf32>, vector<16x32xf32> -> vector<16x32xf32>
    %c1_461 = arith.constant 1 : index
    %c0_462 = arith.constant 0 : index
    %c0_463 = arith.constant 0 : index
    %729 = vector.load %arg5[%c1_461, %c0_462, %c0_463] : memref<3x32x32xf32, #tpu.memory_space<vmem>>, vector<1x32x32xf32>
    %730 = vector.shape_cast %729 : vector<1x32x32xf32> to vector<32x32xf32>
    %cst_464 = arith.constant dense<0.000000e+00> : vector<16x32xf32>
    %731 = tpu.matmul %728, %730, %cst_464 {dimension_numbers = #tpu.dot_dimension_numbers<[1], [0], [0], [1], [0, 0, 1, 1], [], []>} : vector<16x32xf32>, vector<32x32xf32>, vector<16x32xf32> -> vector<16x32xf32>
    %732 = arith.addf %727, %731 : vector<16x32xf32>
    %cst_465 = arith.constant dense<0.000000e+00> : vector<16x32xf32>
    %733 = tpu.matmul %691, %728, %cst_465 {dimension_numbers = #tpu.dot_dimension_numbers<[1], [0], [0], [1], [0, 0, 1, 1], [], []>} : vector<16x16xf32>, vector<16x32xf32>, vector<16x32xf32> -> vector<16x32xf32>
    %734 = arith.subf %733, %724 : vector<16x32xf32>
    %c2_466 = arith.constant 2 : index
    %c0_467 = arith.constant 0 : index
    %c0_468 = arith.constant 0 : index
    %735 = vector.load %arg5[%c2_466, %c0_467, %c0_468] : memref<3x32x32xf32, #tpu.memory_space<vmem>>, vector<1x32x32xf32>
    %736 = vector.shape_cast %735 : vector<1x32x32xf32> to vector<32x32xf32>
    %cst_469 = arith.constant dense<0.000000e+00> : vector<16x32xf32>
    %737 = tpu.matmul %734, %736, %cst_469 {dimension_numbers = #tpu.dot_dimension_numbers<[1], [0], [0], [1], [0, 0, 1, 1], [], []>} : vector<16x32xf32>, vector<32x32xf32>, vector<16x32xf32> -> vector<16x32xf32>
    %738 = arith.addf %732, %737 : vector<16x32xf32>
    %739 = arith.addf %723, %738 : vector<16x32xf32>
    %740 = math.tanh %739 : vector<16x32xf32>
    %741 = arith.mulf %722, %632 : vector<16x32xf32>
    %cst_470 = arith.constant 1.000000e+00 : f32
    %742 = vector.broadcast %cst_470 : f32 to vector<16x32xf32>
    %743 = arith.subf %742, %722 : vector<16x32xf32>
    %744 = arith.mulf %743, %740 : vector<16x32xf32>
    %745 = arith.addf %741, %744 : vector<16x32xf32>
    %746 = tpu.concatenate %745, %683 in 1 : vector<16x32xf32>, vector<16x32xf32> -> vector<16x64xf32>
    %c0_471 = arith.constant 0 : index
    %c0_472 = arith.constant 0 : index
    %c0_473 = arith.constant 0 : index
    %747 = vector.load %arg7[%c0_471, %c0_472, %c0_473] : memref<3x64x96xf32, #tpu.memory_space<vmem>>, vector<1x64x96xf32>
    %748 = vector.shape_cast %747 : vector<1x64x96xf32> to vector<64x96xf32>
    %cst_474 = arith.constant dense<0.000000e+00> : vector<16x96xf32>
    %749 = tpu.matmul %746, %748, %cst_474 {dimension_numbers = #tpu.dot_dimension_numbers<[1], [0], [0], [1], [0, 0, 1, 1], [], []>} : vector<16x64xf32>, vector<64x96xf32>, vector<16x96xf32> -> vector<16x96xf32>
    %cst_475 = arith.constant dense<0.000000e+00> : vector<16x64xf32>
    %750 = tpu.matmul %690, %746, %cst_475 {dimension_numbers = #tpu.dot_dimension_numbers<[1], [0], [0], [1], [0, 0, 1, 1], [], []>} : vector<16x16xf32>, vector<16x64xf32>, vector<16x64xf32> -> vector<16x64xf32>
    %c1_476 = arith.constant 1 : index
    %c0_477 = arith.constant 0 : index
    %c0_478 = arith.constant 0 : index
    %751 = vector.load %arg7[%c1_476, %c0_477, %c0_478] : memref<3x64x96xf32, #tpu.memory_space<vmem>>, vector<1x64x96xf32>
    %752 = vector.shape_cast %751 : vector<1x64x96xf32> to vector<64x96xf32>
    %cst_479 = arith.constant dense<0.000000e+00> : vector<16x96xf32>
    %753 = tpu.matmul %750, %752, %cst_479 {dimension_numbers = #tpu.dot_dimension_numbers<[1], [0], [0], [1], [0, 0, 1, 1], [], []>} : vector<16x64xf32>, vector<64x96xf32>, vector<16x96xf32> -> vector<16x96xf32>
    %754 = arith.addf %749, %753 : vector<16x96xf32>
    %cst_480 = arith.constant dense<0.000000e+00> : vector<16x64xf32>
    %755 = tpu.matmul %691, %750, %cst_480 {dimension_numbers = #tpu.dot_dimension_numbers<[1], [0], [0], [1], [0, 0, 1, 1], [], []>} : vector<16x16xf32>, vector<16x64xf32>, vector<16x64xf32> -> vector<16x64xf32>
    %756 = arith.subf %755, %746 : vector<16x64xf32>
    %c2_481 = arith.constant 2 : index
    %c0_482 = arith.constant 0 : index
    %c0_483 = arith.constant 0 : index
    %757 = vector.load %arg7[%c2_481, %c0_482, %c0_483] : memref<3x64x96xf32, #tpu.memory_space<vmem>>, vector<1x64x96xf32>
    %758 = vector.shape_cast %757 : vector<1x64x96xf32> to vector<64x96xf32>
    %cst_484 = arith.constant dense<0.000000e+00> : vector<16x96xf32>
    %759 = tpu.matmul %756, %758, %cst_484 {dimension_numbers = #tpu.dot_dimension_numbers<[1], [0], [0], [1], [0, 0, 1, 1], [], []>} : vector<16x64xf32>, vector<64x96xf32>, vector<16x96xf32> -> vector<16x96xf32>
    %760 = arith.addf %754, %759 : vector<16x96xf32>
    %761 = arith.addf %760, %5 : vector<16x96xf32>
    %762 = vector.extract_strided_slice %761 {offsets = [0, 0], sizes = [16, 32], strides = [1, 1]} : vector<16x96xf32> to vector<16x32xf32>
    %763 = arith.negf %762 : vector<16x32xf32>
    %764 = math.exp %763 : vector<16x32xf32>
    %cst_485 = arith.constant 1.000000e+00 : f32
    %765 = vector.broadcast %cst_485 : f32 to vector<16x32xf32>
    %766 = arith.addf %765, %764 : vector<16x32xf32>
    %767 = arith.divf %765, %766 : vector<16x32xf32>
    %768 = vector.extract_strided_slice %761 {offsets = [0, 32], sizes = [16, 32], strides = [1, 1]} : vector<16x96xf32> to vector<16x32xf32>
    %769 = arith.negf %768 : vector<16x32xf32>
    %770 = math.exp %769 : vector<16x32xf32>
    %cst_486 = arith.constant 1.000000e+00 : f32
    %771 = vector.broadcast %cst_486 : f32 to vector<16x32xf32>
    %772 = arith.addf %771, %770 : vector<16x32xf32>
    %773 = arith.divf %771, %772 : vector<16x32xf32>
    %774 = vector.extract_strided_slice %761 {offsets = [0, 64], sizes = [16, 32], strides = [1, 1]} : vector<16x96xf32> to vector<16x32xf32>
    %775 = arith.mulf %767, %683 : vector<16x32xf32>
    %c0_487 = arith.constant 0 : index
    %c0_488 = arith.constant 0 : index
    %c0_489 = arith.constant 0 : index
    %776 = vector.load %arg8[%c0_487, %c0_488, %c0_489] : memref<3x32x32xf32, #tpu.memory_space<vmem>>, vector<1x32x32xf32>
    %777 = vector.shape_cast %776 : vector<1x32x32xf32> to vector<32x32xf32>
    %cst_490 = arith.constant dense<0.000000e+00> : vector<16x32xf32>
    %778 = tpu.matmul %775, %777, %cst_490 {dimension_numbers = #tpu.dot_dimension_numbers<[1], [0], [0], [1], [0, 0, 1, 1], [], []>} : vector<16x32xf32>, vector<32x32xf32>, vector<16x32xf32> -> vector<16x32xf32>
    %cst_491 = arith.constant dense<0.000000e+00> : vector<16x32xf32>
    %779 = tpu.matmul %690, %775, %cst_491 {dimension_numbers = #tpu.dot_dimension_numbers<[1], [0], [0], [1], [0, 0, 1, 1], [], []>} : vector<16x16xf32>, vector<16x32xf32>, vector<16x32xf32> -> vector<16x32xf32>
    %c1_492 = arith.constant 1 : index
    %c0_493 = arith.constant 0 : index
    %c0_494 = arith.constant 0 : index
    %780 = vector.load %arg8[%c1_492, %c0_493, %c0_494] : memref<3x32x32xf32, #tpu.memory_space<vmem>>, vector<1x32x32xf32>
    %781 = vector.shape_cast %780 : vector<1x32x32xf32> to vector<32x32xf32>
    %cst_495 = arith.constant dense<0.000000e+00> : vector<16x32xf32>
    %782 = tpu.matmul %779, %781, %cst_495 {dimension_numbers = #tpu.dot_dimension_numbers<[1], [0], [0], [1], [0, 0, 1, 1], [], []>} : vector<16x32xf32>, vector<32x32xf32>, vector<16x32xf32> -> vector<16x32xf32>
    %783 = arith.addf %778, %782 : vector<16x32xf32>
    %cst_496 = arith.constant dense<0.000000e+00> : vector<16x32xf32>
    %784 = tpu.matmul %691, %779, %cst_496 {dimension_numbers = #tpu.dot_dimension_numbers<[1], [0], [0], [1], [0, 0, 1, 1], [], []>} : vector<16x16xf32>, vector<16x32xf32>, vector<16x32xf32> -> vector<16x32xf32>
    %785 = arith.subf %784, %775 : vector<16x32xf32>
    %c2_497 = arith.constant 2 : index
    %c0_498 = arith.constant 0 : index
    %c0_499 = arith.constant 0 : index
    %786 = vector.load %arg8[%c2_497, %c0_498, %c0_499] : memref<3x32x32xf32, #tpu.memory_space<vmem>>, vector<1x32x32xf32>
    %787 = vector.shape_cast %786 : vector<1x32x32xf32> to vector<32x32xf32>
    %cst_500 = arith.constant dense<0.000000e+00> : vector<16x32xf32>
    %788 = tpu.matmul %785, %787, %cst_500 {dimension_numbers = #tpu.dot_dimension_numbers<[1], [0], [0], [1], [0, 0, 1, 1], [], []>} : vector<16x32xf32>, vector<32x32xf32>, vector<16x32xf32> -> vector<16x32xf32>
    %789 = arith.addf %783, %788 : vector<16x32xf32>
    %790 = arith.addf %774, %789 : vector<16x32xf32>
    %791 = math.tanh %790 : vector<16x32xf32>
    %792 = arith.mulf %773, %683 : vector<16x32xf32>
    %cst_501 = arith.constant 1.000000e+00 : f32
    %793 = vector.broadcast %cst_501 : f32 to vector<16x32xf32>
    %794 = arith.subf %793, %773 : vector<16x32xf32>
    %795 = arith.mulf %794, %791 : vector<16x32xf32>
    %796 = arith.addf %792, %795 : vector<16x32xf32>
    %c0_502 = arith.constant 0 : index
    %797 = arith.index_cast %c6_i32 : i32 to index
    %c0_503 = arith.constant 0 : index
    %c0_504 = arith.constant 0 : index
    %798 = vector.load %arg10[%c0_502, %797, %c0_503, %c0_504] : memref<1x8x16x32xf32, #tpu.memory_space<vmem>>, vector<1x1x16x32xf32>
    %799 = vector.shape_cast %798 : vector<1x1x16x32xf32> to vector<16x32xf32>
    %800 = vector.shape_cast %796 : vector<16x32xf32> to vector<1x1x16x32xf32>
    tpu.vector_store %arg10[%c0_502, %797, %c0_503, %c0_504], %800 {strides = array<i32>} : memref<1x8x16x32xf32, #tpu.memory_space<vmem>>, vector<1x1x16x32xf32>,
    %c7_i32 = arith.constant 7 : i32
    %c0_505 = arith.constant 0 : index
    %801 = arith.index_cast %c7_i32 : i32 to index
    %c0_506 = arith.constant 0 : index
    %c0_507 = arith.constant 0 : index
    %802 = vector.load %arg1[%c0_505, %801, %c0_506, %c0_507] : memref<1x8x16x16xf32, #tpu.memory_space<vmem>>, vector<1x1x16x16xf32>
    %803 = vector.shape_cast %802 : vector<1x1x16x16xf32> to vector<16x16xf32>
    %804 = arith.addf %803, %803 : vector<16x16xf32>
    %c0_508 = arith.constant 0 : index
    %805 = arith.index_cast %c7_i32 : i32 to index
    %c0_509 = arith.constant 0 : index
    %c0_510 = arith.constant 0 : index
    %806 = vector.load %arg2[%c0_508, %805, %c0_509, %c0_510] : memref<1x8x16x4xf32, #tpu.memory_space<vmem>>, vector<1x1x16x4xf32>
    %807 = vector.shape_cast %806 : vector<1x1x16x4xf32> to vector<16x4xf32>
    %808 = tpu.concatenate %807, %745 in 1 : vector<16x4xf32>, vector<16x32xf32> -> vector<16x36xf32>
    %c0_511 = arith.constant 0 : index
    %c0_512 = arith.constant 0 : index
    %c0_513 = arith.constant 0 : index
    %809 = vector.load %arg4[%c0_511, %c0_512, %c0_513] : memref<3x36x96xf32, #tpu.memory_space<vmem>>, vector<1x36x96xf32>
    %810 = vector.shape_cast %809 : vector<1x36x96xf32> to vector<36x96xf32>
    %cst_514 = arith.constant dense<0.000000e+00> : vector<16x96xf32>
    %811 = tpu.matmul %808, %810, %cst_514 {dimension_numbers = #tpu.dot_dimension_numbers<[1], [0], [0], [1], [0, 0, 1, 1], [], []>} : vector<16x36xf32>, vector<36x96xf32>, vector<16x96xf32> -> vector<16x96xf32>
    %cst_515 = arith.constant dense<0.000000e+00> : vector<16x36xf32>
    %812 = tpu.matmul %803, %808, %cst_515 {dimension_numbers = #tpu.dot_dimension_numbers<[1], [0], [0], [1], [0, 0, 1, 1], [], []>} : vector<16x16xf32>, vector<16x36xf32>, vector<16x36xf32> -> vector<16x36xf32>
    %c1_516 = arith.constant 1 : index
    %c0_517 = arith.constant 0 : index
    %c0_518 = arith.constant 0 : index
    %813 = vector.load %arg4[%c1_516, %c0_517, %c0_518] : memref<3x36x96xf32, #tpu.memory_space<vmem>>, vector<1x36x96xf32>
    %814 = vector.shape_cast %813 : vector<1x36x96xf32> to vector<36x96xf32>
    %cst_519 = arith.constant dense<0.000000e+00> : vector<16x96xf32>
    %815 = tpu.matmul %812, %814, %cst_519 {dimension_numbers = #tpu.dot_dimension_numbers<[1], [0], [0], [1], [0, 0, 1, 1], [], []>} : vector<16x36xf32>, vector<36x96xf32>, vector<16x96xf32> -> vector<16x96xf32>
    %816 = arith.addf %811, %815 : vector<16x96xf32>
    %cst_520 = arith.constant dense<0.000000e+00> : vector<16x36xf32>
    %817 = tpu.matmul %804, %812, %cst_520 {dimension_numbers = #tpu.dot_dimension_numbers<[1], [0], [0], [1], [0, 0, 1, 1], [], []>} : vector<16x16xf32>, vector<16x36xf32>, vector<16x36xf32> -> vector<16x36xf32>
    %818 = arith.subf %817, %808 : vector<16x36xf32>
    %c2_521 = arith.constant 2 : index
    %c0_522 = arith.constant 0 : index
    %c0_523 = arith.constant 0 : index
    %819 = vector.load %arg4[%c2_521, %c0_522, %c0_523] : memref<3x36x96xf32, #tpu.memory_space<vmem>>, vector<1x36x96xf32>
    %820 = vector.shape_cast %819 : vector<1x36x96xf32> to vector<36x96xf32>
    %cst_524 = arith.constant dense<0.000000e+00> : vector<16x96xf32>
    %821 = tpu.matmul %818, %820, %cst_524 {dimension_numbers = #tpu.dot_dimension_numbers<[1], [0], [0], [1], [0, 0, 1, 1], [], []>} : vector<16x36xf32>, vector<36x96xf32>, vector<16x96xf32> -> vector<16x96xf32>
    %822 = arith.addf %816, %821 : vector<16x96xf32>
    %823 = arith.addf %822, %2 : vector<16x96xf32>
    %824 = vector.extract_strided_slice %823 {offsets = [0, 0], sizes = [16, 32], strides = [1, 1]} : vector<16x96xf32> to vector<16x32xf32>
    %825 = arith.negf %824 : vector<16x32xf32>
    %826 = math.exp %825 : vector<16x32xf32>
    %cst_525 = arith.constant 1.000000e+00 : f32
    %827 = vector.broadcast %cst_525 : f32 to vector<16x32xf32>
    %828 = arith.addf %827, %826 : vector<16x32xf32>
    %829 = arith.divf %827, %828 : vector<16x32xf32>
    %830 = vector.extract_strided_slice %823 {offsets = [0, 32], sizes = [16, 32], strides = [1, 1]} : vector<16x96xf32> to vector<16x32xf32>
    %831 = arith.negf %830 : vector<16x32xf32>
    %832 = math.exp %831 : vector<16x32xf32>
    %cst_526 = arith.constant 1.000000e+00 : f32
    %833 = vector.broadcast %cst_526 : f32 to vector<16x32xf32>
    %834 = arith.addf %833, %832 : vector<16x32xf32>
    %835 = arith.divf %833, %834 : vector<16x32xf32>
    %836 = vector.extract_strided_slice %823 {offsets = [0, 64], sizes = [16, 32], strides = [1, 1]} : vector<16x96xf32> to vector<16x32xf32>
    %837 = arith.mulf %829, %745 : vector<16x32xf32>
    %c0_527 = arith.constant 0 : index
    %c0_528 = arith.constant 0 : index
    %c0_529 = arith.constant 0 : index
    %838 = vector.load %arg5[%c0_527, %c0_528, %c0_529] : memref<3x32x32xf32, #tpu.memory_space<vmem>>, vector<1x32x32xf32>
    %839 = vector.shape_cast %838 : vector<1x32x32xf32> to vector<32x32xf32>
    %cst_530 = arith.constant dense<0.000000e+00> : vector<16x32xf32>
    %840 = tpu.matmul %837, %839, %cst_530 {dimension_numbers = #tpu.dot_dimension_numbers<[1], [0], [0], [1], [0, 0, 1, 1], [], []>} : vector<16x32xf32>, vector<32x32xf32>, vector<16x32xf32> -> vector<16x32xf32>
    %cst_531 = arith.constant dense<0.000000e+00> : vector<16x32xf32>
    %841 = tpu.matmul %803, %837, %cst_531 {dimension_numbers = #tpu.dot_dimension_numbers<[1], [0], [0], [1], [0, 0, 1, 1], [], []>} : vector<16x16xf32>, vector<16x32xf32>, vector<16x32xf32> -> vector<16x32xf32>
    %c1_532 = arith.constant 1 : index
    %c0_533 = arith.constant 0 : index
    %c0_534 = arith.constant 0 : index
    %842 = vector.load %arg5[%c1_532, %c0_533, %c0_534] : memref<3x32x32xf32, #tpu.memory_space<vmem>>, vector<1x32x32xf32>
    %843 = vector.shape_cast %842 : vector<1x32x32xf32> to vector<32x32xf32>
    %cst_535 = arith.constant dense<0.000000e+00> : vector<16x32xf32>
    %844 = tpu.matmul %841, %843, %cst_535 {dimension_numbers = #tpu.dot_dimension_numbers<[1], [0], [0], [1], [0, 0, 1, 1], [], []>} : vector<16x32xf32>, vector<32x32xf32>, vector<16x32xf32> -> vector<16x32xf32>
    %845 = arith.addf %840, %844 : vector<16x32xf32>
    %cst_536 = arith.constant dense<0.000000e+00> : vector<16x32xf32>
    %846 = tpu.matmul %804, %841, %cst_536 {dimension_numbers = #tpu.dot_dimension_numbers<[1], [0], [0], [1], [0, 0, 1, 1], [], []>} : vector<16x16xf32>, vector<16x32xf32>, vector<16x32xf32> -> vector<16x32xf32>
    %847 = arith.subf %846, %837 : vector<16x32xf32>
    %c2_537 = arith.constant 2 : index
    %c0_538 = arith.constant 0 : index
    %c0_539 = arith.constant 0 : index
    %848 = vector.load %arg5[%c2_537, %c0_538, %c0_539] : memref<3x32x32xf32, #tpu.memory_space<vmem>>, vector<1x32x32xf32>
    %849 = vector.shape_cast %848 : vector<1x32x32xf32> to vector<32x32xf32>
    %cst_540 = arith.constant dense<0.000000e+00> : vector<16x32xf32>
    %850 = tpu.matmul %847, %849, %cst_540 {dimension_numbers = #tpu.dot_dimension_numbers<[1], [0], [0], [1], [0, 0, 1, 1], [], []>} : vector<16x32xf32>, vector<32x32xf32>, vector<16x32xf32> -> vector<16x32xf32>
    %851 = arith.addf %845, %850 : vector<16x32xf32>
    %852 = arith.addf %836, %851 : vector<16x32xf32>
    %853 = math.tanh %852 : vector<16x32xf32>
    %854 = arith.mulf %835, %745 : vector<16x32xf32>
    %cst_541 = arith.constant 1.000000e+00 : f32
    %855 = vector.broadcast %cst_541 : f32 to vector<16x32xf32>
    %856 = arith.subf %855, %835 : vector<16x32xf32>
    %857 = arith.mulf %856, %853 : vector<16x32xf32>
    %858 = arith.addf %854, %857 : vector<16x32xf32>
    %859 = tpu.concatenate %858, %796 in 1 : vector<16x32xf32>, vector<16x32xf32> -> vector<16x64xf32>
    %c0_542 = arith.constant 0 : index
    %c0_543 = arith.constant 0 : index
    %c0_544 = arith.constant 0 : index
    %860 = vector.load %arg7[%c0_542, %c0_543, %c0_544] : memref<3x64x96xf32, #tpu.memory_space<vmem>>, vector<1x64x96xf32>
    %861 = vector.shape_cast %860 : vector<1x64x96xf32> to vector<64x96xf32>
    %cst_545 = arith.constant dense<0.000000e+00> : vector<16x96xf32>
    %862 = tpu.matmul %859, %861, %cst_545 {dimension_numbers = #tpu.dot_dimension_numbers<[1], [0], [0], [1], [0, 0, 1, 1], [], []>} : vector<16x64xf32>, vector<64x96xf32>, vector<16x96xf32> -> vector<16x96xf32>
    %cst_546 = arith.constant dense<0.000000e+00> : vector<16x64xf32>
    %863 = tpu.matmul %803, %859, %cst_546 {dimension_numbers = #tpu.dot_dimension_numbers<[1], [0], [0], [1], [0, 0, 1, 1], [], []>} : vector<16x16xf32>, vector<16x64xf32>, vector<16x64xf32> -> vector<16x64xf32>
    %c1_547 = arith.constant 1 : index
    %c0_548 = arith.constant 0 : index
    %c0_549 = arith.constant 0 : index
    %864 = vector.load %arg7[%c1_547, %c0_548, %c0_549] : memref<3x64x96xf32, #tpu.memory_space<vmem>>, vector<1x64x96xf32>
    %865 = vector.shape_cast %864 : vector<1x64x96xf32> to vector<64x96xf32>
    %cst_550 = arith.constant dense<0.000000e+00> : vector<16x96xf32>
    %866 = tpu.matmul %863, %865, %cst_550 {dimension_numbers = #tpu.dot_dimension_numbers<[1], [0], [0], [1], [0, 0, 1, 1], [], []>} : vector<16x64xf32>, vector<64x96xf32>, vector<16x96xf32> -> vector<16x96xf32>
    %867 = arith.addf %862, %866 : vector<16x96xf32>
    %cst_551 = arith.constant dense<0.000000e+00> : vector<16x64xf32>
    %868 = tpu.matmul %804, %863, %cst_551 {dimension_numbers = #tpu.dot_dimension_numbers<[1], [0], [0], [1], [0, 0, 1, 1], [], []>} : vector<16x16xf32>, vector<16x64xf32>, vector<16x64xf32> -> vector<16x64xf32>
    %869 = arith.subf %868, %859 : vector<16x64xf32>
    %c2_552 = arith.constant 2 : index
    %c0_553 = arith.constant 0 : index
    %c0_554 = arith.constant 0 : index
    %870 = vector.load %arg7[%c2_552, %c0_553, %c0_554] : memref<3x64x96xf32, #tpu.memory_space<vmem>>, vector<1x64x96xf32>
    %871 = vector.shape_cast %870 : vector<1x64x96xf32> to vector<64x96xf32>
    %cst_555 = arith.constant dense<0.000000e+00> : vector<16x96xf32>
    %872 = tpu.matmul %869, %871, %cst_555 {dimension_numbers = #tpu.dot_dimension_numbers<[1], [0], [0], [1], [0, 0, 1, 1], [], []>} : vector<16x64xf32>, vector<64x96xf32>, vector<16x96xf32> -> vector<16x96xf32>
    %873 = arith.addf %867, %872 : vector<16x96xf32>
    %874 = arith.addf %873, %5 : vector<16x96xf32>
    %875 = vector.extract_strided_slice %874 {offsets = [0, 0], sizes = [16, 32], strides = [1, 1]} : vector<16x96xf32> to vector<16x32xf32>
    %876 = arith.negf %875 : vector<16x32xf32>
    %877 = math.exp %876 : vector<16x32xf32>
    %cst_556 = arith.constant 1.000000e+00 : f32
    %878 = vector.broadcast %cst_556 : f32 to vector<16x32xf32>
    %879 = arith.addf %878, %877 : vector<16x32xf32>
    %880 = arith.divf %878, %879 : vector<16x32xf32>
    %881 = vector.extract_strided_slice %874 {offsets = [0, 32], sizes = [16, 32], strides = [1, 1]} : vector<16x96xf32> to vector<16x32xf32>
    %882 = arith.negf %881 : vector<16x32xf32>
    %883 = math.exp %882 : vector<16x32xf32>
    %cst_557 = arith.constant 1.000000e+00 : f32
    %884 = vector.broadcast %cst_557 : f32 to vector<16x32xf32>
    %885 = arith.addf %884, %883 : vector<16x32xf32>
    %886 = arith.divf %884, %885 : vector<16x32xf32>
    %887 = vector.extract_strided_slice %874 {offsets = [0, 64], sizes = [16, 32], strides = [1, 1]} : vector<16x96xf32> to vector<16x32xf32>
    %888 = arith.mulf %880, %796 : vector<16x32xf32>
    %c0_558 = arith.constant 0 : index
    %c0_559 = arith.constant 0 : index
    %c0_560 = arith.constant 0 : index
    %889 = vector.load %arg8[%c0_558, %c0_559, %c0_560] : memref<3x32x32xf32, #tpu.memory_space<vmem>>, vector<1x32x32xf32>
    %890 = vector.shape_cast %889 : vector<1x32x32xf32> to vector<32x32xf32>
    %cst_561 = arith.constant dense<0.000000e+00> : vector<16x32xf32>
    %891 = tpu.matmul %888, %890, %cst_561 {dimension_numbers = #tpu.dot_dimension_numbers<[1], [0], [0], [1], [0, 0, 1, 1], [], []>} : vector<16x32xf32>, vector<32x32xf32>, vector<16x32xf32> -> vector<16x32xf32>
    %cst_562 = arith.constant dense<0.000000e+00> : vector<16x32xf32>
    %892 = tpu.matmul %803, %888, %cst_562 {dimension_numbers = #tpu.dot_dimension_numbers<[1], [0], [0], [1], [0, 0, 1, 1], [], []>} : vector<16x16xf32>, vector<16x32xf32>, vector<16x32xf32> -> vector<16x32xf32>
    %c1_563 = arith.constant 1 : index
    %c0_564 = arith.constant 0 : index
    %c0_565 = arith.constant 0 : index
    %893 = vector.load %arg8[%c1_563, %c0_564, %c0_565] : memref<3x32x32xf32, #tpu.memory_space<vmem>>, vector<1x32x32xf32>
    %894 = vector.shape_cast %893 : vector<1x32x32xf32> to vector<32x32xf32>
    %cst_566 = arith.constant dense<0.000000e+00> : vector<16x32xf32>
    %895 = tpu.matmul %892, %894, %cst_566 {dimension_numbers = #tpu.dot_dimension_numbers<[1], [0], [0], [1], [0, 0, 1, 1], [], []>} : vector<16x32xf32>, vector<32x32xf32>, vector<16x32xf32> -> vector<16x32xf32>
    %896 = arith.addf %891, %895 : vector<16x32xf32>
    %cst_567 = arith.constant dense<0.000000e+00> : vector<16x32xf32>
    %897 = tpu.matmul %804, %892, %cst_567 {dimension_numbers = #tpu.dot_dimension_numbers<[1], [0], [0], [1], [0, 0, 1, 1], [], []>} : vector<16x16xf32>, vector<16x32xf32>, vector<16x32xf32> -> vector<16x32xf32>
    %898 = arith.subf %897, %888 : vector<16x32xf32>
    %c2_568 = arith.constant 2 : index
    %c0_569 = arith.constant 0 : index
    %c0_570 = arith.constant 0 : index
    %899 = vector.load %arg8[%c2_568, %c0_569, %c0_570] : memref<3x32x32xf32, #tpu.memory_space<vmem>>, vector<1x32x32xf32>
    %900 = vector.shape_cast %899 : vector<1x32x32xf32> to vector<32x32xf32>
    %cst_571 = arith.constant dense<0.000000e+00> : vector<16x32xf32>
    %901 = tpu.matmul %898, %900, %cst_571 {dimension_numbers = #tpu.dot_dimension_numbers<[1], [0], [0], [1], [0, 0, 1, 1], [], []>} : vector<16x32xf32>, vector<32x32xf32>, vector<16x32xf32> -> vector<16x32xf32>
    %902 = arith.addf %896, %901 : vector<16x32xf32>
    %903 = arith.addf %887, %902 : vector<16x32xf32>
    %904 = math.tanh %903 : vector<16x32xf32>
    %905 = arith.mulf %886, %796 : vector<16x32xf32>
    %cst_572 = arith.constant 1.000000e+00 : f32
    %906 = vector.broadcast %cst_572 : f32 to vector<16x32xf32>
    %907 = arith.subf %906, %886 : vector<16x32xf32>
    %908 = arith.mulf %907, %904 : vector<16x32xf32>
    %909 = arith.addf %905, %908 : vector<16x32xf32>
    %c0_573 = arith.constant 0 : index
    %910 = arith.index_cast %c7_i32 : i32 to index
    %c0_574 = arith.constant 0 : index
    %c0_575 = arith.constant 0 : index
    %911 = vector.load %arg10[%c0_573, %910, %c0_574, %c0_575] : memref<1x8x16x32xf32, #tpu.memory_space<vmem>>, vector<1x1x16x32xf32>
    %912 = vector.shape_cast %911 : vector<1x1x16x32xf32> to vector<16x32xf32>
    %913 = vector.shape_cast %909 : vector<16x32xf32> to vector<1x1x16x32xf32>
    tpu.vector_store %arg10[%c0_573, %910, %c0_574, %c0_575], %913 {strides = array<i32>} : memref<1x8x16x32xf32, #tpu.memory_space<vmem>>, vector<1x1x16x32xf32>,
    %c8_i32 = arith.constant 8 : i32
    %c0_576 = arith.constant 0 : index
    %c0_577 = arith.constant 0 : index
    %c0_578 = arith.constant 0 : index
    %c0_579 = arith.constant 0 : index
    %914 = vector.load %arg11[%c0_576, %c0_577, %c0_578, %c0_579] : memref<1x2x16x32xf32, #tpu.memory_space<vmem>>, vector<1x1x16x32xf32>
    %915 = vector.shape_cast %914 : vector<1x1x16x32xf32> to vector<16x32xf32>
    %916 = vector.shape_cast %858 : vector<16x32xf32> to vector<1x1x16x32xf32>
    tpu.vector_store %arg11[%c0_576, %c0_577, %c0_578, %c0_579], %916 {strides = array<i32>} : memref<1x2x16x32xf32, #tpu.memory_space<vmem>>, vector<1x1x16x32xf32>,
    %c0_580 = arith.constant 0 : index
    %c1_581 = arith.constant 1 : index
    %c0_582 = arith.constant 0 : index
    %c0_583 = arith.constant 0 : index
    %917 = vector.load %arg11[%c0_580, %c1_581, %c0_582, %c0_583] : memref<1x2x16x32xf32, #tpu.memory_space<vmem>>, vector<1x1x16x32xf32>
    %918 = vector.shape_cast %917 : vector<1x1x16x32xf32> to vector<16x32xf32>
    %919 = vector.shape_cast %909 : vector<16x32xf32> to vector<1x1x16x32xf32>
    tpu.vector_store %arg11[%c0_580, %c1_581, %c0_582, %c0_583], %919 {strides = array<i32>} : memref<1x2x16x32xf32, #tpu.memory_space<vmem>>, vector<1x1x16x32xf32>,
    return
  }
  func.func @transform_0(%arg0: i32) -> (i32, i32, i32, i32) {
    %c0_i32 = arith.constant 0 : i32
    %c0_i32_0 = arith.constant 0 : i32
    %c0_i32_1 = arith.constant 0 : i32
    %c0_i32_2 = arith.constant 0 : i32
    return %arg0, %c0_i32, %c0_i32_0, %c0_i32_1 : i32, i32, i32, i32
  }
  func.func @transform_1(%arg0: i32) -> (i32, i32, i32, i32) {
    %c0_i32 = arith.constant 0 : i32
    %c0_i32_0 = arith.constant 0 : i32
    %c0_i32_1 = arith.constant 0 : i32
    %c0_i32_2 = arith.constant 0 : i32
    return %arg0, %c0_i32, %c0_i32_0, %c0_i32_1 : i32, i32, i32, i32
  }
  func.func @transform_2(%arg0: i32) -> (i32, i32, i32, i32) {
    %c0_i32 = arith.constant 0 : i32
    %c0_i32_0 = arith.constant 0 : i32
    %c0_i32_1 = arith.constant 0 : i32
    %c0_i32_2 = arith.constant 0 : i32
    return %arg0, %c0_i32, %c0_i32_0, %c0_i32_1 : i32, i32, i32, i32
  }
  func.func @transform_3(%arg0: i32) -> (i32, i32, i32) {
    %c0_i32 = arith.constant 0 : i32
    %c0_i32_0 = arith.constant 0 : i32
    %c0_i32_1 = arith.constant 0 : i32
    %c0_i32_2 = arith.constant 0 : i32
    return %c0_i32, %c0_i32_0, %c0_i32_1 : i32, i32, i32
  }
  func.func @transform_4(%arg0: i32) -> (i32, i32, i32) {
    %c0_i32 = arith.constant 0 : i32
    %c0_i32_0 = arith.constant 0 : i32
    %c0_i32_1 = arith.constant 0 : i32
    %c0_i32_2 = arith.constant 0 : i32
    return %c0_i32, %c0_i32_0, %c0_i32_1 : i32, i32, i32
  }
  func.func @transform_5(%arg0: i32) -> (i32, i32) {
    %c0_i32 = arith.constant 0 : i32
    %c0_i32_0 = arith.constant 0 : i32
    %c0_i32_1 = arith.constant 0 : i32
    return %c0_i32, %c0_i32_0 : i32, i32
  }
  func.func @transform_6(%arg0: i32) -> (i32, i32, i32) {
    %c0_i32 = arith.constant 0 : i32
    %c0_i32_0 = arith.constant 0 : i32
    %c0_i32_1 = arith.constant 0 : i32
    %c0_i32_2 = arith.constant 0 : i32
    return %c0_i32, %c0_i32_0, %c0_i32_1 : i32, i32, i32
  }
  func.func @transform_7(%arg0: i32) -> (i32, i32, i32) {
    %c0_i32 = arith.constant 0 : i32
    %c0_i32_0 = arith.constant 0 : i32
    %c0_i32_1 = arith.constant 0 : i32
    %c0_i32_2 = arith.constant 0 : i32
    return %c0_i32, %c0_i32_0, %c0_i32_1 : i32, i32, i32
  }
  func.func @transform_8(%arg0: i32) -> (i32, i32) {
    %c0_i32 = arith.constant 0 : i32
    %c0_i32_0 = arith.constant 0 : i32
    %c0_i32_1 = arith.constant 0 : i32
    return %c0_i32, %c0_i32_0 : i32, i32
  }
  func.func @transform_9(%arg0: i32) -> (i32, i32, i32, i32) {
    %c0_i32 = arith.constant 0 : i32
    %c0_i32_0 = arith.constant 0 : i32
    %c0_i32_1 = arith.constant 0 : i32
    %c0_i32_2 = arith.constant 0 : i32
    return %arg0, %c0_i32, %c0_i32_0, %c0_i32_1 : i32, i32, i32, i32
  }
  func.func @transform_10(%arg0: i32) -> (i32, i32, i32, i32) {
    %c0_i32 = arith.constant 0 : i32
    %c0_i32_0 = arith.constant 0 : i32
    %c0_i32_1 = arith.constant 0 : i32
    %c0_i32_2 = arith.constant 0 : i32
    return %arg0, %c0_i32, %c0_i32_0, %c0_i32_1 : i32, i32, i32, i32
  }
}

</mosaic_0001>

<llo_original>
// kernel: _lambda_.1
$region0: #{_lambda_.1}
  #allocation0 [shape = 'u32[]', space=smem, size = 0x4, offset = 0x4, fixed_abs, tag = 'smem constant byte address 0x4 - core index']
  #allocation1 [shape = 'u32[72,128]{1,0:T(1,128)}', space=vmem, size = 0x9000, scoped, tag = 'internal scratch']
  %s0 = inlined_call_operand.vmem [shape: f32[2,8,16,16], index: 0, kind: input, shape index: {}]
  %s1 = inlined_call_operand.vmem [shape: f32[2,8,16,4], index: 1, kind: input, shape index: {}]
  %s2 = inlined_call_operand.vmem [shape: f32[2,2,16,32], index: 2, kind: input, shape index: {}]
  %s3 = inlined_call_operand.vmem [shape: f32[3,36,96], index: 3, kind: input, shape index: {}]
  %s4 = inlined_call_operand.hbm [shape: f32[3,32,32], index: 4, kind: input, shape index: {}]
  %s5 = inlined_call_operand.vmem [shape: f32[1,96], index: 5, kind: input, shape index: {}, may-alias: {5,8}]
  %s6 = inlined_call_operand.hbm [shape: f32[3,64,96], index: 6, kind: input, shape index: {}]
  %s7 = inlined_call_operand.hbm [shape: f32[3,32,32], index: 7, kind: input, shape index: {}]
  %s8 = inlined_call_operand.vmem [shape: f32[1,96], index: 8, kind: input, shape index: {}, may-alias: {5,8}]
  %s9 = inlined_call_operand.vmem [shape: f32[2,8,16,32], index: 9, kind: output, shape index: {0}]
  %s10 = inlined_call_operand.vmem [shape: f32[2,2,16,32], index: 10, kind: output, shape index: {1}]
  %11 = xla_tuple %s9, %s10
  %s12 = sld [smem:[#allocation0]]
  $region89: #{_lambda_.1} parent=0
    _
  %s14 = ssub.s32 1, %s12
  %s15 = scalar_select 0, %s14, %s12
  $region1: #{_lambda_.1} parent=0
    #allocation2 [shape = 'u8[49152]{0}', space=vmem, size = 0xc000, scoped, tag = 'input window, operand 4, single buffered']
    #allocation3 [shape = 's32[2]{0}', space=sflag, size = 0x8, scoped, tag = 'scoped memory for _lambda_.1']
    #allocation4 [shape = 'u8[98304]{0}', space=vmem, size = 0x18000, scoped, tag = 'input window, operand 6, single buffered']
    #allocation5 [shape = 's32[1]{0}', space=sflag, size = 0x4, scoped, tag = 'scoped memory for _lambda_.1']
    #allocation6 [shape = 'u8[49152]{0}', space=vmem, size = 0xc000, scoped, tag = 'input window, operand 7, single buffered']
    %16 = vsyncpa [#allocation3], 0
    %17 = vsyncpa [#allocation5], 0
    loop: start=0, step=1, limit=4
    $region2: #{_lambda_.1} parent=1 // loop_pre_header
      _
    $region3: #{_lambda_.1} parent=1 // loop_header
      %s19 = sphi 0, %s23
      %p20 = scmp.ge.s32.totalorder %s19, 4
      %s29 = sphi 0, %s31
      %s32 = sphi 0, %s29
      %s33 = sphi 0, %s32
      %s49 = sphi 0, %s33
      %s55 = sphi 0, %s57
      %s58 = sphi 0, %s55
      %s59 = sphi 0, %s58
      %s75 = sphi 0, %s59
      %s81 = sphi 0, %s83
      %s84 = sphi 0, %s81
      %s85 = sphi 0, %s84
      %s101 = sphi 0, %s85
      %s105 = sphi 0, %s105
      %s107 = sphi 0, %s105
      %s108 = sphi 0, %s107
      %s122 = sphi 0, %s108
      %s126 = sphi 0, %s126
      %s128 = sphi 0, %s126
      %s129 = sphi 0, %s128
      %s143 = sphi 0, %s129
      %s147 = sphi 0, %s147
      %s149 = sphi 0, %s147
      %s150 = sphi 0, %s149
      %s164 = sphi 0, %s150
      %s168 = sphi 0, %s168
      %s170 = sphi 0, %s168
      %s171 = sphi 0, %s170
      %s185 = sphi 0, %s171
      %s189 = sphi 0, %s189
      %s191 = sphi 0, %s189
      %s192 = sphi 0, %s191
      %s206 = sphi 0, %s192
      %s210 = sphi 0, %s210
      %s212 = sphi 0, %s210
      %s213 = sphi 0, %s212
      %s227 = sphi 0, %s213
      %s233 = sphi 0, %s235
      %s236 = sphi 0, %s233
      %s237 = sphi 0, %s236
      %s253 = sphi 0, %s237
      %s259 = sphi 0, %s261
      %s262 = sphi 0, %s259
      %s263 = sphi 0, %s262
      %s279 = sphi 0, %s263
    $region4: #{_lambda_.1} parent=1 // loop_header_branch
      %22 = sbr.rel (%p20) target = $region8
    $region5: #{_lambda_.1} parent=1 // loop_body
      %s24 = ssub.s32 %s19, 1
      %s25 = ssub.s32 %s19, 2
      %s26 = sadd.s32 %s19, 1
      %s27 = ssub.s32 %s19, %s26
      %p28 = scmp.eq.s32.totalorder %s27, 0
      %s30 = sadd.s32 %s29, 1
      %s31 = scalar_select %p28, %s29, %s30
      %p34 = pneg %p28
      %p35 = scmp.eq.s32.totalorder %s19, 1
      %p36 = por %p34, %p35
      %p37 = scmp.ne.s32.totalorder %s29, %s32
      %p38 = scmp.eq.s32.totalorder %s19, 0
      %p39 = por %p37, %p38
      %p40 = scmp.ne.s32.totalorder %s29, %s32
      %p41 = scmp.eq.s32.totalorder %s24, 1
      %p42 = por %p40, %p41
      %p43 = scmp.ne.s32.totalorder %s32, %s33
      %p44 = scmp.eq.s32.totalorder %s24, 0
      %p45 = por %p43, %p44
      %p46 = scmp.ne.s32.totalorder %s32, %s33
      %p47 = scmp.eq.s32.totalorder %s25, 1
      %p48 = por %p46, %p47
      %p50 = scmp.ne.s32.totalorder %s33, %s49
      %p51 = scmp.eq.s32.totalorder %s25, 0
      %p52 = por %p50, %p51
      %s53 = ssub.s32 %s19, %s26
      %p54 = scmp.eq.s32.totalorder %s53, 0
      %s56 = sadd.s32 %s55, 1
      %s57 = scalar_select %p54, %s55, %s56
      %p60 = pneg %p54
      %p61 = scmp.eq.s32.totalorder %s19, 1
      %p62 = por %p60, %p61
      %p63 = scmp.ne.s32.totalorder %s55, %s58
      %p64 = scmp.eq.s32.totalorder %s19, 0
      %p65 = por %p63, %p64
      %p66 = scmp.ne.s32.totalorder %s55, %s58
      %p67 = scmp.eq.s32.totalorder %s24, 1
      %p68 = por %p66, %p67
      %p69 = scmp.ne.s32.totalorder %s58, %s59
      %p70 = scmp.eq.s32.totalorder %s24, 0
      %p71 = por %p69, %p70
      %p72 = scmp.ne.s32.totalorder %s58, %s59
      %p73 = scmp.eq.s32.totalorder %s25, 1
      %p74 = por %p72, %p73
      %p76 = scmp.ne.s32.totalorder %s59, %s75
      %p77 = scmp.eq.s32.totalorder %s25, 0
      %p78 = por %p76, %p77
      %s79 = ssub.s32 %s19, %s26
      %p80 = scmp.eq.s32.totalorder %s79, 0
      %s82 = sadd.s32 %s81, 1
      %s83 = scalar_select %p80, %s81, %s82
      %p86 = pneg %p80
      %p87 = scmp.eq.s32.totalorder %s19, 1
      %p88 = por %p86, %p87
      %p89 = scmp.ne.s32.totalorder %s81, %s84
      %p90 = scmp.eq.s32.totalorder %s19, 0
      %p91 = por %p89, %p90
      %p92 = scmp.ne.s32.totalorder %s81, %s84
      %p93 = scmp.eq.s32.totalorder %s24, 1
      %p94 = por %p92, %p93
      %p95 = scmp.ne.s32.totalorder %s84, %s85
      %p96 = scmp.eq.s32.totalorder %s24, 0
      %p97 = por %p95, %p96
      %p98 = scmp.ne.s32.totalorder %s84, %s85
      %p99 = scmp.eq.s32.totalorder %s25, 1
      %p100 = por %p98, %p99
      %p102 = scmp.ne.s32.totalorder %s85, %s101
      %p103 = scmp.eq.s32.totalorder %s25, 0
      %p104 = por %p102, %p103
      %s106 = sadd.s32 %s105, 1
      %p109 = scmp.eq.s32.totalorder %s19, 1
      %p110 = scmp.ne.s32.totalorder %s105, %s107
      %p111 = scmp.eq.s32.totalorder %s19, 0
      %p112 = por %p110, %p111
      %p113 = scmp.ne.s32.totalorder %s105, %s107
      %p114 = scmp.eq.s32.totalorder %s24, 1
      %p115 = por %p113, %p114
      %p116 = scmp.ne.s32.totalorder %s107, %s108
      %p117 = scmp.eq.s32.totalorder %s24, 0
      %p118 = por %p116, %p117
      %p119 = scmp.ne.s32.totalorder %s107, %s108
      %p120 = scmp.eq.s32.totalorder %s25, 1
      %p121 = por %p119, %p120
      %p123 = scmp.ne.s32.totalorder %s108, %s122
      %p124 = scmp.eq.s32.totalorder %s25, 0
      %p125 = por %p123, %p124
      %s127 = sadd.s32 %s126, 1
      %p130 = scmp.eq.s32.totalorder %s19, 1
      %p131 = scmp.ne.s32.totalorder %s126, %s128
      %p132 = scmp.eq.s32.totalorder %s19, 0
      %p133 = por %p131, %p132
      %p134 = scmp.ne.s32.totalorder %s126, %s128
      %p135 = scmp.eq.s32.totalorder %s24, 1
      %p136 = por %p134, %p135
      %p137 = scmp.ne.s32.totalorder %s128, %s129
      %p138 = scmp.eq.s32.totalorder %s24, 0
      %p139 = por %p137, %p138
      %p140 = scmp.ne.s32.totalorder %s128, %s129
      %p141 = scmp.eq.s32.totalorder %s25, 1
      %p142 = por %p140, %p141
      %p144 = scmp.ne.s32.totalorder %s129, %s143
      %p145 = scmp.eq.s32.totalorder %s25, 0
      %p146 = por %p144, %p145
      %s148 = sadd.s32 %s147, 1
      %p151 = scmp.eq.s32.totalorder %s19, 1
      %p152 = scmp.ne.s32.totalorder %s147, %s149
      %p153 = scmp.eq.s32.totalorder %s19, 0
      %p154 = por %p152, %p153
      %p155 = scmp.ne.s32.totalorder %s147, %s149
      %p156 = scmp.eq.s32.totalorder %s24, 1
      %p157 = por %p155, %p156
      %p158 = scmp.ne.s32.totalorder %s149, %s150
      %p159 = scmp.eq.s32.totalorder %s24, 0
      %p160 = por %p158, %p159
      %p161 = scmp.ne.s32.totalorder %s149, %s150
      %p162 = scmp.eq.s32.totalorder %s25, 1
      %p163 = por %p161, %p162
      %p165 = scmp.ne.s32.totalorder %s150, %s164
      %p166 = scmp.eq.s32.totalorder %s25, 0
      %p167 = por %p165, %p166
      %s169 = sadd.s32 %s168, 1
      %p172 = scmp.eq.s32.totalorder %s19, 1
      %p173 = scmp.ne.s32.totalorder %s168, %s170
      %p174 = scmp.eq.s32.totalorder %s19, 0
      %p175 = por %p173, %p174
      %p176 = scmp.ne.s32.totalorder %s168, %s170
      %p177 = scmp.eq.s32.totalorder %s24, 1
      %p178 = por %p176, %p177
      %p179 = scmp.ne.s32.totalorder %s170, %s171
      %p180 = scmp.eq.s32.totalorder %s24, 0
      %p181 = por %p179, %p180
      %p182 = scmp.ne.s32.totalorder %s170, %s171
      %p183 = scmp.eq.s32.totalorder %s25, 1
      %p184 = por %p182, %p183
      %p186 = scmp.ne.s32.totalorder %s171, %s185
      %p187 = scmp.eq.s32.totalorder %s25, 0
      %p188 = por %p186, %p187
      %s190 = sadd.s32 %s189, 1
      %p193 = scmp.eq.s32.totalorder %s19, 1
      %p194 = scmp.ne.s32.totalorder %s189, %s191
      %p195 = scmp.eq.s32.totalorder %s19, 0
      %p196 = por %p194, %p195
      %p197 = scmp.ne.s32.totalorder %s189, %s191
      %p198 = scmp.eq.s32.totalorder %s24, 1
      %p199 = por %p197, %p198
      %p200 = scmp.ne.s32.totalorder %s191, %s192
      %p201 = scmp.eq.s32.totalorder %s24, 0
      %p202 = por %p200, %p201
      %p203 = scmp.ne.s32.totalorder %s191, %s192
      %p204 = scmp.eq.s32.totalorder %s25, 1
      %p205 = por %p203, %p204
      %p207 = scmp.ne.s32.totalorder %s192, %s206
      %p208 = scmp.eq.s32.totalorder %s25, 0
      %p209 = por %p207, %p208
      %s211 = sadd.s32 %s210, 1
      %p214 = scmp.eq.s32.totalorder %s19, 1
      %p215 = scmp.ne.s32.totalorder %s210, %s212
      %p216 = scmp.eq.s32.totalorder %s19, 0
      %p217 = por %p215, %p216
      %p218 = scmp.ne.s32.totalorder %s210, %s212
      %p219 = scmp.eq.s32.totalorder %s24, 1
      %p220 = por %p218, %p219
      %p221 = scmp.ne.s32.totalorder %s212, %s213
      %p222 = scmp.eq.s32.totalorder %s24, 0
      %p223 = por %p221, %p222
      %p224 = scmp.ne.s32.totalorder %s212, %s213
      %p225 = scmp.eq.s32.totalorder %s25, 1
      %p226 = por %p224, %p225
      %p228 = scmp.ne.s32.totalorder %s213, %s227
      %p229 = scmp.eq.s32.totalorder %s25, 0
      %p230 = por %p228, %p229
      %s231 = ssub.s32 %s19, %s26
      %p232 = scmp.eq.s32.totalorder %s231, 0
      %s234 = sadd.s32 %s233, 1
      %s235 = scalar_select %p232, %s233, %s234
      %p238 = pneg %p232
      %p239 = scmp.eq.s32.totalorder %s19, 1
      %p240 = por %p238, %p239
      %p241 = scmp.ne.s32.totalorder %s233, %s236
      %p242 = scmp.eq.s32.totalorder %s19, 0
      %p243 = por %p241, %p242
      %p244 = scmp.ne.s32.totalorder %s233, %s236
      %p245 = scmp.eq.s32.totalorder %s24, 1
      %p246 = por %p244, %p245
      %p247 = scmp.ne.s32.totalorder %s236, %s237
      %p248 = scmp.eq.s32.totalorder %s24, 0
      %p249 = por %p247, %p248
      %p250 = scmp.ne.s32.totalorder %s236, %s237
      %p251 = scmp.eq.s32.totalorder %s25, 1
      %p252 = por %p250, %p251
      %p254 = scmp.ne.s32.totalorder %s237, %s253
      %p255 = scmp.eq.s32.totalorder %s25, 0
      %p256 = por %p254, %p255
      %s257 = ssub.s32 %s19, %s26
      %p258 = scmp.eq.s32.totalorder %s257, 0
      %s260 = sadd.s32 %s259, 1
      %s261 = scalar_select %p258, %s259, %s260
      %p264 = pneg %p258
      %p265 = scmp.eq.s32.totalorder %s19, 1
      %p266 = por %p264, %p265
      %p267 = scmp.ne.s32.totalorder %s259, %s262
      %p268 = scmp.eq.s32.totalorder %s19, 0
      %p269 = por %p267, %p268
      %p270 = scmp.ne.s32.totalorder %s259, %s262
      %p271 = scmp.eq.s32.totalorder %s24, 1
      %p272 = por %p270, %p271
      %p273 = scmp.ne.s32.totalorder %s262, %s263
      %p274 = scmp.eq.s32.totalorder %s24, 0
      %p275 = por %p273, %p274
      %p276 = scmp.ne.s32.totalorder %s262, %s263
      %p277 = scmp.eq.s32.totalorder %s25, 1
      %p278 = por %p276, %p277
      %p280 = scmp.ne.s32.totalorder %s263, %s279
      %p281 = scmp.eq.s32.totalorder %s25, 0
      %p282 = por %p280, %p281
      %p283 = scmp.le.s32.totalorder 1, %s19
      %p284 = scmp.lt.s32.totalorder %s19, 3
      %p285 = pnand %p283, %p284
      %p286 = pneg %p285
      // Predicated region
      $region9: #{_lambda_.1} parent=5 // pred_check
        _
      $region10: #{_lambda_.1} parent=5 // pred_check_branch
        %288 = sbr.rel (%p285) target = $region12
      $region11: #{_lambda_.1} parent=5 // pred_region
        %s289 = ssub.s32 %s19, 1
        // Predicated region
        $region13: #{_lambda_.1} parent=11 // pred_check
          %p290 = pneg %p118
        $region14: #{_lambda_.1} parent=11 // pred_check_branch
          %292 = sbr.rel (%p290) target = $region16
        $region15: #{_lambda_.1} parent=11 // pred_region
          _
        $region16: #{_lambda_.1} parent=11 // pred_fallthru
          _
        // Predicated region
        $region17: #{_lambda_.1} parent=11 // pred_check
          %p293 = pneg %p139
        $region18: #{_lambda_.1} parent=11 // pred_check_branch
          %295 = sbr.rel (%p293) target = $region20
        $region19: #{_lambda_.1} parent=11 // pred_region
          %297 = vsyncadd [#allocation3], 0
          %s298 = sshll.u32 %s4, 4
          %s299 = int_to_ptr.hbm [resolvable:$true] %s298
          %s300 = sshll.u32 [#allocation2], 4
          %s301 = int_to_ptr.vmem [resolvable:$true] %s300
          %306 = dma.hbm_to_vmem [thread:$0]  %s299, 1536, %s301, [#allocation3], 128, 128, 8
        $region20: #{_lambda_.1} parent=11 // pred_fallthru
          _
        // Predicated region
        $region21: #{_lambda_.1} parent=11 // pred_check
          %p307 = pneg %p160
        $region22: #{_lambda_.1} parent=11 // pred_check_branch
          %309 = sbr.rel (%p307) target = $region24
        $region23: #{_lambda_.1} parent=11 // pred_region
          _
        $region24: #{_lambda_.1} parent=11 // pred_fallthru
          _
        // Predicated region
        $region25: #{_lambda_.1} parent=11 // pred_check
          %p310 = pneg %p181
        $region26: #{_lambda_.1} parent=11 // pred_check_branch
          %312 = sbr.rel (%p310) target = $region28
        $region27: #{_lambda_.1} parent=11 // pred_region
          %314 = vsyncadd [#allocation5], 0
          %s315 = sshll.u32 %s6, 4
          %s316 = int_to_ptr.hbm [resolvable:$true] %s315
          %s317 = sshll.u32 [#allocation4], 4
          %s318 = int_to_ptr.vmem [resolvable:$true] %s317
          %323 = dma.hbm_to_vmem [thread:$0]  %s316, 3072, %s318, [#allocation5], 128, 128, 8
        $region28: #{_lambda_.1} parent=11 // pred_fallthru
          _
        // Predicated region
        $region29: #{_lambda_.1} parent=11 // pred_check
          %p324 = pneg %p202
        $region30: #{_lambda_.1} parent=11 // pred_check_branch
          %326 = sbr.rel (%p324) target = $region32
        $region31: #{_lambda_.1} parent=11 // pred_region
          %328 = vsyncadd [#allocation5], 0
          %s329 = sshll.u32 %s7, 4
          %s330 = int_to_ptr.hbm [resolvable:$true] %s329
          %s331 = sshll.u32 [#allocation6], 4
          %s332 = int_to_ptr.vmem [resolvable:$true] %s331
          %337 = dma.hbm_to_vmem [thread:$0]  %s330, 1536, %s332, [#allocation5], 128, 128, 8
        $region32: #{_lambda_.1} parent=11 // pred_fallthru
          _
        // Predicated region
        $region33: #{_lambda_.1} parent=11 // pred_check
          %p338 = pneg %p223
        $region34: #{_lambda_.1} parent=11 // pred_check_branch
          %340 = sbr.rel (%p338) target = $region36
        $region35: #{_lambda_.1} parent=11 // pred_region
          _
        $region36: #{_lambda_.1} parent=11 // pred_fallthru
          _
      $region12: #{_lambda_.1} parent=5 // pred_fallthru
        _
      %p341 = scmp.lt.s32.totalorder %s19, 2
      // Predicated region
      $region37: #{_lambda_.1} parent=5 // pred_check
        %p342 = pneg %p341
      $region38: #{_lambda_.1} parent=5 // pred_check_branch
        %344 = sbr.rel (%p342) target = $region40
      $region39: #{_lambda_.1} parent=5 // pred_region
        // Predicated region
        $region41: #{_lambda_.1} parent=39 // pred_check
          %p345 = pneg %p39
        $region42: #{_lambda_.1} parent=39 // pred_check_branch
          %347 = sbr.rel (%p345) target = $region44
        $region43: #{_lambda_.1} parent=39 // pred_region
          %p348 = scmp.lt.s32.totalorder %s19, 1
          %s349 = scalar_select %p348, %s19, 1
          %s350 = smul.addr %s349, 16
          %s351 = smul.addr %s350, 8
          %s352 = scalar_lea.vmem %s0, %s351
        $region44: #{_lambda_.1} parent=39 // pred_fallthru
          _
        // Predicated region
        $region45: #{_lambda_.1} parent=39 // pred_check
          %p353 = pneg %p65
        $region46: #{_lambda_.1} parent=39 // pred_check_branch
          %355 = sbr.rel (%p353) target = $region48
        $region47: #{_lambda_.1} parent=39 // pred_region
          %p356 = scmp.lt.s32.totalorder %s19, 1
          %s357 = scalar_select %p356, %s19, 1
          %s358 = smul.addr %s357, 16
          %s359 = smul.addr %s358, 8
          %s360 = scalar_lea.vmem %s1, %s359
        $region48: #{_lambda_.1} parent=39 // pred_fallthru
          _
        // Predicated region
        $region49: #{_lambda_.1} parent=39 // pred_check
          %p361 = pneg %p91
        $region50: #{_lambda_.1} parent=39 // pred_check_branch
          %363 = sbr.rel (%p361) target = $region52
        $region51: #{_lambda_.1} parent=39 // pred_region
          %p364 = scmp.lt.s32.totalorder %s19, 1
          %s365 = scalar_select %p364, %s19, 1
          %s366 = smul.addr %s365, 4
          %s367 = smul.addr %s366, 8
          %s368 = scalar_lea.vmem %s2, %s367
        $region52: #{_lambda_.1} parent=39 // pred_fallthru
          _
      $region40: #{_lambda_.1} parent=5 // pred_fallthru
        _
      %p369 = scmp.le.s32.totalorder 1, %s19
      %p370 = scmp.lt.s32.totalorder %s19, 3
      %p371 = pnand %p369, %p370
      %p372 = pneg %p371
      // Predicated region
      $region53: #{_lambda_.1} parent=5 // pred_check
        _
      $region54: #{_lambda_.1} parent=5 // pred_check_branch
        %374 = sbr.rel (%p371) target = $region56
      $region55: #{_lambda_.1} parent=5 // pred_region
        %s375 = ssub.s32 %s19, 1
        // Predicated region
        $region57: #{_lambda_.1} parent=55 // pred_check
          %p376 = pneg %p139
        $region58: #{_lambda_.1} parent=55 // pred_check_branch
          %378 = sbr.rel (%p376) target = $region60
        $region59: #{_lambda_.1} parent=55 // pred_region
          %380 = dma.done [#allocation3], 1536
        $region60: #{_lambda_.1} parent=55 // pred_fallthru
          _
        // Predicated region
        $region61: #{_lambda_.1} parent=55 // pred_check
          %p381 = pneg %p181
        $region62: #{_lambda_.1} parent=55 // pred_check_branch
          %383 = sbr.rel (%p381) target = $region64
        $region63: #{_lambda_.1} parent=55 // pred_region
          %385 = dma.done [#allocation5], 3072
        $region64: #{_lambda_.1} parent=55 // pred_fallthru
          _
        // Predicated region
        $region65: #{_lambda_.1} parent=55 // pred_check
          %p386 = pneg %p202
        $region66: #{_lambda_.1} parent=55 // pred_check_branch
          %388 = sbr.rel (%p386) target = $region68
        $region67: #{_lambda_.1} parent=55 // pred_region
          %390 = dma.done [#allocation5], 1536
        $region68: #{_lambda_.1} parent=55 // pred_fallthru
          _
        %p391 = scmp.lt.s32.totalorder %s24, 1
        %s392 = scalar_select %p391, %s24, 1
        %s393 = smul.addr %s392, 16
        %s394 = smul.addr %s393, 8
        %s395 = scalar_lea.vmem %s0, %s394
        %p396 = pneg %p45
        %p397 = pneg %p42
        %p398 = scmp.lt.s32.totalorder %s24, 1
        %s399 = scalar_select %p398, %s24, 1
        %s400 = smul.addr %s399, 16
        %s401 = smul.addr %s400, 8
        %s402 = scalar_lea.vmem %s1, %s401
        %p403 = pneg %p71
        %p404 = pneg %p68
        %p405 = scmp.lt.s32.totalorder %s24, 1
        %s406 = scalar_select %p405, %s24, 1
        %s407 = smul.addr %s406, 4
        %s408 = smul.addr %s407, 8
        %s409 = scalar_lea.vmem %s2, %s408
        %p410 = pneg %p97
        %p411 = pneg %p94
        %p412 = pneg %p118
        %p413 = pneg %p115
        %p414 = pneg %p139
        %p415 = pneg %p136
        %p416 = pneg %p160
        %p417 = pneg %p157
        %p418 = pneg %p181
        %p419 = pneg %p178
        %p420 = pneg %p202
        %p421 = pneg %p199
        %p422 = pneg %p223
        %p423 = pneg %p220
        %p424 = pneg %p249
        %p425 = pneg %p246
        %p426 = scmp.lt.s32.totalorder %s24, 1
        %s427 = scalar_select %p426, %s24, 1
        %s428 = smul.addr %s427, 16
        %s429 = smul.addr %s428, 8
        %s430 = scalar_lea.vmem %s9, %s429
        %p431 = pneg %p275
        %p432 = pneg %p272
        %p433 = scmp.lt.s32.totalorder %s24, 1
        %s434 = scalar_select %p433, %s24, 1
        %s435 = smul.addr %s434, 4
        %s436 = smul.addr %s435, 8
        %s437 = scalar_lea.vmem %s10, %s436
        %p438 = scmp.lt.s32.totalorder %s24, 1
        %s439 = scalar_select %p438, %s24, 1
        %s440 = smul.addr %s439, 16
        %s441 = smul.addr %s440, 8
        %s442 = scalar_lea.vmem %s0, %s441
        %p443 = scmp.lt.s32.totalorder %s24, 1
        %s444 = scalar_select %p443, %s24, 1
        %s445 = smul.addr %s444, 16
        %s446 = smul.addr %s445, 8
        %s447 = scalar_lea.vmem %s1, %s446
        %p448 = scmp.lt.s32.totalorder %s24, 1
        %s449 = scalar_select %p448, %s24, 1
        %s450 = smul.addr %s449, 4
        %s451 = smul.addr %s450, 8
        %s452 = scalar_lea.vmem %s2, %s451
        %p453 = scmp.lt.s32.totalorder %s24, 1
        %s454 = scalar_select %p453, %s24, 1
        %s455 = smul.addr %s454, 16
        %s456 = smul.addr %s455, 8
        %s457 = scalar_lea.vmem %s9, %s456
        %p458 = scmp.lt.s32.totalorder %s24, 1
        %s459 = scalar_select %p458, %s24, 1
        %s460 = smul.addr %s459, 4
        %s461 = smul.addr %s460, 8
        %s462 = scalar_lea.vmem %s10, %s461
        %v463 = vld [vmem:[%s5] sm:$0x1]
        %v465 = vperm.slane %v463, 0
        %v467 = vld [vmem:[%s8] sm:$0x1]
        %v469 = vperm.slane %v467, 0
        %v471 = vld [vmem:[%s452] sm:$0xff]
        %v472 = vld [vmem:[%s452 + $0x8] sm:$0xff]
        %s473 = scalar_lea.vmem %s452, 16
        %v474 = vld [vmem:[%s473] sm:$0xff]
        %v475 = vld [vmem:[%s473 + $0x8] sm:$0xff]
        %v476 = vld [vmem:[%s442] sm:$0xff]
        %v477 = vld [vmem:[%s442 + $0x8] sm:$0xff]
        %v478 = vadd.f32 %v476, %v476
        %v479 = vadd.f32 %v477, %v477
        %v480 = vld [vmem:[%s447] sm:$0xff]
        %v481 = vld [vmem:[%s447 + $0x8] sm:$0xff]
        %484 = vrot.lane.b32.xlu0 %v471, 4
        %v485 = vpop.permute.xlu0 %484
        %486 = vrot.lane.b32.xlu0 %v472, 4
        %v487 = vpop.permute.xlu0 %486
        %vm490 = vcmask 31744
        %v491 = vsel %vm490, %v480, %v485
        %v492 = vsel %vm490, %v481, %v487
        %v493 = vld [vmem:[%s3] sm:$0xff]
        %v494 = vld [vmem:[%s3 + $0x8] sm:$0xff]
        %v495 = vld [vmem:[%s3 + $0x10] sm:$0xff]
        %v496 = vld [vmem:[%s3 + $0x18] sm:$0xff]
        %v497 = vld [vmem:[%s3 + $0x20] sm:$0xf]
        %vm498 = vcmask 130048
        %v500 = vsel %vm498, %v476, 0
        %v503 = vsel %vm498, %v477, 0
        %505 = vmatpush.msra.mxu0 0.0
        %506 = vmatpush.msra.mxu0 0.0
        %507 = vmatpush.msra.mxu0 0.0
        %508 = vmatpush.msra.mxu0 0.0
        %509 = vmatpush.msra.mxu0 0.0
        %510 = vmatpush.msra.mxu0 0.0
        %511 = vmatpush.msra.mxu0 0.0
        %512 = vmatpush.msra.mxu0 0.0
        %513 = vmatpush.msra.mxu0 0.0
        %514 = vmatpush.msra.mxu0 0.0
        %515 = vmatpush.msra.mxu0 0.0
        %516 = vmatpush.msra.mxu0 0.0
        %517 = vmatpush.msra.mxu0 0.0
        %518 = vmatpush.msra.mxu0 0.0
        %519 = vmatpush.msra.mxu0 %v492
        %520 = vmatpush.msra.mxu0 %v491
        %521 = vmatmul.f32.gmra.mxu0 %v500
        %v522 = vpop.f32.mrf.mxu0
        %v523 = vadd.f32 0.0, %v522
        %524 = vmatmul.f32.gmra.mxu0 %v503
        %v525 = vpop.f32.mrf.mxu0
        %v526 = vadd.f32 0.0, %v525
        %527 = vdwg.mxu0
        %s528 = scalar_lea.vmem %s3, 40
        %v529 = vld [vmem:[%s528] sm:$0xff]
        %v530 = vld [vmem:[%s528 + $0x8] sm:$0xff]
        %v531 = vld [vmem:[%s528 + $0x10] sm:$0xff]
        %v532 = vld [vmem:[%s528 + $0x18] sm:$0xff]
        %v533 = vld [vmem:[%s528 + $0x20] sm:$0xf]
        %vm534 = vcmask 293888
        %v536 = vsel %vm534, %v523, 0
        %v539 = vsel %vm534, %v526, 0
        %vm541 = vcmask 1043456
        %v543 = vsel %vm541, %v533, 0
        %545 = vmatpush.msra.mxu0 0.0
        %546 = vmatpush.msra.mxu0 0.0
        %547 = vmatpush.msra.mxu0 0.0
        %548 = vmatpush.msra.mxu0 0.0
        %549 = vmatpush.msra.mxu0 0.0
        %550 = vmatpush.msra.mxu0 0.0
        %551 = vmatpush.msra.mxu0 0.0
        %552 = vmatpush.msra.mxu0 0.0
        %553 = vmatpush.msra.mxu0 0.0
        %554 = vmatpush.msra.mxu0 0.0
        %555 = vmatpush.msra.mxu0 0.0
        %556 = vmatpush.msra.mxu0 %v543
        %557 = vmatpush.msra.mxu0 %v532
        %558 = vmatpush.msra.mxu0 %v531
        %559 = vmatpush.msra.mxu0 %v530
        %560 = vmatpush.msra.mxu0 %v529
        %561 = vmatmul.f32.gmra.mxu0 %v536
        %v562 = vpop.f32.mrf.mxu0
        %v563 = vadd.f32 0.0, %v562
        %564 = vmatmul.f32.gmra.mxu0 %v539
        %v565 = vpop.f32.mrf.mxu0
        %v566 = vadd.f32 0.0, %v565
        %567 = vdwg.mxu0
        %v569 = vsel %vm534, %v491, 0
        %v572 = vsel %vm534, %v492, 0
        %v575 = vsel %vm541, %v497, 0
        %577 = vmatpush.msra.mxu0 0.0
        %578 = vmatpush.msra.mxu0 0.0
        %579 = vmatpush.msra.mxu0 0.0
        %580 = vmatpush.msra.mxu0 0.0
        %581 = vmatpush.msra.mxu0 0.0
        %582 = vmatpush.msra.mxu0 0.0
        %583 = vmatpush.msra.mxu0 0.0
        %584 = vmatpush.msra.mxu0 0.0
        %585 = vmatpush.msra.mxu0 0.0
        %586 = vmatpush.msra.mxu0 0.0
        %587 = vmatpush.msra.mxu0 0.0
        %588 = vmatpush.msra.mxu0 %v575
        %589 = vmatpush.msra.mxu0 %v496
        %590 = vmatpush.msra.mxu0 %v495
        %591 = vmatpush.msra.mxu0 %v494
        %592 = vmatpush.msra.mxu0 %v493
        %593 = vmatmul.f32.gmra.mxu0 %v569
        %v594 = vpop.f32.mrf.mxu0
        %v595 = vadd.f32 %v563, %v594
        %596 = vmatmul.f32.gmra.mxu0 %v572
        %v597 = vpop.f32.mrf.mxu0
        %v598 = vadd.f32 %v566, %v597
        %599 = vdwg.mxu0
        %v601 = vsel %vm498, %v478, 0
        %v604 = vsel %vm498, %v479, 0
        %606 = vmatpush.msra.mxu0 0.0
        %607 = vmatpush.msra.mxu0 0.0
        %608 = vmatpush.msra.mxu0 0.0
        %609 = vmatpush.msra.mxu0 0.0
        %610 = vmatpush.msra.mxu0 0.0
        %611 = vmatpush.msra.mxu0 0.0
        %612 = vmatpush.msra.mxu0 0.0
        %613 = vmatpush.msra.mxu0 0.0
        %614 = vmatpush.msra.mxu0 0.0
        %615 = vmatpush.msra.mxu0 0.0
        %616 = vmatpush.msra.mxu0 0.0
        %617 = vmatpush.msra.mxu0 0.0
        %618 = vmatpush.msra.mxu0 0.0
        %619 = vmatpush.msra.mxu0 0.0
        %620 = vmatpush.msra.mxu0 %v526
        %621 = vmatpush.msra.mxu0 %v523
        %622 = vmatmul.f32.gmra.mxu0 %v601
        %v623 = vpop.f32.mrf.mxu0
        %v624 = vadd.f32 0.0, %v623
        %625 = vmatmul.f32.gmra.mxu0 %v604
        %v626 = vpop.f32.mrf.mxu0
        %v627 = vadd.f32 0.0, %v626
        %628 = vdwg.mxu0
        %v629 = vsub.f32 %v624, %v491
        %v630 = vsub.f32 %v627, %v492
        %s631 = scalar_lea.vmem %s3, 80
        %v632 = vld [vmem:[%s631] sm:$0xff]
        %v633 = vld [vmem:[%s631 + $0x8] sm:$0xff]
        %v634 = vld [vmem:[%s631 + $0x10] sm:$0xff]
        %v635 = vld [vmem:[%s631 + $0x18] sm:$0xff]
        %v636 = vld [vmem:[%s631 + $0x20] sm:$0xf]
        %v638 = vsel %vm534, %v629, 0
        %v641 = vsel %vm534, %v630, 0
        %v644 = vsel %vm541, %v636, 0
        %646 = vmatpush.msra.mxu0 0.0
        %647 = vmatpush.msra.mxu0 0.0
        %648 = vmatpush.msra.mxu0 0.0
        %649 = vmatpush.msra.mxu0 0.0
        %650 = vmatpush.msra.mxu0 0.0
        %651 = vmatpush.msra.mxu0 0.0
        %652 = vmatpush.msra.mxu0 0.0
        %653 = vmatpush.msra.mxu0 0.0
        %654 = vmatpush.msra.mxu0 0.0
        %655 = vmatpush.msra.mxu0 0.0
        %656 = vmatpush.msra.mxu0 0.0
        %657 = vmatpush.msra.mxu0 %v644
        %658 = vmatpush.msra.mxu0 %v635
        %659 = vmatpush.msra.mxu0 %v634
        %660 = vmatpush.msra.mxu0 %v633
        %661 = vmatpush.msra.mxu0 %v632
        %662 = vmatmul.f32.gmra.mxu0 %v638
        %v663 = vpop.f32.mrf.mxu0
        %v664 = vadd.f32 0.0, %v663
        %665 = vmatmul.f32.gmra.mxu0 %v641
        %v666 = vpop.f32.mrf.mxu0
        %v667 = vadd.f32 0.0, %v666
        %668 = vdwg.mxu0
        %v669 = vadd.f32 %v595, %v664
        %v670 = vadd.f32 %v598, %v667
        %v671 = vadd.f32 %v669, %v465
        %v672 = vadd.f32 %v670, %v465
        %v673 = vxor.u32 %v671, 2147483648
        %v674 = vxor.u32 %v672, 2147483648
        %v675 = vmul.f32 %v673, 1.442695
        %v676 = vpow.pop %v675
        %v677 = vmul.f32 %v674, 1.442695
        %v678 = vpow.pop %v677
        %v679 = vadd.f32 %v676, 1.0
        %v680 = vadd.f32 %v678, 1.0
        %v681 = vrcp.pop %v679
        %v682 = vmul.f32 %v679, %v681
        %v683 = vsub.f32 1.0, %v682
        %v684 = vmul.f32 %v681, %v683
        %v685 = vadd.f32 %v681, %v684
        %vm686 = vweird.f32 %v679
        %vm687 = vweird.f32 %v681
        %vm688 = vmor %vm686, %vm687
        %v689 = vsel %vm688, %v681, %v685
        %v690 = vand.u32 2147483647, %v679
        %vm691 = vcmp.eq.f32.partialorder %v690, 8.507059e+37
        %v692 = vand.u32 %v679, 2147483648
        %v693 = vor.u32 1.1754944e-38, %v692
        %v694 = vsel %vm691, %v693, %v689
        %v695 = vmul.f32 1.0, %v694
        %v696 = vrcp.pop %v680
        %v697 = vmul.f32 %v680, %v696
        %v698 = vsub.f32 1.0, %v697
        %v699 = vmul.f32 %v696, %v698
        %v700 = vadd.f32 %v696, %v699
        %vm701 = vweird.f32 %v680
        %vm702 = vweird.f32 %v696
        %vm703 = vmor %vm701, %vm702
        %v704 = vsel %vm703, %v696, %v700
        %v705 = vand.u32 2147483647, %v680
        %vm706 = vcmp.eq.f32.partialorder %v705, 8.507059e+37
        %v707 = vand.u32 %v680, 2147483648
        %v708 = vor.u32 1.1754944e-38, %v707
        %v709 = vsel %vm706, %v708, %v704
        %v710 = vmul.f32 1.0, %v709
        %v711 = vmul.f32 %v695, %v471
        %v712 = vmul.f32 %v710, %v472
        %v713 = vld [vmem:[#allocation2] sm:$0xff]
        %v714 = vld [vmem:[#allocation2 + $0x8] sm:$0xff]
        %v715 = vld [vmem:[#allocation2 + $0x10] sm:$0xff]
        %v716 = vld [vmem:[#allocation2 + $0x18] sm:$0xff]
        %717 = vmatpush.msra.mxu0 0.0
        %718 = vmatpush.msra.mxu0 0.0
        %719 = vmatpush.msra.mxu0 0.0
        %720 = vmatpush.msra.mxu0 0.0
        %721 = vmatpush.msra.mxu0 0.0
        %722 = vmatpush.msra.mxu0 0.0
        %723 = vmatpush.msra.mxu0 0.0
        %724 = vmatpush.msra.mxu0 0.0
        %725 = vmatpush.msra.mxu0 0.0
        %726 = vmatpush.msra.mxu0 0.0
        %727 = vmatpush.msra.mxu0 0.0
        %728 = vmatpush.msra.mxu0 0.0
        %729 = vmatpush.msra.mxu0 0.0
        %730 = vmatpush.msra.mxu0 0.0
        %731 = vmatpush.msra.mxu0 %v712
        %732 = vmatpush.msra.mxu0 %v711
        %733 = vmatmul.f32.gmra.mxu0 %v500
        %v734 = vpop.f32.mrf.mxu0
        %v735 = vadd.f32 0.0, %v734
        %736 = vmatmul.f32.gmra.mxu0 %v503
        %v737 = vpop.f32.mrf.mxu0
        %v738 = vadd.f32 0.0, %v737
        %739 = vdwg.mxu0
        %s740 = scalar_lea.vmem [#allocation2], 32
        %v741 = vld [vmem:[%s740] sm:$0xff]
        %v742 = vld [vmem:[%s740 + $0x8] sm:$0xff]
        %v743 = vld [vmem:[%s740 + $0x10] sm:$0xff]
        %v744 = vld [vmem:[%s740 + $0x18] sm:$0xff]
        %vm745 = vcmask 261120
        %v747 = vsel %vm745, %v735, 0
        %v750 = vsel %vm745, %v738, 0
        %752 = vmatpush.msra.mxu0 0.0
        %753 = vmatpush.msra.mxu0 0.0
        %754 = vmatpush.msra.mxu0 0.0
        %755 = vmatpush.msra.mxu0 0.0
        %756 = vmatpush.msra.mxu0 0.0
        %757 = vmatpush.msra.mxu0 0.0
        %758 = vmatpush.msra.mxu0 0.0
        %759 = vmatpush.msra.mxu0 0.0
        %760 = vmatpush.msra.mxu0 0.0
        %761 = vmatpush.msra.mxu0 0.0
        %762 = vmatpush.msra.mxu0 0.0
        %763 = vmatpush.msra.mxu0 0.0
        %764 = vmatpush.msra.mxu0 %v744
        %765 = vmatpush.msra.mxu0 %v743
        %766 = vmatpush.msra.mxu0 %v742
        %767 = vmatpush.msra.mxu0 %v741
        %768 = vmatmul.f32.gmra.mxu0 %v747
        %v769 = vpop.f32.mrf.mxu0
        %v770 = vadd.f32 0.0, %v769
        %771 = vmatmul.f32.gmra.mxu0 %v750
        %v772 = vpop.f32.mrf.mxu0
        %v773 = vadd.f32 0.0, %v772
        %774 = vdwg.mxu0
        %v776 = vsel %vm745, %v711, 0
        %v779 = vsel %vm745, %v712, 0
        %781 = vmatpush.msra.mxu0 0.0
        %782 = vmatpush.msra.mxu0 0.0
        %783 = vmatpush.msra.mxu0 0.0
        %784 = vmatpush.msra.mxu0 0.0
        %785 = vmatpush.msra.mxu0 0.0
        %786 = vmatpush.msra.mxu0 0.0
        %787 = vmatpush.msra.mxu0 0.0
        %788 = vmatpush.msra.mxu0 0.0
        %789 = vmatpush.msra.mxu0 0.0
        %790 = vmatpush.msra.mxu0 0.0
        %791 = vmatpush.msra.mxu0 0.0
        %792 = vmatpush.msra.mxu0 0.0
        %793 = vmatpush.msra.mxu0 %v716
        %794 = vmatpush.msra.mxu0 %v715
        %795 = vmatpush.msra.mxu0 %v714
        %796 = vmatpush.msra.mxu0 %v713
        %797 = vmatmul.f32.gmra.mxu0 %v776
        %v798 = vpop.f32.mrf.mxu0
        %v799 = vadd.f32 %v770, %v798
        %800 = vmatmul.f32.gmra.mxu0 %v779
        %v801 = vpop.f32.mrf.mxu0
        %v802 = vadd.f32 %v773, %v801
        %803 = vdwg.mxu0
        %804 = vmatpush.msra.mxu0 0.0
        %805 = vmatpush.msra.mxu0 0.0
        %806 = vmatpush.msra.mxu0 0.0
        %807 = vmatpush.msra.mxu0 0.0
        %808 = vmatpush.msra.mxu0 0.0
        %809 = vmatpush.msra.mxu0 0.0
        %810 = vmatpush.msra.mxu0 0.0
        %811 = vmatpush.msra.mxu0 0.0
        %812 = vmatpush.msra.mxu0 0.0
        %813 = vmatpush.msra.mxu0 0.0
        %814 = vmatpush.msra.mxu0 0.0
        %815 = vmatpush.msra.mxu0 0.0
        %816 = vmatpush.msra.mxu0 0.0
        %817 = vmatpush.msra.mxu0 0.0
        %818 = vmatpush.msra.mxu0 %v738
        %819 = vmatpush.msra.mxu0 %v735
        %820 = vmatmul.f32.gmra.mxu0 %v601
        %v821 = vpop.f32.mrf.mxu0
        %v822 = vadd.f32 0.0, %v821
        %823 = vmatmul.f32.gmra.mxu0 %v604
        %v824 = vpop.f32.mrf.mxu0
        %v825 = vadd.f32 0.0, %v824
        %826 = vdwg.mxu0
        %v827 = vsub.f32 %v822, %v711
        %v828 = vsub.f32 %v825, %v712
        %s829 = scalar_lea.vmem [#allocation2], 64
        %v830 = vld [vmem:[%s829] sm:$0xff]
        %v831 = vld [vmem:[%s829 + $0x8] sm:$0xff]
        %v832 = vld [vmem:[%s829 + $0x10] sm:$0xff]
        %v833 = vld [vmem:[%s829 + $0x18] sm:$0xff]
        %v835 = vsel %vm745, %v827, 0
        %v838 = vsel %vm745, %v828, 0
        %840 = vmatpush.msra.mxu0 0.0
        %841 = vmatpush.msra.mxu0 0.0
        %842 = vmatpush.msra.mxu0 0.0
        %843 = vmatpush.msra.mxu0 0.0
        %844 = vmatpush.msra.mxu0 0.0
        %845 = vmatpush.msra.mxu0 0.0
        %846 = vmatpush.msra.mxu0 0.0
        %847 = vmatpush.msra.mxu0 0.0
        %848 = vmatpush.msra.mxu0 0.0
        %849 = vmatpush.msra.mxu0 0.0
        %850 = vmatpush.msra.mxu0 0.0
        %851 = vmatpush.msra.mxu0 0.0
        %852 = vmatpush.msra.mxu0 %v833
        %853 = vmatpush.msra.mxu0 %v832
        %854 = vmatpush.msra.mxu0 %v831
        %855 = vmatpush.msra.mxu0 %v830
        %856 = vmatmul.f32.gmra.mxu0 %v835
        %v857 = vpop.f32.mrf.mxu0
        %v858 = vadd.f32 0.0, %v857
        %859 = vmatmul.f32.gmra.mxu0 %v838
        %v860 = vpop.f32.mrf.mxu0
        %v861 = vadd.f32 0.0, %v860
        %862 = vdwg.mxu0
        %v863 = vadd.f32 %v799, %v858
        %v864 = vadd.f32 %v802, %v861
        %867 = vrot.lane.b32.xlu0 %v863, 64
        %v868 = vpop.permute.xlu0 %867
        %869 = vrot.lane.b32.xlu0 %v864, 64
        %v870 = vpop.permute.xlu0 %869
        %v873 = vadd.f32 %v671, %v868
        %v874 = vadd.f32 %v672, %v870
        %v875 = vtanh.pop %v873
        %v876 = vtanh.pop %v874
        %877 = vrot.lane.b32.xlu0 %v471, 32
        %v878 = vpop.permute.xlu0 %877
        %879 = vrot.lane.b32.xlu0 %v472, 32
        %v880 = vpop.permute.xlu0 %879
        %v883 = vmul.f32 %v695, %v878
        %v884 = vmul.f32 %v710, %v880
        %v885 = vsub.f32 1.0, %v695
        %v886 = vsub.f32 1.0, %v710
        %889 = vrot.lane.b32.xlu0 %v875, 96
        %v890 = vpop.permute.xlu0 %889
        %891 = vrot.lane.b32.xlu0 %v876, 96
        %v892 = vpop.permute.xlu0 %891
        %v895 = vmul.f32 %v885, %v890
        %v896 = vmul.f32 %v886, %v892
        %v897 = vadd.f32 %v883, %v895
        %v898 = vadd.f32 %v884, %v896
        %901 = vrot.lane.b32.xlu0 %v897, 96
        %v902 = vpop.permute.xlu0 %901
        %903 = vrot.lane.b32.xlu0 %v898, 96
        %v904 = vpop.permute.xlu0 %903
        %909 = vrot.lane.b32.xlu0 %v474, 32
        %v910 = vpop.permute.xlu0 %909
        %911 = vrot.lane.b32.xlu0 %v475, 32
        %v912 = vpop.permute.xlu0 %911
        %v915 = vsel %vm745, %v902, %v910
        %v916 = vsel %vm745, %v904, %v912
        %v917 = vld [vmem:[#allocation4] sm:$0xff]
        %v918 = vld [vmem:[#allocation4 + $0x8] sm:$0xff]
        %v919 = vld [vmem:[#allocation4 + $0x10] sm:$0xff]
        %v920 = vld [vmem:[#allocation4 + $0x18] sm:$0xff]
        %v921 = vld [vmem:[#allocation4 + $0x20] sm:$0xff]
        %v922 = vld [vmem:[#allocation4 + $0x28] sm:$0xff]
        %v923 = vld [vmem:[#allocation4 + $0x30] sm:$0xff]
        %v924 = vld [vmem:[#allocation4 + $0x38] sm:$0xff]
        %925 = vmatpush.msra.mxu0 0.0
        %926 = vmatpush.msra.mxu0 0.0
        %927 = vmatpush.msra.mxu0 0.0
        %928 = vmatpush.msra.mxu0 0.0
        %929 = vmatpush.msra.mxu0 0.0
        %930 = vmatpush.msra.mxu0 0.0
        %931 = vmatpush.msra.mxu0 0.0
        %932 = vmatpush.msra.mxu0 0.0
        %933 = vmatpush.msra.mxu0 0.0
        %934 = vmatpush.msra.mxu0 0.0
        %935 = vmatpush.msra.mxu0 0.0
        %936 = vmatpush.msra.mxu0 0.0
        %937 = vmatpush.msra.mxu0 0.0
        %938 = vmatpush.msra.mxu0 0.0
        %939 = vmatpush.msra.mxu0 %v916
        %940 = vmatpush.msra.mxu0 %v915
        %941 = vmatmul.f32.gmra.mxu0 %v500
        %v942 = vpop.f32.mrf.mxu0
        %v943 = vadd.f32 0.0, %v942
        %944 = vmatmul.f32.gmra.mxu0 %v503
        %v945 = vpop.f32.mrf.mxu0
        %v946 = vadd.f32 0.0, %v945
        %947 = vdwg.mxu0
        %s948 = scalar_lea.vmem [#allocation4], 64
        %v949 = vld [vmem:[%s948] sm:$0xff]
        %v950 = vld [vmem:[%s948 + $0x8] sm:$0xff]
        %v951 = vld [vmem:[%s948 + $0x10] sm:$0xff]
        %v952 = vld [vmem:[%s948 + $0x18] sm:$0xff]
        %v953 = vld [vmem:[%s948 + $0x20] sm:$0xff]
        %v954 = vld [vmem:[%s948 + $0x28] sm:$0xff]
        %v955 = vld [vmem:[%s948 + $0x30] sm:$0xff]
        %v956 = vld [vmem:[%s948 + $0x38] sm:$0xff]
        %vm957 = vcmask 523264
        %v959 = vsel %vm957, %v943, 0
        %v962 = vsel %vm957, %v946, 0
        %964 = vmatpush.msra.mxu0 0.0
        %965 = vmatpush.msra.mxu0 0.0
        %966 = vmatpush.msra.mxu0 0.0
        %967 = vmatpush.msra.mxu0 0.0
        %968 = vmatpush.msra.mxu0 0.0
        %969 = vmatpush.msra.mxu0 0.0
        %970 = vmatpush.msra.mxu0 0.0
        %971 = vmatpush.msra.mxu0 0.0
        %972 = vmatpush.msra.mxu0 %v956
        %973 = vmatpush.msra.mxu0 %v955
        %974 = vmatpush.msra.mxu0 %v954
        %975 = vmatpush.msra.mxu0 %v953
        %976 = vmatpush.msra.mxu0 %v952
        %977 = vmatpush.msra.mxu0 %v951
        %978 = vmatpush.msra.mxu0 %v950
        %979 = vmatpush.msra.mxu0 %v949
        %980 = vmatmul.f32.gmra.mxu0 %v959
        %v981 = vpop.f32.mrf.mxu0
        %v982 = vadd.f32 0.0, %v981
        %983 = vmatmul.f32.gmra.mxu0 %v962
        %v984 = vpop.f32.mrf.mxu0
        %v985 = vadd.f32 0.0, %v984
        %986 = vdwg.mxu0
        %v988 = vsel %vm957, %v915, 0
        %v991 = vsel %vm957, %v916, 0
        %993 = vmatpush.msra.mxu0 0.0
        %994 = vmatpush.msra.mxu0 0.0
        %995 = vmatpush.msra.mxu0 0.0
        %996 = vmatpush.msra.mxu0 0.0
        %997 = vmatpush.msra.mxu0 0.0
        %998 = vmatpush.msra.mxu0 0.0
        %999 = vmatpush.msra.mxu0 0.0
        %1000 = vmatpush.msra.mxu0 0.0
        %1001 = vmatpush.msra.mxu0 %v924
        %1002 = vmatpush.msra.mxu0 %v923
        %1003 = vmatpush.msra.mxu0 %v922
        %1004 = vmatpush.msra.mxu0 %v921
        %1005 = vmatpush.msra.mxu0 %v920
        %1006 = vmatpush.msra.mxu0 %v919
        %1007 = vmatpush.msra.mxu0 %v918
        %1008 = vmatpush.msra.mxu0 %v917
        %1009 = vmatmul.f32.gmra.mxu0 %v988
        %v1010 = vpop.f32.mrf.mxu0
        %v1011 = vadd.f32 %v982, %v1010
        %1012 = vmatmul.f32.gmra.mxu0 %v991
        %v1013 = vpop.f32.mrf.mxu0
        %v1014 = vadd.f32 %v985, %v1013
        %1015 = vdwg.mxu0
        %1016 = vmatpush.msra.mxu0 0.0
        %1017 = vmatpush.msra.mxu0 0.0
        %1018 = vmatpush.msra.mxu0 0.0
        %1019 = vmatpush.msra.mxu0 0.0
        %1020 = vmatpush.msra.mxu0 0.0
        %1021 = vmatpush.msra.mxu0 0.0
        %1022 = vmatpush.msra.mxu0 0.0
        %1023 = vmatpush.msra.mxu0 0.0
        %1024 = vmatpush.msra.mxu0 0.0
        %1025 = vmatpush.msra.mxu0 0.0
        %1026 = vmatpush.msra.mxu0 0.0
        %1027 = vmatpush.msra.mxu0 0.0
        %1028 = vmatpush.msra.mxu0 0.0
        %1029 = vmatpush.msra.mxu0 0.0
        %1030 = vmatpush.msra.mxu0 %v946
        %1031 = vmatpush.msra.mxu0 %v943
        %1032 = vmatmul.f32.gmra.mxu0 %v601
        %v1033 = vpop.f32.mrf.mxu0
        %v1034 = vadd.f32 0.0, %v1033
        %1035 = vmatmul.f32.gmra.mxu0 %v604
        %v1036 = vpop.f32.mrf.mxu0
        %v1037 = vadd.f32 0.0, %v1036
        %1038 = vdwg.mxu0
        %v1039 = vsub.f32 %v1034, %v915
        %v1040 = vsub.f32 %v1037, %v916
        %s1041 = scalar_lea.vmem [#allocation4], 128
        %v1042 = vld [vmem:[%s1041] sm:$0xff]
        %v1043 = vld [vmem:[%s1041 + $0x8] sm:$0xff]
        %v1044 = vld [vmem:[%s1041 + $0x10] sm:$0xff]
        %v1045 = vld [vmem:[%s1041 + $0x18] sm:$0xff]
        %v1046 = vld [vmem:[%s1041 + $0x20] sm:$0xff]
        %v1047 = vld [vmem:[%s1041 + $0x28] sm:$0xff]
        %v1048 = vld [vmem:[%s1041 + $0x30] sm:$0xff]
        %v1049 = vld [vmem:[%s1041 + $0x38] sm:$0xff]
        %v1051 = vsel %vm957, %v1039, 0
        %v1054 = vsel %vm957, %v1040, 0
        %1056 = vmatpush.msra.mxu0 0.0
        %1057 = vmatpush.msra.mxu0 0.0
        %1058 = vmatpush.msra.mxu0 0.0
        %1059 = vmatpush.msra.mxu0 0.0
        %1060 = vmatpush.msra.mxu0 0.0
        %1061 = vmatpush.msra.mxu0 0.0
        %1062 = vmatpush.msra.mxu0 0.0
        %1063 = vmatpush.msra.mxu0 0.0
        %1064 = vmatpush.msra.mxu0 %v1049
        %1065 = vmatpush.msra.mxu0 %v1048
        %1066 = vmatpush.msra.mxu0 %v1047
        %1067 = vmatpush.msra.mxu0 %v1046
        %1068 = vmatpush.msra.mxu0 %v1045
        %1069 = vmatpush.msra.mxu0 %v1044
        %1070 = vmatpush.msra.mxu0 %v1043
        %1071 = vmatpush.msra.mxu0 %v1042
        %1072 = vmatmul.f32.gmra.mxu0 %v1051
        %v1073 = vpop.f32.mrf.mxu0
        %v1074 = vadd.f32 0.0, %v1073
        %1075 = vmatmul.f32.gmra.mxu0 %v1054
        %v1076 = vpop.f32.mrf.mxu0
        %v1077 = vadd.f32 0.0, %v1076
        %1078 = vdwg.mxu0
        %v1079 = vadd.f32 %v1011, %v1074
        %v1080 = vadd.f32 %v1014, %v1077
        %v1081 = vadd.f32 %v1079, %v469
        %v1082 = vadd.f32 %v1080, %v469
        %v1083 = vxor.u32 %v1081, 2147483648
        %v1084 = vxor.u32 %v1082, 2147483648
        %v1085 = vmul.f32 %v1083, 1.442695
        %v1086 = vpow.pop %v1085
        %v1087 = vmul.f32 %v1084, 1.442695
        %v1088 = vpow.pop %v1087
        %v1089 = vadd.f32 %v1086, 1.0
        %v1090 = vadd.f32 %v1088, 1.0
        %v1091 = vrcp.pop %v1089
        %v1092 = vmul.f32 %v1089, %v1091
        %v1093 = vsub.f32 1.0, %v1092
        %v1094 = vmul.f32 %v1091, %v1093
        %v1095 = vadd.f32 %v1091, %v1094
        %vm1096 = vweird.f32 %v1089
        %vm1097 = vweird.f32 %v1091
        %vm1098 = vmor %vm1096, %vm1097
        %v1099 = vsel %vm1098, %v1091, %v1095
        %v1100 = vand.u32 2147483647, %v1089
        %vm1101 = vcmp.eq.f32.partialorder %v1100, 8.507059e+37
        %v1102 = vand.u32 %v1089, 2147483648
        %v1103 = vor.u32 1.1754944e-38, %v1102
        %v1104 = vsel %vm1101, %v1103, %v1099
        %v1105 = vmul.f32 1.0, %v1104
        %v1106 = vrcp.pop %v1090
        %v1107 = vmul.f32 %v1090, %v1106
        %v1108 = vsub.f32 1.0, %v1107
        %v1109 = vmul.f32 %v1106, %v1108
        %v1110 = vadd.f32 %v1106, %v1109
        %vm1111 = vweird.f32 %v1090
        %vm1112 = vweird.f32 %v1106
        %vm1113 = vmor %vm1111, %vm1112
        %v1114 = vsel %vm1113, %v1106, %v1110
        %v1115 = vand.u32 2147483647, %v1090
        %vm1116 = vcmp.eq.f32.partialorder %v1115, 8.507059e+37
        %v1117 = vand.u32 %v1090, 2147483648
        %v1118 = vor.u32 1.1754944e-38, %v1117
        %v1119 = vsel %vm1116, %v1118, %v1114
        %v1120 = vmul.f32 1.0, %v1119
        %v1121 = vmul.f32 %v1105, %v474
        %v1122 = vmul.f32 %v1120, %v475
        %v1123 = vld [vmem:[#allocation6] sm:$0xff]
        %v1124 = vld [vmem:[#allocation6 + $0x8] sm:$0xff]
        %v1125 = vld [vmem:[#allocation6 + $0x10] sm:$0xff]
        %v1126 = vld [vmem:[#allocation6 + $0x18] sm:$0xff]
        %1127 = vmatpush.msra.mxu0 0.0
        %1128 = vmatpush.msra.mxu0 0.0
        %1129 = vmatpush.msra.mxu0 0.0
        %1130 = vmatpush.msra.mxu0 0.0
        %1131 = vmatpush.msra.mxu0 0.0
        %1132 = vmatpush.msra.mxu0 0.0
        %1133 = vmatpush.msra.mxu0 0.0
        %1134 = vmatpush.msra.mxu0 0.0
        %1135 = vmatpush.msra.mxu0 0.0
        %1136 = vmatpush.msra.mxu0 0.0
        %1137 = vmatpush.msra.mxu0 0.0
        %1138 = vmatpush.msra.mxu0 0.0
        %1139 = vmatpush.msra.mxu0 0.0
        %1140 = vmatpush.msra.mxu0 0.0
        %1141 = vmatpush.msra.mxu0 %v1122
        %1142 = vmatpush.msra.mxu0 %v1121
        %1143 = vmatmul.f32.gmra.mxu0 %v500
        %v1144 = vpop.f32.mrf.mxu0
        %v1145 = vadd.f32 0.0, %v1144
        %1146 = vmatmul.f32.gmra.mxu0 %v503
        %v1147 = vpop.f32.mrf.mxu0
        %v1148 = vadd.f32 0.0, %v1147
        %1149 = vdwg.mxu0
        %s1150 = scalar_lea.vmem [#allocation6], 32
        %v1151 = vld [vmem:[%s1150] sm:$0xff]
        %v1152 = vld [vmem:[%s1150 + $0x8] sm:$0xff]
        %v1153 = vld [vmem:[%s1150 + $0x10] sm:$0xff]
        %v1154 = vld [vmem:[%s1150 + $0x18] sm:$0xff]
        %v1156 = vsel %vm745, %v1145, 0
        %v1159 = vsel %vm745, %v1148, 0
        %1161 = vmatpush.msra.mxu0 0.0
        %1162 = vmatpush.msra.mxu0 0.0
        %1163 = vmatpush.msra.mxu0 0.0
        %1164 = vmatpush.msra.mxu0 0.0
        %1165 = vmatpush.msra.mxu0 0.0
        %1166 = vmatpush.msra.mxu0 0.0
        %1167 = vmatpush.msra.mxu0 0.0
        %1168 = vmatpush.msra.mxu0 0.0
        %1169 = vmatpush.msra.mxu0 0.0
        %1170 = vmatpush.msra.mxu0 0.0
        %1171 = vmatpush.msra.mxu0 0.0
        %1172 = vmatpush.msra.mxu0 0.0
        %1173 = vmatpush.msra.mxu0 %v1154
        %1174 = vmatpush.msra.mxu0 %v1153
        %1175 = vmatpush.msra.mxu0 %v1152
        %1176 = vmatpush.msra.mxu0 %v1151
        %1177 = vmatmul.f32.gmra.mxu0 %v1156
        %v1178 = vpop.f32.mrf.mxu0
        %v1179 = vadd.f32 0.0, %v1178
        %1180 = vmatmul.f32.gmra.mxu0 %v1159
        %v1181 = vpop.f32.mrf.mxu0
        %v1182 = vadd.f32 0.0, %v1181
        %1183 = vdwg.mxu0
        %v1185 = vsel %vm745, %v1121, 0
        %v1188 = vsel %vm745, %v1122, 0
        %1190 = vmatpush.msra.mxu0 0.0
        %1191 = vmatpush.msra.mxu0 0.0
        %1192 = vmatpush.msra.mxu0 0.0
        %1193 = vmatpush.msra.mxu0 0.0
        %1194 = vmatpush.msra.mxu0 0.0
        %1195 = vmatpush.msra.mxu0 0.0
        %1196 = vmatpush.msra.mxu0 0.0
        %1197 = vmatpush.msra.mxu0 0.0
        %1198 = vmatpush.msra.mxu0 0.0
        %1199 = vmatpush.msra.mxu0 0.0
        %1200 = vmatpush.msra.mxu0 0.0
        %1201 = vmatpush.msra.mxu0 0.0
        %1202 = vmatpush.msra.mxu0 %v1126
        %1203 = vmatpush.msra.mxu0 %v1125
        %1204 = vmatpush.msra.mxu0 %v1124
        %1205 = vmatpush.msra.mxu0 %v1123
        %1206 = vmatmul.f32.gmra.mxu0 %v1185
        %v1207 = vpop.f32.mrf.mxu0
        %v1208 = vadd.f32 %v1179, %v1207
        %1209 = vmatmul.f32.gmra.mxu0 %v1188
        %v1210 = vpop.f32.mrf.mxu0
        %v1211 = vadd.f32 %v1182, %v1210
        %1212 = vdwg.mxu0
        %1213 = vmatpush.msra.mxu0 0.0
        %1214 = vmatpush.msra.mxu0 0.0
        %1215 = vmatpush.msra.mxu0 0.0
        %1216 = vmatpush.msra.mxu0 0.0
        %1217 = vmatpush.msra.mxu0 0.0
        %1218 = vmatpush.msra.mxu0 0.0
        %1219 = vmatpush.msra.mxu0 0.0
        %1220 = vmatpush.msra.mxu0 0.0
        %1221 = vmatpush.msra.mxu0 0.0
        %1222 = vmatpush.msra.mxu0 0.0
        %1223 = vmatpush.msra.mxu0 0.0
        %1224 = vmatpush.msra.mxu0 0.0
        %1225 = vmatpush.msra.mxu0 0.0
        %1226 = vmatpush.msra.mxu0 0.0
        %1227 = vmatpush.msra.mxu0 %v1148
        %1228 = vmatpush.msra.mxu0 %v1145
        %1229 = vmatmul.f32.gmra.mxu0 %v601
        %v1230 = vpop.f32.mrf.mxu0
        %v1231 = vadd.f32 0.0, %v1230
        %1232 = vmatmul.f32.gmra.mxu0 %v604
        %v1233 = vpop.f32.mrf.mxu0
        %v1234 = vadd.f32 0.0, %v1233
        %1235 = vdwg.mxu0
        %v1236 = vsub.f32 %v1231, %v1121
        %v1237 = vsub.f32 %v1234, %v1122
        %s1238 = scalar_lea.vmem [#allocation6], 64
        %v1239 = vld [vmem:[%s1238] sm:$0xff]
        %v1240 = vld [vmem:[%s1238 + $0x8] sm:$0xff]
        %v1241 = vld [vmem:[%s1238 + $0x10] sm:$0xff]
        %v1242 = vld [vmem:[%s1238 + $0x18] sm:$0xff]
        %v1244 = vsel %vm745, %v1236, 0
        %v1247 = vsel %vm745, %v1237, 0
        %1249 = vmatpush.msra.mxu0 0.0
        %1250 = vmatpush.msra.mxu0 0.0
        %1251 = vmatpush.msra.mxu0 0.0
        %1252 = vmatpush.msra.mxu0 0.0
        %1253 = vmatpush.msra.mxu0 0.0
        %1254 = vmatpush.msra.mxu0 0.0
        %1255 = vmatpush.msra.mxu0 0.0
        %1256 = vmatpush.msra.mxu0 0.0
        %1257 = vmatpush.msra.mxu0 0.0
        %1258 = vmatpush.msra.mxu0 0.0
        %1259 = vmatpush.msra.mxu0 0.0
        %1260 = vmatpush.msra.mxu0 0.0
        %1261 = vmatpush.msra.mxu0 %v1242
        %1262 = vmatpush.msra.mxu0 %v1241
        %1263 = vmatpush.msra.mxu0 %v1240
        %1264 = vmatpush.msra.mxu0 %v1239
        %1265 = vmatmul.f32.gmra.mxu0 %v1244
        %v1266 = vpop.f32.mrf.mxu0
        %v1267 = vadd.f32 0.0, %v1266
        %1268 = vmatmul.f32.gmra.mxu0 %v1247
        %v1269 = vpop.f32.mrf.mxu0
        %v1270 = vadd.f32 0.0, %v1269
        %1271 = vdwg.mxu0
        %v1272 = vadd.f32 %v1208, %v1267
        %v1273 = vadd.f32 %v1211, %v1270
        %1276 = vrot.lane.b32.xlu0 %v1272, 64
        %v1277 = vpop.permute.xlu0 %1276
        %1278 = vrot.lane.b32.xlu0 %v1273, 64
        %v1279 = vpop.permute.xlu0 %1278
        %v1282 = vadd.f32 %v1081, %v1277
        %v1283 = vadd.f32 %v1082, %v1279
        %v1284 = vtanh.pop %v1282
        %v1285 = vtanh.pop %v1283
        %v1286 = vmul.f32 %v1105, %v910
        %v1287 = vmul.f32 %v1120, %v912
        %v1288 = vsub.f32 1.0, %v1105
        %v1289 = vsub.f32 1.0, %v1120
        %1292 = vrot.lane.b32.xlu0 %v1284, 96
        %v1293 = vpop.permute.xlu0 %1292
        %1294 = vrot.lane.b32.xlu0 %v1285, 96
        %v1295 = vpop.permute.xlu0 %1294
        %v1298 = vmul.f32 %v1288, %v1293
        %v1299 = vmul.f32 %v1289, %v1295
        %v1300 = vadd.f32 %v1286, %v1298
        %v1301 = vadd.f32 %v1287, %v1299
        %1304 = vrot.lane.b32.xlu0 %v1300, 96
        %v1305 = vpop.permute.xlu0 %1304
        %1306 = vrot.lane.b32.xlu0 %v1301, 96
        %v1307 = vpop.permute.xlu0 %1306
        %1310 = vst.msk [vmem:[%s457] sm:$0xff] %vm745, %v1305
        %1311 = vst.msk [vmem:[%s457 + $0x8] sm:$0xff] %vm745, %v1307
        %s1312 = scalar_lea.vmem %s442, 16
        %v1313 = vld [vmem:[%s1312] sm:$0xff]
        %v1314 = vld [vmem:[%s1312 + $0x8] sm:$0xff]
        %v1315 = vadd.f32 %v1313, %v1313
        %v1316 = vadd.f32 %v1314, %v1314
        %s1317 = scalar_lea.vmem %s447, 16
        %v1318 = vld [vmem:[%s1317] sm:$0xff]
        %v1319 = vld [vmem:[%s1317 + $0x8] sm:$0xff]
        %1320 = vrot.lane.b32.xlu0 %v897, 100
        %v1321 = vpop.permute.xlu0 %1320
        %1322 = vrot.lane.b32.xlu0 %v898, 100
        %v1323 = vpop.permute.xlu0 %1322
        %v1326 = vsel %vm490, %v1318, %v1321
        %v1327 = vsel %vm490, %v1319, %v1323
        %v1328 = vld [vmem:[%s3] sm:$0xff]
        %v1329 = vld [vmem:[%s3 + $0x8] sm:$0xff]
        %v1330 = vld [vmem:[%s3 + $0x10] sm:$0xff]
        %v1331 = vld [vmem:[%s3 + $0x18] sm:$0xff]
        %v1332 = vld [vmem:[%s3 + $0x20] sm:$0xf]
        %v1334 = vsel %vm498, %v1313, 0
        %v1337 = vsel %vm498, %v1314, 0
        %1339 = vmatpush.msra.mxu0 0.0
        %1340 = vmatpush.msra.mxu0 0.0
        %1341 = vmatpush.msra.mxu0 0.0
        %1342 = vmatpush.msra.mxu0 0.0
        %1343 = vmatpush.msra.mxu0 0.0
        %1344 = vmatpush.msra.mxu0 0.0
        %1345 = vmatpush.msra.mxu0 0.0
        %1346 = vmatpush.msra.mxu0 0.0
        %1347 = vmatpush.msra.mxu0 0.0
        %1348 = vmatpush.msra.mxu0 0.0
        %1349 = vmatpush.msra.mxu0 0.0
        %1350 = vmatpush.msra.mxu0 0.0
        %1351 = vmatpush.msra.mxu0 0.0
        %1352 = vmatpush.msra.mxu0 0.0
        %1353 = vmatpush.msra.mxu0 %v1327
        %1354 = vmatpush.msra.mxu0 %v1326
        %1355 = vmatmul.f32.gmra.mxu0 %v1334
        %v1356 = vpop.f32.mrf.mxu0
        %v1357 = vadd.f32 0.0, %v1356
        %1358 = vmatmul.f32.gmra.mxu0 %v1337
        %v1359 = vpop.f32.mrf.mxu0
        %v1360 = vadd.f32 0.0, %v1359
        %1361 = vdwg.mxu0
        %v1362 = vld [vmem:[%s528] sm:$0xff]
        %v1363 = vld [vmem:[%s528 + $0x8] sm:$0xff]
        %v1364 = vld [vmem:[%s528 + $0x10] sm:$0xff]
        %v1365 = vld [vmem:[%s528 + $0x18] sm:$0xff]
        %v1366 = vld [vmem:[%s528 + $0x20] sm:$0xf]
        %v1368 = vsel %vm534, %v1357, 0
        %v1371 = vsel %vm534, %v1360, 0
        %v1374 = vsel %vm541, %v1366, 0
        %1376 = vmatpush.msra.mxu0 0.0
        %1377 = vmatpush.msra.mxu0 0.0
        %1378 = vmatpush.msra.mxu0 0.0
        %1379 = vmatpush.msra.mxu0 0.0
        %1380 = vmatpush.msra.mxu0 0.0
        %1381 = vmatpush.msra.mxu0 0.0
        %1382 = vmatpush.msra.mxu0 0.0
        %1383 = vmatpush.msra.mxu0 0.0
        %1384 = vmatpush.msra.mxu0 0.0
        %1385 = vmatpush.msra.mxu0 0.0
        %1386 = vmatpush.msra.mxu0 0.0
        %1387 = vmatpush.msra.mxu0 %v1374
        %1388 = vmatpush.msra.mxu0 %v1365
        %1389 = vmatpush.msra.mxu0 %v1364
        %1390 = vmatpush.msra.mxu0 %v1363
        %1391 = vmatpush.msra.mxu0 %v1362
        %1392 = vmatmul.f32.gmra.mxu0 %v1368
        %v1393 = vpop.f32.mrf.mxu0
        %v1394 = vadd.f32 0.0, %v1393
        %1395 = vmatmul.f32.gmra.mxu0 %v1371
        %v1396 = vpop.f32.mrf.mxu0
        %v1397 = vadd.f32 0.0, %v1396
        %1398 = vdwg.mxu0
        %v1400 = vsel %vm534, %v1326, 0
        %v1403 = vsel %vm534, %v1327, 0
        %v1406 = vsel %vm541, %v1332, 0
        %1408 = vmatpush.msra.mxu0 0.0
        %1409 = vmatpush.msra.mxu0 0.0
        %1410 = vmatpush.msra.mxu0 0.0
        %1411 = vmatpush.msra.mxu0 0.0
        %1412 = vmatpush.msra.mxu0 0.0
        %1413 = vmatpush.msra.mxu0 0.0
        %1414 = vmatpush.msra.mxu0 0.0
        %1415 = vmatpush.msra.mxu0 0.0
        %1416 = vmatpush.msra.mxu0 0.0
        %1417 = vmatpush.msra.mxu0 0.0
        %1418 = vmatpush.msra.mxu0 0.0
        %1419 = vmatpush.msra.mxu0 %v1406
        %1420 = vmatpush.msra.mxu0 %v1331
        %1421 = vmatpush.msra.mxu0 %v1330
        %1422 = vmatpush.msra.mxu0 %v1329
        %1423 = vmatpush.msra.mxu0 %v1328
        %1424 = vmatmul.f32.gmra.mxu0 %v1400
        %v1425 = vpop.f32.mrf.mxu0
        %v1426 = vadd.f32 %v1394, %v1425
        %1427 = vmatmul.f32.gmra.mxu0 %v1403
        %v1428 = vpop.f32.mrf.mxu0
        %v1429 = vadd.f32 %v1397, %v1428
        %1430 = vdwg.mxu0
        %v1432 = vsel %vm498, %v1315, 0
        %v1435 = vsel %vm498, %v1316, 0
        %1437 = vmatpush.msra.mxu0 0.0
        %1438 = vmatpush.msra.mxu0 0.0
        %1439 = vmatpush.msra.mxu0 0.0
        %1440 = vmatpush.msra.mxu0 0.0
        %1441 = vmatpush.msra.mxu0 0.0
        %1442 = vmatpush.msra.mxu0 0.0
        %1443 = vmatpush.msra.mxu0 0.0
        %1444 = vmatpush.msra.mxu0 0.0
        %1445 = vmatpush.msra.mxu0 0.0
        %1446 = vmatpush.msra.mxu0 0.0
        %1447 = vmatpush.msra.mxu0 0.0
        %1448 = vmatpush.msra.mxu0 0.0
        %1449 = vmatpush.msra.mxu0 0.0
        %1450 = vmatpush.msra.mxu0 0.0
        %1451 = vmatpush.msra.mxu0 %v1360
        %1452 = vmatpush.msra.mxu0 %v1357
        %1453 = vmatmul.f32.gmra.mxu0 %v1432
        %v1454 = vpop.f32.mrf.mxu0
        %v1455 = vadd.f32 0.0, %v1454
        %1456 = vmatmul.f32.gmra.mxu0 %v1435
        %v1457 = vpop.f32.mrf.mxu0
        %v1458 = vadd.f32 0.0, %v1457
        %1459 = vdwg.mxu0
        %v1460 = vsub.f32 %v1455, %v1326
        %v1461 = vsub.f32 %v1458, %v1327
        %v1462 = vld [vmem:[%s631] sm:$0xff]
        %v1463 = vld [vmem:[%s631 + $0x8] sm:$0xff]
        %v1464 = vld [vmem:[%s631 + $0x10] sm:$0xff]
        %v1465 = vld [vmem:[%s631 + $0x18] sm:$0xff]
        %v1466 = vld [vmem:[%s631 + $0x20] sm:$0xf]
        %v1468 = vsel %vm534, %v1460, 0
        %v1471 = vsel %vm534, %v1461, 0
        %v1474 = vsel %vm541, %v1466, 0
        %1476 = vmatpush.msra.mxu0 0.0
        %1477 = vmatpush.msra.mxu0 0.0
        %1478 = vmatpush.msra.mxu0 0.0
        %1479 = vmatpush.msra.mxu0 0.0
        %1480 = vmatpush.msra.mxu0 0.0
        %1481 = vmatpush.msra.mxu0 0.0
        %1482 = vmatpush.msra.mxu0 0.0
        %1483 = vmatpush.msra.mxu0 0.0
        %1484 = vmatpush.msra.mxu0 0.0
        %1485 = vmatpush.msra.mxu0 0.0
        %1486 = vmatpush.msra.mxu0 0.0
        %1487 = vmatpush.msra.mxu0 %v1474
        %1488 = vmatpush.msra.mxu0 %v1465
        %1489 = vmatpush.msra.mxu0 %v1464
        %1490 = vmatpush.msra.mxu0 %v1463
        %1491 = vmatpush.msra.mxu0 %v1462
        %1492 = vmatmul.f32.gmra.mxu0 %v1468
        %v1493 = vpop.f32.mrf.mxu0
        %v1494 = vadd.f32 0.0, %v1493
        %1495 = vmatmul.f32.gmra.mxu0 %v1471
        %v1496 = vpop.f32.mrf.mxu0
        %v1497 = vadd.f32 0.0, %v1496
        %1498 = vdwg.mxu0
        %v1499 = vadd.f32 %v1426, %v1494
        %v1500 = vadd.f32 %v1429, %v1497
        %v1501 = vadd.f32 %v1499, %v465
        %v1502 = vadd.f32 %v1500, %v465
        %v1503 = vxor.u32 %v1501, 2147483648
        %v1504 = vxor.u32 %v1502, 2147483648
        %v1505 = vmul.f32 %v1503, 1.442695
        %v1506 = vpow.pop %v1505
        %v1507 = vmul.f32 %v1504, 1.442695
        %v1508 = vpow.pop %v1507
        %v1509 = vadd.f32 %v1506, 1.0
        %v1510 = vadd.f32 %v1508, 1.0
        %v1511 = vrcp.pop %v1509
        %v1512 = vmul.f32 %v1509, %v1511
        %v1513 = vsub.f32 1.0, %v1512
        %v1514 = vmul.f32 %v1511, %v1513
        %v1515 = vadd.f32 %v1511, %v1514
        %vm1516 = vweird.f32 %v1509
        %vm1517 = vweird.f32 %v1511
        %vm1518 = vmor %vm1516, %vm1517
        %v1519 = vsel %vm1518, %v1511, %v1515
        %v1520 = vand.u32 2147483647, %v1509
        %vm1521 = vcmp.eq.f32.partialorder %v1520, 8.507059e+37
        %v1522 = vand.u32 %v1509, 2147483648
        %v1523 = vor.u32 1.1754944e-38, %v1522
        %v1524 = vsel %vm1521, %v1523, %v1519
        %v1525 = vmul.f32 1.0, %v1524
        %v1526 = vrcp.pop %v1510
        %v1527 = vmul.f32 %v1510, %v1526
        %v1528 = vsub.f32 1.0, %v1527
        %v1529 = vmul.f32 %v1526, %v1528
        %v1530 = vadd.f32 %v1526, %v1529
        %vm1531 = vweird.f32 %v1510
        %vm1532 = vweird.f32 %v1526
        %vm1533 = vmor %vm1531, %vm1532
        %v1534 = vsel %vm1533, %v1526, %v1530
        %v1535 = vand.u32 2147483647, %v1510
        %vm1536 = vcmp.eq.f32.partialorder %v1535, 8.507059e+37
        %v1537 = vand.u32 %v1510, 2147483648
        %v1538 = vor.u32 1.1754944e-38, %v1537
        %v1539 = vsel %vm1536, %v1538, %v1534
        %v1540 = vmul.f32 1.0, %v1539
        %v1541 = vmul.f32 %v1525, %v902
        %v1542 = vmul.f32 %v1540, %v904
        %v1543 = vld [vmem:[#allocation2] sm:$0xff]
        %v1544 = vld [vmem:[#allocation2 + $0x8] sm:$0xff]
        %v1545 = vld [vmem:[#allocation2 + $0x10] sm:$0xff]
        %v1546 = vld [vmem:[#allocation2 + $0x18] sm:$0xff]
        %1547 = vmatpush.msra.mxu0 0.0
        %1548 = vmatpush.msra.mxu0 0.0
        %1549 = vmatpush.msra.mxu0 0.0
        %1550 = vmatpush.msra.mxu0 0.0
        %1551 = vmatpush.msra.mxu0 0.0
        %1552 = vmatpush.msra.mxu0 0.0
        %1553 = vmatpush.msra.mxu0 0.0
        %1554 = vmatpush.msra.mxu0 0.0
        %1555 = vmatpush.msra.mxu0 0.0
        %1556 = vmatpush.msra.mxu0 0.0
        %1557 = vmatpush.msra.mxu0 0.0
        %1558 = vmatpush.msra.mxu0 0.0
        %1559 = vmatpush.msra.mxu0 0.0
        %1560 = vmatpush.msra.mxu0 0.0
        %1561 = vmatpush.msra.mxu0 %v1542
        %1562 = vmatpush.msra.mxu0 %v1541
        %1563 = vmatmul.f32.gmra.mxu0 %v1334
        %v1564 = vpop.f32.mrf.mxu0
        %v1565 = vadd.f32 0.0, %v1564
        %1566 = vmatmul.f32.gmra.mxu0 %v1337
        %v1567 = vpop.f32.mrf.mxu0
        %v1568 = vadd.f32 0.0, %v1567
        %1569 = vdwg.mxu0
        %v1570 = vld [vmem:[%s740] sm:$0xff]
        %v1571 = vld [vmem:[%s740 + $0x8] sm:$0xff]
        %v1572 = vld [vmem:[%s740 + $0x10] sm:$0xff]
        %v1573 = vld [vmem:[%s740 + $0x18] sm:$0xff]
        %v1575 = vsel %vm745, %v1565, 0
        %v1578 = vsel %vm745, %v1568, 0
        %1580 = vmatpush.msra.mxu0 0.0
        %1581 = vmatpush.msra.mxu0 0.0
        %1582 = vmatpush.msra.mxu0 0.0
        %1583 = vmatpush.msra.mxu0 0.0
        %1584 = vmatpush.msra.mxu0 0.0
        %1585 = vmatpush.msra.mxu0 0.0
        %1586 = vmatpush.msra.mxu0 0.0
        %1587 = vmatpush.msra.mxu0 0.0
        %1588 = vmatpush.msra.mxu0 0.0
        %1589 = vmatpush.msra.mxu0 0.0
        %1590 = vmatpush.msra.mxu0 0.0
        %1591 = vmatpush.msra.mxu0 0.0
        %1592 = vmatpush.msra.mxu0 %v1573
        %1593 = vmatpush.msra.mxu0 %v1572
        %1594 = vmatpush.msra.mxu0 %v1571
        %1595 = vmatpush.msra.mxu0 %v1570
        %1596 = vmatmul.f32.gmra.mxu0 %v1575
        %v1597 = vpop.f32.mrf.mxu0
        %v1598 = vadd.f32 0.0, %v1597
        %1599 = vmatmul.f32.gmra.mxu0 %v1578
        %v1600 = vpop.f32.mrf.mxu0
        %v1601 = vadd.f32 0.0, %v1600
        %1602 = vdwg.mxu0
        %v1604 = vsel %vm745, %v1541, 0
        %v1607 = vsel %vm745, %v1542, 0
        %1609 = vmatpush.msra.mxu0 0.0
        %1610 = vmatpush.msra.mxu0 0.0
        %1611 = vmatpush.msra.mxu0 0.0
        %1612 = vmatpush.msra.mxu0 0.0
        %1613 = vmatpush.msra.mxu0 0.0
        %1614 = vmatpush.msra.mxu0 0.0
        %1615 = vmatpush.msra.mxu0 0.0
        %1616 = vmatpush.msra.mxu0 0.0
        %1617 = vmatpush.msra.mxu0 0.0
        %1618 = vmatpush.msra.mxu0 0.0
        %1619 = vmatpush.msra.mxu0 0.0
        %1620 = vmatpush.msra.mxu0 0.0
        %1621 = vmatpush.msra.mxu0 %v1546
        %1622 = vmatpush.msra.mxu0 %v1545
        %1623 = vmatpush.msra.mxu0 %v1544
        %1624 = vmatpush.msra.mxu0 %v1543
        %1625 = vmatmul.f32.gmra.mxu0 %v1604
        %v1626 = vpop.f32.mrf.mxu0
        %v1627 = vadd.f32 %v1598, %v1626
        %1628 = vmatmul.f32.gmra.mxu0 %v1607
        %v1629 = vpop.f32.mrf.mxu0
        %v1630 = vadd.f32 %v1601, %v1629
        %1631 = vdwg.mxu0
        %1632 = vmatpush.msra.mxu0 0.0
        %1633 = vmatpush.msra.mxu0 0.0
        %1634 = vmatpush.msra.mxu0 0.0
        %1635 = vmatpush.msra.mxu0 0.0
        %1636 = vmatpush.msra.mxu0 0.0
        %1637 = vmatpush.msra.mxu0 0.0
        %1638 = vmatpush.msra.mxu0 0.0
        %1639 = vmatpush.msra.mxu0 0.0
        %1640 = vmatpush.msra.mxu0 0.0
        %1641 = vmatpush.msra.mxu0 0.0
        %1642 = vmatpush.msra.mxu0 0.0
        %1643 = vmatpush.msra.mxu0 0.0
        %1644 = vmatpush.msra.mxu0 0.0
        %1645 = vmatpush.msra.mxu0 0.0
        %1646 = vmatpush.msra.mxu0 %v1568
        %1647 = vmatpush.msra.mxu0 %v1565
        %1648 = vmatmul.f32.gmra.mxu0 %v1432
        %v1649 = vpop.f32.mrf.mxu0
        %v1650 = vadd.f32 0.0, %v1649
        %1651 = vmatmul.f32.gmra.mxu0 %v1435
        %v1652 = vpop.f32.mrf.mxu0
        %v1653 = vadd.f32 0.0, %v1652
        %1654 = vdwg.mxu0
        %v1655 = vsub.f32 %v1650, %v1541
        %v1656 = vsub.f32 %v1653, %v1542
        %v1657 = vld [vmem:[%s829] sm:$0xff]
        %v1658 = vld [vmem:[%s829 + $0x8] sm:$0xff]
        %v1659 = vld [vmem:[%s829 + $0x10] sm:$0xff]
        %v1660 = vld [vmem:[%s829 + $0x18] sm:$0xff]
        %v1662 = vsel %vm745, %v1655, 0
        %v1665 = vsel %vm745, %v1656, 0
        %1667 = vmatpush.msra.mxu0 0.0
        %1668 = vmatpush.msra.mxu0 0.0
        %1669 = vmatpush.msra.mxu0 0.0
        %1670 = vmatpush.msra.mxu0 0.0
        %1671 = vmatpush.msra.mxu0 0.0
        %1672 = vmatpush.msra.mxu0 0.0
        %1673 = vmatpush.msra.mxu0 0.0
        %1674 = vmatpush.msra.mxu0 0.0
        %1675 = vmatpush.msra.mxu0 0.0
        %1676 = vmatpush.msra.mxu0 0.0
        %1677 = vmatpush.msra.mxu0 0.0
        %1678 = vmatpush.msra.mxu0 0.0
        %1679 = vmatpush.msra.mxu0 %v1660
        %1680 = vmatpush.msra.mxu0 %v1659
        %1681 = vmatpush.msra.mxu0 %v1658
        %1682 = vmatpush.msra.mxu0 %v1657
        %1683 = vmatmul.f32.gmra.mxu0 %v1662
        %v1684 = vpop.f32.mrf.mxu0
        %v1685 = vadd.f32 0.0, %v1684
        %1686 = vmatmul.f32.gmra.mxu0 %v1665
        %v1687 = vpop.f32.mrf.mxu0
        %v1688 = vadd.f32 0.0, %v1687
        %1689 = vdwg.mxu0
        %v1690 = vadd.f32 %v1627, %v1685
        %v1691 = vadd.f32 %v1630, %v1688
        %1694 = vrot.lane.b32.xlu0 %v1690, 64
        %v1695 = vpop.permute.xlu0 %1694
        %1696 = vrot.lane.b32.xlu0 %v1691, 64
        %v1697 = vpop.permute.xlu0 %1696
        %v1700 = vadd.f32 %v1501, %v1695
        %v1701 = vadd.f32 %v1502, %v1697
        %v1702 = vtanh.pop %v1700
        %v1703 = vtanh.pop %v1701
        %v1704 = vmul.f32 %v1525, %v897
        %v1705 = vmul.f32 %v1540, %v898
        %v1706 = vsub.f32 1.0, %v1525
        %v1707 = vsub.f32 1.0, %v1540
        %1710 = vrot.lane.b32.xlu0 %v1702, 96
        %v1711 = vpop.permute.xlu0 %1710
        %1712 = vrot.lane.b32.xlu0 %v1703, 96
        %v1713 = vpop.permute.xlu0 %1712
        %v1716 = vmul.f32 %v1706, %v1711
        %v1717 = vmul.f32 %v1707, %v1713
        %v1718 = vadd.f32 %v1704, %v1716
        %v1719 = vadd.f32 %v1705, %v1717
        %1722 = vrot.lane.b32.xlu0 %v1718, 96
        %v1723 = vpop.permute.xlu0 %1722
        %1724 = vrot.lane.b32.xlu0 %v1719, 96
        %v1725 = vpop.permute.xlu0 %1724
        %v1728 = vsel %vm745, %v1723, %v1300
        %v1729 = vsel %vm745, %v1725, %v1301
        %v1730 = vld [vmem:[#allocation4] sm:$0xff]
        %v1731 = vld [vmem:[#allocation4 + $0x8] sm:$0xff]
        %v1732 = vld [vmem:[#allocation4 + $0x10] sm:$0xff]
        %v1733 = vld [vmem:[#allocation4 + $0x18] sm:$0xff]
        %v1734 = vld [vmem:[#allocation4 + $0x20] sm:$0xff]
        %v1735 = vld [vmem:[#allocation4 + $0x28] sm:$0xff]
        %v1736 = vld [vmem:[#allocation4 + $0x30] sm:$0xff]
        %v1737 = vld [vmem:[#allocation4 + $0x38] sm:$0xff]
        %1738 = vmatpush.msra.mxu0 0.0
        %1739 = vmatpush.msra.mxu0 0.0
        %1740 = vmatpush.msra.mxu0 0.0
        %1741 = vmatpush.msra.mxu0 0.0
        %1742 = vmatpush.msra.mxu0 0.0
        %1743 = vmatpush.msra.mxu0 0.0
        %1744 = vmatpush.msra.mxu0 0.0
        %1745 = vmatpush.msra.mxu0 0.0
        %1746 = vmatpush.msra.mxu0 0.0
        %1747 = vmatpush.msra.mxu0 0.0
        %1748 = vmatpush.msra.mxu0 0.0
        %1749 = vmatpush.msra.mxu0 0.0
        %1750 = vmatpush.msra.mxu0 0.0
        %1751 = vmatpush.msra.mxu0 0.0
        %1752 = vmatpush.msra.mxu0 %v1729
        %1753 = vmatpush.msra.mxu0 %v1728
        %1754 = vmatmul.f32.gmra.mxu0 %v1334
        %v1755 = vpop.f32.mrf.mxu0
        %v1756 = vadd.f32 0.0, %v1755
        %1757 = vmatmul.f32.gmra.mxu0 %v1337
        %v1758 = vpop.f32.mrf.mxu0
        %v1759 = vadd.f32 0.0, %v1758
        %1760 = vdwg.mxu0
        %v1761 = vld [vmem:[%s948] sm:$0xff]
        %v1762 = vld [vmem:[%s948 + $0x8] sm:$0xff]
        %v1763 = vld [vmem:[%s948 + $0x10] sm:$0xff]
        %v1764 = vld [vmem:[%s948 + $0x18] sm:$0xff]
        %v1765 = vld [vmem:[%s948 + $0x20] sm:$0xff]
        %v1766 = vld [vmem:[%s948 + $0x28] sm:$0xff]
        %v1767 = vld [vmem:[%s948 + $0x30] sm:$0xff]
        %v1768 = vld [vmem:[%s948 + $0x38] sm:$0xff]
        %v1770 = vsel %vm957, %v1756, 0
        %v1773 = vsel %vm957, %v1759, 0
        %1775 = vmatpush.msra.mxu0 0.0
        %1776 = vmatpush.msra.mxu0 0.0
        %1777 = vmatpush.msra.mxu0 0.0
        %1778 = vmatpush.msra.mxu0 0.0
        %1779 = vmatpush.msra.mxu0 0.0
        %1780 = vmatpush.msra.mxu0 0.0
        %1781 = vmatpush.msra.mxu0 0.0
        %1782 = vmatpush.msra.mxu0 0.0
        %1783 = vmatpush.msra.mxu0 %v1768
        %1784 = vmatpush.msra.mxu0 %v1767
        %1785 = vmatpush.msra.mxu0 %v1766
        %1786 = vmatpush.msra.mxu0 %v1765
        %1787 = vmatpush.msra.mxu0 %v1764
        %1788 = vmatpush.msra.mxu0 %v1763
        %1789 = vmatpush.msra.mxu0 %v1762
        %1790 = vmatpush.msra.mxu0 %v1761
        %1791 = vmatmul.f32.gmra.mxu0 %v1770
        %v1792 = vpop.f32.mrf.mxu0
        %v1793 = vadd.f32 0.0, %v1792
        %1794 = vmatmul.f32.gmra.mxu0 %v1773
        %v1795 = vpop.f32.mrf.mxu0
        %v1796 = vadd.f32 0.0, %v1795
        %1797 = vdwg.mxu0
        %v1799 = vsel %vm957, %v1728, 0
        %v1802 = vsel %vm957, %v1729, 0
        %1804 = vmatpush.msra.mxu0 0.0
        %1805 = vmatpush.msra.mxu0 0.0
        %1806 = vmatpush.msra.mxu0 0.0
        %1807 = vmatpush.msra.mxu0 0.0
        %1808 = vmatpush.msra.mxu0 0.0
        %1809 = vmatpush.msra.mxu0 0.0
        %1810 = vmatpush.msra.mxu0 0.0
        %1811 = vmatpush.msra.mxu0 0.0
        %1812 = vmatpush.msra.mxu0 %v1737
        %1813 = vmatpush.msra.mxu0 %v1736
        %1814 = vmatpush.msra.mxu0 %v1735
        %1815 = vmatpush.msra.mxu0 %v1734
        %1816 = vmatpush.msra.mxu0 %v1733
        %1817 = vmatpush.msra.mxu0 %v1732
        %1818 = vmatpush.msra.mxu0 %v1731
        %1819 = vmatpush.msra.mxu0 %v1730
        %1820 = vmatmul.f32.gmra.mxu0 %v1799
        %v1821 = vpop.f32.mrf.mxu0
        %v1822 = vadd.f32 %v1793, %v1821
        %1823 = vmatmul.f32.gmra.mxu0 %v1802
        %v1824 = vpop.f32.mrf.mxu0
        %v1825 = vadd.f32 %v1796, %v1824
        %1826 = vdwg.mxu0
        %1827 = vmatpush.msra.mxu0 0.0
        %1828 = vmatpush.msra.mxu0 0.0
        %1829 = vmatpush.msra.mxu0 0.0
        %1830 = vmatpush.msra.mxu0 0.0
        %1831 = vmatpush.msra.mxu0 0.0
        %1832 = vmatpush.msra.mxu0 0.0
        %1833 = vmatpush.msra.mxu0 0.0
        %1834 = vmatpush.msra.mxu0 0.0
        %1835 = vmatpush.msra.mxu0 0.0
        %1836 = vmatpush.msra.mxu0 0.0
        %1837 = vmatpush.msra.mxu0 0.0
        %1838 = vmatpush.msra.mxu0 0.0
        %1839 = vmatpush.msra.mxu0 0.0
        %1840 = vmatpush.msra.mxu0 0.0
        %1841 = vmatpush.msra.mxu0 %v1759
        %1842 = vmatpush.msra.mxu0 %v1756
        %1843 = vmatmul.f32.gmra.mxu0 %v1432
        %v1844 = vpop.f32.mrf.mxu0
        %v1845 = vadd.f32 0.0, %v1844
        %1846 = vmatmul.f32.gmra.mxu0 %v1435
        %v1847 = vpop.f32.mrf.mxu0
        %v1848 = vadd.f32 0.0, %v1847
        %1849 = vdwg.mxu0
        %v1850 = vsub.f32 %v1845, %v1728
        %v1851 = vsub.f32 %v1848, %v1729
        %v1852 = vld [vmem:[%s1041] sm:$0xff]
        %v1853 = vld [vmem:[%s1041 + $0x8] sm:$0xff]
        %v1854 = vld [vmem:[%s1041 + $0x10] sm:$0xff]
        %v1855 = vld [vmem:[%s1041 + $0x18] sm:$0xff]
        %v1856 = vld [vmem:[%s1041 + $0x20] sm:$0xff]
        %v1857 = vld [vmem:[%s1041 + $0x28] sm:$0xff]
        %v1858 = vld [vmem:[%s1041 + $0x30] sm:$0xff]
        %v1859 = vld [vmem:[%s1041 + $0x38] sm:$0xff]
        %v1861 = vsel %vm957, %v1850, 0
        %v1864 = vsel %vm957, %v1851, 0
        %1866 = vmatpush.msra.mxu0 0.0
        %1867 = vmatpush.msra.mxu0 0.0
        %1868 = vmatpush.msra.mxu0 0.0
        %1869 = vmatpush.msra.mxu0 0.0
        %1870 = vmatpush.msra.mxu0 0.0
        %1871 = vmatpush.msra.mxu0 0.0
        %1872 = vmatpush.msra.mxu0 0.0
        %1873 = vmatpush.msra.mxu0 0.0
        %1874 = vmatpush.msra.mxu0 %v1859
        %1875 = vmatpush.msra.mxu0 %v1858
        %1876 = vmatpush.msra.mxu0 %v1857
        %1877 = vmatpush.msra.mxu0 %v1856
        %1878 = vmatpush.msra.mxu0 %v1855
        %1879 = vmatpush.msra.mxu0 %v1854
        %1880 = vmatpush.msra.mxu0 %v1853
        %1881 = vmatpush.msra.mxu0 %v1852
        %1882 = vmatmul.f32.gmra.mxu0 %v1861
        %v1883 = vpop.f32.mrf.mxu0
        %v1884 = vadd.f32 0.0, %v1883
        %1885 = vmatmul.f32.gmra.mxu0 %v1864
        %v1886 = vpop.f32.mrf.mxu0
        %v1887 = vadd.f32 0.0, %v1886
        %1888 = vdwg.mxu0
        %v1889 = vadd.f32 %v1822, %v1884
        %v1890 = vadd.f32 %v1825, %v1887
        %v1891 = vadd.f32 %v1889, %v469
        %v1892 = vadd.f32 %v1890, %v469
        %v1893 = vxor.u32 %v1891, 2147483648
        %v1894 = vxor.u32 %v1892, 2147483648
        %v1895 = vmul.f32 %v1893, 1.442695
        %v1896 = vpow.pop %v1895
        %v1897 = vmul.f32 %v1894, 1.442695
        %v1898 = vpow.pop %v1897
        %v1899 = vadd.f32 %v1896, 1.0
        %v1900 = vadd.f32 %v1898, 1.0
        %v1901 = vrcp.pop %v1899
        %v1902 = vmul.f32 %v1899, %v1901
        %v1903 = vsub.f32 1.0, %v1902
        %v1904 = vmul.f32 %v1901, %v1903
        %v1905 = vadd.f32 %v1901, %v1904
        %vm1906 = vweird.f32 %v1899
        %vm1907 = vweird.f32 %v1901
        %vm1908 = vmor %vm1906, %vm1907
        %v1909 = vsel %vm1908, %v1901, %v1905
        %v1910 = vand.u32 2147483647, %v1899
        %vm1911 = vcmp.eq.f32.partialorder %v1910, 8.507059e+37
        %v1912 = vand.u32 %v1899, 2147483648
        %v1913 = vor.u32 1.1754944e-38, %v1912
        %v1914 = vsel %vm1911, %v1913, %v1909
        %v1915 = vmul.f32 1.0, %v1914
        %v1916 = vrcp.pop %v1900
        %v1917 = vmul.f32 %v1900, %v1916
        %v1918 = vsub.f32 1.0, %v1917
        %v1919 = vmul.f32 %v1916, %v1918
        %v1920 = vadd.f32 %v1916, %v1919
        %vm1921 = vweird.f32 %v1900
        %vm1922 = vweird.f32 %v1916
        %vm1923 = vmor %vm1921, %vm1922
        %v1924 = vsel %vm1923, %v1916, %v1920
        %v1925 = vand.u32 2147483647, %v1900
        %vm1926 = vcmp.eq.f32.partialorder %v1925, 8.507059e+37
        %v1927 = vand.u32 %v1900, 2147483648
        %v1928 = vor.u32 1.1754944e-38, %v1927
        %v1929 = vsel %vm1926, %v1928, %v1924
        %v1930 = vmul.f32 1.0, %v1929
        %v1931 = vmul.f32 %v1915, %v1305
        %v1932 = vmul.f32 %v1930, %v1307
        %v1933 = vld [vmem:[#allocation6] sm:$0xff]
        %v1934 = vld [vmem:[#allocation6 + $0x8] sm:$0xff]
        %v1935 = vld [vmem:[#allocation6 + $0x10] sm:$0xff]
        %v1936 = vld [vmem:[#allocation6 + $0x18] sm:$0xff]
        %1937 = vmatpush.msra.mxu0 0.0
        %1938 = vmatpush.msra.mxu0 0.0
        %1939 = vmatpush.msra.mxu0 0.0
        %1940 = vmatpush.msra.mxu0 0.0
        %1941 = vmatpush.msra.mxu0 0.0
        %1942 = vmatpush.msra.mxu0 0.0
        %1943 = vmatpush.msra.mxu0 0.0
        %1944 = vmatpush.msra.mxu0 0.0
        %1945 = vmatpush.msra.mxu0 0.0
        %1946 = vmatpush.msra.mxu0 0.0
        %1947 = vmatpush.msra.mxu0 0.0
        %1948 = vmatpush.msra.mxu0 0.0
        %1949 = vmatpush.msra.mxu0 0.0
        %1950 = vmatpush.msra.mxu0 0.0
        %1951 = vmatpush.msra.mxu0 %v1932
        %1952 = vmatpush.msra.mxu0 %v1931
        %1953 = vmatmul.f32.gmra.mxu0 %v1334
        %v1954 = vpop.f32.mrf.mxu0
        %v1955 = vadd.f32 0.0, %v1954
        %1956 = vmatmul.f32.gmra.mxu0 %v1337
        %v1957 = vpop.f32.mrf.mxu0
        %v1958 = vadd.f32 0.0, %v1957
        %1959 = vdwg.mxu0
        %v1960 = vld [vmem:[%s1150] sm:$0xff]
        %v1961 = vld [vmem:[%s1150 + $0x8] sm:$0xff]
        %v1962 = vld [vmem:[%s1150 + $0x10] sm:$0xff]
        %v1963 = vld [vmem:[%s1150 + $0x18] sm:$0xff]
        %v1965 = vsel %vm745, %v1955, 0
        %v1968 = vsel %vm745, %v1958, 0
        %1970 = vmatpush.msra.mxu0 0.0
        %1971 = vmatpush.msra.mxu0 0.0
        %1972 = vmatpush.msra.mxu0 0.0
        %1973 = vmatpush.msra.mxu0 0.0
        %1974 = vmatpush.msra.mxu0 0.0
        %1975 = vmatpush.msra.mxu0 0.0
        %1976 = vmatpush.msra.mxu0 0.0
        %1977 = vmatpush.msra.mxu0 0.0
        %1978 = vmatpush.msra.mxu0 0.0
        %1979 = vmatpush.msra.mxu0 0.0
        %1980 = vmatpush.msra.mxu0 0.0
        %1981 = vmatpush.msra.mxu0 0.0
        %1982 = vmatpush.msra.mxu0 %v1963
        %1983 = vmatpush.msra.mxu0 %v1962
        %1984 = vmatpush.msra.mxu0 %v1961
        %1985 = vmatpush.msra.mxu0 %v1960
        %1986 = vmatmul.f32.gmra.mxu0 %v1965
        %v1987 = vpop.f32.mrf.mxu0
        %v1988 = vadd.f32 0.0, %v1987
        %1989 = vmatmul.f32.gmra.mxu0 %v1968
        %v1990 = vpop.f32.mrf.mxu0
        %v1991 = vadd.f32 0.0, %v1990
        %1992 = vdwg.mxu0
        %v1994 = vsel %vm745, %v1931, 0
        %v1997 = vsel %vm745, %v1932, 0
        %1999 = vmatpush.msra.mxu0 0.0
        %2000 = vmatpush.msra.mxu0 0.0
        %2001 = vmatpush.msra.mxu0 0.0
        %2002 = vmatpush.msra.mxu0 0.0
        %2003 = vmatpush.msra.mxu0 0.0
        %2004 = vmatpush.msra.mxu0 0.0
        %2005 = vmatpush.msra.mxu0 0.0
        %2006 = vmatpush.msra.mxu0 0.0
        %2007 = vmatpush.msra.mxu0 0.0
        %2008 = vmatpush.msra.mxu0 0.0
        %2009 = vmatpush.msra.mxu0 0.0
        %2010 = vmatpush.msra.mxu0 0.0
        %2011 = vmatpush.msra.mxu0 %v1936
        %2012 = vmatpush.msra.mxu0 %v1935
        %2013 = vmatpush.msra.mxu0 %v1934
        %2014 = vmatpush.msra.mxu0 %v1933
        %2015 = vmatmul.f32.gmra.mxu0 %v1994
        %v2016 = vpop.f32.mrf.mxu0
        %v2017 = vadd.f32 %v1988, %v2016
        %2018 = vmatmul.f32.gmra.mxu0 %v1997
        %v2019 = vpop.f32.mrf.mxu0
        %v2020 = vadd.f32 %v1991, %v2019
        %2021 = vdwg.mxu0
        %2022 = vmatpush.msra.mxu0 0.0
        %2023 = vmatpush.msra.mxu0 0.0
        %2024 = vmatpush.msra.mxu0 0.0
        %2025 = vmatpush.msra.mxu0 0.0
        %2026 = vmatpush.msra.mxu0 0.0
        %2027 = vmatpush.msra.mxu0 0.0
        %2028 = vmatpush.msra.mxu0 0.0
        %2029 = vmatpush.msra.mxu0 0.0
        %2030 = vmatpush.msra.mxu0 0.0
        %2031 = vmatpush.msra.mxu0 0.0
        %2032 = vmatpush.msra.mxu0 0.0
        %2033 = vmatpush.msra.mxu0 0.0
        %2034 = vmatpush.msra.mxu0 0.0
        %2035 = vmatpush.msra.mxu0 0.0
        %2036 = vmatpush.msra.mxu0 %v1958
        %2037 = vmatpush.msra.mxu0 %v1955
        %2038 = vmatmul.f32.gmra.mxu0 %v1432
        %v2039 = vpop.f32.mrf.mxu0
        %v2040 = vadd.f32 0.0, %v2039
        %2041 = vmatmul.f32.gmra.mxu0 %v1435
        %v2042 = vpop.f32.mrf.mxu0
        %v2043 = vadd.f32 0.0, %v2042
        %2044 = vdwg.mxu0
        %v2045 = vsub.f32 %v2040, %v1931
        %v2046 = vsub.f32 %v2043, %v1932
        %v2047 = vld [vmem:[%s1238] sm:$0xff]
        %v2048 = vld [vmem:[%s1238 + $0x8] sm:$0xff]
        %v2049 = vld [vmem:[%s1238 + $0x10] sm:$0xff]
        %v2050 = vld [vmem:[%s1238 + $0x18] sm:$0xff]
        %v2052 = vsel %vm745, %v2045, 0
        %v2055 = vsel %vm745, %v2046, 0
        %2057 = vmatpush.msra.mxu0 0.0
        %2058 = vmatpush.msra.mxu0 0.0
        %2059 = vmatpush.msra.mxu0 0.0
        %2060 = vmatpush.msra.mxu0 0.0
        %2061 = vmatpush.msra.mxu0 0.0
        %2062 = vmatpush.msra.mxu0 0.0
        %2063 = vmatpush.msra.mxu0 0.0
        %2064 = vmatpush.msra.mxu0 0.0
        %2065 = vmatpush.msra.mxu0 0.0
        %2066 = vmatpush.msra.mxu0 0.0
        %2067 = vmatpush.msra.mxu0 0.0
        %2068 = vmatpush.msra.mxu0 0.0
        %2069 = vmatpush.msra.mxu0 %v2050
        %2070 = vmatpush.msra.mxu0 %v2049
        %2071 = vmatpush.msra.mxu0 %v2048
        %2072 = vmatpush.msra.mxu0 %v2047
        %2073 = vmatmul.f32.gmra.mxu0 %v2052
        %v2074 = vpop.f32.mrf.mxu0
        %v2075 = vadd.f32 0.0, %v2074
        %2076 = vmatmul.f32.gmra.mxu0 %v2055
        %v2077 = vpop.f32.mrf.mxu0
        %v2078 = vadd.f32 0.0, %v2077
        %2079 = vdwg.mxu0
        %v2080 = vadd.f32 %v2017, %v2075
        %v2081 = vadd.f32 %v2020, %v2078
        %2084 = vrot.lane.b32.xlu0 %v2080, 64
        %v2085 = vpop.permute.xlu0 %2084
        %2086 = vrot.lane.b32.xlu0 %v2081, 64
        %v2087 = vpop.permute.xlu0 %2086
        %v2090 = vadd.f32 %v1891, %v2085
        %v2091 = vadd.f32 %v1892, %v2087
        %v2092 = vtanh.pop %v2090
        %v2093 = vtanh.pop %v2091
        %v2094 = vmul.f32 %v1915, %v1300
        %v2095 = vmul.f32 %v1930, %v1301
        %v2096 = vsub.f32 1.0, %v1915
        %v2097 = vsub.f32 1.0, %v1930
        %2100 = vrot.lane.b32.xlu0 %v2092, 96
        %v2101 = vpop.permute.xlu0 %2100
        %2102 = vrot.lane.b32.xlu0 %v2093, 96
        %v2103 = vpop.permute.xlu0 %2102
        %v2106 = vmul.f32 %v2096, %v2101
        %v2107 = vmul.f32 %v2097, %v2103
        %v2108 = vadd.f32 %v2094, %v2106
        %v2109 = vadd.f32 %v2095, %v2107
        %2112 = vrot.lane.b32.xlu0 %v2108, 96
        %v2113 = vpop.permute.xlu0 %2112
        %2114 = vrot.lane.b32.xlu0 %v2109, 96
        %v2115 = vpop.permute.xlu0 %2114
        %s2118 = scalar_lea.vmem %s457, 16
        %2119 = vst.msk [vmem:[%s2118] sm:$0xff] %vm745, %v2113
        %2120 = vst.msk [vmem:[%s2118 + $0x8] sm:$0xff] %vm745, %v2115
        %s2121 = scalar_lea.vmem %s442, 32
        %v2122 = vld [vmem:[%s2121] sm:$0xff]
        %v2123 = vld [vmem:[%s2121 + $0x8] sm:$0xff]
        %v2124 = vadd.f32 %v2122, %v2122
        %v2125 = vadd.f32 %v2123, %v2123
        %s2126 = scalar_lea.vmem %s447, 32
        %v2127 = vld [vmem:[%s2126] sm:$0xff]
        %v2128 = vld [vmem:[%s2126 + $0x8] sm:$0xff]
        %2129 = vrot.lane.b32.xlu0 %v1718, 100
        %v2130 = vpop.permute.xlu0 %2129
        %2131 = vrot.lane.b32.xlu0 %v1719, 100
        %v2132 = vpop.permute.xlu0 %2131
        %v2135 = vsel %vm490, %v2127, %v2130
        %v2136 = vsel %vm490, %v2128, %v2132
        %v2137 = vld [vmem:[%s3] sm:$0xff]
        %v2138 = vld [vmem:[%s3 + $0x8] sm:$0xff]
        %v2139 = vld [vmem:[%s3 + $0x10] sm:$0xff]
        %v2140 = vld [vmem:[%s3 + $0x18] sm:$0xff]
        %v2141 = vld [vmem:[%s3 + $0x20] sm:$0xf]
        %v2143 = vsel %vm498, %v2122, 0
        %v2146 = vsel %vm498, %v2123, 0
        %2148 = vmatpush.msra.mxu0 0.0
        %2149 = vmatpush.msra.mxu0 0.0
        %2150 = vmatpush.msra.mxu0 0.0
        %2151 = vmatpush.msra.mxu0 0.0
        %2152 = vmatpush.msra.mxu0 0.0
        %2153 = vmatpush.msra.mxu0 0.0
        %2154 = vmatpush.msra.mxu0 0.0
        %2155 = vmatpush.msra.mxu0 0.0
        %2156 = vmatpush.msra.mxu0 0.0
        %2157 = vmatpush.msra.mxu0 0.0
        %2158 = vmatpush.msra.mxu0 0.0
        %2159 = vmatpush.msra.mxu0 0.0
        %2160 = vmatpush.msra.mxu0 0.0
        %2161 = vmatpush.msra.mxu0 0.0
        %2162 = vmatpush.msra.mxu0 %v2136
        %2163 = vmatpush.msra.mxu0 %v2135
        %2164 = vmatmul.f32.gmra.mxu0 %v2143
        %v2165 = vpop.f32.mrf.mxu0
        %v2166 = vadd.f32 0.0, %v2165
        %2167 = vmatmul.f32.gmra.mxu0 %v2146
        %v2168 = vpop.f32.mrf.mxu0
        %v2169 = vadd.f32 0.0, %v2168
        %2170 = vdwg.mxu0
        %v2171 = vld [vmem:[%s528] sm:$0xff]
        %v2172 = vld [vmem:[%s528 + $0x8] sm:$0xff]
        %v2173 = vld [vmem:[%s528 + $0x10] sm:$0xff]
        %v2174 = vld [vmem:[%s528 + $0x18] sm:$0xff]
        %v2175 = vld [vmem:[%s528 + $0x20] sm:$0xf]
        %v2177 = vsel %vm534, %v2166, 0
        %v2180 = vsel %vm534, %v2169, 0
        %v2183 = vsel %vm541, %v2175, 0
        %2185 = vmatpush.msra.mxu0 0.0
        %2186 = vmatpush.msra.mxu0 0.0
        %2187 = vmatpush.msra.mxu0 0.0
        %2188 = vmatpush.msra.mxu0 0.0
        %2189 = vmatpush.msra.mxu0 0.0
        %2190 = vmatpush.msra.mxu0 0.0
        %2191 = vmatpush.msra.mxu0 0.0
        %2192 = vmatpush.msra.mxu0 0.0
        %2193 = vmatpush.msra.mxu0 0.0
        %2194 = vmatpush.msra.mxu0 0.0
        %2195 = vmatpush.msra.mxu0 0.0
        %2196 = vmatpush.msra.mxu0 %v2183
        %2197 = vmatpush.msra.mxu0 %v2174
        %2198 = vmatpush.msra.mxu0 %v2173
        %2199 = vmatpush.msra.mxu0 %v2172
        %2200 = vmatpush.msra.mxu0 %v2171
        %2201 = vmatmul.f32.gmra.mxu0 %v2177
        %v2202 = vpop.f32.mrf.mxu0
        %v2203 = vadd.f32 0.0, %v2202
        %2204 = vmatmul.f32.gmra.mxu0 %v2180
        %v2205 = vpop.f32.mrf.mxu0
        %v2206 = vadd.f32 0.0, %v2205
        %2207 = vdwg.mxu0
        %v2209 = vsel %vm534, %v2135, 0
        %v2212 = vsel %vm534, %v2136, 0
        %v2215 = vsel %vm541, %v2141, 0
        %2217 = vmatpush.msra.mxu0 0.0
        %2218 = vmatpush.msra.mxu0 0.0
        %2219 = vmatpush.msra.mxu0 0.0
        %2220 = vmatpush.msra.mxu0 0.0
        %2221 = vmatpush.msra.mxu0 0.0
        %2222 = vmatpush.msra.mxu0 0.0
        %2223 = vmatpush.msra.mxu0 0.0
        %2224 = vmatpush.msra.mxu0 0.0
        %2225 = vmatpush.msra.mxu0 0.0
        %2226 = vmatpush.msra.mxu0 0.0
        %2227 = vmatpush.msra.mxu0 0.0
        %2228 = vmatpush.msra.mxu0 %v2215
        %2229 = vmatpush.msra.mxu0 %v2140
        %2230 = vmatpush.msra.mxu0 %v2139
        %2231 = vmatpush.msra.mxu0 %v2138
        %2232 = vmatpush.msra.mxu0 %v2137
        %2233 = vmatmul.f32.gmra.mxu0 %v2209
        %v2234 = vpop.f32.mrf.mxu0
        %v2235 = vadd.f32 %v2203, %v2234
        %2236 = vmatmul.f32.gmra.mxu0 %v2212
        %v2237 = vpop.f32.mrf.mxu0
        %v2238 = vadd.f32 %v2206, %v2237
        %2239 = vdwg.mxu0
        %v2241 = vsel %vm498, %v2124, 0
        %v2244 = vsel %vm498, %v2125, 0
        %2246 = vmatpush.msra.mxu0 0.0
        %2247 = vmatpush.msra.mxu0 0.0
        %2248 = vmatpush.msra.mxu0 0.0
        %2249 = vmatpush.msra.mxu0 0.0
        %2250 = vmatpush.msra.mxu0 0.0
        %2251 = vmatpush.msra.mxu0 0.0
        %2252 = vmatpush.msra.mxu0 0.0
        %2253 = vmatpush.msra.mxu0 0.0
        %2254 = vmatpush.msra.mxu0 0.0
        %2255 = vmatpush.msra.mxu0 0.0
        %2256 = vmatpush.msra.mxu0 0.0
        %2257 = vmatpush.msra.mxu0 0.0
        %2258 = vmatpush.msra.mxu0 0.0
        %2259 = vmatpush.msra.mxu0 0.0
        %2260 = vmatpush.msra.mxu0 %v2169
        %2261 = vmatpush.msra.mxu0 %v2166
        %2262 = vmatmul.f32.gmra.mxu0 %v2241
        %v2263 = vpop.f32.mrf.mxu0
        %v2264 = vadd.f32 0.0, %v2263
        %2265 = vmatmul.f32.gmra.mxu0 %v2244
        %v2266 = vpop.f32.mrf.mxu0
        %v2267 = vadd.f32 0.0, %v2266
        %2268 = vdwg.mxu0
        %v2269 = vsub.f32 %v2264, %v2135
        %v2270 = vsub.f32 %v2267, %v2136
        %v2271 = vld [vmem:[%s631] sm:$0xff]
        %v2272 = vld [vmem:[%s631 + $0x8] sm:$0xff]
        %v2273 = vld [vmem:[%s631 + $0x10] sm:$0xff]
        %v2274 = vld [vmem:[%s631 + $0x18] sm:$0xff]
        %v2275 = vld [vmem:[%s631 + $0x20] sm:$0xf]
        %v2277 = vsel %vm534, %v2269, 0
        %v2280 = vsel %vm534, %v2270, 0
        %v2283 = vsel %vm541, %v2275, 0
        %2285 = vmatpush.msra.mxu0 0.0
        %2286 = vmatpush.msra.mxu0 0.0
        %2287 = vmatpush.msra.mxu0 0.0
        %2288 = vmatpush.msra.mxu0 0.0
        %2289 = vmatpush.msra.mxu0 0.0
        %2290 = vmatpush.msra.mxu0 0.0
        %2291 = vmatpush.msra.mxu0 0.0
        %2292 = vmatpush.msra.mxu0 0.0
        %2293 = vmatpush.msra.mxu0 0.0
        %2294 = vmatpush.msra.mxu0 0.0
        %2295 = vmatpush.msra.mxu0 0.0
        %2296 = vmatpush.msra.mxu0 %v2283
        %2297 = vmatpush.msra.mxu0 %v2274
        %2298 = vmatpush.msra.mxu0 %v2273
        %2299 = vmatpush.msra.mxu0 %v2272
        %2300 = vmatpush.msra.mxu0 %v2271
        %2301 = vmatmul.f32.gmra.mxu0 %v2277
        %v2302 = vpop.f32.mrf.mxu0
        %v2303 = vadd.f32 0.0, %v2302
        %2304 = vmatmul.f32.gmra.mxu0 %v2280
        %v2305 = vpop.f32.mrf.mxu0
        %v2306 = vadd.f32 0.0, %v2305
        %2307 = vdwg.mxu0
        %v2308 = vadd.f32 %v2235, %v2303
        %v2309 = vadd.f32 %v2238, %v2306
        %v2310 = vadd.f32 %v2308, %v465
        %v2311 = vadd.f32 %v2309, %v465
        %v2312 = vxor.u32 %v2310, 2147483648
        %v2313 = vxor.u32 %v2311, 2147483648
        %v2314 = vmul.f32 %v2312, 1.442695
        %v2315 = vpow.pop %v2314
        %v2316 = vmul.f32 %v2313, 1.442695
        %v2317 = vpow.pop %v2316
        %v2318 = vadd.f32 %v2315, 1.0
        %v2319 = vadd.f32 %v2317, 1.0
        %v2320 = vrcp.pop %v2318
        %v2321 = vmul.f32 %v2318, %v2320
        %v2322 = vsub.f32 1.0, %v2321
        %v2323 = vmul.f32 %v2320, %v2322
        %v2324 = vadd.f32 %v2320, %v2323
        %vm2325 = vweird.f32 %v2318
        %vm2326 = vweird.f32 %v2320
        %vm2327 = vmor %vm2325, %vm2326
        %v2328 = vsel %vm2327, %v2320, %v2324
        %v2329 = vand.u32 2147483647, %v2318
        %vm2330 = vcmp.eq.f32.partialorder %v2329, 8.507059e+37
        %v2331 = vand.u32 %v2318, 2147483648
        %v2332 = vor.u32 1.1754944e-38, %v2331
        %v2333 = vsel %vm2330, %v2332, %v2328
        %v2334 = vmul.f32 1.0, %v2333
        %v2335 = vrcp.pop %v2319
        %v2336 = vmul.f32 %v2319, %v2335
        %v2337 = vsub.f32 1.0, %v2336
        %v2338 = vmul.f32 %v2335, %v2337
        %v2339 = vadd.f32 %v2335, %v2338
        %vm2340 = vweird.f32 %v2319
        %vm2341 = vweird.f32 %v2335
        %vm2342 = vmor %vm2340, %vm2341
        %v2343 = vsel %vm2342, %v2335, %v2339
        %v2344 = vand.u32 2147483647, %v2319
        %vm2345 = vcmp.eq.f32.partialorder %v2344, 8.507059e+37
        %v2346 = vand.u32 %v2319, 2147483648
        %v2347 = vor.u32 1.1754944e-38, %v2346
        %v2348 = vsel %vm2345, %v2347, %v2343
        %v2349 = vmul.f32 1.0, %v2348
        %v2350 = vmul.f32 %v2334, %v1723
        %v2351 = vmul.f32 %v2349, %v1725
        %v2352 = vld [vmem:[#allocation2] sm:$0xff]
        %v2353 = vld [vmem:[#allocation2 + $0x8] sm:$0xff]
        %v2354 = vld [vmem:[#allocation2 + $0x10] sm:$0xff]
        %v2355 = vld [vmem:[#allocation2 + $0x18] sm:$0xff]
        %2356 = vmatpush.msra.mxu0 0.0
        %2357 = vmatpush.msra.mxu0 0.0
        %2358 = vmatpush.msra.mxu0 0.0
        %2359 = vmatpush.msra.mxu0 0.0
        %2360 = vmatpush.msra.mxu0 0.0
        %2361 = vmatpush.msra.mxu0 0.0
        %2362 = vmatpush.msra.mxu0 0.0
        %2363 = vmatpush.msra.mxu0 0.0
        %2364 = vmatpush.msra.mxu0 0.0
        %2365 = vmatpush.msra.mxu0 0.0
        %2366 = vmatpush.msra.mxu0 0.0
        %2367 = vmatpush.msra.mxu0 0.0
        %2368 = vmatpush.msra.mxu0 0.0
        %2369 = vmatpush.msra.mxu0 0.0
        %2370 = vmatpush.msra.mxu0 %v2351
        %2371 = vmatpush.msra.mxu0 %v2350
        %2372 = vmatmul.f32.gmra.mxu0 %v2143
        %v2373 = vpop.f32.mrf.mxu0
        %v2374 = vadd.f32 0.0, %v2373
        %2375 = vmatmul.f32.gmra.mxu0 %v2146
        %v2376 = vpop.f32.mrf.mxu0
        %v2377 = vadd.f32 0.0, %v2376
        %2378 = vdwg.mxu0
        %v2379 = vld [vmem:[%s740] sm:$0xff]
        %v2380 = vld [vmem:[%s740 + $0x8] sm:$0xff]
        %v2381 = vld [vmem:[%s740 + $0x10] sm:$0xff]
        %v2382 = vld [vmem:[%s740 + $0x18] sm:$0xff]
        %v2384 = vsel %vm745, %v2374, 0
        %v2387 = vsel %vm745, %v2377, 0
        %2389 = vmatpush.msra.mxu0 0.0
        %2390 = vmatpush.msra.mxu0 0.0
        %2391 = vmatpush.msra.mxu0 0.0
        %2392 = vmatpush.msra.mxu0 0.0
        %2393 = vmatpush.msra.mxu0 0.0
        %2394 = vmatpush.msra.mxu0 0.0
        %2395 = vmatpush.msra.mxu0 0.0
        %2396 = vmatpush.msra.mxu0 0.0
        %2397 = vmatpush.msra.mxu0 0.0
        %2398 = vmatpush.msra.mxu0 0.0
        %2399 = vmatpush.msra.mxu0 0.0
        %2400 = vmatpush.msra.mxu0 0.0
        %2401 = vmatpush.msra.mxu0 %v2382
        %2402 = vmatpush.msra.mxu0 %v2381
        %2403 = vmatpush.msra.mxu0 %v2380
        %2404 = vmatpush.msra.mxu0 %v2379
        %2405 = vmatmul.f32.gmra.mxu0 %v2384
        %v2406 = vpop.f32.mrf.mxu0
        %v2407 = vadd.f32 0.0, %v2406
        %2408 = vmatmul.f32.gmra.mxu0 %v2387
        %v2409 = vpop.f32.mrf.mxu0
        %v2410 = vadd.f32 0.0, %v2409
        %2411 = vdwg.mxu0
        %v2413 = vsel %vm745, %v2350, 0
        %v2416 = vsel %vm745, %v2351, 0
        %2418 = vmatpush.msra.mxu0 0.0
        %2419 = vmatpush.msra.mxu0 0.0
        %2420 = vmatpush.msra.mxu0 0.0
        %2421 = vmatpush.msra.mxu0 0.0
        %2422 = vmatpush.msra.mxu0 0.0
        %2423 = vmatpush.msra.mxu0 0.0
        %2424 = vmatpush.msra.mxu0 0.0
        %2425 = vmatpush.msra.mxu0 0.0
        %2426 = vmatpush.msra.mxu0 0.0
        %2427 = vmatpush.msra.mxu0 0.0
        %2428 = vmatpush.msra.mxu0 0.0
        %2429 = vmatpush.msra.mxu0 0.0
        %2430 = vmatpush.msra.mxu0 %v2355
        %2431 = vmatpush.msra.mxu0 %v2354
        %2432 = vmatpush.msra.mxu0 %v2353
        %2433 = vmatpush.msra.mxu0 %v2352
        %2434 = vmatmul.f32.gmra.mxu0 %v2413
        %v2435 = vpop.f32.mrf.mxu0
        %v2436 = vadd.f32 %v2407, %v2435
        %2437 = vmatmul.f32.gmra.mxu0 %v2416
        %v2438 = vpop.f32.mrf.mxu0
        %v2439 = vadd.f32 %v2410, %v2438
        %2440 = vdwg.mxu0
        %2441 = vmatpush.msra.mxu0 0.0
        %2442 = vmatpush.msra.mxu0 0.0
        %2443 = vmatpush.msra.mxu0 0.0
        %2444 = vmatpush.msra.mxu0 0.0
        %2445 = vmatpush.msra.mxu0 0.0
        %2446 = vmatpush.msra.mxu0 0.0
        %2447 = vmatpush.msra.mxu0 0.0
        %2448 = vmatpush.msra.mxu0 0.0
        %2449 = vmatpush.msra.mxu0 0.0
        %2450 = vmatpush.msra.mxu0 0.0
        %2451 = vmatpush.msra.mxu0 0.0
        %2452 = vmatpush.msra.mxu0 0.0
        %2453 = vmatpush.msra.mxu0 0.0
        %2454 = vmatpush.msra.mxu0 0.0
        %2455 = vmatpush.msra.mxu0 %v2377
        %2456 = vmatpush.msra.mxu0 %v2374
        %2457 = vmatmul.f32.gmra.mxu0 %v2241
        %v2458 = vpop.f32.mrf.mxu0
        %v2459 = vadd.f32 0.0, %v2458
        %2460 = vmatmul.f32.gmra.mxu0 %v2244
        %v2461 = vpop.f32.mrf.mxu0
        %v2462 = vadd.f32 0.0, %v2461
        %2463 = vdwg.mxu0
        %v2464 = vsub.f32 %v2459, %v2350
        %v2465 = vsub.f32 %v2462, %v2351
        %v2466 = vld [vmem:[%s829] sm:$0xff]
        %v2467 = vld [vmem:[%s829 + $0x8] sm:$0xff]
        %v2468 = vld [vmem:[%s829 + $0x10] sm:$0xff]
        %v2469 = vld [vmem:[%s829 + $0x18] sm:$0xff]
        %v2471 = vsel %vm745, %v2464, 0
        %v2474 = vsel %vm745, %v2465, 0
        %2476 = vmatpush.msra.mxu0 0.0
        %2477 = vmatpush.msra.mxu0 0.0
        %2478 = vmatpush.msra.mxu0 0.0
        %2479 = vmatpush.msra.mxu0 0.0
        %2480 = vmatpush.msra.mxu0 0.0
        %2481 = vmatpush.msra.mxu0 0.0
        %2482 = vmatpush.msra.mxu0 0.0
        %2483 = vmatpush.msra.mxu0 0.0
        %2484 = vmatpush.msra.mxu0 0.0
        %2485 = vmatpush.msra.mxu0 0.0
        %2486 = vmatpush.msra.mxu0 0.0
        %2487 = vmatpush.msra.mxu0 0.0
        %2488 = vmatpush.msra.mxu0 %v2469
        %2489 = vmatpush.msra.mxu0 %v2468
        %2490 = vmatpush.msra.mxu0 %v2467
        %2491 = vmatpush.msra.mxu0 %v2466
        %2492 = vmatmul.f32.gmra.mxu0 %v2471
        %v2493 = vpop.f32.mrf.mxu0
        %v2494 = vadd.f32 0.0, %v2493
        %2495 = vmatmul.f32.gmra.mxu0 %v2474
        %v2496 = vpop.f32.mrf.mxu0
        %v2497 = vadd.f32 0.0, %v2496
        %2498 = vdwg.mxu0
        %v2499 = vadd.f32 %v2436, %v2494
        %v2500 = vadd.f32 %v2439, %v2497
        %2503 = vrot.lane.b32.xlu0 %v2499, 64
        %v2504 = vpop.permute.xlu0 %2503
        %2505 = vrot.lane.b32.xlu0 %v2500, 64
        %v2506 = vpop.permute.xlu0 %2505
        %v2509 = vadd.f32 %v2310, %v2504
        %v2510 = vadd.f32 %v2311, %v2506
        %v2511 = vtanh.pop %v2509
        %v2512 = vtanh.pop %v2510
        %v2513 = vmul.f32 %v2334, %v1718
        %v2514 = vmul.f32 %v2349, %v1719
        %v2515 = vsub.f32 1.0, %v2334
        %v2516 = vsub.f32 1.0, %v2349
        %2519 = vrot.lane.b32.xlu0 %v2511, 96
        %v2520 = vpop.permute.xlu0 %2519
        %2521 = vrot.lane.b32.xlu0 %v2512, 96
        %v2522 = vpop.permute.xlu0 %2521
        %v2525 = vmul.f32 %v2515, %v2520
        %v2526 = vmul.f32 %v2516, %v2522
        %v2527 = vadd.f32 %v2513, %v2525
        %v2528 = vadd.f32 %v2514, %v2526
        %2531 = vrot.lane.b32.xlu0 %v2527, 96
        %v2532 = vpop.permute.xlu0 %2531
        %2533 = vrot.lane.b32.xlu0 %v2528, 96
        %v2534 = vpop.permute.xlu0 %2533
        %v2537 = vsel %vm745, %v2532, %v2108
        %v2538 = vsel %vm745, %v2534, %v2109
        %v2539 = vld [vmem:[#allocation4] sm:$0xff]
        %v2540 = vld [vmem:[#allocation4 + $0x8] sm:$0xff]
        %v2541 = vld [vmem:[#allocation4 + $0x10] sm:$0xff]
        %v2542 = vld [vmem:[#allocation4 + $0x18] sm:$0xff]
        %v2543 = vld [vmem:[#allocation4 + $0x20] sm:$0xff]
        %v2544 = vld [vmem:[#allocation4 + $0x28] sm:$0xff]
        %v2545 = vld [vmem:[#allocation4 + $0x30] sm:$0xff]
        %v2546 = vld [vmem:[#allocation4 + $0x38] sm:$0xff]
        %2547 = vmatpush.msra.mxu0 0.0
        %2548 = vmatpush.msra.mxu0 0.0
        %2549 = vmatpush.msra.mxu0 0.0
        %2550 = vmatpush.msra.mxu0 0.0
        %2551 = vmatpush.msra.mxu0 0.0
        %2552 = vmatpush.msra.mxu0 0.0
        %2553 = vmatpush.msra.mxu0 0.0
        %2554 = vmatpush.msra.mxu0 0.0
        %2555 = vmatpush.msra.mxu0 0.0
        %2556 = vmatpush.msra.mxu0 0.0
        %2557 = vmatpush.msra.mxu0 0.0
        %2558 = vmatpush.msra.mxu0 0.0
        %2559 = vmatpush.msra.mxu0 0.0
        %2560 = vmatpush.msra.mxu0 0.0
        %2561 = vmatpush.msra.mxu0 %v2538
        %2562 = vmatpush.msra.mxu0 %v2537
        %2563 = vmatmul.f32.gmra.mxu0 %v2143
        %v2564 = vpop.f32.mrf.mxu0
        %v2565 = vadd.f32 0.0, %v2564
        %2566 = vmatmul.f32.gmra.mxu0 %v2146
        %v2567 = vpop.f32.mrf.mxu0
        %v2568 = vadd.f32 0.0, %v2567
        %2569 = vdwg.mxu0
        %v2570 = vld [vmem:[%s948] sm:$0xff]
        %v2571 = vld [vmem:[%s948 + $0x8] sm:$0xff]
        %v2572 = vld [vmem:[%s948 + $0x10] sm:$0xff]
        %v2573 = vld [vmem:[%s948 + $0x18] sm:$0xff]
        %v2574 = vld [vmem:[%s948 + $0x20] sm:$0xff]
        %v2575 = vld [vmem:[%s948 + $0x28] sm:$0xff]
        %v2576 = vld [vmem:[%s948 + $0x30] sm:$0xff]
        %v2577 = vld [vmem:[%s948 + $0x38] sm:$0xff]
        %v2579 = vsel %vm957, %v2565, 0
        %v2582 = vsel %vm957, %v2568, 0
        %2584 = vmatpush.msra.mxu0 0.0
        %2585 = vmatpush.msra.mxu0 0.0
        %2586 = vmatpush.msra.mxu0 0.0
        %2587 = vmatpush.msra.mxu0 0.0
        %2588 = vmatpush.msra.mxu0 0.0
        %2589 = vmatpush.msra.mxu0 0.0
        %2590 = vmatpush.msra.mxu0 0.0
        %2591 = vmatpush.msra.mxu0 0.0
        %2592 = vmatpush.msra.mxu0 %v2577
        %2593 = vmatpush.msra.mxu0 %v2576
        %2594 = vmatpush.msra.mxu0 %v2575
        %2595 = vmatpush.msra.mxu0 %v2574
        %2596 = vmatpush.msra.mxu0 %v2573
        %2597 = vmatpush.msra.mxu0 %v2572
        %2598 = vmatpush.msra.mxu0 %v2571
        %2599 = vmatpush.msra.mxu0 %v2570
        %2600 = vmatmul.f32.gmra.mxu0 %v2579
        %v2601 = vpop.f32.mrf.mxu0
        %v2602 = vadd.f32 0.0, %v2601
        %2603 = vmatmul.f32.gmra.mxu0 %v2582
        %v2604 = vpop.f32.mrf.mxu0
        %v2605 = vadd.f32 0.0, %v2604
        %2606 = vdwg.mxu0
        %v2608 = vsel %vm957, %v2537, 0
        %v2611 = vsel %vm957, %v2538, 0
        %2613 = vmatpush.msra.mxu0 0.0
        %2614 = vmatpush.msra.mxu0 0.0
        %2615 = vmatpush.msra.mxu0 0.0
        %2616 = vmatpush.msra.mxu0 0.0
        %2617 = vmatpush.msra.mxu0 0.0
        %2618 = vmatpush.msra.mxu0 0.0
        %2619 = vmatpush.msra.mxu0 0.0
        %2620 = vmatpush.msra.mxu0 0.0
        %2621 = vmatpush.msra.mxu0 %v2546
        %2622 = vmatpush.msra.mxu0 %v2545
        %2623 = vmatpush.msra.mxu0 %v2544
        %2624 = vmatpush.msra.mxu0 %v2543
        %2625 = vmatpush.msra.mxu0 %v2542
        %2626 = vmatpush.msra.mxu0 %v2541
        %2627 = vmatpush.msra.mxu0 %v2540
        %2628 = vmatpush.msra.mxu0 %v2539
        %2629 = vmatmul.f32.gmra.mxu0 %v2608
        %v2630 = vpop.f32.mrf.mxu0
        %v2631 = vadd.f32 %v2602, %v2630
        %2632 = vmatmul.f32.gmra.mxu0 %v2611
        %v2633 = vpop.f32.mrf.mxu0
        %v2634 = vadd.f32 %v2605, %v2633
        %2635 = vdwg.mxu0
        %2636 = vmatpush.msra.mxu0 0.0
        %2637 = vmatpush.msra.mxu0 0.0
        %2638 = vmatpush.msra.mxu0 0.0
        %2639 = vmatpush.msra.mxu0 0.0
        %2640 = vmatpush.msra.mxu0 0.0
        %2641 = vmatpush.msra.mxu0 0.0
        %2642 = vmatpush.msra.mxu0 0.0
        %2643 = vmatpush.msra.mxu0 0.0
        %2644 = vmatpush.msra.mxu0 0.0
        %2645 = vmatpush.msra.mxu0 0.0
        %2646 = vmatpush.msra.mxu0 0.0
        %2647 = vmatpush.msra.mxu0 0.0
        %2648 = vmatpush.msra.mxu0 0.0
        %2649 = vmatpush.msra.mxu0 0.0
        %2650 = vmatpush.msra.mxu0 %v2568
        %2651 = vmatpush.msra.mxu0 %v2565
        %2652 = vmatmul.f32.gmra.mxu0 %v2241
        %v2653 = vpop.f32.mrf.mxu0
        %v2654 = vadd.f32 0.0, %v2653
        %2655 = vmatmul.f32.gmra.mxu0 %v2244
        %v2656 = vpop.f32.mrf.mxu0
        %v2657 = vadd.f32 0.0, %v2656
        %2658 = vdwg.mxu0
        %v2659 = vsub.f32 %v2654, %v2537
        %v2660 = vsub.f32 %v2657, %v2538
        %v2661 = vld [vmem:[%s1041] sm:$0xff]
        %v2662 = vld [vmem:[%s1041 + $0x8] sm:$0xff]
        %v2663 = vld [vmem:[%s1041 + $0x10] sm:$0xff]
        %v2664 = vld [vmem:[%s1041 + $0x18] sm:$0xff]
        %v2665 = vld [vmem:[%s1041 + $0x20] sm:$0xff]
        %v2666 = vld [vmem:[%s1041 + $0x28] sm:$0xff]
        %v2667 = vld [vmem:[%s1041 + $0x30] sm:$0xff]
        %v2668 = vld [vmem:[%s1041 + $0x38] sm:$0xff]
        %v2670 = vsel %vm957, %v2659, 0
        %v2673 = vsel %vm957, %v2660, 0
        %2675 = vmatpush.msra.mxu0 0.0
        %2676 = vmatpush.msra.mxu0 0.0
        %2677 = vmatpush.msra.mxu0 0.0
        %2678 = vmatpush.msra.mxu0 0.0
        %2679 = vmatpush.msra.mxu0 0.0
        %2680 = vmatpush.msra.mxu0 0.0
        %2681 = vmatpush.msra.mxu0 0.0
        %2682 = vmatpush.msra.mxu0 0.0
        %2683 = vmatpush.msra.mxu0 %v2668
        %2684 = vmatpush.msra.mxu0 %v2667
        %2685 = vmatpush.msra.mxu0 %v2666
        %2686 = vmatpush.msra.mxu0 %v2665
        %2687 = vmatpush.msra.mxu0 %v2664
        %2688 = vmatpush.msra.mxu0 %v2663
        %2689 = vmatpush.msra.mxu0 %v2662
        %2690 = vmatpush.msra.mxu0 %v2661
        %2691 = vmatmul.f32.gmra.mxu0 %v2670
        %v2692 = vpop.f32.mrf.mxu0
        %v2693 = vadd.f32 0.0, %v2692
        %2694 = vmatmul.f32.gmra.mxu0 %v2673
        %v2695 = vpop.f32.mrf.mxu0
        %v2696 = vadd.f32 0.0, %v2695
        %2697 = vdwg.mxu0
        %v2698 = vadd.f32 %v2631, %v2693
        %v2699 = vadd.f32 %v2634, %v2696
        %v2700 = vadd.f32 %v2698, %v469
        %v2701 = vadd.f32 %v2699, %v469
        %v2702 = vxor.u32 %v2700, 2147483648
        %v2703 = vxor.u32 %v2701, 2147483648
        %v2704 = vmul.f32 %v2702, 1.442695
        %v2705 = vpow.pop %v2704
        %v2706 = vmul.f32 %v2703, 1.442695
        %v2707 = vpow.pop %v2706
        %v2708 = vadd.f32 %v2705, 1.0
        %v2709 = vadd.f32 %v2707, 1.0
        %v2710 = vrcp.pop %v2708
        %v2711 = vmul.f32 %v2708, %v2710
        %v2712 = vsub.f32 1.0, %v2711
        %v2713 = vmul.f32 %v2710, %v2712
        %v2714 = vadd.f32 %v2710, %v2713
        %vm2715 = vweird.f32 %v2708
        %vm2716 = vweird.f32 %v2710
        %vm2717 = vmor %vm2715, %vm2716
        %v2718 = vsel %vm2717, %v2710, %v2714
        %v2719 = vand.u32 2147483647, %v2708
        %vm2720 = vcmp.eq.f32.partialorder %v2719, 8.507059e+37
        %v2721 = vand.u32 %v2708, 2147483648
        %v2722 = vor.u32 1.1754944e-38, %v2721
        %v2723 = vsel %vm2720, %v2722, %v2718
        %v2724 = vmul.f32 1.0, %v2723
        %v2725 = vrcp.pop %v2709
        %v2726 = vmul.f32 %v2709, %v2725
        %v2727 = vsub.f32 1.0, %v2726
        %v2728 = vmul.f32 %v2725, %v2727
        %v2729 = vadd.f32 %v2725, %v2728
        %vm2730 = vweird.f32 %v2709
        %vm2731 = vweird.f32 %v2725
        %vm2732 = vmor %vm2730, %vm2731
        %v2733 = vsel %vm2732, %v2725, %v2729
        %v2734 = vand.u32 2147483647, %v2709
        %vm2735 = vcmp.eq.f32.partialorder %v2734, 8.507059e+37
        %v2736 = vand.u32 %v2709, 2147483648
        %v2737 = vor.u32 1.1754944e-38, %v2736
        %v2738 = vsel %vm2735, %v2737, %v2733
        %v2739 = vmul.f32 1.0, %v2738
        %v2740 = vmul.f32 %v2724, %v2113
        %v2741 = vmul.f32 %v2739, %v2115
        %v2742 = vld [vmem:[#allocation6] sm:$0xff]
        %v2743 = vld [vmem:[#allocation6 + $0x8] sm:$0xff]
        %v2744 = vld [vmem:[#allocation6 + $0x10] sm:$0xff]
        %v2745 = vld [vmem:[#allocation6 + $0x18] sm:$0xff]
        %2746 = vmatpush.msra.mxu0 0.0
        %2747 = vmatpush.msra.mxu0 0.0
        %2748 = vmatpush.msra.mxu0 0.0
        %2749 = vmatpush.msra.mxu0 0.0
        %2750 = vmatpush.msra.mxu0 0.0
        %2751 = vmatpush.msra.mxu0 0.0
        %2752 = vmatpush.msra.mxu0 0.0
        %2753 = vmatpush.msra.mxu0 0.0
        %2754 = vmatpush.msra.mxu0 0.0
        %2755 = vmatpush.msra.mxu0 0.0
        %2756 = vmatpush.msra.mxu0 0.0
        %2757 = vmatpush.msra.mxu0 0.0
        %2758 = vmatpush.msra.mxu0 0.0
        %2759 = vmatpush.msra.mxu0 0.0
        %2760 = vmatpush.msra.mxu0 %v2741
        %2761 = vmatpush.msra.mxu0 %v2740
        %2762 = vmatmul.f32.gmra.mxu0 %v2143
        %v2763 = vpop.f32.mrf.mxu0
        %v2764 = vadd.f32 0.0, %v2763
        %2765 = vmatmul.f32.gmra.mxu0 %v2146
        %v2766 = vpop.f32.mrf.mxu0
        %v2767 = vadd.f32 0.0, %v2766
        %2768 = vdwg.mxu0
        %v2769 = vld [vmem:[%s1150] sm:$0xff]
        %v2770 = vld [vmem:[%s1150 + $0x8] sm:$0xff]
        %v2771 = vld [vmem:[%s1150 + $0x10] sm:$0xff]
        %v2772 = vld [vmem:[%s1150 + $0x18] sm:$0xff]
        %v2774 = vsel %vm745, %v2764, 0
        %v2777 = vsel %vm745, %v2767, 0
        %2779 = vmatpush.msra.mxu0 0.0
        %2780 = vmatpush.msra.mxu0 0.0
        %2781 = vmatpush.msra.mxu0 0.0
        %2782 = vmatpush.msra.mxu0 0.0
        %2783 = vmatpush.msra.mxu0 0.0
        %2784 = vmatpush.msra.mxu0 0.0
        %2785 = vmatpush.msra.mxu0 0.0
        %2786 = vmatpush.msra.mxu0 0.0
        %2787 = vmatpush.msra.mxu0 0.0
        %2788 = vmatpush.msra.mxu0 0.0
        %2789 = vmatpush.msra.mxu0 0.0
        %2790 = vmatpush.msra.mxu0 0.0
        %2791 = vmatpush.msra.mxu0 %v2772
        %2792 = vmatpush.msra.mxu0 %v2771
        %2793 = vmatpush.msra.mxu0 %v2770
        %2794 = vmatpush.msra.mxu0 %v2769
        %2795 = vmatmul.f32.gmra.mxu0 %v2774
        %v2796 = vpop.f32.mrf.mxu0
        %v2797 = vadd.f32 0.0, %v2796
        %2798 = vmatmul.f32.gmra.mxu0 %v2777
        %v2799 = vpop.f32.mrf.mxu0
        %v2800 = vadd.f32 0.0, %v2799
        %2801 = vdwg.mxu0
        %v2803 = vsel %vm745, %v2740, 0
        %v2806 = vsel %vm745, %v2741, 0
        %2808 = vmatpush.msra.mxu0 0.0
        %2809 = vmatpush.msra.mxu0 0.0
        %2810 = vmatpush.msra.mxu0 0.0
        %2811 = vmatpush.msra.mxu0 0.0
        %2812 = vmatpush.msra.mxu0 0.0
        %2813 = vmatpush.msra.mxu0 0.0
        %2814 = vmatpush.msra.mxu0 0.0
        %2815 = vmatpush.msra.mxu0 0.0
        %2816 = vmatpush.msra.mxu0 0.0
        %2817 = vmatpush.msra.mxu0 0.0
        %2818 = vmatpush.msra.mxu0 0.0
        %2819 = vmatpush.msra.mxu0 0.0
        %2820 = vmatpush.msra.mxu0 %v2745
        %2821 = vmatpush.msra.mxu0 %v2744
        %2822 = vmatpush.msra.mxu0 %v2743
        %2823 = vmatpush.msra.mxu0 %v2742
        %2824 = vmatmul.f32.gmra.mxu0 %v2803
        %v2825 = vpop.f32.mrf.mxu0
        %v2826 = vadd.f32 %v2797, %v2825
        %2827 = vmatmul.f32.gmra.mxu0 %v2806
        %v2828 = vpop.f32.mrf.mxu0
        %v2829 = vadd.f32 %v2800, %v2828
        %2830 = vdwg.mxu0
        %2831 = vmatpush.msra.mxu0 0.0
        %2832 = vmatpush.msra.mxu0 0.0
        %2833 = vmatpush.msra.mxu0 0.0
        %2834 = vmatpush.msra.mxu0 0.0
        %2835 = vmatpush.msra.mxu0 0.0
        %2836 = vmatpush.msra.mxu0 0.0
        %2837 = vmatpush.msra.mxu0 0.0
        %2838 = vmatpush.msra.mxu0 0.0
        %2839 = vmatpush.msra.mxu0 0.0
        %2840 = vmatpush.msra.mxu0 0.0
        %2841 = vmatpush.msra.mxu0 0.0
        %2842 = vmatpush.msra.mxu0 0.0
        %2843 = vmatpush.msra.mxu0 0.0
        %2844 = vmatpush.msra.mxu0 0.0
        %2845 = vmatpush.msra.mxu0 %v2767
        %2846 = vmatpush.msra.mxu0 %v2764
        %2847 = vmatmul.f32.gmra.mxu0 %v2241
        %v2848 = vpop.f32.mrf.mxu0
        %v2849 = vadd.f32 0.0, %v2848
        %2850 = vmatmul.f32.gmra.mxu0 %v2244
        %v2851 = vpop.f32.mrf.mxu0
        %v2852 = vadd.f32 0.0, %v2851
        %2853 = vdwg.mxu0
        %v2854 = vsub.f32 %v2849, %v2740
        %v2855 = vsub.f32 %v2852, %v2741
        %v2856 = vld [vmem:[%s1238] sm:$0xff]
        %v2857 = vld [vmem:[%s1238 + $0x8] sm:$0xff]
        %v2858 = vld [vmem:[%s1238 + $0x10] sm:$0xff]
        %v2859 = vld [vmem:[%s1238 + $0x18] sm:$0xff]
        %v2861 = vsel %vm745, %v2854, 0
        %v2864 = vsel %vm745, %v2855, 0
        %2866 = vmatpush.msra.mxu0 0.0
        %2867 = vmatpush.msra.mxu0 0.0
        %2868 = vmatpush.msra.mxu0 0.0
        %2869 = vmatpush.msra.mxu0 0.0
        %2870 = vmatpush.msra.mxu0 0.0
        %2871 = vmatpush.msra.mxu0 0.0
        %2872 = vmatpush.msra.mxu0 0.0
        %2873 = vmatpush.msra.mxu0 0.0
        %2874 = vmatpush.msra.mxu0 0.0
        %2875 = vmatpush.msra.mxu0 0.0
        %2876 = vmatpush.msra.mxu0 0.0
        %2877 = vmatpush.msra.mxu0 0.0
        %2878 = vmatpush.msra.mxu0 %v2859
        %2879 = vmatpush.msra.mxu0 %v2858
        %2880 = vmatpush.msra.mxu0 %v2857
        %2881 = vmatpush.msra.mxu0 %v2856
        %2882 = vmatmul.f32.gmra.mxu0 %v2861
        %v2883 = vpop.f32.mrf.mxu0
        %v2884 = vadd.f32 0.0, %v2883
        %2885 = vmatmul.f32.gmra.mxu0 %v2864
        %v2886 = vpop.f32.mrf.mxu0
        %v2887 = vadd.f32 0.0, %v2886
        %2888 = vdwg.mxu0
        %v2889 = vadd.f32 %v2826, %v2884
        %v2890 = vadd.f32 %v2829, %v2887
        %2893 = vrot.lane.b32.xlu0 %v2889, 64
        %v2894 = vpop.permute.xlu0 %2893
        %2895 = vrot.lane.b32.xlu0 %v2890, 64
        %v2896 = vpop.permute.xlu0 %2895
        %v2899 = vadd.f32 %v2700, %v2894
        %v2900 = vadd.f32 %v2701, %v2896
        %v2901 = vtanh.pop %v2899
        %v2902 = vtanh.pop %v2900
        %v2903 = vmul.f32 %v2724, %v2108
        %v2904 = vmul.f32 %v2739, %v2109
        %v2905 = vsub.f32 1.0, %v2724
        %v2906 = vsub.f32 1.0, %v2739
        %2909 = vrot.lane.b32.xlu0 %v2901, 96
        %v2910 = vpop.permute.xlu0 %2909
        %2911 = vrot.lane.b32.xlu0 %v2902, 96
        %v2912 = vpop.permute.xlu0 %2911
        %v2915 = vmul.f32 %v2905, %v2910
        %v2916 = vmul.f32 %v2906, %v2912
        %v2917 = vadd.f32 %v2903, %v2915
        %v2918 = vadd.f32 %v2904, %v2916
        %2921 = vrot.lane.b32.xlu0 %v2917, 96
        %v2922 = vpop.permute.xlu0 %2921
        %2923 = vrot.lane.b32.xlu0 %v2918, 96
        %v2924 = vpop.permute.xlu0 %2923
        %s2927 = scalar_lea.vmem %s457, 32
        %2928 = vst.msk [vmem:[%s2927] sm:$0xff] %vm745, %v2922
        %2929 = vst.msk [vmem:[%s2927 + $0x8] sm:$0xff] %vm745, %v2924
        %s2930 = scalar_lea.vmem %s442, 48
        %v2931 = vld [vmem:[%s2930] sm:$0xff]
        %v2932 = vld [vmem:[%s2930 + $0x8] sm:$0xff]
        %v2933 = vadd.f32 %v2931, %v2931
        %v2934 = vadd.f32 %v2932, %v2932
        %s2935 = scalar_lea.vmem %s447, 48
        %v2936 = vld [vmem:[%s2935] sm:$0xff]
        %v2937 = vld [vmem:[%s2935 + $0x8] sm:$0xff]
        %2938 = vrot.lane.b32.xlu0 %v2527, 100
        %v2939 = vpop.permute.xlu0 %2938
        %2940 = vrot.lane.b32.xlu0 %v2528, 100
        %v2941 = vpop.permute.xlu0 %2940
        %v2944 = vsel %vm490, %v2936, %v2939
        %v2945 = vsel %vm490, %v2937, %v2941
        %v2946 = vld [vmem:[%s3] sm:$0xff]
        %v2947 = vld [vmem:[%s3 + $0x8] sm:$0xff]
        %v2948 = vld [vmem:[%s3 + $0x10] sm:$0xff]
        %v2949 = vld [vmem:[%s3 + $0x18] sm:$0xff]
        %v2950 = vld [vmem:[%s3 + $0x20] sm:$0xf]
        %v2952 = vsel %vm498, %v2931, 0
        %v2955 = vsel %vm498, %v2932, 0
        %2957 = vmatpush.msra.mxu0 0.0
        %2958 = vmatpush.msra.mxu0 0.0
        %2959 = vmatpush.msra.mxu0 0.0
        %2960 = vmatpush.msra.mxu0 0.0
        %2961 = vmatpush.msra.mxu0 0.0
        %2962 = vmatpush.msra.mxu0 0.0
        %2963 = vmatpush.msra.mxu0 0.0
        %2964 = vmatpush.msra.mxu0 0.0
        %2965 = vmatpush.msra.mxu0 0.0
        %2966 = vmatpush.msra.mxu0 0.0
        %2967 = vmatpush.msra.mxu0 0.0
        %2968 = vmatpush.msra.mxu0 0.0
        %2969 = vmatpush.msra.mxu0 0.0
        %2970 = vmatpush.msra.mxu0 0.0
        %2971 = vmatpush.msra.mxu0 %v2945
        %2972 = vmatpush.msra.mxu0 %v2944
        %2973 = vmatmul.f32.gmra.mxu0 %v2952
        %v2974 = vpop.f32.mrf.mxu0
        %v2975 = vadd.f32 0.0, %v2974
        %2976 = vmatmul.f32.gmra.mxu0 %v2955
        %v2977 = vpop.f32.mrf.mxu0
        %v2978 = vadd.f32 0.0, %v2977
        %2979 = vdwg.mxu0
        %v2980 = vld [vmem:[%s528] sm:$0xff]
        %v2981 = vld [vmem:[%s528 + $0x8] sm:$0xff]
        %v2982 = vld [vmem:[%s528 + $0x10] sm:$0xff]
        %v2983 = vld [vmem:[%s528 + $0x18] sm:$0xff]
        %v2984 = vld [vmem:[%s528 + $0x20] sm:$0xf]
        %v2986 = vsel %vm534, %v2975, 0
        %v2989 = vsel %vm534, %v2978, 0
        %v2992 = vsel %vm541, %v2984, 0
        %2994 = vmatpush.msra.mxu0 0.0
        %2995 = vmatpush.msra.mxu0 0.0
        %2996 = vmatpush.msra.mxu0 0.0
        %2997 = vmatpush.msra.mxu0 0.0
        %2998 = vmatpush.msra.mxu0 0.0
        %2999 = vmatpush.msra.mxu0 0.0
        %3000 = vmatpush.msra.mxu0 0.0
        %3001 = vmatpush.msra.mxu0 0.0
        %3002 = vmatpush.msra.mxu0 0.0
        %3003 = vmatpush.msra.mxu0 0.0
        %3004 = vmatpush.msra.mxu0 0.0
        %3005 = vmatpush.msra.mxu0 %v2992
        %3006 = vmatpush.msra.mxu0 %v2983
        %3007 = vmatpush.msra.mxu0 %v2982
        %3008 = vmatpush.msra.mxu0 %v2981
        %3009 = vmatpush.msra.mxu0 %v2980
        %3010 = vmatmul.f32.gmra.mxu0 %v2986
        %v3011 = vpop.f32.mrf.mxu0
        %v3012 = vadd.f32 0.0, %v3011
        %3013 = vmatmul.f32.gmra.mxu0 %v2989
        %v3014 = vpop.f32.mrf.mxu0
        %v3015 = vadd.f32 0.0, %v3014
        %3016 = vdwg.mxu0
        %v3018 = vsel %vm534, %v2944, 0
        %v3021 = vsel %vm534, %v2945, 0
        %v3024 = vsel %vm541, %v2950, 0
        %3026 = vmatpush.msra.mxu0 0.0
        %3027 = vmatpush.msra.mxu0 0.0
        %3028 = vmatpush.msra.mxu0 0.0
        %3029 = vmatpush.msra.mxu0 0.0
        %3030 = vmatpush.msra.mxu0 0.0
        %3031 = vmatpush.msra.mxu0 0.0
        %3032 = vmatpush.msra.mxu0 0.0
        %3033 = vmatpush.msra.mxu0 0.0
        %3034 = vmatpush.msra.mxu0 0.0
        %3035 = vmatpush.msra.mxu0 0.0
        %3036 = vmatpush.msra.mxu0 0.0
        %3037 = vmatpush.msra.mxu0 %v3024
        %3038 = vmatpush.msra.mxu0 %v2949
        %3039 = vmatpush.msra.mxu0 %v2948
        %3040 = vmatpush.msra.mxu0 %v2947
        %3041 = vmatpush.msra.mxu0 %v2946
        %3042 = vmatmul.f32.gmra.mxu0 %v3018
        %v3043 = vpop.f32.mrf.mxu0
        %v3044 = vadd.f32 %v3012, %v3043
        %3045 = vmatmul.f32.gmra.mxu0 %v3021
        %v3046 = vpop.f32.mrf.mxu0
        %v3047 = vadd.f32 %v3015, %v3046
        %3048 = vdwg.mxu0
        %v3050 = vsel %vm498, %v2933, 0
        %v3053 = vsel %vm498, %v2934, 0
        %3055 = vmatpush.msra.mxu0 0.0
        %3056 = vmatpush.msra.mxu0 0.0
        %3057 = vmatpush.msra.mxu0 0.0
        %3058 = vmatpush.msra.mxu0 0.0
        %3059 = vmatpush.msra.mxu0 0.0
        %3060 = vmatpush.msra.mxu0 0.0
        %3061 = vmatpush.msra.mxu0 0.0
        %3062 = vmatpush.msra.mxu0 0.0
        %3063 = vmatpush.msra.mxu0 0.0
        %3064 = vmatpush.msra.mxu0 0.0
        %3065 = vmatpush.msra.mxu0 0.0
        %3066 = vmatpush.msra.mxu0 0.0
        %3067 = vmatpush.msra.mxu0 0.0
        %3068 = vmatpush.msra.mxu0 0.0
        %3069 = vmatpush.msra.mxu0 %v2978
        %3070 = vmatpush.msra.mxu0 %v2975
        %3071 = vmatmul.f32.gmra.mxu0 %v3050
        %v3072 = vpop.f32.mrf.mxu0
        %v3073 = vadd.f32 0.0, %v3072
        %3074 = vmatmul.f32.gmra.mxu0 %v3053
        %v3075 = vpop.f32.mrf.mxu0
        %v3076 = vadd.f32 0.0, %v3075
        %3077 = vdwg.mxu0
        %v3078 = vsub.f32 %v3073, %v2944
        %v3079 = vsub.f32 %v3076, %v2945
        %v3080 = vld [vmem:[%s631] sm:$0xff]
        %v3081 = vld [vmem:[%s631 + $0x8] sm:$0xff]
        %v3082 = vld [vmem:[%s631 + $0x10] sm:$0xff]
        %v3083 = vld [vmem:[%s631 + $0x18] sm:$0xff]
        %v3084 = vld [vmem:[%s631 + $0x20] sm:$0xf]
        %v3086 = vsel %vm534, %v3078, 0
        %v3089 = vsel %vm534, %v3079, 0
        %v3092 = vsel %vm541, %v3084, 0
        %3094 = vmatpush.msra.mxu0 0.0
        %3095 = vmatpush.msra.mxu0 0.0
        %3096 = vmatpush.msra.mxu0 0.0
        %3097 = vmatpush.msra.mxu0 0.0
        %3098 = vmatpush.msra.mxu0 0.0
        %3099 = vmatpush.msra.mxu0 0.0
        %3100 = vmatpush.msra.mxu0 0.0
        %3101 = vmatpush.msra.mxu0 0.0
        %3102 = vmatpush.msra.mxu0 0.0
        %3103 = vmatpush.msra.mxu0 0.0
        %3104 = vmatpush.msra.mxu0 0.0
        %3105 = vmatpush.msra.mxu0 %v3092
        %3106 = vmatpush.msra.mxu0 %v3083
        %3107 = vmatpush.msra.mxu0 %v3082
        %3108 = vmatpush.msra.mxu0 %v3081
        %3109 = vmatpush.msra.mxu0 %v3080
        %3110 = vmatmul.f32.gmra.mxu0 %v3086
        %v3111 = vpop.f32.mrf.mxu0
        %v3112 = vadd.f32 0.0, %v3111
        %3113 = vmatmul.f32.gmra.mxu0 %v3089
        %v3114 = vpop.f32.mrf.mxu0
        %v3115 = vadd.f32 0.0, %v3114
        %3116 = vdwg.mxu0
        %v3117 = vadd.f32 %v3044, %v3112
        %v3118 = vadd.f32 %v3047, %v3115
        %v3119 = vadd.f32 %v3117, %v465
        %v3120 = vadd.f32 %v3118, %v465
        %v3121 = vxor.u32 %v3119, 2147483648
        %v3122 = vxor.u32 %v3120, 2147483648
        %v3123 = vmul.f32 %v3121, 1.442695
        %v3124 = vpow.pop %v3123
        %v3125 = vmul.f32 %v3122, 1.442695
        %v3126 = vpow.pop %v3125
        %v3127 = vadd.f32 %v3124, 1.0
        %v3128 = vadd.f32 %v3126, 1.0
        %v3129 = vrcp.pop %v3127
        %v3130 = vmul.f32 %v3127, %v3129
        %v3131 = vsub.f32 1.0, %v3130
        %v3132 = vmul.f32 %v3129, %v3131
        %v3133 = vadd.f32 %v3129, %v3132
        %vm3134 = vweird.f32 %v3127
        %vm3135 = vweird.f32 %v3129
        %vm3136 = vmor %vm3134, %vm3135
        %v3137 = vsel %vm3136, %v3129, %v3133
        %v3138 = vand.u32 2147483647, %v3127
        %vm3139 = vcmp.eq.f32.partialorder %v3138, 8.507059e+37
        %v3140 = vand.u32 %v3127, 2147483648
        %v3141 = vor.u32 1.1754944e-38, %v3140
        %v3142 = vsel %vm3139, %v3141, %v3137
        %v3143 = vmul.f32 1.0, %v3142
        %v3144 = vrcp.pop %v3128
        %v3145 = vmul.f32 %v3128, %v3144
        %v3146 = vsub.f32 1.0, %v3145
        %v3147 = vmul.f32 %v3144, %v3146
        %v3148 = vadd.f32 %v3144, %v3147
        %vm3149 = vweird.f32 %v3128
        %vm3150 = vweird.f32 %v3144
        %vm3151 = vmor %vm3149, %vm3150
        %v3152 = vsel %vm3151, %v3144, %v3148
        %v3153 = vand.u32 2147483647, %v3128
        %vm3154 = vcmp.eq.f32.partialorder %v3153, 8.507059e+37
        %v3155 = vand.u32 %v3128, 2147483648
        %v3156 = vor.u32 1.1754944e-38, %v3155
        %v3157 = vsel %vm3154, %v3156, %v3152
        %v3158 = vmul.f32 1.0, %v3157
        %v3159 = vmul.f32 %v3143, %v2532
        %v3160 = vmul.f32 %v3158, %v2534
        %v3161 = vld [vmem:[#allocation2] sm:$0xff]
        %v3162 = vld [vmem:[#allocation2 + $0x8] sm:$0xff]
        %v3163 = vld [vmem:[#allocation2 + $0x10] sm:$0xff]
        %v3164 = vld [vmem:[#allocation2 + $0x18] sm:$0xff]
        %3165 = vmatpush.msra.mxu0 0.0
        %3166 = vmatpush.msra.mxu0 0.0
        %3167 = vmatpush.msra.mxu0 0.0
        %3168 = vmatpush.msra.mxu0 0.0
        %3169 = vmatpush.msra.mxu0 0.0
        %3170 = vmatpush.msra.mxu0 0.0
        %3171 = vmatpush.msra.mxu0 0.0
        %3172 = vmatpush.msra.mxu0 0.0
        %3173 = vmatpush.msra.mxu0 0.0
        %3174 = vmatpush.msra.mxu0 0.0
        %3175 = vmatpush.msra.mxu0 0.0
        %3176 = vmatpush.msra.mxu0 0.0
        %3177 = vmatpush.msra.mxu0 0.0
        %3178 = vmatpush.msra.mxu0 0.0
        %3179 = vmatpush.msra.mxu0 %v3160
        %3180 = vmatpush.msra.mxu0 %v3159
        %3181 = vmatmul.f32.gmra.mxu0 %v2952
        %v3182 = vpop.f32.mrf.mxu0
        %v3183 = vadd.f32 0.0, %v3182
        %3184 = vmatmul.f32.gmra.mxu0 %v2955
        %v3185 = vpop.f32.mrf.mxu0
        %v3186 = vadd.f32 0.0, %v3185
        %3187 = vdwg.mxu0
        %v3188 = vld [vmem:[%s740] sm:$0xff]
        %v3189 = vld [vmem:[%s740 + $0x8] sm:$0xff]
        %v3190 = vld [vmem:[%s740 + $0x10] sm:$0xff]
        %v3191 = vld [vmem:[%s740 + $0x18] sm:$0xff]
        %v3193 = vsel %vm745, %v3183, 0
        %v3196 = vsel %vm745, %v3186, 0
        %3198 = vmatpush.msra.mxu0 0.0
        %3199 = vmatpush.msra.mxu0 0.0
        %3200 = vmatpush.msra.mxu0 0.0
        %3201 = vmatpush.msra.mxu0 0.0
        %3202 = vmatpush.msra.mxu0 0.0
        %3203 = vmatpush.msra.mxu0 0.0
        %3204 = vmatpush.msra.mxu0 0.0
        %3205 = vmatpush.msra.mxu0 0.0
        %3206 = vmatpush.msra.mxu0 0.0
        %3207 = vmatpush.msra.mxu0 0.0
        %3208 = vmatpush.msra.mxu0 0.0
        %3209 = vmatpush.msra.mxu0 0.0
        %3210 = vmatpush.msra.mxu0 %v3191
        %3211 = vmatpush.msra.mxu0 %v3190
        %3212 = vmatpush.msra.mxu0 %v3189
        %3213 = vmatpush.msra.mxu0 %v3188
        %3214 = vmatmul.f32.gmra.mxu0 %v3193
        %v3215 = vpop.f32.mrf.mxu0
        %v3216 = vadd.f32 0.0, %v3215
        %3217 = vmatmul.f32.gmra.mxu0 %v3196
        %v3218 = vpop.f32.mrf.mxu0
        %v3219 = vadd.f32 0.0, %v3218
        %3220 = vdwg.mxu0
        %v3222 = vsel %vm745, %v3159, 0
        %v3225 = vsel %vm745, %v3160, 0
        %3227 = vmatpush.msra.mxu0 0.0
        %3228 = vmatpush.msra.mxu0 0.0
        %3229 = vmatpush.msra.mxu0 0.0
        %3230 = vmatpush.msra.mxu0 0.0
        %3231 = vmatpush.msra.mxu0 0.0
        %3232 = vmatpush.msra.mxu0 0.0
        %3233 = vmatpush.msra.mxu0 0.0
        %3234 = vmatpush.msra.mxu0 0.0
        %3235 = vmatpush.msra.mxu0 0.0
        %3236 = vmatpush.msra.mxu0 0.0
        %3237 = vmatpush.msra.mxu0 0.0
        %3238 = vmatpush.msra.mxu0 0.0
        %3239 = vmatpush.msra.mxu0 %v3164
        %3240 = vmatpush.msra.mxu0 %v3163
        %3241 = vmatpush.msra.mxu0 %v3162
        %3242 = vmatpush.msra.mxu0 %v3161
        %3243 = vmatmul.f32.gmra.mxu0 %v3222
        %v3244 = vpop.f32.mrf.mxu0
        %v3245 = vadd.f32 %v3216, %v3244
        %3246 = vmatmul.f32.gmra.mxu0 %v3225
        %v3247 = vpop.f32.mrf.mxu0
        %v3248 = vadd.f32 %v3219, %v3247
        %3249 = vdwg.mxu0
        %3250 = vmatpush.msra.mxu0 0.0
        %3251 = vmatpush.msra.mxu0 0.0
        %3252 = vmatpush.msra.mxu0 0.0
        %3253 = vmatpush.msra.mxu0 0.0
        %3254 = vmatpush.msra.mxu0 0.0
        %3255 = vmatpush.msra.mxu0 0.0
        %3256 = vmatpush.msra.mxu0 0.0
        %3257 = vmatpush.msra.mxu0 0.0
        %3258 = vmatpush.msra.mxu0 0.0
        %3259 = vmatpush.msra.mxu0 0.0
        %3260 = vmatpush.msra.mxu0 0.0
        %3261 = vmatpush.msra.mxu0 0.0
        %3262 = vmatpush.msra.mxu0 0.0
        %3263 = vmatpush.msra.mxu0 0.0
        %3264 = vmatpush.msra.mxu0 %v3186
        %3265 = vmatpush.msra.mxu0 %v3183
        %3266 = vmatmul.f32.gmra.mxu0 %v3050
        %v3267 = vpop.f32.mrf.mxu0
        %v3268 = vadd.f32 0.0, %v3267
        %3269 = vmatmul.f32.gmra.mxu0 %v3053
        %v3270 = vpop.f32.mrf.mxu0
        %v3271 = vadd.f32 0.0, %v3270
        %3272 = vdwg.mxu0
        %v3273 = vsub.f32 %v3268, %v3159
        %v3274 = vsub.f32 %v3271, %v3160
        %v3275 = vld [vmem:[%s829] sm:$0xff]
        %v3276 = vld [vmem:[%s829 + $0x8] sm:$0xff]
        %v3277 = vld [vmem:[%s829 + $0x10] sm:$0xff]
        %v3278 = vld [vmem:[%s829 + $0x18] sm:$0xff]
        %v3280 = vsel %vm745, %v3273, 0
        %v3283 = vsel %vm745, %v3274, 0
        %3285 = vmatpush.msra.mxu0 0.0
        %3286 = vmatpush.msra.mxu0 0.0
        %3287 = vmatpush.msra.mxu0 0.0
        %3288 = vmatpush.msra.mxu0 0.0
        %3289 = vmatpush.msra.mxu0 0.0
        %3290 = vmatpush.msra.mxu0 0.0
        %3291 = vmatpush.msra.mxu0 0.0
        %3292 = vmatpush.msra.mxu0 0.0
        %3293 = vmatpush.msra.mxu0 0.0
        %3294 = vmatpush.msra.mxu0 0.0
        %3295 = vmatpush.msra.mxu0 0.0
        %3296 = vmatpush.msra.mxu0 0.0
        %3297 = vmatpush.msra.mxu0 %v3278
        %3298 = vmatpush.msra.mxu0 %v3277
        %3299 = vmatpush.msra.mxu0 %v3276
        %3300 = vmatpush.msra.mxu0 %v3275
        %3301 = vmatmul.f32.gmra.mxu0 %v3280
        %v3302 = vpop.f32.mrf.mxu0
        %v3303 = vadd.f32 0.0, %v3302
        %3304 = vmatmul.f32.gmra.mxu0 %v3283
        %v3305 = vpop.f32.mrf.mxu0
        %v3306 = vadd.f32 0.0, %v3305
        %3307 = vdwg.mxu0
        %v3308 = vadd.f32 %v3245, %v3303
        %v3309 = vadd.f32 %v3248, %v3306
        %3312 = vrot.lane.b32.xlu0 %v3308, 64
        %v3313 = vpop.permute.xlu0 %3312
        %3314 = vrot.lane.b32.xlu0 %v3309, 64
        %v3315 = vpop.permute.xlu0 %3314
        %v3318 = vadd.f32 %v3119, %v3313
        %v3319 = vadd.f32 %v3120, %v3315
        %v3320 = vtanh.pop %v3318
        %v3321 = vtanh.pop %v3319
        %v3322 = vmul.f32 %v3143, %v2527
        %v3323 = vmul.f32 %v3158, %v2528
        %v3324 = vsub.f32 1.0, %v3143
        %v3325 = vsub.f32 1.0, %v3158
        %3328 = vrot.lane.b32.xlu0 %v3320, 96
        %v3329 = vpop.permute.xlu0 %3328
        %3330 = vrot.lane.b32.xlu0 %v3321, 96
        %v3331 = vpop.permute.xlu0 %3330
        %v3334 = vmul.f32 %v3324, %v3329
        %v3335 = vmul.f32 %v3325, %v3331
        %v3336 = vadd.f32 %v3322, %v3334
        %v3337 = vadd.f32 %v3323, %v3335
        %3340 = vrot.lane.b32.xlu0 %v3336, 96
        %v3341 = vpop.permute.xlu0 %3340
        %3342 = vrot.lane.b32.xlu0 %v3337, 96
        %v3343 = vpop.permute.xlu0 %3342
        %v3346 = vsel %vm745, %v3341, %v2917
        %v3347 = vsel %vm745, %v3343, %v2918
        %v3348 = vld [vmem:[#allocation4] sm:$0xff]
        %v3349 = vld [vmem:[#allocation4 + $0x8] sm:$0xff]
        %v3350 = vld [vmem:[#allocation4 + $0x10] sm:$0xff]
        %v3351 = vld [vmem:[#allocation4 + $0x18] sm:$0xff]
        %v3352 = vld [vmem:[#allocation4 + $0x20] sm:$0xff]
        %v3353 = vld [vmem:[#allocation4 + $0x28] sm:$0xff]
        %v3354 = vld [vmem:[#allocation4 + $0x30] sm:$0xff]
        %v3355 = vld [vmem:[#allocation4 + $0x38] sm:$0xff]
        %3356 = vmatpush.msra.mxu0 0.0
        %3357 = vmatpush.msra.mxu0 0.0
        %3358 = vmatpush.msra.mxu0 0.0
        %3359 = vmatpush.msra.mxu0 0.0
        %3360 = vmatpush.msra.mxu0 0.0
        %3361 = vmatpush.msra.mxu0 0.0
        %3362 = vmatpush.msra.mxu0 0.0
        %3363 = vmatpush.msra.mxu0 0.0
        %3364 = vmatpush.msra.mxu0 0.0
        %3365 = vmatpush.msra.mxu0 0.0
        %3366 = vmatpush.msra.mxu0 0.0
        %3367 = vmatpush.msra.mxu0 0.0
        %3368 = vmatpush.msra.mxu0 0.0
        %3369 = vmatpush.msra.mxu0 0.0
        %3370 = vmatpush.msra.mxu0 %v3347
        %3371 = vmatpush.msra.mxu0 %v3346
        %3372 = vmatmul.f32.gmra.mxu0 %v2952
        %v3373 = vpop.f32.mrf.mxu0
        %v3374 = vadd.f32 0.0, %v3373
        %3375 = vmatmul.f32.gmra.mxu0 %v2955
        %v3376 = vpop.f32.mrf.mxu0
        %v3377 = vadd.f32 0.0, %v3376
        %3378 = vdwg.mxu0
        %v3379 = vld [vmem:[%s948] sm:$0xff]
        %v3380 = vld [vmem:[%s948 + $0x8] sm:$0xff]
        %v3381 = vld [vmem:[%s948 + $0x10] sm:$0xff]
        %v3382 = vld [vmem:[%s948 + $0x18] sm:$0xff]
        %v3383 = vld [vmem:[%s948 + $0x20] sm:$0xff]
        %v3384 = vld [vmem:[%s948 + $0x28] sm:$0xff]
        %v3385 = vld [vmem:[%s948 + $0x30] sm:$0xff]
        %v3386 = vld [vmem:[%s948 + $0x38] sm:$0xff]
        %v3388 = vsel %vm957, %v3374, 0
        %v3391 = vsel %vm957, %v3377, 0
        %3393 = vmatpush.msra.mxu0 0.0
        %3394 = vmatpush.msra.mxu0 0.0
        %3395 = vmatpush.msra.mxu0 0.0
        %3396 = vmatpush.msra.mxu0 0.0
        %3397 = vmatpush.msra.mxu0 0.0
        %3398 = vmatpush.msra.mxu0 0.0
        %3399 = vmatpush.msra.mxu0 0.0
        %3400 = vmatpush.msra.mxu0 0.0
        %3401 = vmatpush.msra.mxu0 %v3386
        %3402 = vmatpush.msra.mxu0 %v3385
        %3403 = vmatpush.msra.mxu0 %v3384
        %3404 = vmatpush.msra.mxu0 %v3383
        %3405 = vmatpush.msra.mxu0 %v3382
        %3406 = vmatpush.msra.mxu0 %v3381
        %3407 = vmatpush.msra.mxu0 %v3380
        %3408 = vmatpush.msra.mxu0 %v3379
        %3409 = vmatmul.f32.gmra.mxu0 %v3388
        %v3410 = vpop.f32.mrf.mxu0
        %v3411 = vadd.f32 0.0, %v3410
        %3412 = vmatmul.f32.gmra.mxu0 %v3391
        %v3413 = vpop.f32.mrf.mxu0
        %v3414 = vadd.f32 0.0, %v3413
        %3415 = vdwg.mxu0
        %v3417 = vsel %vm957, %v3346, 0
        %v3420 = vsel %vm957, %v3347, 0
        %3422 = vmatpush.msra.mxu0 0.0
        %3423 = vmatpush.msra.mxu0 0.0
        %3424 = vmatpush.msra.mxu0 0.0
        %3425 = vmatpush.msra.mxu0 0.0
        %3426 = vmatpush.msra.mxu0 0.0
        %3427 = vmatpush.msra.mxu0 0.0
        %3428 = vmatpush.msra.mxu0 0.0
        %3429 = vmatpush.msra.mxu0 0.0
        %3430 = vmatpush.msra.mxu0 %v3355
        %3431 = vmatpush.msra.mxu0 %v3354
        %3432 = vmatpush.msra.mxu0 %v3353
        %3433 = vmatpush.msra.mxu0 %v3352
        %3434 = vmatpush.msra.mxu0 %v3351
        %3435 = vmatpush.msra.mxu0 %v3350
        %3436 = vmatpush.msra.mxu0 %v3349
        %3437 = vmatpush.msra.mxu0 %v3348
        %3438 = vmatmul.f32.gmra.mxu0 %v3417
        %v3439 = vpop.f32.mrf.mxu0
        %v3440 = vadd.f32 %v3411, %v3439
        %3441 = vmatmul.f32.gmra.mxu0 %v3420
        %v3442 = vpop.f32.mrf.mxu0
        %v3443 = vadd.f32 %v3414, %v3442
        %3444 = vdwg.mxu0
        %3445 = vmatpush.msra.mxu0 0.0
        %3446 = vmatpush.msra.mxu0 0.0
        %3447 = vmatpush.msra.mxu0 0.0
        %3448 = vmatpush.msra.mxu0 0.0
        %3449 = vmatpush.msra.mxu0 0.0
        %3450 = vmatpush.msra.mxu0 0.0
        %3451 = vmatpush.msra.mxu0 0.0
        %3452 = vmatpush.msra.mxu0 0.0
        %3453 = vmatpush.msra.mxu0 0.0
        %3454 = vmatpush.msra.mxu0 0.0
        %3455 = vmatpush.msra.mxu0 0.0
        %3456 = vmatpush.msra.mxu0 0.0
        %3457 = vmatpush.msra.mxu0 0.0
        %3458 = vmatpush.msra.mxu0 0.0
        %3459 = vmatpush.msra.mxu0 %v3377
        %3460 = vmatpush.msra.mxu0 %v3374
        %3461 = vmatmul.f32.gmra.mxu0 %v3050
        %v3462 = vpop.f32.mrf.mxu0
        %v3463 = vadd.f32 0.0, %v3462
        %3464 = vmatmul.f32.gmra.mxu0 %v3053
        %v3465 = vpop.f32.mrf.mxu0
        %v3466 = vadd.f32 0.0, %v3465
        %3467 = vdwg.mxu0
        %v3468 = vsub.f32 %v3463, %v3346
        %v3469 = vsub.f32 %v3466, %v3347
        %v3470 = vld [vmem:[%s1041] sm:$0xff]
        %v3471 = vld [vmem:[%s1041 + $0x8] sm:$0xff]
        %v3472 = vld [vmem:[%s1041 + $0x10] sm:$0xff]
        %v3473 = vld [vmem:[%s1041 + $0x18] sm:$0xff]
        %v3474 = vld [vmem:[%s1041 + $0x20] sm:$0xff]
        %v3475 = vld [vmem:[%s1041 + $0x28] sm:$0xff]
        %v3476 = vld [vmem:[%s1041 + $0x30] sm:$0xff]
        %v3477 = vld [vmem:[%s1041 + $0x38] sm:$0xff]
        %v3479 = vsel %vm957, %v3468, 0
        %v3482 = vsel %vm957, %v3469, 0
        %3484 = vmatpush.msra.mxu0 0.0
        %3485 = vmatpush.msra.mxu0 0.0
        %3486 = vmatpush.msra.mxu0 0.0
        %3487 = vmatpush.msra.mxu0 0.0
        %3488 = vmatpush.msra.mxu0 0.0
        %3489 = vmatpush.msra.mxu0 0.0
        %3490 = vmatpush.msra.mxu0 0.0
        %3491 = vmatpush.msra.mxu0 0.0
        %3492 = vmatpush.msra.mxu0 %v3477
        %3493 = vmatpush.msra.mxu0 %v3476
        %3494 = vmatpush.msra.mxu0 %v3475
        %3495 = vmatpush.msra.mxu0 %v3474
        %3496 = vmatpush.msra.mxu0 %v3473
        %3497 = vmatpush.msra.mxu0 %v3472
        %3498 = vmatpush.msra.mxu0 %v3471
        %3499 = vmatpush.msra.mxu0 %v3470
        %3500 = vmatmul.f32.gmra.mxu0 %v3479
        %v3501 = vpop.f32.mrf.mxu0
        %v3502 = vadd.f32 0.0, %v3501
        %3503 = vmatmul.f32.gmra.mxu0 %v3482
        %v3504 = vpop.f32.mrf.mxu0
        %v3505 = vadd.f32 0.0, %v3504
        %3506 = vdwg.mxu0
        %v3507 = vadd.f32 %v3440, %v3502
        %v3508 = vadd.f32 %v3443, %v3505
        %v3509 = vadd.f32 %v3507, %v469
        %v3510 = vadd.f32 %v3508, %v469
        %v3511 = vxor.u32 %v3509, 2147483648
        %v3512 = vxor.u32 %v3510, 2147483648
        %v3513 = vmul.f32 %v3511, 1.442695
        %v3514 = vpow.pop %v3513
        %v3515 = vmul.f32 %v3512, 1.442695
        %v3516 = vpow.pop %v3515
        %v3517 = vadd.f32 %v3514, 1.0
        %v3518 = vadd.f32 %v3516, 1.0
        %v3519 = vrcp.pop %v3517
        %v3520 = vmul.f32 %v3517, %v3519
        %v3521 = vsub.f32 1.0, %v3520
        %v3522 = vmul.f32 %v3519, %v3521
        %v3523 = vadd.f32 %v3519, %v3522
        %vm3524 = vweird.f32 %v3517
        %vm3525 = vweird.f32 %v3519
        %vm3526 = vmor %vm3524, %vm3525
        %v3527 = vsel %vm3526, %v3519, %v3523
        %v3528 = vand.u32 2147483647, %v3517
        %vm3529 = vcmp.eq.f32.partialorder %v3528, 8.507059e+37
        %v3530 = vand.u32 %v3517, 2147483648
        %v3531 = vor.u32 1.1754944e-38, %v3530
        %v3532 = vsel %vm3529, %v3531, %v3527
        %v3533 = vmul.f32 1.0, %v3532
        %v3534 = vrcp.pop %v3518
        %v3535 = vmul.f32 %v3518, %v3534
        %v3536 = vsub.f32 1.0, %v3535
        %v3537 = vmul.f32 %v3534, %v3536
        %v3538 = vadd.f32 %v3534, %v3537
        %vm3539 = vweird.f32 %v3518
        %vm3540 = vweird.f32 %v3534
        %vm3541 = vmor %vm3539, %vm3540
        %v3542 = vsel %vm3541, %v3534, %v3538
        %v3543 = vand.u32 2147483647, %v3518
        %vm3544 = vcmp.eq.f32.partialorder %v3543, 8.507059e+37
        %v3545 = vand.u32 %v3518, 2147483648
        %v3546 = vor.u32 1.1754944e-38, %v3545
        %v3547 = vsel %vm3544, %v3546, %v3542
        %v3548 = vmul.f32 1.0, %v3547
        %v3549 = vmul.f32 %v3533, %v2922
        %v3550 = vmul.f32 %v3548, %v2924
        %v3551 = vld [vmem:[#allocation6] sm:$0xff]
        %v3552 = vld [vmem:[#allocation6 + $0x8] sm:$0xff]
        %v3553 = vld [vmem:[#allocation6 + $0x10] sm:$0xff]
        %v3554 = vld [vmem:[#allocation6 + $0x18] sm:$0xff]
        %3555 = vmatpush.msra.mxu0 0.0
        %3556 = vmatpush.msra.mxu0 0.0
        %3557 = vmatpush.msra.mxu0 0.0
        %3558 = vmatpush.msra.mxu0 0.0
        %3559 = vmatpush.msra.mxu0 0.0
        %3560 = vmatpush.msra.mxu0 0.0
        %3561 = vmatpush.msra.mxu0 0.0
        %3562 = vmatpush.msra.mxu0 0.0
        %3563 = vmatpush.msra.mxu0 0.0
        %3564 = vmatpush.msra.mxu0 0.0
        %3565 = vmatpush.msra.mxu0 0.0
        %3566 = vmatpush.msra.mxu0 0.0
        %3567 = vmatpush.msra.mxu0 0.0
        %3568 = vmatpush.msra.mxu0 0.0
        %3569 = vmatpush.msra.mxu0 %v3550
        %3570 = vmatpush.msra.mxu0 %v3549
        %3571 = vmatmul.f32.gmra.mxu0 %v2952
        %v3572 = vpop.f32.mrf.mxu0
        %v3573 = vadd.f32 0.0, %v3572
        %3574 = vmatmul.f32.gmra.mxu0 %v2955
        %v3575 = vpop.f32.mrf.mxu0
        %v3576 = vadd.f32 0.0, %v3575
        %3577 = vdwg.mxu0
        %v3578 = vld [vmem:[%s1150] sm:$0xff]
        %v3579 = vld [vmem:[%s1150 + $0x8] sm:$0xff]
        %v3580 = vld [vmem:[%s1150 + $0x10] sm:$0xff]
        %v3581 = vld [vmem:[%s1150 + $0x18] sm:$0xff]
        %v3583 = vsel %vm745, %v3573, 0
        %v3586 = vsel %vm745, %v3576, 0
        %3588 = vmatpush.msra.mxu0 0.0
        %3589 = vmatpush.msra.mxu0 0.0
        %3590 = vmatpush.msra.mxu0 0.0
        %3591 = vmatpush.msra.mxu0 0.0
        %3592 = vmatpush.msra.mxu0 0.0
        %3593 = vmatpush.msra.mxu0 0.0
        %3594 = vmatpush.msra.mxu0 0.0
        %3595 = vmatpush.msra.mxu0 0.0
        %3596 = vmatpush.msra.mxu0 0.0
        %3597 = vmatpush.msra.mxu0 0.0
        %3598 = vmatpush.msra.mxu0 0.0
        %3599 = vmatpush.msra.mxu0 0.0
        %3600 = vmatpush.msra.mxu0 %v3581
        %3601 = vmatpush.msra.mxu0 %v3580
        %3602 = vmatpush.msra.mxu0 %v3579
        %3603 = vmatpush.msra.mxu0 %v3578
        %3604 = vmatmul.f32.gmra.mxu0 %v3583
        %v3605 = vpop.f32.mrf.mxu0
        %v3606 = vadd.f32 0.0, %v3605
        %3607 = vmatmul.f32.gmra.mxu0 %v3586
        %v3608 = vpop.f32.mrf.mxu0
        %v3609 = vadd.f32 0.0, %v3608
        %3610 = vdwg.mxu0
        %v3612 = vsel %vm745, %v3549, 0
        %v3615 = vsel %vm745, %v3550, 0
        %3617 = vmatpush.msra.mxu0 0.0
        %3618 = vmatpush.msra.mxu0 0.0
        %3619 = vmatpush.msra.mxu0 0.0
        %3620 = vmatpush.msra.mxu0 0.0
        %3621 = vmatpush.msra.mxu0 0.0
        %3622 = vmatpush.msra.mxu0 0.0
        %3623 = vmatpush.msra.mxu0 0.0
        %3624 = vmatpush.msra.mxu0 0.0
        %3625 = vmatpush.msra.mxu0 0.0
        %3626 = vmatpush.msra.mxu0 0.0
        %3627 = vmatpush.msra.mxu0 0.0
        %3628 = vmatpush.msra.mxu0 0.0
        %3629 = vmatpush.msra.mxu0 %v3554
        %3630 = vmatpush.msra.mxu0 %v3553
        %3631 = vmatpush.msra.mxu0 %v3552
        %3632 = vmatpush.msra.mxu0 %v3551
        %3633 = vmatmul.f32.gmra.mxu0 %v3612
        %v3634 = vpop.f32.mrf.mxu0
        %v3635 = vadd.f32 %v3606, %v3634
        %3636 = vmatmul.f32.gmra.mxu0 %v3615
        %v3637 = vpop.f32.mrf.mxu0
        %v3638 = vadd.f32 %v3609, %v3637
        %3639 = vdwg.mxu0
        %3640 = vmatpush.msra.mxu0 0.0
        %3641 = vmatpush.msra.mxu0 0.0
        %3642 = vmatpush.msra.mxu0 0.0
        %3643 = vmatpush.msra.mxu0 0.0
        %3644 = vmatpush.msra.mxu0 0.0
        %3645 = vmatpush.msra.mxu0 0.0
        %3646 = vmatpush.msra.mxu0 0.0
        %3647 = vmatpush.msra.mxu0 0.0
        %3648 = vmatpush.msra.mxu0 0.0
        %3649 = vmatpush.msra.mxu0 0.0
        %3650 = vmatpush.msra.mxu0 0.0
        %3651 = vmatpush.msra.mxu0 0.0
        %3652 = vmatpush.msra.mxu0 0.0
        %3653 = vmatpush.msra.mxu0 0.0
        %3654 = vmatpush.msra.mxu0 %v3576
        %3655 = vmatpush.msra.mxu0 %v3573
        %3656 = vmatmul.f32.gmra.mxu0 %v3050
        %v3657 = vpop.f32.mrf.mxu0
        %v3658 = vadd.f32 0.0, %v3657
        %3659 = vmatmul.f32.gmra.mxu0 %v3053
        %v3660 = vpop.f32.mrf.mxu0
        %v3661 = vadd.f32 0.0, %v3660
        %3662 = vdwg.mxu0
        %v3663 = vsub.f32 %v3658, %v3549
        %v3664 = vsub.f32 %v3661, %v3550
        %v3665 = vld [vmem:[%s1238] sm:$0xff]
        %v3666 = vld [vmem:[%s1238 + $0x8] sm:$0xff]
        %v3667 = vld [vmem:[%s1238 + $0x10] sm:$0xff]
        %v3668 = vld [vmem:[%s1238 + $0x18] sm:$0xff]
        %v3670 = vsel %vm745, %v3663, 0
        %v3673 = vsel %vm745, %v3664, 0
        %3675 = vmatpush.msra.mxu0 0.0
        %3676 = vmatpush.msra.mxu0 0.0
        %3677 = vmatpush.msra.mxu0 0.0
        %3678 = vmatpush.msra.mxu0 0.0
        %3679 = vmatpush.msra.mxu0 0.0
        %3680 = vmatpush.msra.mxu0 0.0
        %3681 = vmatpush.msra.mxu0 0.0
        %3682 = vmatpush.msra.mxu0 0.0
        %3683 = vmatpush.msra.mxu0 0.0
        %3684 = vmatpush.msra.mxu0 0.0
        %3685 = vmatpush.msra.mxu0 0.0
        %3686 = vmatpush.msra.mxu0 0.0
        %3687 = vmatpush.msra.mxu0 %v3668
        %3688 = vmatpush.msra.mxu0 %v3667
        %3689 = vmatpush.msra.mxu0 %v3666
        %3690 = vmatpush.msra.mxu0 %v3665
        %3691 = vmatmul.f32.gmra.mxu0 %v3670
        %v3692 = vpop.f32.mrf.mxu0
        %v3693 = vadd.f32 0.0, %v3692
        %3694 = vmatmul.f32.gmra.mxu0 %v3673
        %v3695 = vpop.f32.mrf.mxu0
        %v3696 = vadd.f32 0.0, %v3695
        %3697 = vdwg.mxu0
        %v3698 = vadd.f32 %v3635, %v3693
        %v3699 = vadd.f32 %v3638, %v3696
        %3702 = vrot.lane.b32.xlu0 %v3698, 64
        %v3703 = vpop.permute.xlu0 %3702
        %3704 = vrot.lane.b32.xlu0 %v3699, 64
        %v3705 = vpop.permute.xlu0 %3704
        %v3708 = vadd.f32 %v3509, %v3703
        %v3709 = vadd.f32 %v3510, %v3705
        %v3710 = vtanh.pop %v3708
        %v3711 = vtanh.pop %v3709
        %v3712 = vmul.f32 %v3533, %v2917
        %v3713 = vmul.f32 %v3548, %v2918
        %v3714 = vsub.f32 1.0, %v3533
        %v3715 = vsub.f32 1.0, %v3548
        %3718 = vrot.lane.b32.xlu0 %v3710, 96
        %v3719 = vpop.permute.xlu0 %3718
        %3720 = vrot.lane.b32.xlu0 %v3711, 96
        %v3721 = vpop.permute.xlu0 %3720
        %v3724 = vmul.f32 %v3714, %v3719
        %v3725 = vmul.f32 %v3715, %v3721
        %v3726 = vadd.f32 %v3712, %v3724
        %v3727 = vadd.f32 %v3713, %v3725
        %3730 = vrot.lane.b32.xlu0 %v3726, 96
        %v3731 = vpop.permute.xlu0 %3730
        %3732 = vrot.lane.b32.xlu0 %v3727, 96
        %v3733 = vpop.permute.xlu0 %3732
        %s3736 = scalar_lea.vmem %s457, 48
        %3737 = vst.msk [vmem:[%s3736] sm:$0xff] %vm745, %v3731
        %3738 = vst.msk [vmem:[%s3736 + $0x8] sm:$0xff] %vm745, %v3733
        %s3739 = scalar_lea.vmem %s442, 64
        %v3740 = vld [vmem:[%s3739] sm:$0xff]
        %v3741 = vld [vmem:[%s3739 + $0x8] sm:$0xff]
        %v3742 = vadd.f32 %v3740, %v3740
        %v3743 = vadd.f32 %v3741, %v3741
        %s3744 = scalar_lea.vmem %s447, 64
        %v3745 = vld [vmem:[%s3744] sm:$0xff]
        %v3746 = vld [vmem:[%s3744 + $0x8] sm:$0xff]
        %3747 = vrot.lane.b32.xlu0 %v3336, 100
        %v3748 = vpop.permute.xlu0 %3747
        %3749 = vrot.lane.b32.xlu0 %v3337, 100
        %v3750 = vpop.permute.xlu0 %3749
        %v3753 = vsel %vm490, %v3745, %v3748
        %v3754 = vsel %vm490, %v3746, %v3750
        %v3755 = vld [vmem:[%s3] sm:$0xff]
        %v3756 = vld [vmem:[%s3 + $0x8] sm:$0xff]
        %v3757 = vld [vmem:[%s3 + $0x10] sm:$0xff]
        %v3758 = vld [vmem:[%s3 + $0x18] sm:$0xff]
        %v3759 = vld [vmem:[%s3 + $0x20] sm:$0xf]
        %v3761 = vsel %vm498, %v3740, 0
        %v3764 = vsel %vm498, %v3741, 0
        %3766 = vmatpush.msra.mxu0 0.0
        %3767 = vmatpush.msra.mxu0 0.0
        %3768 = vmatpush.msra.mxu0 0.0
        %3769 = vmatpush.msra.mxu0 0.0
        %3770 = vmatpush.msra.mxu0 0.0
        %3771 = vmatpush.msra.mxu0 0.0
        %3772 = vmatpush.msra.mxu0 0.0
        %3773 = vmatpush.msra.mxu0 0.0
        %3774 = vmatpush.msra.mxu0 0.0
        %3775 = vmatpush.msra.mxu0 0.0
        %3776 = vmatpush.msra.mxu0 0.0
        %3777 = vmatpush.msra.mxu0 0.0
        %3778 = vmatpush.msra.mxu0 0.0
        %3779 = vmatpush.msra.mxu0 0.0
        %3780 = vmatpush.msra.mxu0 %v3754
        %3781 = vmatpush.msra.mxu0 %v3753
        %3782 = vmatmul.f32.gmra.mxu0 %v3761
        %v3783 = vpop.f32.mrf.mxu0
        %v3784 = vadd.f32 0.0, %v3783
        %3785 = vmatmul.f32.gmra.mxu0 %v3764
        %v3786 = vpop.f32.mrf.mxu0
        %v3787 = vadd.f32 0.0, %v3786
        %3788 = vdwg.mxu0
        %v3789 = vld [vmem:[%s528] sm:$0xff]
        %v3790 = vld [vmem:[%s528 + $0x8] sm:$0xff]
        %v3791 = vld [vmem:[%s528 + $0x10] sm:$0xff]
        %v3792 = vld [vmem:[%s528 + $0x18] sm:$0xff]
        %v3793 = vld [vmem:[%s528 + $0x20] sm:$0xf]
        %v3795 = vsel %vm534, %v3784, 0
        %v3798 = vsel %vm534, %v3787, 0
        %v3801 = vsel %vm541, %v3793, 0
        %3803 = vmatpush.msra.mxu0 0.0
        %3804 = vmatpush.msra.mxu0 0.0
        %3805 = vmatpush.msra.mxu0 0.0
        %3806 = vmatpush.msra.mxu0 0.0
        %3807 = vmatpush.msra.mxu0 0.0
        %3808 = vmatpush.msra.mxu0 0.0
        %3809 = vmatpush.msra.mxu0 0.0
        %3810 = vmatpush.msra.mxu0 0.0
        %3811 = vmatpush.msra.mxu0 0.0
        %3812 = vmatpush.msra.mxu0 0.0
        %3813 = vmatpush.msra.mxu0 0.0
        %3814 = vmatpush.msra.mxu0 %v3801
        %3815 = vmatpush.msra.mxu0 %v3792
        %3816 = vmatpush.msra.mxu0 %v3791
        %3817 = vmatpush.msra.mxu0 %v3790
        %3818 = vmatpush.msra.mxu0 %v3789
        %3819 = vmatmul.f32.gmra.mxu0 %v3795
        %v3820 = vpop.f32.mrf.mxu0
        %v3821 = vadd.f32 0.0, %v3820
        %3822 = vmatmul.f32.gmra.mxu0 %v3798
        %v3823 = vpop.f32.mrf.mxu0
        %v3824 = vadd.f32 0.0, %v3823
        %3825 = vdwg.mxu0
        %v3827 = vsel %vm534, %v3753, 0
        %v3830 = vsel %vm534, %v3754, 0
        %v3833 = vsel %vm541, %v3759, 0
        %3835 = vmatpush.msra.mxu0 0.0
        %3836 = vmatpush.msra.mxu0 0.0
        %3837 = vmatpush.msra.mxu0 0.0
        %3838 = vmatpush.msra.mxu0 0.0
        %3839 = vmatpush.msra.mxu0 0.0
        %3840 = vmatpush.msra.mxu0 0.0
        %3841 = vmatpush.msra.mxu0 0.0
        %3842 = vmatpush.msra.mxu0 0.0
        %3843 = vmatpush.msra.mxu0 0.0
        %3844 = vmatpush.msra.mxu0 0.0
        %3845 = vmatpush.msra.mxu0 0.0
        %3846 = vmatpush.msra.mxu0 %v3833
        %3847 = vmatpush.msra.mxu0 %v3758
        %3848 = vmatpush.msra.mxu0 %v3757
        %3849 = vmatpush.msra.mxu0 %v3756
        %3850 = vmatpush.msra.mxu0 %v3755
        %3851 = vmatmul.f32.gmra.mxu0 %v3827
        %v3852 = vpop.f32.mrf.mxu0
        %v3853 = vadd.f32 %v3821, %v3852
        %3854 = vmatmul.f32.gmra.mxu0 %v3830
        %v3855 = vpop.f32.mrf.mxu0
        %v3856 = vadd.f32 %v3824, %v3855
        %3857 = vdwg.mxu0
        %v3859 = vsel %vm498, %v3742, 0
        %v3862 = vsel %vm498, %v3743, 0
        %3864 = vmatpush.msra.mxu0 0.0
        %3865 = vmatpush.msra.mxu0 0.0
        %3866 = vmatpush.msra.mxu0 0.0
        %3867 = vmatpush.msra.mxu0 0.0
        %3868 = vmatpush.msra.mxu0 0.0
        %3869 = vmatpush.msra.mxu0 0.0
        %3870 = vmatpush.msra.mxu0 0.0
        %3871 = vmatpush.msra.mxu0 0.0
        %3872 = vmatpush.msra.mxu0 0.0
        %3873 = vmatpush.msra.mxu0 0.0
        %3874 = vmatpush.msra.mxu0 0.0
        %3875 = vmatpush.msra.mxu0 0.0
        %3876 = vmatpush.msra.mxu0 0.0
        %3877 = vmatpush.msra.mxu0 0.0
        %3878 = vmatpush.msra.mxu0 %v3787
        %3879 = vmatpush.msra.mxu0 %v3784
        %3880 = vmatmul.f32.gmra.mxu0 %v3859
        %v3881 = vpop.f32.mrf.mxu0
        %v3882 = vadd.f32 0.0, %v3881
        %3883 = vmatmul.f32.gmra.mxu0 %v3862
        %v3884 = vpop.f32.mrf.mxu0
        %v3885 = vadd.f32 0.0, %v3884
        %3886 = vdwg.mxu0
        %v3887 = vsub.f32 %v3882, %v3753
        %v3888 = vsub.f32 %v3885, %v3754
        %v3889 = vld [vmem:[%s631] sm:$0xff]
        %v3890 = vld [vmem:[%s631 + $0x8] sm:$0xff]
        %v3891 = vld [vmem:[%s631 + $0x10] sm:$0xff]
        %v3892 = vld [vmem:[%s631 + $0x18] sm:$0xff]
        %v3893 = vld [vmem:[%s631 + $0x20] sm:$0xf]
        %v3895 = vsel %vm534, %v3887, 0
        %v3898 = vsel %vm534, %v3888, 0
        %v3901 = vsel %vm541, %v3893, 0
        %3903 = vmatpush.msra.mxu0 0.0
        %3904 = vmatpush.msra.mxu0 0.0
        %3905 = vmatpush.msra.mxu0 0.0
        %3906 = vmatpush.msra.mxu0 0.0
        %3907 = vmatpush.msra.mxu0 0.0
        %3908 = vmatpush.msra.mxu0 0.0
        %3909 = vmatpush.msra.mxu0 0.0
        %3910 = vmatpush.msra.mxu0 0.0
        %3911 = vmatpush.msra.mxu0 0.0
        %3912 = vmatpush.msra.mxu0 0.0
        %3913 = vmatpush.msra.mxu0 0.0
        %3914 = vmatpush.msra.mxu0 %v3901
        %3915 = vmatpush.msra.mxu0 %v3892
        %3916 = vmatpush.msra.mxu0 %v3891
        %3917 = vmatpush.msra.mxu0 %v3890
        %3918 = vmatpush.msra.mxu0 %v3889
        %3919 = vmatmul.f32.gmra.mxu0 %v3895
        %v3920 = vpop.f32.mrf.mxu0
        %v3921 = vadd.f32 0.0, %v3920
        %3922 = vmatmul.f32.gmra.mxu0 %v3898
        %v3923 = vpop.f32.mrf.mxu0
        %v3924 = vadd.f32 0.0, %v3923
        %3925 = vdwg.mxu0
        %v3926 = vadd.f32 %v3853, %v3921
        %v3927 = vadd.f32 %v3856, %v3924
        %v3928 = vadd.f32 %v3926, %v465
        %v3929 = vadd.f32 %v3927, %v465
        %v3930 = vxor.u32 %v3928, 2147483648
        %v3931 = vxor.u32 %v3929, 2147483648
        %v3932 = vmul.f32 %v3930, 1.442695
        %v3933 = vpow.pop %v3932
        %v3934 = vmul.f32 %v3931, 1.442695
        %v3935 = vpow.pop %v3934
        %v3936 = vadd.f32 %v3933, 1.0
        %v3937 = vadd.f32 %v3935, 1.0
        %v3938 = vrcp.pop %v3936
        %v3939 = vmul.f32 %v3936, %v3938
        %v3940 = vsub.f32 1.0, %v3939
        %v3941 = vmul.f32 %v3938, %v3940
        %v3942 = vadd.f32 %v3938, %v3941
        %vm3943 = vweird.f32 %v3936
        %vm3944 = vweird.f32 %v3938
        %vm3945 = vmor %vm3943, %vm3944
        %v3946 = vsel %vm3945, %v3938, %v3942
        %v3947 = vand.u32 2147483647, %v3936
        %vm3948 = vcmp.eq.f32.partialorder %v3947, 8.507059e+37
        %v3949 = vand.u32 %v3936, 2147483648
        %v3950 = vor.u32 1.1754944e-38, %v3949
        %v3951 = vsel %vm3948, %v3950, %v3946
        %v3952 = vmul.f32 1.0, %v3951
        %v3953 = vrcp.pop %v3937
        %v3954 = vmul.f32 %v3937, %v3953
        %v3955 = vsub.f32 1.0, %v3954
        %v3956 = vmul.f32 %v3953, %v3955
        %v3957 = vadd.f32 %v3953, %v3956
        %vm3958 = vweird.f32 %v3937
        %vm3959 = vweird.f32 %v3953
        %vm3960 = vmor %vm3958, %vm3959
        %v3961 = vsel %vm3960, %v3953, %v3957
        %v3962 = vand.u32 2147483647, %v3937
        %vm3963 = vcmp.eq.f32.partialorder %v3962, 8.507059e+37
        %v3964 = vand.u32 %v3937, 2147483648
        %v3965 = vor.u32 1.1754944e-38, %v3964
        %v3966 = vsel %vm3963, %v3965, %v3961
        %v3967 = vmul.f32 1.0, %v3966
        %v3968 = vmul.f32 %v3952, %v3341
        %v3969 = vmul.f32 %v3967, %v3343
        %v3970 = vld [vmem:[#allocation2] sm:$0xff]
        %v3971 = vld [vmem:[#allocation2 + $0x8] sm:$0xff]
        %v3972 = vld [vmem:[#allocation2 + $0x10] sm:$0xff]
        %v3973 = vld [vmem:[#allocation2 + $0x18] sm:$0xff]
        %3974 = vmatpush.msra.mxu0 0.0
        %3975 = vmatpush.msra.mxu0 0.0
        %3976 = vmatpush.msra.mxu0 0.0
        %3977 = vmatpush.msra.mxu0 0.0
        %3978 = vmatpush.msra.mxu0 0.0
        %3979 = vmatpush.msra.mxu0 0.0
        %3980 = vmatpush.msra.mxu0 0.0
        %3981 = vmatpush.msra.mxu0 0.0
        %3982 = vmatpush.msra.mxu0 0.0
        %3983 = vmatpush.msra.mxu0 0.0
        %3984 = vmatpush.msra.mxu0 0.0
        %3985 = vmatpush.msra.mxu0 0.0
        %3986 = vmatpush.msra.mxu0 0.0
        %3987 = vmatpush.msra.mxu0 0.0
        %3988 = vmatpush.msra.mxu0 %v3969
        %3989 = vmatpush.msra.mxu0 %v3968
        %3990 = vmatmul.f32.gmra.mxu0 %v3761
        %v3991 = vpop.f32.mrf.mxu0
        %v3992 = vadd.f32 0.0, %v3991
        %3993 = vmatmul.f32.gmra.mxu0 %v3764
        %v3994 = vpop.f32.mrf.mxu0
        %v3995 = vadd.f32 0.0, %v3994
        %3996 = vdwg.mxu0
        %v3997 = vld [vmem:[%s740] sm:$0xff]
        %v3998 = vld [vmem:[%s740 + $0x8] sm:$0xff]
        %v3999 = vld [vmem:[%s740 + $0x10] sm:$0xff]
        %v4000 = vld [vmem:[%s740 + $0x18] sm:$0xff]
        %v4002 = vsel %vm745, %v3992, 0
        %v4005 = vsel %vm745, %v3995, 0
        %4007 = vmatpush.msra.mxu0 0.0
        %4008 = vmatpush.msra.mxu0 0.0
        %4009 = vmatpush.msra.mxu0 0.0
        %4010 = vmatpush.msra.mxu0 0.0
        %4011 = vmatpush.msra.mxu0 0.0
        %4012 = vmatpush.msra.mxu0 0.0
        %4013 = vmatpush.msra.mxu0 0.0
        %4014 = vmatpush.msra.mxu0 0.0
        %4015 = vmatpush.msra.mxu0 0.0
        %4016 = vmatpush.msra.mxu0 0.0
        %4017 = vmatpush.msra.mxu0 0.0
        %4018 = vmatpush.msra.mxu0 0.0
        %4019 = vmatpush.msra.mxu0 %v4000
        %4020 = vmatpush.msra.mxu0 %v3999
        %4021 = vmatpush.msra.mxu0 %v3998
        %4022 = vmatpush.msra.mxu0 %v3997
        %4023 = vmatmul.f32.gmra.mxu0 %v4002
        %v4024 = vpop.f32.mrf.mxu0
        %v4025 = vadd.f32 0.0, %v4024
        %4026 = vmatmul.f32.gmra.mxu0 %v4005
        %v4027 = vpop.f32.mrf.mxu0
        %v4028 = vadd.f32 0.0, %v4027
        %4029 = vdwg.mxu0
        %v4031 = vsel %vm745, %v3968, 0
        %v4034 = vsel %vm745, %v3969, 0
        %4036 = vmatpush.msra.mxu0 0.0
        %4037 = vmatpush.msra.mxu0 0.0
        %4038 = vmatpush.msra.mxu0 0.0
        %4039 = vmatpush.msra.mxu0 0.0
        %4040 = vmatpush.msra.mxu0 0.0
        %4041 = vmatpush.msra.mxu0 0.0
        %4042 = vmatpush.msra.mxu0 0.0
        %4043 = vmatpush.msra.mxu0 0.0
        %4044 = vmatpush.msra.mxu0 0.0
        %4045 = vmatpush.msra.mxu0 0.0
        %4046 = vmatpush.msra.mxu0 0.0
        %4047 = vmatpush.msra.mxu0 0.0
        %4048 = vmatpush.msra.mxu0 %v3973
        %4049 = vmatpush.msra.mxu0 %v3972
        %4050 = vmatpush.msra.mxu0 %v3971
        %4051 = vmatpush.msra.mxu0 %v3970
        %4052 = vmatmul.f32.gmra.mxu0 %v4031
        %v4053 = vpop.f32.mrf.mxu0
        %v4054 = vadd.f32 %v4025, %v4053
        %4055 = vmatmul.f32.gmra.mxu0 %v4034
        %v4056 = vpop.f32.mrf.mxu0
        %v4057 = vadd.f32 %v4028, %v4056
        %4058 = vdwg.mxu0
        %4059 = vmatpush.msra.mxu0 0.0
        %4060 = vmatpush.msra.mxu0 0.0
        %4061 = vmatpush.msra.mxu0 0.0
        %4062 = vmatpush.msra.mxu0 0.0
        %4063 = vmatpush.msra.mxu0 0.0
        %4064 = vmatpush.msra.mxu0 0.0
        %4065 = vmatpush.msra.mxu0 0.0
        %4066 = vmatpush.msra.mxu0 0.0
        %4067 = vmatpush.msra.mxu0 0.0
        %4068 = vmatpush.msra.mxu0 0.0
        %4069 = vmatpush.msra.mxu0 0.0
        %4070 = vmatpush.msra.mxu0 0.0
        %4071 = vmatpush.msra.mxu0 0.0
        %4072 = vmatpush.msra.mxu0 0.0
        %4073 = vmatpush.msra.mxu0 %v3995
        %4074 = vmatpush.msra.mxu0 %v3992
        %4075 = vmatmul.f32.gmra.mxu0 %v3859
        %v4076 = vpop.f32.mrf.mxu0
        %v4077 = vadd.f32 0.0, %v4076
        %4078 = vmatmul.f32.gmra.mxu0 %v3862
        %v4079 = vpop.f32.mrf.mxu0
        %v4080 = vadd.f32 0.0, %v4079
        %4081 = vdwg.mxu0
        %v4082 = vsub.f32 %v4077, %v3968
        %v4083 = vsub.f32 %v4080, %v3969
        %v4084 = vld [vmem:[%s829] sm:$0xff]
        %v4085 = vld [vmem:[%s829 + $0x8] sm:$0xff]
        %v4086 = vld [vmem:[%s829 + $0x10] sm:$0xff]
        %v4087 = vld [vmem:[%s829 + $0x18] sm:$0xff]
        %v4089 = vsel %vm745, %v4082, 0
        %v4092 = vsel %vm745, %v4083, 0
        %4094 = vmatpush.msra.mxu0 0.0
        %4095 = vmatpush.msra.mxu0 0.0
        %4096 = vmatpush.msra.mxu0 0.0
        %4097 = vmatpush.msra.mxu0 0.0
        %4098 = vmatpush.msra.mxu0 0.0
        %4099 = vmatpush.msra.mxu0 0.0
        %4100 = vmatpush.msra.mxu0 0.0
        %4101 = vmatpush.msra.mxu0 0.0
        %4102 = vmatpush.msra.mxu0 0.0
        %4103 = vmatpush.msra.mxu0 0.0
        %4104 = vmatpush.msra.mxu0 0.0
        %4105 = vmatpush.msra.mxu0 0.0
        %4106 = vmatpush.msra.mxu0 %v4087
        %4107 = vmatpush.msra.mxu0 %v4086
        %4108 = vmatpush.msra.mxu0 %v4085
        %4109 = vmatpush.msra.mxu0 %v4084
        %4110 = vmatmul.f32.gmra.mxu0 %v4089
        %v4111 = vpop.f32.mrf.mxu0
        %v4112 = vadd.f32 0.0, %v4111
        %4113 = vmatmul.f32.gmra.mxu0 %v4092
        %v4114 = vpop.f32.mrf.mxu0
        %v4115 = vadd.f32 0.0, %v4114
        %4116 = vdwg.mxu0
        %v4117 = vadd.f32 %v4054, %v4112
        %v4118 = vadd.f32 %v4057, %v4115
        %4121 = vrot.lane.b32.xlu0 %v4117, 64
        %v4122 = vpop.permute.xlu0 %4121
        %4123 = vrot.lane.b32.xlu0 %v4118, 64
        %v4124 = vpop.permute.xlu0 %4123
        %v4127 = vadd.f32 %v3928, %v4122
        %v4128 = vadd.f32 %v3929, %v4124
        %v4129 = vtanh.pop %v4127
        %v4130 = vtanh.pop %v4128
        %v4131 = vmul.f32 %v3952, %v3336
        %v4132 = vmul.f32 %v3967, %v3337
        %v4133 = vsub.f32 1.0, %v3952
        %v4134 = vsub.f32 1.0, %v3967
        %4137 = vrot.lane.b32.xlu0 %v4129, 96
        %v4138 = vpop.permute.xlu0 %4137
        %4139 = vrot.lane.b32.xlu0 %v4130, 96
        %v4140 = vpop.permute.xlu0 %4139
        %v4143 = vmul.f32 %v4133, %v4138
        %v4144 = vmul.f32 %v4134, %v4140
        %v4145 = vadd.f32 %v4131, %v4143
        %v4146 = vadd.f32 %v4132, %v4144
        %4149 = vrot.lane.b32.xlu0 %v4145, 96
        %v4150 = vpop.permute.xlu0 %4149
        %4151 = vrot.lane.b32.xlu0 %v4146, 96
        %v4152 = vpop.permute.xlu0 %4151
        %v4155 = vsel %vm745, %v4150, %v3726
        %v4156 = vsel %vm745, %v4152, %v3727
        %v4157 = vld [vmem:[#allocation4] sm:$0xff]
        %v4158 = vld [vmem:[#allocation4 + $0x8] sm:$0xff]
        %v4159 = vld [vmem:[#allocation4 + $0x10] sm:$0xff]
        %v4160 = vld [vmem:[#allocation4 + $0x18] sm:$0xff]
        %v4161 = vld [vmem:[#allocation4 + $0x20] sm:$0xff]
        %v4162 = vld [vmem:[#allocation4 + $0x28] sm:$0xff]
        %v4163 = vld [vmem:[#allocation4 + $0x30] sm:$0xff]
        %v4164 = vld [vmem:[#allocation4 + $0x38] sm:$0xff]
        %4165 = vmatpush.msra.mxu0 0.0
        %4166 = vmatpush.msra.mxu0 0.0
        %4167 = vmatpush.msra.mxu0 0.0
        %4168 = vmatpush.msra.mxu0 0.0
        %4169 = vmatpush.msra.mxu0 0.0
        %4170 = vmatpush.msra.mxu0 0.0
        %4171 = vmatpush.msra.mxu0 0.0
        %4172 = vmatpush.msra.mxu0 0.0
        %4173 = vmatpush.msra.mxu0 0.0
        %4174 = vmatpush.msra.mxu0 0.0
        %4175 = vmatpush.msra.mxu0 0.0
        %4176 = vmatpush.msra.mxu0 0.0
        %4177 = vmatpush.msra.mxu0 0.0
        %4178 = vmatpush.msra.mxu0 0.0
        %4179 = vmatpush.msra.mxu0 %v4156
        %4180 = vmatpush.msra.mxu0 %v4155
        %4181 = vmatmul.f32.gmra.mxu0 %v3761
        %v4182 = vpop.f32.mrf.mxu0
        %v4183 = vadd.f32 0.0, %v4182
        %4184 = vmatmul.f32.gmra.mxu0 %v3764
        %v4185 = vpop.f32.mrf.mxu0
        %v4186 = vadd.f32 0.0, %v4185
        %4187 = vdwg.mxu0
        %v4188 = vld [vmem:[%s948] sm:$0xff]
        %v4189 = vld [vmem:[%s948 + $0x8] sm:$0xff]
        %v4190 = vld [vmem:[%s948 + $0x10] sm:$0xff]
        %v4191 = vld [vmem:[%s948 + $0x18] sm:$0xff]
        %v4192 = vld [vmem:[%s948 + $0x20] sm:$0xff]
        %v4193 = vld [vmem:[%s948 + $0x28] sm:$0xff]
        %v4194 = vld [vmem:[%s948 + $0x30] sm:$0xff]
        %v4195 = vld [vmem:[%s948 + $0x38] sm:$0xff]
        %v4197 = vsel %vm957, %v4183, 0
        %v4200 = vsel %vm957, %v4186, 0
        %4202 = vmatpush.msra.mxu0 0.0
        %4203 = vmatpush.msra.mxu0 0.0
        %4204 = vmatpush.msra.mxu0 0.0
        %4205 = vmatpush.msra.mxu0 0.0
        %4206 = vmatpush.msra.mxu0 0.0
        %4207 = vmatpush.msra.mxu0 0.0
        %4208 = vmatpush.msra.mxu0 0.0
        %4209 = vmatpush.msra.mxu0 0.0
        %4210 = vmatpush.msra.mxu0 %v4195
        %4211 = vmatpush.msra.mxu0 %v4194
        %4212 = vmatpush.msra.mxu0 %v4193
        %4213 = vmatpush.msra.mxu0 %v4192
        %4214 = vmatpush.msra.mxu0 %v4191
        %4215 = vmatpush.msra.mxu0 %v4190
        %4216 = vmatpush.msra.mxu0 %v4189
        %4217 = vmatpush.msra.mxu0 %v4188
        %4218 = vmatmul.f32.gmra.mxu0 %v4197
        %v4219 = vpop.f32.mrf.mxu0
        %v4220 = vadd.f32 0.0, %v4219
        %4221 = vmatmul.f32.gmra.mxu0 %v4200
        %v4222 = vpop.f32.mrf.mxu0
        %v4223 = vadd.f32 0.0, %v4222
        %4224 = vdwg.mxu0
        %v4226 = vsel %vm957, %v4155, 0
        %v4229 = vsel %vm957, %v4156, 0
        %4231 = vmatpush.msra.mxu0 0.0
        %4232 = vmatpush.msra.mxu0 0.0
        %4233 = vmatpush.msra.mxu0 0.0
        %4234 = vmatpush.msra.mxu0 0.0
        %4235 = vmatpush.msra.mxu0 0.0
        %4236 = vmatpush.msra.mxu0 0.0
        %4237 = vmatpush.msra.mxu0 0.0
        %4238 = vmatpush.msra.mxu0 0.0
        %4239 = vmatpush.msra.mxu0 %v4164
        %4240 = vmatpush.msra.mxu0 %v4163
        %4241 = vmatpush.msra.mxu0 %v4162
        %4242 = vmatpush.msra.mxu0 %v4161
        %4243 = vmatpush.msra.mxu0 %v4160
        %4244 = vmatpush.msra.mxu0 %v4159
        %4245 = vmatpush.msra.mxu0 %v4158
        %4246 = vmatpush.msra.mxu0 %v4157
        %4247 = vmatmul.f32.gmra.mxu0 %v4226
        %v4248 = vpop.f32.mrf.mxu0
        %v4249 = vadd.f32 %v4220, %v4248
        %4250 = vmatmul.f32.gmra.mxu0 %v4229
        %v4251 = vpop.f32.mrf.mxu0
        %v4252 = vadd.f32 %v4223, %v4251
        %4253 = vdwg.mxu0
        %4254 = vmatpush.msra.mxu0 0.0
        %4255 = vmatpush.msra.mxu0 0.0
        %4256 = vmatpush.msra.mxu0 0.0
        %4257 = vmatpush.msra.mxu0 0.0
        %4258 = vmatpush.msra.mxu0 0.0
        %4259 = vmatpush.msra.mxu0 0.0
        %4260 = vmatpush.msra.mxu0 0.0
        %4261 = vmatpush.msra.mxu0 0.0
        %4262 = vmatpush.msra.mxu0 0.0
        %4263 = vmatpush.msra.mxu0 0.0
        %4264 = vmatpush.msra.mxu0 0.0
        %4265 = vmatpush.msra.mxu0 0.0
        %4266 = vmatpush.msra.mxu0 0.0
        %4267 = vmatpush.msra.mxu0 0.0
        %4268 = vmatpush.msra.mxu0 %v4186
        %4269 = vmatpush.msra.mxu0 %v4183
        %4270 = vmatmul.f32.gmra.mxu0 %v3859
        %v4271 = vpop.f32.mrf.mxu0
        %v4272 = vadd.f32 0.0, %v4271
        %4273 = vmatmul.f32.gmra.mxu0 %v3862
        %v4274 = vpop.f32.mrf.mxu0
        %v4275 = vadd.f32 0.0, %v4274
        %4276 = vdwg.mxu0
        %v4277 = vsub.f32 %v4272, %v4155
        %v4278 = vsub.f32 %v4275, %v4156
        %v4279 = vld [vmem:[%s1041] sm:$0xff]
        %v4280 = vld [vmem:[%s1041 + $0x8] sm:$0xff]
        %v4281 = vld [vmem:[%s1041 + $0x10] sm:$0xff]
        %v4282 = vld [vmem:[%s1041 + $0x18] sm:$0xff]
        %v4283 = vld [vmem:[%s1041 + $0x20] sm:$0xff]
        %v4284 = vld [vmem:[%s1041 + $0x28] sm:$0xff]
        %v4285 = vld [vmem:[%s1041 + $0x30] sm:$0xff]
        %v4286 = vld [vmem:[%s1041 + $0x38] sm:$0xff]
        %v4288 = vsel %vm957, %v4277, 0
        %v4291 = vsel %vm957, %v4278, 0
        %4293 = vmatpush.msra.mxu0 0.0
        %4294 = vmatpush.msra.mxu0 0.0
        %4295 = vmatpush.msra.mxu0 0.0
        %4296 = vmatpush.msra.mxu0 0.0
        %4297 = vmatpush.msra.mxu0 0.0
        %4298 = vmatpush.msra.mxu0 0.0
        %4299 = vmatpush.msra.mxu0 0.0
        %4300 = vmatpush.msra.mxu0 0.0
        %4301 = vmatpush.msra.mxu0 %v4286
        %4302 = vmatpush.msra.mxu0 %v4285
        %4303 = vmatpush.msra.mxu0 %v4284
        %4304 = vmatpush.msra.mxu0 %v4283
        %4305 = vmatpush.msra.mxu0 %v4282
        %4306 = vmatpush.msra.mxu0 %v4281
        %4307 = vmatpush.msra.mxu0 %v4280
        %4308 = vmatpush.msra.mxu0 %v4279
        %4309 = vmatmul.f32.gmra.mxu0 %v4288
        %v4310 = vpop.f32.mrf.mxu0
        %v4311 = vadd.f32 0.0, %v4310
        %4312 = vmatmul.f32.gmra.mxu0 %v4291
        %v4313 = vpop.f32.mrf.mxu0
        %v4314 = vadd.f32 0.0, %v4313
        %4315 = vdwg.mxu0
        %v4316 = vadd.f32 %v4249, %v4311
        %v4317 = vadd.f32 %v4252, %v4314
        %v4318 = vadd.f32 %v4316, %v469
        %v4319 = vadd.f32 %v4317, %v469
        %v4320 = vxor.u32 %v4318, 2147483648
        %v4321 = vxor.u32 %v4319, 2147483648
        %v4322 = vmul.f32 %v4320, 1.442695
        %v4323 = vpow.pop %v4322
        %v4324 = vmul.f32 %v4321, 1.442695
        %v4325 = vpow.pop %v4324
        %v4326 = vadd.f32 %v4323, 1.0
        %v4327 = vadd.f32 %v4325, 1.0
        %v4328 = vrcp.pop %v4326
        %v4329 = vmul.f32 %v4326, %v4328
        %v4330 = vsub.f32 1.0, %v4329
        %v4331 = vmul.f32 %v4328, %v4330
        %v4332 = vadd.f32 %v4328, %v4331
        %vm4333 = vweird.f32 %v4326
        %vm4334 = vweird.f32 %v4328
        %vm4335 = vmor %vm4333, %vm4334
        %v4336 = vsel %vm4335, %v4328, %v4332
        %v4337 = vand.u32 2147483647, %v4326
        %vm4338 = vcmp.eq.f32.partialorder %v4337, 8.507059e+37
        %v4339 = vand.u32 %v4326, 2147483648
        %v4340 = vor.u32 1.1754944e-38, %v4339
        %v4341 = vsel %vm4338, %v4340, %v4336
        %v4342 = vmul.f32 1.0, %v4341
        %v4343 = vrcp.pop %v4327
        %v4344 = vmul.f32 %v4327, %v4343
        %v4345 = vsub.f32 1.0, %v4344
        %v4346 = vmul.f32 %v4343, %v4345
        %v4347 = vadd.f32 %v4343, %v4346
        %vm4348 = vweird.f32 %v4327
        %vm4349 = vweird.f32 %v4343
        %vm4350 = vmor %vm4348, %vm4349
        %v4351 = vsel %vm4350, %v4343, %v4347
        %v4352 = vand.u32 2147483647, %v4327
        %vm4353 = vcmp.eq.f32.partialorder %v4352, 8.507059e+37
        %v4354 = vand.u32 %v4327, 2147483648
        %v4355 = vor.u32 1.1754944e-38, %v4354
        %v4356 = vsel %vm4353, %v4355, %v4351
        %v4357 = vmul.f32 1.0, %v4356
        %v4358 = vmul.f32 %v4342, %v3731
        %v4359 = vmul.f32 %v4357, %v3733
        %v4360 = vld [vmem:[#allocation6] sm:$0xff]
        %v4361 = vld [vmem:[#allocation6 + $0x8] sm:$0xff]
        %v4362 = vld [vmem:[#allocation6 + $0x10] sm:$0xff]
        %v4363 = vld [vmem:[#allocation6 + $0x18] sm:$0xff]
        %4364 = vmatpush.msra.mxu0 0.0
        %4365 = vmatpush.msra.mxu0 0.0
        %4366 = vmatpush.msra.mxu0 0.0
        %4367 = vmatpush.msra.mxu0 0.0
        %4368 = vmatpush.msra.mxu0 0.0
        %4369 = vmatpush.msra.mxu0 0.0
        %4370 = vmatpush.msra.mxu0 0.0
        %4371 = vmatpush.msra.mxu0 0.0
        %4372 = vmatpush.msra.mxu0 0.0
        %4373 = vmatpush.msra.mxu0 0.0
        %4374 = vmatpush.msra.mxu0 0.0
        %4375 = vmatpush.msra.mxu0 0.0
        %4376 = vmatpush.msra.mxu0 0.0
        %4377 = vmatpush.msra.mxu0 0.0
        %4378 = vmatpush.msra.mxu0 %v4359
        %4379 = vmatpush.msra.mxu0 %v4358
        %4380 = vmatmul.f32.gmra.mxu0 %v3761
        %v4381 = vpop.f32.mrf.mxu0
        %v4382 = vadd.f32 0.0, %v4381
        %4383 = vmatmul.f32.gmra.mxu0 %v3764
        %v4384 = vpop.f32.mrf.mxu0
        %v4385 = vadd.f32 0.0, %v4384
        %4386 = vdwg.mxu0
        %v4387 = vld [vmem:[%s1150] sm:$0xff]
        %v4388 = vld [vmem:[%s1150 + $0x8] sm:$0xff]
        %v4389 = vld [vmem:[%s1150 + $0x10] sm:$0xff]
        %v4390 = vld [vmem:[%s1150 + $0x18] sm:$0xff]
        %v4392 = vsel %vm745, %v4382, 0
        %v4395 = vsel %vm745, %v4385, 0
        %4397 = vmatpush.msra.mxu0 0.0
        %4398 = vmatpush.msra.mxu0 0.0
        %4399 = vmatpush.msra.mxu0 0.0
        %4400 = vmatpush.msra.mxu0 0.0
        %4401 = vmatpush.msra.mxu0 0.0
        %4402 = vmatpush.msra.mxu0 0.0
        %4403 = vmatpush.msra.mxu0 0.0
        %4404 = vmatpush.msra.mxu0 0.0
        %4405 = vmatpush.msra.mxu0 0.0
        %4406 = vmatpush.msra.mxu0 0.0
        %4407 = vmatpush.msra.mxu0 0.0
        %4408 = vmatpush.msra.mxu0 0.0
        %4409 = vmatpush.msra.mxu0 %v4390
        %4410 = vmatpush.msra.mxu0 %v4389
        %4411 = vmatpush.msra.mxu0 %v4388
        %4412 = vmatpush.msra.mxu0 %v4387
        %4413 = vmatmul.f32.gmra.mxu0 %v4392
        %v4414 = vpop.f32.mrf.mxu0
        %v4415 = vadd.f32 0.0, %v4414
        %4416 = vmatmul.f32.gmra.mxu0 %v4395
        %v4417 = vpop.f32.mrf.mxu0
        %v4418 = vadd.f32 0.0, %v4417
        %4419 = vdwg.mxu0
        %v4421 = vsel %vm745, %v4358, 0
        %v4424 = vsel %vm745, %v4359, 0
        %4426 = vmatpush.msra.mxu0 0.0
        %4427 = vmatpush.msra.mxu0 0.0
        %4428 = vmatpush.msra.mxu0 0.0
        %4429 = vmatpush.msra.mxu0 0.0
        %4430 = vmatpush.msra.mxu0 0.0
        %4431 = vmatpush.msra.mxu0 0.0
        %4432 = vmatpush.msra.mxu0 0.0
        %4433 = vmatpush.msra.mxu0 0.0
        %4434 = vmatpush.msra.mxu0 0.0
        %4435 = vmatpush.msra.mxu0 0.0
        %4436 = vmatpush.msra.mxu0 0.0
        %4437 = vmatpush.msra.mxu0 0.0
        %4438 = vmatpush.msra.mxu0 %v4363
        %4439 = vmatpush.msra.mxu0 %v4362
        %4440 = vmatpush.msra.mxu0 %v4361
        %4441 = vmatpush.msra.mxu0 %v4360
        %4442 = vmatmul.f32.gmra.mxu0 %v4421
        %v4443 = vpop.f32.mrf.mxu0
        %v4444 = vadd.f32 %v4415, %v4443
        %4445 = vmatmul.f32.gmra.mxu0 %v4424
        %v4446 = vpop.f32.mrf.mxu0
        %v4447 = vadd.f32 %v4418, %v4446
        %4448 = vdwg.mxu0
        %4449 = vmatpush.msra.mxu0 0.0
        %4450 = vmatpush.msra.mxu0 0.0
        %4451 = vmatpush.msra.mxu0 0.0
        %4452 = vmatpush.msra.mxu0 0.0
        %4453 = vmatpush.msra.mxu0 0.0
        %4454 = vmatpush.msra.mxu0 0.0
        %4455 = vmatpush.msra.mxu0 0.0
        %4456 = vmatpush.msra.mxu0 0.0
        %4457 = vmatpush.msra.mxu0 0.0
        %4458 = vmatpush.msra.mxu0 0.0
        %4459 = vmatpush.msra.mxu0 0.0
        %4460 = vmatpush.msra.mxu0 0.0
        %4461 = vmatpush.msra.mxu0 0.0
        %4462 = vmatpush.msra.mxu0 0.0
        %4463 = vmatpush.msra.mxu0 %v4385
        %4464 = vmatpush.msra.mxu0 %v4382
        %4465 = vmatmul.f32.gmra.mxu0 %v3859
        %v4466 = vpop.f32.mrf.mxu0
        %v4467 = vadd.f32 0.0, %v4466
        %4468 = vmatmul.f32.gmra.mxu0 %v3862
        %v4469 = vpop.f32.mrf.mxu0
        %v4470 = vadd.f32 0.0, %v4469
        %4471 = vdwg.mxu0
        %v4472 = vsub.f32 %v4467, %v4358
        %v4473 = vsub.f32 %v4470, %v4359
        %v4474 = vld [vmem:[%s1238] sm:$0xff]
        %v4475 = vld [vmem:[%s1238 + $0x8] sm:$0xff]
        %v4476 = vld [vmem:[%s1238 + $0x10] sm:$0xff]
        %v4477 = vld [vmem:[%s1238 + $0x18] sm:$0xff]
        %v4479 = vsel %vm745, %v4472, 0
        %v4482 = vsel %vm745, %v4473, 0
        %4484 = vmatpush.msra.mxu0 0.0
        %4485 = vmatpush.msra.mxu0 0.0
        %4486 = vmatpush.msra.mxu0 0.0
        %4487 = vmatpush.msra.mxu0 0.0
        %4488 = vmatpush.msra.mxu0 0.0
        %4489 = vmatpush.msra.mxu0 0.0
        %4490 = vmatpush.msra.mxu0 0.0
        %4491 = vmatpush.msra.mxu0 0.0
        %4492 = vmatpush.msra.mxu0 0.0
        %4493 = vmatpush.msra.mxu0 0.0
        %4494 = vmatpush.msra.mxu0 0.0
        %4495 = vmatpush.msra.mxu0 0.0
        %4496 = vmatpush.msra.mxu0 %v4477
        %4497 = vmatpush.msra.mxu0 %v4476
        %4498 = vmatpush.msra.mxu0 %v4475
        %4499 = vmatpush.msra.mxu0 %v4474
        %4500 = vmatmul.f32.gmra.mxu0 %v4479
        %v4501 = vpop.f32.mrf.mxu0
        %v4502 = vadd.f32 0.0, %v4501
        %4503 = vmatmul.f32.gmra.mxu0 %v4482
        %v4504 = vpop.f32.mrf.mxu0
        %v4505 = vadd.f32 0.0, %v4504
        %4506 = vdwg.mxu0
        %v4507 = vadd.f32 %v4444, %v4502
        %v4508 = vadd.f32 %v4447, %v4505
        %4511 = vrot.lane.b32.xlu0 %v4507, 64
        %v4512 = vpop.permute.xlu0 %4511
        %4513 = vrot.lane.b32.xlu0 %v4508, 64
        %v4514 = vpop.permute.xlu0 %4513
        %v4517 = vadd.f32 %v4318, %v4512
        %v4518 = vadd.f32 %v4319, %v4514
        %v4519 = vtanh.pop %v4517
        %v4520 = vtanh.pop %v4518
        %v4521 = vmul.f32 %v4342, %v3726
        %v4522 = vmul.f32 %v4357, %v3727
        %v4523 = vsub.f32 1.0, %v4342
        %v4524 = vsub.f32 1.0, %v4357
        %4527 = vrot.lane.b32.xlu0 %v4519, 96
        %v4528 = vpop.permute.xlu0 %4527
        %4529 = vrot.lane.b32.xlu0 %v4520, 96
        %v4530 = vpop.permute.xlu0 %4529
        %v4533 = vmul.f32 %v4523, %v4528
        %v4534 = vmul.f32 %v4524, %v4530
        %v4535 = vadd.f32 %v4521, %v4533
        %v4536 = vadd.f32 %v4522, %v4534
        %4539 = vrot.lane.b32.xlu0 %v4535, 96
        %v4540 = vpop.permute.xlu0 %4539
        %4541 = vrot.lane.b32.xlu0 %v4536, 96
        %v4542 = vpop.permute.xlu0 %4541
        %s4545 = scalar_lea.vmem %s457, 64
        %4546 = vst.msk [vmem:[%s4545] sm:$0xff] %vm745, %v4540
        %4547 = vst.msk [vmem:[%s4545 + $0x8] sm:$0xff] %vm745, %v4542
        %s4548 = scalar_lea.vmem %s442, 80
        %v4549 = vld [vmem:[%s4548] sm:$0xff]
        %v4550 = vld [vmem:[%s4548 + $0x8] sm:$0xff]
        %v4551 = vadd.f32 %v4549, %v4549
        %v4552 = vadd.f32 %v4550, %v4550
        %s4553 = scalar_lea.vmem %s447, 80
        %v4554 = vld [vmem:[%s4553] sm:$0xff]
        %v4555 = vld [vmem:[%s4553 + $0x8] sm:$0xff]
        %4556 = vrot.lane.b32.xlu0 %v4145, 100
        %v4557 = vpop.permute.xlu0 %4556
        %4558 = vrot.lane.b32.xlu0 %v4146, 100
        %v4559 = vpop.permute.xlu0 %4558
        %v4562 = vsel %vm490, %v4554, %v4557
        %v4563 = vsel %vm490, %v4555, %v4559
        %v4564 = vld [vmem:[%s3] sm:$0xff]
        %v4565 = vld [vmem:[%s3 + $0x8] sm:$0xff]
        %v4566 = vld [vmem:[%s3 + $0x10] sm:$0xff]
        %v4567 = vld [vmem:[%s3 + $0x18] sm:$0xff]
        %v4568 = vld [vmem:[%s3 + $0x20] sm:$0xf]
        %v4570 = vsel %vm498, %v4549, 0
        %v4573 = vsel %vm498, %v4550, 0
        %4575 = vmatpush.msra.mxu0 0.0
        %4576 = vmatpush.msra.mxu0 0.0
        %4577 = vmatpush.msra.mxu0 0.0
        %4578 = vmatpush.msra.mxu0 0.0
        %4579 = vmatpush.msra.mxu0 0.0
        %4580 = vmatpush.msra.mxu0 0.0
        %4581 = vmatpush.msra.mxu0 0.0
        %4582 = vmatpush.msra.mxu0 0.0
        %4583 = vmatpush.msra.mxu0 0.0
        %4584 = vmatpush.msra.mxu0 0.0
        %4585 = vmatpush.msra.mxu0 0.0
        %4586 = vmatpush.msra.mxu0 0.0
        %4587 = vmatpush.msra.mxu0 0.0
        %4588 = vmatpush.msra.mxu0 0.0
        %4589 = vmatpush.msra.mxu0 %v4563
        %4590 = vmatpush.msra.mxu0 %v4562
        %4591 = vmatmul.f32.gmra.mxu0 %v4570
        %v4592 = vpop.f32.mrf.mxu0
        %v4593 = vadd.f32 0.0, %v4592
        %4594 = vmatmul.f32.gmra.mxu0 %v4573
        %v4595 = vpop.f32.mrf.mxu0
        %v4596 = vadd.f32 0.0, %v4595
        %4597 = vdwg.mxu0
        %v4598 = vld [vmem:[%s528] sm:$0xff]
        %v4599 = vld [vmem:[%s528 + $0x8] sm:$0xff]
        %v4600 = vld [vmem:[%s528 + $0x10] sm:$0xff]
        %v4601 = vld [vmem:[%s528 + $0x18] sm:$0xff]
        %v4602 = vld [vmem:[%s528 + $0x20] sm:$0xf]
        %v4604 = vsel %vm534, %v4593, 0
        %v4607 = vsel %vm534, %v4596, 0
        %v4610 = vsel %vm541, %v4602, 0
        %4612 = vmatpush.msra.mxu0 0.0
        %4613 = vmatpush.msra.mxu0 0.0
        %4614 = vmatpush.msra.mxu0 0.0
        %4615 = vmatpush.msra.mxu0 0.0
        %4616 = vmatpush.msra.mxu0 0.0
        %4617 = vmatpush.msra.mxu0 0.0
        %4618 = vmatpush.msra.mxu0 0.0
        %4619 = vmatpush.msra.mxu0 0.0
        %4620 = vmatpush.msra.mxu0 0.0
        %4621 = vmatpush.msra.mxu0 0.0
        %4622 = vmatpush.msra.mxu0 0.0
        %4623 = vmatpush.msra.mxu0 %v4610
        %4624 = vmatpush.msra.mxu0 %v4601
        %4625 = vmatpush.msra.mxu0 %v4600
        %4626 = vmatpush.msra.mxu0 %v4599
        %4627 = vmatpush.msra.mxu0 %v4598
        %4628 = vmatmul.f32.gmra.mxu0 %v4604
        %v4629 = vpop.f32.mrf.mxu0
        %v4630 = vadd.f32 0.0, %v4629
        %4631 = vmatmul.f32.gmra.mxu0 %v4607
        %v4632 = vpop.f32.mrf.mxu0
        %v4633 = vadd.f32 0.0, %v4632
        %4634 = vdwg.mxu0
        %v4636 = vsel %vm534, %v4562, 0
        %v4639 = vsel %vm534, %v4563, 0
        %v4642 = vsel %vm541, %v4568, 0
        %4644 = vmatpush.msra.mxu0 0.0
        %4645 = vmatpush.msra.mxu0 0.0
        %4646 = vmatpush.msra.mxu0 0.0
        %4647 = vmatpush.msra.mxu0 0.0
        %4648 = vmatpush.msra.mxu0 0.0
        %4649 = vmatpush.msra.mxu0 0.0
        %4650 = vmatpush.msra.mxu0 0.0
        %4651 = vmatpush.msra.mxu0 0.0
        %4652 = vmatpush.msra.mxu0 0.0
        %4653 = vmatpush.msra.mxu0 0.0
        %4654 = vmatpush.msra.mxu0 0.0
        %4655 = vmatpush.msra.mxu0 %v4642
        %4656 = vmatpush.msra.mxu0 %v4567
        %4657 = vmatpush.msra.mxu0 %v4566
        %4658 = vmatpush.msra.mxu0 %v4565
        %4659 = vmatpush.msra.mxu0 %v4564
        %4660 = vmatmul.f32.gmra.mxu0 %v4636
        %v4661 = vpop.f32.mrf.mxu0
        %v4662 = vadd.f32 %v4630, %v4661
        %4663 = vmatmul.f32.gmra.mxu0 %v4639
        %v4664 = vpop.f32.mrf.mxu0
        %v4665 = vadd.f32 %v4633, %v4664
        %4666 = vdwg.mxu0
        %v4668 = vsel %vm498, %v4551, 0
        %v4671 = vsel %vm498, %v4552, 0
        %4673 = vmatpush.msra.mxu0 0.0
        %4674 = vmatpush.msra.mxu0 0.0
        %4675 = vmatpush.msra.mxu0 0.0
        %4676 = vmatpush.msra.mxu0 0.0
        %4677 = vmatpush.msra.mxu0 0.0
        %4678 = vmatpush.msra.mxu0 0.0
        %4679 = vmatpush.msra.mxu0 0.0
        %4680 = vmatpush.msra.mxu0 0.0
        %4681 = vmatpush.msra.mxu0 0.0
        %4682 = vmatpush.msra.mxu0 0.0
        %4683 = vmatpush.msra.mxu0 0.0
        %4684 = vmatpush.msra.mxu0 0.0
        %4685 = vmatpush.msra.mxu0 0.0
        %4686 = vmatpush.msra.mxu0 0.0
        %4687 = vmatpush.msra.mxu0 %v4596
        %4688 = vmatpush.msra.mxu0 %v4593
        %4689 = vmatmul.f32.gmra.mxu0 %v4668
        %v4690 = vpop.f32.mrf.mxu0
        %v4691 = vadd.f32 0.0, %v4690
        %4692 = vmatmul.f32.gmra.mxu0 %v4671
        %v4693 = vpop.f32.mrf.mxu0
        %v4694 = vadd.f32 0.0, %v4693
        %4695 = vdwg.mxu0
        %v4696 = vsub.f32 %v4691, %v4562
        %v4697 = vsub.f32 %v4694, %v4563
        %v4698 = vld [vmem:[%s631] sm:$0xff]
        %v4699 = vld [vmem:[%s631 + $0x8] sm:$0xff]
        %v4700 = vld [vmem:[%s631 + $0x10] sm:$0xff]
        %v4701 = vld [vmem:[%s631 + $0x18] sm:$0xff]
        %v4702 = vld [vmem:[%s631 + $0x20] sm:$0xf]
        %v4704 = vsel %vm534, %v4696, 0
        %v4707 = vsel %vm534, %v4697, 0
        %v4710 = vsel %vm541, %v4702, 0
        %4712 = vmatpush.msra.mxu0 0.0
        %4713 = vmatpush.msra.mxu0 0.0
        %4714 = vmatpush.msra.mxu0 0.0
        %4715 = vmatpush.msra.mxu0 0.0
        %4716 = vmatpush.msra.mxu0 0.0
        %4717 = vmatpush.msra.mxu0 0.0
        %4718 = vmatpush.msra.mxu0 0.0
        %4719 = vmatpush.msra.mxu0 0.0
        %4720 = vmatpush.msra.mxu0 0.0
        %4721 = vmatpush.msra.mxu0 0.0
        %4722 = vmatpush.msra.mxu0 0.0
        %4723 = vmatpush.msra.mxu0 %v4710
        %4724 = vmatpush.msra.mxu0 %v4701
        %4725 = vmatpush.msra.mxu0 %v4700
        %4726 = vmatpush.msra.mxu0 %v4699
        %4727 = vmatpush.msra.mxu0 %v4698
        %4728 = vmatmul.f32.gmra.mxu0 %v4704
        %v4729 = vpop.f32.mrf.mxu0
        %v4730 = vadd.f32 0.0, %v4729
        %4731 = vmatmul.f32.gmra.mxu0 %v4707
        %v4732 = vpop.f32.mrf.mxu0
        %v4733 = vadd.f32 0.0, %v4732
        %4734 = vdwg.mxu0
        %v4735 = vadd.f32 %v4662, %v4730
        %v4736 = vadd.f32 %v4665, %v4733
        %v4737 = vadd.f32 %v4735, %v465
        %v4738 = vadd.f32 %v4736, %v465
        %v4739 = vxor.u32 %v4737, 2147483648
        %v4740 = vxor.u32 %v4738, 2147483648
        %v4741 = vmul.f32 %v4739, 1.442695
        %v4742 = vpow.pop %v4741
        %v4743 = vmul.f32 %v4740, 1.442695
        %v4744 = vpow.pop %v4743
        %v4745 = vadd.f32 %v4742, 1.0
        %v4746 = vadd.f32 %v4744, 1.0
        %v4747 = vrcp.pop %v4745
        %v4748 = vmul.f32 %v4745, %v4747
        %v4749 = vsub.f32 1.0, %v4748
        %v4750 = vmul.f32 %v4747, %v4749
        %v4751 = vadd.f32 %v4747, %v4750
        %vm4752 = vweird.f32 %v4745
        %vm4753 = vweird.f32 %v4747
        %vm4754 = vmor %vm4752, %vm4753
        %v4755 = vsel %vm4754, %v4747, %v4751
        %v4756 = vand.u32 2147483647, %v4745
        %vm4757 = vcmp.eq.f32.partialorder %v4756, 8.507059e+37
        %v4758 = vand.u32 %v4745, 2147483648
        %v4759 = vor.u32 1.1754944e-38, %v4758
        %v4760 = vsel %vm4757, %v4759, %v4755
        %v4761 = vmul.f32 1.0, %v4760
        %v4762 = vrcp.pop %v4746
        %v4763 = vmul.f32 %v4746, %v4762
        %v4764 = vsub.f32 1.0, %v4763
        %v4765 = vmul.f32 %v4762, %v4764
        %v4766 = vadd.f32 %v4762, %v4765
        %vm4767 = vweird.f32 %v4746
        %vm4768 = vweird.f32 %v4762
        %vm4769 = vmor %vm4767, %vm4768
        %v4770 = vsel %vm4769, %v4762, %v4766
        %v4771 = vand.u32 2147483647, %v4746
        %vm4772 = vcmp.eq.f32.partialorder %v4771, 8.507059e+37
        %v4773 = vand.u32 %v4746, 2147483648
        %v4774 = vor.u32 1.1754944e-38, %v4773
        %v4775 = vsel %vm4772, %v4774, %v4770
        %v4776 = vmul.f32 1.0, %v4775
        %v4777 = vmul.f32 %v4761, %v4150
        %v4778 = vmul.f32 %v4776, %v4152
        %v4779 = vld [vmem:[#allocation2] sm:$0xff]
        %v4780 = vld [vmem:[#allocation2 + $0x8] sm:$0xff]
        %v4781 = vld [vmem:[#allocation2 + $0x10] sm:$0xff]
        %v4782 = vld [vmem:[#allocation2 + $0x18] sm:$0xff]
        %4783 = vmatpush.msra.mxu0 0.0
        %4784 = vmatpush.msra.mxu0 0.0
        %4785 = vmatpush.msra.mxu0 0.0
        %4786 = vmatpush.msra.mxu0 0.0
        %4787 = vmatpush.msra.mxu0 0.0
        %4788 = vmatpush.msra.mxu0 0.0
        %4789 = vmatpush.msra.mxu0 0.0
        %4790 = vmatpush.msra.mxu0 0.0
        %4791 = vmatpush.msra.mxu0 0.0
        %4792 = vmatpush.msra.mxu0 0.0
        %4793 = vmatpush.msra.mxu0 0.0
        %4794 = vmatpush.msra.mxu0 0.0
        %4795 = vmatpush.msra.mxu0 0.0
        %4796 = vmatpush.msra.mxu0 0.0
        %4797 = vmatpush.msra.mxu0 %v4778
        %4798 = vmatpush.msra.mxu0 %v4777
        %4799 = vmatmul.f32.gmra.mxu0 %v4570
        %v4800 = vpop.f32.mrf.mxu0
        %v4801 = vadd.f32 0.0, %v4800
        %4802 = vmatmul.f32.gmra.mxu0 %v4573
        %v4803 = vpop.f32.mrf.mxu0
        %v4804 = vadd.f32 0.0, %v4803
        %4805 = vdwg.mxu0
        %v4806 = vld [vmem:[%s740] sm:$0xff]
        %v4807 = vld [vmem:[%s740 + $0x8] sm:$0xff]
        %v4808 = vld [vmem:[%s740 + $0x10] sm:$0xff]
        %v4809 = vld [vmem:[%s740 + $0x18] sm:$0xff]
        %v4811 = vsel %vm745, %v4801, 0
        %v4814 = vsel %vm745, %v4804, 0
        %4816 = vmatpush.msra.mxu0 0.0
        %4817 = vmatpush.msra.mxu0 0.0
        %4818 = vmatpush.msra.mxu0 0.0
        %4819 = vmatpush.msra.mxu0 0.0
        %4820 = vmatpush.msra.mxu0 0.0
        %4821 = vmatpush.msra.mxu0 0.0
        %4822 = vmatpush.msra.mxu0 0.0
        %4823 = vmatpush.msra.mxu0 0.0
        %4824 = vmatpush.msra.mxu0 0.0
        %4825 = vmatpush.msra.mxu0 0.0
        %4826 = vmatpush.msra.mxu0 0.0
        %4827 = vmatpush.msra.mxu0 0.0
        %4828 = vmatpush.msra.mxu0 %v4809
        %4829 = vmatpush.msra.mxu0 %v4808
        %4830 = vmatpush.msra.mxu0 %v4807
        %4831 = vmatpush.msra.mxu0 %v4806
        %4832 = vmatmul.f32.gmra.mxu0 %v4811
        %v4833 = vpop.f32.mrf.mxu0
        %v4834 = vadd.f32 0.0, %v4833
        %4835 = vmatmul.f32.gmra.mxu0 %v4814
        %v4836 = vpop.f32.mrf.mxu0
        %v4837 = vadd.f32 0.0, %v4836
        %4838 = vdwg.mxu0
        %v4840 = vsel %vm745, %v4777, 0
        %v4843 = vsel %vm745, %v4778, 0
        %4845 = vmatpush.msra.mxu0 0.0
        %4846 = vmatpush.msra.mxu0 0.0
        %4847 = vmatpush.msra.mxu0 0.0
        %4848 = vmatpush.msra.mxu0 0.0
        %4849 = vmatpush.msra.mxu0 0.0
        %4850 = vmatpush.msra.mxu0 0.0
        %4851 = vmatpush.msra.mxu0 0.0
        %4852 = vmatpush.msra.mxu0 0.0
        %4853 = vmatpush.msra.mxu0 0.0
        %4854 = vmatpush.msra.mxu0 0.0
        %4855 = vmatpush.msra.mxu0 0.0
        %4856 = vmatpush.msra.mxu0 0.0
        %4857 = vmatpush.msra.mxu0 %v4782
        %4858 = vmatpush.msra.mxu0 %v4781
        %4859 = vmatpush.msra.mxu0 %v4780
        %4860 = vmatpush.msra.mxu0 %v4779
        %4861 = vmatmul.f32.gmra.mxu0 %v4840
        %v4862 = vpop.f32.mrf.mxu0
        %v4863 = vadd.f32 %v4834, %v4862
        %4864 = vmatmul.f32.gmra.mxu0 %v4843
        %v4865 = vpop.f32.mrf.mxu0
        %v4866 = vadd.f32 %v4837, %v4865
        %4867 = vdwg.mxu0
        %4868 = vmatpush.msra.mxu0 0.0
        %4869 = vmatpush.msra.mxu0 0.0
        %4870 = vmatpush.msra.mxu0 0.0
        %4871 = vmatpush.msra.mxu0 0.0
        %4872 = vmatpush.msra.mxu0 0.0
        %4873 = vmatpush.msra.mxu0 0.0
        %4874 = vmatpush.msra.mxu0 0.0
        %4875 = vmatpush.msra.mxu0 0.0
        %4876 = vmatpush.msra.mxu0 0.0
        %4877 = vmatpush.msra.mxu0 0.0
        %4878 = vmatpush.msra.mxu0 0.0
        %4879 = vmatpush.msra.mxu0 0.0
        %4880 = vmatpush.msra.mxu0 0.0
        %4881 = vmatpush.msra.mxu0 0.0
        %4882 = vmatpush.msra.mxu0 %v4804
        %4883 = vmatpush.msra.mxu0 %v4801
        %4884 = vmatmul.f32.gmra.mxu0 %v4668
        %v4885 = vpop.f32.mrf.mxu0
        %v4886 = vadd.f32 0.0, %v4885
        %4887 = vmatmul.f32.gmra.mxu0 %v4671
        %v4888 = vpop.f32.mrf.mxu0
        %v4889 = vadd.f32 0.0, %v4888
        %4890 = vdwg.mxu0
        %v4891 = vsub.f32 %v4886, %v4777
        %v4892 = vsub.f32 %v4889, %v4778
        %v4893 = vld [vmem:[%s829] sm:$0xff]
        %v4894 = vld [vmem:[%s829 + $0x8] sm:$0xff]
        %v4895 = vld [vmem:[%s829 + $0x10] sm:$0xff]
        %v4896 = vld [vmem:[%s829 + $0x18] sm:$0xff]
        %v4898 = vsel %vm745, %v4891, 0
        %v4901 = vsel %vm745, %v4892, 0
        %4903 = vmatpush.msra.mxu0 0.0
        %4904 = vmatpush.msra.mxu0 0.0
        %4905 = vmatpush.msra.mxu0 0.0
        %4906 = vmatpush.msra.mxu0 0.0
        %4907 = vmatpush.msra.mxu0 0.0
        %4908 = vmatpush.msra.mxu0 0.0
        %4909 = vmatpush.msra.mxu0 0.0
        %4910 = vmatpush.msra.mxu0 0.0
        %4911 = vmatpush.msra.mxu0 0.0
        %4912 = vmatpush.msra.mxu0 0.0
        %4913 = vmatpush.msra.mxu0 0.0
        %4914 = vmatpush.msra.mxu0 0.0
        %4915 = vmatpush.msra.mxu0 %v4896
        %4916 = vmatpush.msra.mxu0 %v4895
        %4917 = vmatpush.msra.mxu0 %v4894
        %4918 = vmatpush.msra.mxu0 %v4893
        %4919 = vmatmul.f32.gmra.mxu0 %v4898
        %v4920 = vpop.f32.mrf.mxu0
        %v4921 = vadd.f32 0.0, %v4920
        %4922 = vmatmul.f32.gmra.mxu0 %v4901
        %v4923 = vpop.f32.mrf.mxu0
        %v4924 = vadd.f32 0.0, %v4923
        %4925 = vdwg.mxu0
        %v4926 = vadd.f32 %v4863, %v4921
        %v4927 = vadd.f32 %v4866, %v4924
        %4930 = vrot.lane.b32.xlu0 %v4926, 64
        %v4931 = vpop.permute.xlu0 %4930
        %4932 = vrot.lane.b32.xlu0 %v4927, 64
        %v4933 = vpop.permute.xlu0 %4932
        %v4936 = vadd.f32 %v4737, %v4931
        %v4937 = vadd.f32 %v4738, %v4933
        %v4938 = vtanh.pop %v4936
        %v4939 = vtanh.pop %v4937
        %v4940 = vmul.f32 %v4761, %v4145
        %v4941 = vmul.f32 %v4776, %v4146
        %v4942 = vsub.f32 1.0, %v4761
        %v4943 = vsub.f32 1.0, %v4776
        %4946 = vrot.lane.b32.xlu0 %v4938, 96
        %v4947 = vpop.permute.xlu0 %4946
        %4948 = vrot.lane.b32.xlu0 %v4939, 96
        %v4949 = vpop.permute.xlu0 %4948
        %v4952 = vmul.f32 %v4942, %v4947
        %v4953 = vmul.f32 %v4943, %v4949
        %v4954 = vadd.f32 %v4940, %v4952
        %v4955 = vadd.f32 %v4941, %v4953
        %4958 = vrot.lane.b32.xlu0 %v4954, 96
        %v4959 = vpop.permute.xlu0 %4958
        %4960 = vrot.lane.b32.xlu0 %v4955, 96
        %v4961 = vpop.permute.xlu0 %4960
        %v4964 = vsel %vm745, %v4959, %v4535
        %v4965 = vsel %vm745, %v4961, %v4536
        %v4966 = vld [vmem:[#allocation4] sm:$0xff]
        %v4967 = vld [vmem:[#allocation4 + $0x8] sm:$0xff]
        %v4968 = vld [vmem:[#allocation4 + $0x10] sm:$0xff]
        %v4969 = vld [vmem:[#allocation4 + $0x18] sm:$0xff]
        %v4970 = vld [vmem:[#allocation4 + $0x20] sm:$0xff]
        %v4971 = vld [vmem:[#allocation4 + $0x28] sm:$0xff]
        %v4972 = vld [vmem:[#allocation4 + $0x30] sm:$0xff]
        %v4973 = vld [vmem:[#allocation4 + $0x38] sm:$0xff]
        %4974 = vmatpush.msra.mxu0 0.0
        %4975 = vmatpush.msra.mxu0 0.0
        %4976 = vmatpush.msra.mxu0 0.0
        %4977 = vmatpush.msra.mxu0 0.0
        %4978 = vmatpush.msra.mxu0 0.0
        %4979 = vmatpush.msra.mxu0 0.0
        %4980 = vmatpush.msra.mxu0 0.0
        %4981 = vmatpush.msra.mxu0 0.0
        %4982 = vmatpush.msra.mxu0 0.0
        %4983 = vmatpush.msra.mxu0 0.0
        %4984 = vmatpush.msra.mxu0 0.0
        %4985 = vmatpush.msra.mxu0 0.0
        %4986 = vmatpush.msra.mxu0 0.0
        %4987 = vmatpush.msra.mxu0 0.0
        %4988 = vmatpush.msra.mxu0 %v4965
        %4989 = vmatpush.msra.mxu0 %v4964
        %4990 = vmatmul.f32.gmra.mxu0 %v4570
        %v4991 = vpop.f32.mrf.mxu0
        %v4992 = vadd.f32 0.0, %v4991
        %4993 = vmatmul.f32.gmra.mxu0 %v4573
        %v4994 = vpop.f32.mrf.mxu0
        %v4995 = vadd.f32 0.0, %v4994
        %4996 = vdwg.mxu0
        %v4997 = vld [vmem:[%s948] sm:$0xff]
        %v4998 = vld [vmem:[%s948 + $0x8] sm:$0xff]
        %v4999 = vld [vmem:[%s948 + $0x10] sm:$0xff]
        %v5000 = vld [vmem:[%s948 + $0x18] sm:$0xff]
        %v5001 = vld [vmem:[%s948 + $0x20] sm:$0xff]
        %v5002 = vld [vmem:[%s948 + $0x28] sm:$0xff]
        %v5003 = vld [vmem:[%s948 + $0x30] sm:$0xff]
        %v5004 = vld [vmem:[%s948 + $0x38] sm:$0xff]
        %v5006 = vsel %vm957, %v4992, 0
        %v5009 = vsel %vm957, %v4995, 0
        %5011 = vmatpush.msra.mxu0 0.0
        %5012 = vmatpush.msra.mxu0 0.0
        %5013 = vmatpush.msra.mxu0 0.0
        %5014 = vmatpush.msra.mxu0 0.0
        %5015 = vmatpush.msra.mxu0 0.0
        %5016 = vmatpush.msra.mxu0 0.0
        %5017 = vmatpush.msra.mxu0 0.0
        %5018 = vmatpush.msra.mxu0 0.0
        %5019 = vmatpush.msra.mxu0 %v5004
        %5020 = vmatpush.msra.mxu0 %v5003
        %5021 = vmatpush.msra.mxu0 %v5002
        %5022 = vmatpush.msra.mxu0 %v5001
        %5023 = vmatpush.msra.mxu0 %v5000
        %5024 = vmatpush.msra.mxu0 %v4999
        %5025 = vmatpush.msra.mxu0 %v4998
        %5026 = vmatpush.msra.mxu0 %v4997
        %5027 = vmatmul.f32.gmra.mxu0 %v5006
        %v5028 = vpop.f32.mrf.mxu0
        %v5029 = vadd.f32 0.0, %v5028
        %5030 = vmatmul.f32.gmra.mxu0 %v5009
        %v5031 = vpop.f32.mrf.mxu0
        %v5032 = vadd.f32 0.0, %v5031
        %5033 = vdwg.mxu0
        %v5035 = vsel %vm957, %v4964, 0
        %v5038 = vsel %vm957, %v4965, 0
        %5040 = vmatpush.msra.mxu0 0.0
        %5041 = vmatpush.msra.mxu0 0.0
        %5042 = vmatpush.msra.mxu0 0.0
        %5043 = vmatpush.msra.mxu0 0.0
        %5044 = vmatpush.msra.mxu0 0.0
        %5045 = vmatpush.msra.mxu0 0.0
        %5046 = vmatpush.msra.mxu0 0.0
        %5047 = vmatpush.msra.mxu0 0.0
        %5048 = vmatpush.msra.mxu0 %v4973
        %5049 = vmatpush.msra.mxu0 %v4972
        %5050 = vmatpush.msra.mxu0 %v4971
        %5051 = vmatpush.msra.mxu0 %v4970
        %5052 = vmatpush.msra.mxu0 %v4969
        %5053 = vmatpush.msra.mxu0 %v4968
        %5054 = vmatpush.msra.mxu0 %v4967
        %5055 = vmatpush.msra.mxu0 %v4966
        %5056 = vmatmul.f32.gmra.mxu0 %v5035
        %v5057 = vpop.f32.mrf.mxu0
        %v5058 = vadd.f32 %v5029, %v5057
        %5059 = vmatmul.f32.gmra.mxu0 %v5038
        %v5060 = vpop.f32.mrf.mxu0
        %v5061 = vadd.f32 %v5032, %v5060
        %5062 = vdwg.mxu0
        %5063 = vmatpush.msra.mxu0 0.0
        %5064 = vmatpush.msra.mxu0 0.0
        %5065 = vmatpush.msra.mxu0 0.0
        %5066 = vmatpush.msra.mxu0 0.0
        %5067 = vmatpush.msra.mxu0 0.0
        %5068 = vmatpush.msra.mxu0 0.0
        %5069 = vmatpush.msra.mxu0 0.0
        %5070 = vmatpush.msra.mxu0 0.0
        %5071 = vmatpush.msra.mxu0 0.0
        %5072 = vmatpush.msra.mxu0 0.0
        %5073 = vmatpush.msra.mxu0 0.0
        %5074 = vmatpush.msra.mxu0 0.0
        %5075 = vmatpush.msra.mxu0 0.0
        %5076 = vmatpush.msra.mxu0 0.0
        %5077 = vmatpush.msra.mxu0 %v4995
        %5078 = vmatpush.msra.mxu0 %v4992
        %5079 = vmatmul.f32.gmra.mxu0 %v4668
        %v5080 = vpop.f32.mrf.mxu0
        %v5081 = vadd.f32 0.0, %v5080
        %5082 = vmatmul.f32.gmra.mxu0 %v4671
        %v5083 = vpop.f32.mrf.mxu0
        %v5084 = vadd.f32 0.0, %v5083
        %5085 = vdwg.mxu0
        %v5086 = vsub.f32 %v5081, %v4964
        %v5087 = vsub.f32 %v5084, %v4965
        %v5088 = vld [vmem:[%s1041] sm:$0xff]
        %v5089 = vld [vmem:[%s1041 + $0x8] sm:$0xff]
        %v5090 = vld [vmem:[%s1041 + $0x10] sm:$0xff]
        %v5091 = vld [vmem:[%s1041 + $0x18] sm:$0xff]
        %v5092 = vld [vmem:[%s1041 + $0x20] sm:$0xff]
        %v5093 = vld [vmem:[%s1041 + $0x28] sm:$0xff]
        %v5094 = vld [vmem:[%s1041 + $0x30] sm:$0xff]
        %v5095 = vld [vmem:[%s1041 + $0x38] sm:$0xff]
        %v5097 = vsel %vm957, %v5086, 0
        %v5100 = vsel %vm957, %v5087, 0
        %5102 = vmatpush.msra.mxu0 0.0
        %5103 = vmatpush.msra.mxu0 0.0
        %5104 = vmatpush.msra.mxu0 0.0
        %5105 = vmatpush.msra.mxu0 0.0
        %5106 = vmatpush.msra.mxu0 0.0
        %5107 = vmatpush.msra.mxu0 0.0
        %5108 = vmatpush.msra.mxu0 0.0
        %5109 = vmatpush.msra.mxu0 0.0
        %5110 = vmatpush.msra.mxu0 %v5095
        %5111 = vmatpush.msra.mxu0 %v5094
        %5112 = vmatpush.msra.mxu0 %v5093
        %5113 = vmatpush.msra.mxu0 %v5092
        %5114 = vmatpush.msra.mxu0 %v5091
        %5115 = vmatpush.msra.mxu0 %v5090
        %5116 = vmatpush.msra.mxu0 %v5089
        %5117 = vmatpush.msra.mxu0 %v5088
        %5118 = vmatmul.f32.gmra.mxu0 %v5097
        %v5119 = vpop.f32.mrf.mxu0
        %v5120 = vadd.f32 0.0, %v5119
        %5121 = vmatmul.f32.gmra.mxu0 %v5100
        %v5122 = vpop.f32.mrf.mxu0
        %v5123 = vadd.f32 0.0, %v5122
        %5124 = vdwg.mxu0
        %v5125 = vadd.f32 %v5058, %v5120
        %v5126 = vadd.f32 %v5061, %v5123
        %v5127 = vadd.f32 %v5125, %v469
        %v5128 = vadd.f32 %v5126, %v469
        %v5129 = vxor.u32 %v5127, 2147483648
        %v5130 = vxor.u32 %v5128, 2147483648
        %v5131 = vmul.f32 %v5129, 1.442695
        %v5132 = vpow.pop %v5131
        %v5133 = vmul.f32 %v5130, 1.442695
        %v5134 = vpow.pop %v5133
        %v5135 = vadd.f32 %v5132, 1.0
        %v5136 = vadd.f32 %v5134, 1.0
        %v5137 = vrcp.pop %v5135
        %v5138 = vmul.f32 %v5135, %v5137
        %v5139 = vsub.f32 1.0, %v5138
        %v5140 = vmul.f32 %v5137, %v5139
        %v5141 = vadd.f32 %v5137, %v5140
        %vm5142 = vweird.f32 %v5135
        %vm5143 = vweird.f32 %v5137
        %vm5144 = vmor %vm5142, %vm5143
        %v5145 = vsel %vm5144, %v5137, %v5141
        %v5146 = vand.u32 2147483647, %v5135
        %vm5147 = vcmp.eq.f32.partialorder %v5146, 8.507059e+37
        %v5148 = vand.u32 %v5135, 2147483648
        %v5149 = vor.u32 1.1754944e-38, %v5148
        %v5150 = vsel %vm5147, %v5149, %v5145
        %v5151 = vmul.f32 1.0, %v5150
        %v5152 = vrcp.pop %v5136
        %v5153 = vmul.f32 %v5136, %v5152
        %v5154 = vsub.f32 1.0, %v5153
        %v5155 = vmul.f32 %v5152, %v5154
        %v5156 = vadd.f32 %v5152, %v5155
        %vm5157 = vweird.f32 %v5136
        %vm5158 = vweird.f32 %v5152
        %vm5159 = vmor %vm5157, %vm5158
        %v5160 = vsel %vm5159, %v5152, %v5156
        %v5161 = vand.u32 2147483647, %v5136
        %vm5162 = vcmp.eq.f32.partialorder %v5161, 8.507059e+37
        %v5163 = vand.u32 %v5136, 2147483648
        %v5164 = vor.u32 1.1754944e-38, %v5163
        %v5165 = vsel %vm5162, %v5164, %v5160
        %v5166 = vmul.f32 1.0, %v5165
        %v5167 = vmul.f32 %v5151, %v4540
        %v5168 = vmul.f32 %v5166, %v4542
        %v5169 = vld [vmem:[#allocation6] sm:$0xff]
        %v5170 = vld [vmem:[#allocation6 + $0x8] sm:$0xff]
        %v5171 = vld [vmem:[#allocation6 + $0x10] sm:$0xff]
        %v5172 = vld [vmem:[#allocation6 + $0x18] sm:$0xff]
        %5173 = vmatpush.msra.mxu0 0.0
        %5174 = vmatpush.msra.mxu0 0.0
        %5175 = vmatpush.msra.mxu0 0.0
        %5176 = vmatpush.msra.mxu0 0.0
        %5177 = vmatpush.msra.mxu0 0.0
        %5178 = vmatpush.msra.mxu0 0.0
        %5179 = vmatpush.msra.mxu0 0.0
        %5180 = vmatpush.msra.mxu0 0.0
        %5181 = vmatpush.msra.mxu0 0.0
        %5182 = vmatpush.msra.mxu0 0.0
        %5183 = vmatpush.msra.mxu0 0.0
        %5184 = vmatpush.msra.mxu0 0.0
        %5185 = vmatpush.msra.mxu0 0.0
        %5186 = vmatpush.msra.mxu0 0.0
        %5187 = vmatpush.msra.mxu0 %v5168
        %5188 = vmatpush.msra.mxu0 %v5167
        %5189 = vmatmul.f32.gmra.mxu0 %v4570
        %v5190 = vpop.f32.mrf.mxu0
        %v5191 = vadd.f32 0.0, %v5190
        %5192 = vmatmul.f32.gmra.mxu0 %v4573
        %v5193 = vpop.f32.mrf.mxu0
        %v5194 = vadd.f32 0.0, %v5193
        %5195 = vdwg.mxu0
        %v5196 = vld [vmem:[%s1150] sm:$0xff]
        %v5197 = vld [vmem:[%s1150 + $0x8] sm:$0xff]
        %v5198 = vld [vmem:[%s1150 + $0x10] sm:$0xff]
        %v5199 = vld [vmem:[%s1150 + $0x18] sm:$0xff]
        %v5201 = vsel %vm745, %v5191, 0
        %v5204 = vsel %vm745, %v5194, 0
        %5206 = vmatpush.msra.mxu0 0.0
        %5207 = vmatpush.msra.mxu0 0.0
        %5208 = vmatpush.msra.mxu0 0.0
        %5209 = vmatpush.msra.mxu0 0.0
        %5210 = vmatpush.msra.mxu0 0.0
        %5211 = vmatpush.msra.mxu0 0.0
        %5212 = vmatpush.msra.mxu0 0.0
        %5213 = vmatpush.msra.mxu0 0.0
        %5214 = vmatpush.msra.mxu0 0.0
        %5215 = vmatpush.msra.mxu0 0.0
        %5216 = vmatpush.msra.mxu0 0.0
        %5217 = vmatpush.msra.mxu0 0.0
        %5218 = vmatpush.msra.mxu0 %v5199
        %5219 = vmatpush.msra.mxu0 %v5198
        %5220 = vmatpush.msra.mxu0 %v5197
        %5221 = vmatpush.msra.mxu0 %v5196
        %5222 = vmatmul.f32.gmra.mxu0 %v5201
        %v5223 = vpop.f32.mrf.mxu0
        %v5224 = vadd.f32 0.0, %v5223
        %5225 = vmatmul.f32.gmra.mxu0 %v5204
        %v5226 = vpop.f32.mrf.mxu0
        %v5227 = vadd.f32 0.0, %v5226
        %5228 = vdwg.mxu0
        %v5230 = vsel %vm745, %v5167, 0
        %v5233 = vsel %vm745, %v5168, 0
        %5235 = vmatpush.msra.mxu0 0.0
        %5236 = vmatpush.msra.mxu0 0.0
        %5237 = vmatpush.msra.mxu0 0.0
        %5238 = vmatpush.msra.mxu0 0.0
        %5239 = vmatpush.msra.mxu0 0.0
        %5240 = vmatpush.msra.mxu0 0.0
        %5241 = vmatpush.msra.mxu0 0.0
        %5242 = vmatpush.msra.mxu0 0.0
        %5243 = vmatpush.msra.mxu0 0.0
        %5244 = vmatpush.msra.mxu0 0.0
        %5245 = vmatpush.msra.mxu0 0.0
        %5246 = vmatpush.msra.mxu0 0.0
        %5247 = vmatpush.msra.mxu0 %v5172
        %5248 = vmatpush.msra.mxu0 %v5171
        %5249 = vmatpush.msra.mxu0 %v5170
        %5250 = vmatpush.msra.mxu0 %v5169
        %5251 = vmatmul.f32.gmra.mxu0 %v5230
        %v5252 = vpop.f32.mrf.mxu0
        %v5253 = vadd.f32 %v5224, %v5252
        %5254 = vmatmul.f32.gmra.mxu0 %v5233
        %v5255 = vpop.f32.mrf.mxu0
        %v5256 = vadd.f32 %v5227, %v5255
        %5257 = vdwg.mxu0
        %5258 = vmatpush.msra.mxu0 0.0
        %5259 = vmatpush.msra.mxu0 0.0
        %5260 = vmatpush.msra.mxu0 0.0
        %5261 = vmatpush.msra.mxu0 0.0
        %5262 = vmatpush.msra.mxu0 0.0
        %5263 = vmatpush.msra.mxu0 0.0
        %5264 = vmatpush.msra.mxu0 0.0
        %5265 = vmatpush.msra.mxu0 0.0
        %5266 = vmatpush.msra.mxu0 0.0
        %5267 = vmatpush.msra.mxu0 0.0
        %5268 = vmatpush.msra.mxu0 0.0
        %5269 = vmatpush.msra.mxu0 0.0
        %5270 = vmatpush.msra.mxu0 0.0
        %5271 = vmatpush.msra.mxu0 0.0
        %5272 = vmatpush.msra.mxu0 %v5194
        %5273 = vmatpush.msra.mxu0 %v5191
        %5274 = vmatmul.f32.gmra.mxu0 %v4668
        %v5275 = vpop.f32.mrf.mxu0
        %v5276 = vadd.f32 0.0, %v5275
        %5277 = vmatmul.f32.gmra.mxu0 %v4671
        %v5278 = vpop.f32.mrf.mxu0
        %v5279 = vadd.f32 0.0, %v5278
        %5280 = vdwg.mxu0
        %v5281 = vsub.f32 %v5276, %v5167
        %v5282 = vsub.f32 %v5279, %v5168
        %v5283 = vld [vmem:[%s1238] sm:$0xff]
        %v5284 = vld [vmem:[%s1238 + $0x8] sm:$0xff]
        %v5285 = vld [vmem:[%s1238 + $0x10] sm:$0xff]
        %v5286 = vld [vmem:[%s1238 + $0x18] sm:$0xff]
        %v5288 = vsel %vm745, %v5281, 0
        %v5291 = vsel %vm745, %v5282, 0
        %5293 = vmatpush.msra.mxu0 0.0
        %5294 = vmatpush.msra.mxu0 0.0
        %5295 = vmatpush.msra.mxu0 0.0
        %5296 = vmatpush.msra.mxu0 0.0
        %5297 = vmatpush.msra.mxu0 0.0
        %5298 = vmatpush.msra.mxu0 0.0
        %5299 = vmatpush.msra.mxu0 0.0
        %5300 = vmatpush.msra.mxu0 0.0
        %5301 = vmatpush.msra.mxu0 0.0
        %5302 = vmatpush.msra.mxu0 0.0
        %5303 = vmatpush.msra.mxu0 0.0
        %5304 = vmatpush.msra.mxu0 0.0
        %5305 = vmatpush.msra.mxu0 %v5286
        %5306 = vmatpush.msra.mxu0 %v5285
        %5307 = vmatpush.msra.mxu0 %v5284
        %5308 = vmatpush.msra.mxu0 %v5283
        %5309 = vmatmul.f32.gmra.mxu0 %v5288
        %v5310 = vpop.f32.mrf.mxu0
        %v5311 = vadd.f32 0.0, %v5310
        %5312 = vmatmul.f32.gmra.mxu0 %v5291
        %v5313 = vpop.f32.mrf.mxu0
        %v5314 = vadd.f32 0.0, %v5313
        %5315 = vdwg.mxu0
        %v5316 = vadd.f32 %v5253, %v5311
        %v5317 = vadd.f32 %v5256, %v5314
        %5320 = vrot.lane.b32.xlu0 %v5316, 64
        %v5321 = vpop.permute.xlu0 %5320
        %5322 = vrot.lane.b32.xlu0 %v5317, 64
        %v5323 = vpop.permute.xlu0 %5322
        %v5326 = vadd.f32 %v5127, %v5321
        %v5327 = vadd.f32 %v5128, %v5323
        %v5328 = vtanh.pop %v5326
        %v5329 = vtanh.pop %v5327
        %v5330 = vmul.f32 %v5151, %v4535
        %v5331 = vmul.f32 %v5166, %v4536
        %v5332 = vsub.f32 1.0, %v5151
        %v5333 = vsub.f32 1.0, %v5166
        %5336 = vrot.lane.b32.xlu0 %v5328, 96
        %v5337 = vpop.permute.xlu0 %5336
        %5338 = vrot.lane.b32.xlu0 %v5329, 96
        %v5339 = vpop.permute.xlu0 %5338
        %v5342 = vmul.f32 %v5332, %v5337
        %v5343 = vmul.f32 %v5333, %v5339
        %v5344 = vadd.f32 %v5330, %v5342
        %v5345 = vadd.f32 %v5331, %v5343
        %5348 = vrot.lane.b32.xlu0 %v5344, 96
        %v5349 = vpop.permute.xlu0 %5348
        %5350 = vrot.lane.b32.xlu0 %v5345, 96
        %v5351 = vpop.permute.xlu0 %5350
        %s5354 = scalar_lea.vmem %s457, 80
        %5355 = vst.msk [vmem:[%s5354] sm:$0xff] %vm745, %v5349
        %5356 = vst.msk [vmem:[%s5354 + $0x8] sm:$0xff] %vm745, %v5351
        %s5357 = scalar_lea.vmem %s442, 96
        %v5358 = vld [vmem:[%s5357] sm:$0xff]
        %v5359 = vld [vmem:[%s5357 + $0x8] sm:$0xff]
        %v5360 = vadd.f32 %v5358, %v5358
        %v5361 = vadd.f32 %v5359, %v5359
        %s5362 = scalar_lea.vmem %s447, 96
        %v5363 = vld [vmem:[%s5362] sm:$0xff]
        %v5364 = vld [vmem:[%s5362 + $0x8] sm:$0xff]
        %5365 = vrot.lane.b32.xlu0 %v4954, 100
        %v5366 = vpop.permute.xlu0 %5365
        %5367 = vrot.lane.b32.xlu0 %v4955, 100
        %v5368 = vpop.permute.xlu0 %5367
        %v5371 = vsel %vm490, %v5363, %v5366
        %v5372 = vsel %vm490, %v5364, %v5368
        %v5373 = vld [vmem:[%s3] sm:$0xff]
        %v5374 = vld [vmem:[%s3 + $0x8] sm:$0xff]
        %v5375 = vld [vmem:[%s3 + $0x10] sm:$0xff]
        %v5376 = vld [vmem:[%s3 + $0x18] sm:$0xff]
        %v5377 = vld [vmem:[%s3 + $0x20] sm:$0xf]
        %v5379 = vsel %vm498, %v5358, 0
        %v5382 = vsel %vm498, %v5359, 0
        %5384 = vmatpush.msra.mxu0 0.0
        %5385 = vmatpush.msra.mxu0 0.0
        %5386 = vmatpush.msra.mxu0 0.0
        %5387 = vmatpush.msra.mxu0 0.0
        %5388 = vmatpush.msra.mxu0 0.0
        %5389 = vmatpush.msra.mxu0 0.0
        %5390 = vmatpush.msra.mxu0 0.0
        %5391 = vmatpush.msra.mxu0 0.0
        %5392 = vmatpush.msra.mxu0 0.0
        %5393 = vmatpush.msra.mxu0 0.0
        %5394 = vmatpush.msra.mxu0 0.0
        %5395 = vmatpush.msra.mxu0 0.0
        %5396 = vmatpush.msra.mxu0 0.0
        %5397 = vmatpush.msra.mxu0 0.0
        %5398 = vmatpush.msra.mxu0 %v5372
        %5399 = vmatpush.msra.mxu0 %v5371
        %5400 = vmatmul.f32.gmra.mxu0 %v5379
        %v5401 = vpop.f32.mrf.mxu0
        %v5402 = vadd.f32 0.0, %v5401
        %5403 = vmatmul.f32.gmra.mxu0 %v5382
        %v5404 = vpop.f32.mrf.mxu0
        %v5405 = vadd.f32 0.0, %v5404
        %5406 = vdwg.mxu0
        %v5407 = vld [vmem:[%s528] sm:$0xff]
        %v5408 = vld [vmem:[%s528 + $0x8] sm:$0xff]
        %v5409 = vld [vmem:[%s528 + $0x10] sm:$0xff]
        %v5410 = vld [vmem:[%s528 + $0x18] sm:$0xff]
        %v5411 = vld [vmem:[%s528 + $0x20] sm:$0xf]
        %v5413 = vsel %vm534, %v5402, 0
        %v5416 = vsel %vm534, %v5405, 0
        %v5419 = vsel %vm541, %v5411, 0
        %5421 = vmatpush.msra.mxu0 0.0
        %5422 = vmatpush.msra.mxu0 0.0
        %5423 = vmatpush.msra.mxu0 0.0
        %5424 = vmatpush.msra.mxu0 0.0
        %5425 = vmatpush.msra.mxu0 0.0
        %5426 = vmatpush.msra.mxu0 0.0
        %5427 = vmatpush.msra.mxu0 0.0
        %5428 = vmatpush.msra.mxu0 0.0
        %5429 = vmatpush.msra.mxu0 0.0
        %5430 = vmatpush.msra.mxu0 0.0
        %5431 = vmatpush.msra.mxu0 0.0
        %5432 = vmatpush.msra.mxu0 %v5419
        %5433 = vmatpush.msra.mxu0 %v5410
        %5434 = vmatpush.msra.mxu0 %v5409
        %5435 = vmatpush.msra.mxu0 %v5408
        %5436 = vmatpush.msra.mxu0 %v5407
        %5437 = vmatmul.f32.gmra.mxu0 %v5413
        %v5438 = vpop.f32.mrf.mxu0
        %v5439 = vadd.f32 0.0, %v5438
        %5440 = vmatmul.f32.gmra.mxu0 %v5416
        %v5441 = vpop.f32.mrf.mxu0
        %v5442 = vadd.f32 0.0, %v5441
        %5443 = vdwg.mxu0
        %v5445 = vsel %vm534, %v5371, 0
        %v5448 = vsel %vm534, %v5372, 0
        %v5451 = vsel %vm541, %v5377, 0
        %5453 = vmatpush.msra.mxu0 0.0
        %5454 = vmatpush.msra.mxu0 0.0
        %5455 = vmatpush.msra.mxu0 0.0
        %5456 = vmatpush.msra.mxu0 0.0
        %5457 = vmatpush.msra.mxu0 0.0
        %5458 = vmatpush.msra.mxu0 0.0
        %5459 = vmatpush.msra.mxu0 0.0
        %5460 = vmatpush.msra.mxu0 0.0
        %5461 = vmatpush.msra.mxu0 0.0
        %5462 = vmatpush.msra.mxu0 0.0
        %5463 = vmatpush.msra.mxu0 0.0
        %5464 = vmatpush.msra.mxu0 %v5451
        %5465 = vmatpush.msra.mxu0 %v5376
        %5466 = vmatpush.msra.mxu0 %v5375
        %5467 = vmatpush.msra.mxu0 %v5374
        %5468 = vmatpush.msra.mxu0 %v5373
        %5469 = vmatmul.f32.gmra.mxu0 %v5445
        %v5470 = vpop.f32.mrf.mxu0
        %v5471 = vadd.f32 %v5439, %v5470
        %5472 = vmatmul.f32.gmra.mxu0 %v5448
        %v5473 = vpop.f32.mrf.mxu0
        %v5474 = vadd.f32 %v5442, %v5473
        %5475 = vdwg.mxu0
        %v5477 = vsel %vm498, %v5360, 0
        %v5480 = vsel %vm498, %v5361, 0
        %5482 = vmatpush.msra.mxu0 0.0
        %5483 = vmatpush.msra.mxu0 0.0
        %5484 = vmatpush.msra.mxu0 0.0
        %5485 = vmatpush.msra.mxu0 0.0
        %5486 = vmatpush.msra.mxu0 0.0
        %5487 = vmatpush.msra.mxu0 0.0
        %5488 = vmatpush.msra.mxu0 0.0
        %5489 = vmatpush.msra.mxu0 0.0
        %5490 = vmatpush.msra.mxu0 0.0
        %5491 = vmatpush.msra.mxu0 0.0
        %5492 = vmatpush.msra.mxu0 0.0
        %5493 = vmatpush.msra.mxu0 0.0
        %5494 = vmatpush.msra.mxu0 0.0
        %5495 = vmatpush.msra.mxu0 0.0
        %5496 = vmatpush.msra.mxu0 %v5405
        %5497 = vmatpush.msra.mxu0 %v5402
        %5498 = vmatmul.f32.gmra.mxu0 %v5477
        %v5499 = vpop.f32.mrf.mxu0
        %v5500 = vadd.f32 0.0, %v5499
        %5501 = vmatmul.f32.gmra.mxu0 %v5480
        %v5502 = vpop.f32.mrf.mxu0
        %v5503 = vadd.f32 0.0, %v5502
        %5504 = vdwg.mxu0
        %v5505 = vsub.f32 %v5500, %v5371
        %v5506 = vsub.f32 %v5503, %v5372
        %v5507 = vld [vmem:[%s631] sm:$0xff]
        %v5508 = vld [vmem:[%s631 + $0x8] sm:$0xff]
        %v5509 = vld [vmem:[%s631 + $0x10] sm:$0xff]
        %v5510 = vld [vmem:[%s631 + $0x18] sm:$0xff]
        %v5511 = vld [vmem:[%s631 + $0x20] sm:$0xf]
        %v5513 = vsel %vm534, %v5505, 0
        %v5516 = vsel %vm534, %v5506, 0
        %v5519 = vsel %vm541, %v5511, 0
        %5521 = vmatpush.msra.mxu0 0.0
        %5522 = vmatpush.msra.mxu0 0.0
        %5523 = vmatpush.msra.mxu0 0.0
        %5524 = vmatpush.msra.mxu0 0.0
        %5525 = vmatpush.msra.mxu0 0.0
        %5526 = vmatpush.msra.mxu0 0.0
        %5527 = vmatpush.msra.mxu0 0.0
        %5528 = vmatpush.msra.mxu0 0.0
        %5529 = vmatpush.msra.mxu0 0.0
        %5530 = vmatpush.msra.mxu0 0.0
        %5531 = vmatpush.msra.mxu0 0.0
        %5532 = vmatpush.msra.mxu0 %v5519
        %5533 = vmatpush.msra.mxu0 %v5510
        %5534 = vmatpush.msra.mxu0 %v5509
        %5535 = vmatpush.msra.mxu0 %v5508
        %5536 = vmatpush.msra.mxu0 %v5507
        %5537 = vmatmul.f32.gmra.mxu0 %v5513
        %v5538 = vpop.f32.mrf.mxu0
        %v5539 = vadd.f32 0.0, %v5538
        %5540 = vmatmul.f32.gmra.mxu0 %v5516
        %v5541 = vpop.f32.mrf.mxu0
        %v5542 = vadd.f32 0.0, %v5541
        %5543 = vdwg.mxu0
        %v5544 = vadd.f32 %v5471, %v5539
        %v5545 = vadd.f32 %v5474, %v5542
        %v5546 = vadd.f32 %v5544, %v465
        %v5547 = vadd.f32 %v5545, %v465
        %v5548 = vxor.u32 %v5546, 2147483648
        %v5549 = vxor.u32 %v5547, 2147483648
        %v5550 = vmul.f32 %v5548, 1.442695
        %v5551 = vpow.pop %v5550
        %v5552 = vmul.f32 %v5549, 1.442695
        %v5553 = vpow.pop %v5552
        %v5554 = vadd.f32 %v5551, 1.0
        %v5555 = vadd.f32 %v5553, 1.0
        %v5556 = vrcp.pop %v5554
        %v5557 = vmul.f32 %v5554, %v5556
        %v5558 = vsub.f32 1.0, %v5557
        %v5559 = vmul.f32 %v5556, %v5558
        %v5560 = vadd.f32 %v5556, %v5559
        %vm5561 = vweird.f32 %v5554
        %vm5562 = vweird.f32 %v5556
        %vm5563 = vmor %vm5561, %vm5562
        %v5564 = vsel %vm5563, %v5556, %v5560
        %v5565 = vand.u32 2147483647, %v5554
        %vm5566 = vcmp.eq.f32.partialorder %v5565, 8.507059e+37
        %v5567 = vand.u32 %v5554, 2147483648
        %v5568 = vor.u32 1.1754944e-38, %v5567
        %v5569 = vsel %vm5566, %v5568, %v5564
        %v5570 = vmul.f32 1.0, %v5569
        %v5571 = vrcp.pop %v5555
        %v5572 = vmul.f32 %v5555, %v5571
        %v5573 = vsub.f32 1.0, %v5572
        %v5574 = vmul.f32 %v5571, %v5573
        %v5575 = vadd.f32 %v5571, %v5574
        %vm5576 = vweird.f32 %v5555
        %vm5577 = vweird.f32 %v5571
        %vm5578 = vmor %vm5576, %vm5577
        %v5579 = vsel %vm5578, %v5571, %v5575
        %v5580 = vand.u32 2147483647, %v5555
        %vm5581 = vcmp.eq.f32.partialorder %v5580, 8.507059e+37
        %v5582 = vand.u32 %v5555, 2147483648
        %v5583 = vor.u32 1.1754944e-38, %v5582
        %v5584 = vsel %vm5581, %v5583, %v5579
        %v5585 = vmul.f32 1.0, %v5584
        %v5586 = vmul.f32 %v5570, %v4959
        %v5587 = vmul.f32 %v5585, %v4961
        %v5588 = vld [vmem:[#allocation2] sm:$0xff]
        %v5589 = vld [vmem:[#allocation2 + $0x8] sm:$0xff]
        %v5590 = vld [vmem:[#allocation2 + $0x10] sm:$0xff]
        %v5591 = vld [vmem:[#allocation2 + $0x18] sm:$0xff]
        %5592 = vmatpush.msra.mxu0 0.0
        %5593 = vmatpush.msra.mxu0 0.0
        %5594 = vmatpush.msra.mxu0 0.0
        %5595 = vmatpush.msra.mxu0 0.0
        %5596 = vmatpush.msra.mxu0 0.0
        %5597 = vmatpush.msra.mxu0 0.0
        %5598 = vmatpush.msra.mxu0 0.0
        %5599 = vmatpush.msra.mxu0 0.0
        %5600 = vmatpush.msra.mxu0 0.0
        %5601 = vmatpush.msra.mxu0 0.0
        %5602 = vmatpush.msra.mxu0 0.0
        %5603 = vmatpush.msra.mxu0 0.0
        %5604 = vmatpush.msra.mxu0 0.0
        %5605 = vmatpush.msra.mxu0 0.0
        %5606 = vmatpush.msra.mxu0 %v5587
        %5607 = vmatpush.msra.mxu0 %v5586
        %5608 = vmatmul.f32.gmra.mxu0 %v5379
        %v5609 = vpop.f32.mrf.mxu0
        %v5610 = vadd.f32 0.0, %v5609
        %5611 = vmatmul.f32.gmra.mxu0 %v5382
        %v5612 = vpop.f32.mrf.mxu0
        %v5613 = vadd.f32 0.0, %v5612
        %5614 = vdwg.mxu0
        %v5615 = vld [vmem:[%s740] sm:$0xff]
        %v5616 = vld [vmem:[%s740 + $0x8] sm:$0xff]
        %v5617 = vld [vmem:[%s740 + $0x10] sm:$0xff]
        %v5618 = vld [vmem:[%s740 + $0x18] sm:$0xff]
        %v5620 = vsel %vm745, %v5610, 0
        %v5623 = vsel %vm745, %v5613, 0
        %5625 = vmatpush.msra.mxu0 0.0
        %5626 = vmatpush.msra.mxu0 0.0
        %5627 = vmatpush.msra.mxu0 0.0
        %5628 = vmatpush.msra.mxu0 0.0
        %5629 = vmatpush.msra.mxu0 0.0
        %5630 = vmatpush.msra.mxu0 0.0
        %5631 = vmatpush.msra.mxu0 0.0
        %5632 = vmatpush.msra.mxu0 0.0
        %5633 = vmatpush.msra.mxu0 0.0
        %5634 = vmatpush.msra.mxu0 0.0
        %5635 = vmatpush.msra.mxu0 0.0
        %5636 = vmatpush.msra.mxu0 0.0
        %5637 = vmatpush.msra.mxu0 %v5618
        %5638 = vmatpush.msra.mxu0 %v5617
        %5639 = vmatpush.msra.mxu0 %v5616
        %5640 = vmatpush.msra.mxu0 %v5615
        %5641 = vmatmul.f32.gmra.mxu0 %v5620
        %v5642 = vpop.f32.mrf.mxu0
        %v5643 = vadd.f32 0.0, %v5642
        %5644 = vmatmul.f32.gmra.mxu0 %v5623
        %v5645 = vpop.f32.mrf.mxu0
        %v5646 = vadd.f32 0.0, %v5645
        %5647 = vdwg.mxu0
        %v5649 = vsel %vm745, %v5586, 0
        %v5652 = vsel %vm745, %v5587, 0
        %5654 = vmatpush.msra.mxu0 0.0
        %5655 = vmatpush.msra.mxu0 0.0
        %5656 = vmatpush.msra.mxu0 0.0
        %5657 = vmatpush.msra.mxu0 0.0
        %5658 = vmatpush.msra.mxu0 0.0
        %5659 = vmatpush.msra.mxu0 0.0
        %5660 = vmatpush.msra.mxu0 0.0
        %5661 = vmatpush.msra.mxu0 0.0
        %5662 = vmatpush.msra.mxu0 0.0
        %5663 = vmatpush.msra.mxu0 0.0
        %5664 = vmatpush.msra.mxu0 0.0
        %5665 = vmatpush.msra.mxu0 0.0
        %5666 = vmatpush.msra.mxu0 %v5591
        %5667 = vmatpush.msra.mxu0 %v5590
        %5668 = vmatpush.msra.mxu0 %v5589
        %5669 = vmatpush.msra.mxu0 %v5588
        %5670 = vmatmul.f32.gmra.mxu0 %v5649
        %v5671 = vpop.f32.mrf.mxu0
        %v5672 = vadd.f32 %v5643, %v5671
        %5673 = vmatmul.f32.gmra.mxu0 %v5652
        %v5674 = vpop.f32.mrf.mxu0
        %v5675 = vadd.f32 %v5646, %v5674
        %5676 = vdwg.mxu0
        %5677 = vmatpush.msra.mxu0 0.0
        %5678 = vmatpush.msra.mxu0 0.0
        %5679 = vmatpush.msra.mxu0 0.0
        %5680 = vmatpush.msra.mxu0 0.0
        %5681 = vmatpush.msra.mxu0 0.0
        %5682 = vmatpush.msra.mxu0 0.0
        %5683 = vmatpush.msra.mxu0 0.0
        %5684 = vmatpush.msra.mxu0 0.0
        %5685 = vmatpush.msra.mxu0 0.0
        %5686 = vmatpush.msra.mxu0 0.0
        %5687 = vmatpush.msra.mxu0 0.0
        %5688 = vmatpush.msra.mxu0 0.0
        %5689 = vmatpush.msra.mxu0 0.0
        %5690 = vmatpush.msra.mxu0 0.0
        %5691 = vmatpush.msra.mxu0 %v5613
        %5692 = vmatpush.msra.mxu0 %v5610
        %5693 = vmatmul.f32.gmra.mxu0 %v5477
        %v5694 = vpop.f32.mrf.mxu0
        %v5695 = vadd.f32 0.0, %v5694
        %5696 = vmatmul.f32.gmra.mxu0 %v5480
        %v5697 = vpop.f32.mrf.mxu0
        %v5698 = vadd.f32 0.0, %v5697
        %5699 = vdwg.mxu0
        %v5700 = vsub.f32 %v5695, %v5586
        %v5701 = vsub.f32 %v5698, %v5587
        %v5702 = vld [vmem:[%s829] sm:$0xff]
        %v5703 = vld [vmem:[%s829 + $0x8] sm:$0xff]
        %v5704 = vld [vmem:[%s829 + $0x10] sm:$0xff]
        %v5705 = vld [vmem:[%s829 + $0x18] sm:$0xff]
        %v5707 = vsel %vm745, %v5700, 0
        %v5710 = vsel %vm745, %v5701, 0
        %5712 = vmatpush.msra.mxu0 0.0
        %5713 = vmatpush.msra.mxu0 0.0
        %5714 = vmatpush.msra.mxu0 0.0
        %5715 = vmatpush.msra.mxu0 0.0
        %5716 = vmatpush.msra.mxu0 0.0
        %5717 = vmatpush.msra.mxu0 0.0
        %5718 = vmatpush.msra.mxu0 0.0
        %5719 = vmatpush.msra.mxu0 0.0
        %5720 = vmatpush.msra.mxu0 0.0
        %5721 = vmatpush.msra.mxu0 0.0
        %5722 = vmatpush.msra.mxu0 0.0
        %5723 = vmatpush.msra.mxu0 0.0
        %5724 = vmatpush.msra.mxu0 %v5705
        %5725 = vmatpush.msra.mxu0 %v5704
        %5726 = vmatpush.msra.mxu0 %v5703
        %5727 = vmatpush.msra.mxu0 %v5702
        %5728 = vmatmul.f32.gmra.mxu0 %v5707
        %v5729 = vpop.f32.mrf.mxu0
        %v5730 = vadd.f32 0.0, %v5729
        %5731 = vmatmul.f32.gmra.mxu0 %v5710
        %v5732 = vpop.f32.mrf.mxu0
        %v5733 = vadd.f32 0.0, %v5732
        %5734 = vdwg.mxu0
        %v5735 = vadd.f32 %v5672, %v5730
        %v5736 = vadd.f32 %v5675, %v5733
        %5739 = vrot.lane.b32.xlu0 %v5735, 64
        %v5740 = vpop.permute.xlu0 %5739
        %5741 = vrot.lane.b32.xlu0 %v5736, 64
        %v5742 = vpop.permute.xlu0 %5741
        %v5745 = vadd.f32 %v5546, %v5740
        %v5746 = vadd.f32 %v5547, %v5742
        %v5747 = vtanh.pop %v5745
        %v5748 = vtanh.pop %v5746
        %v5749 = vmul.f32 %v5570, %v4954
        %v5750 = vmul.f32 %v5585, %v4955
        %v5751 = vsub.f32 1.0, %v5570
        %v5752 = vsub.f32 1.0, %v5585
        %5755 = vrot.lane.b32.xlu0 %v5747, 96
        %v5756 = vpop.permute.xlu0 %5755
        %5757 = vrot.lane.b32.xlu0 %v5748, 96
        %v5758 = vpop.permute.xlu0 %5757
        %v5761 = vmul.f32 %v5751, %v5756
        %v5762 = vmul.f32 %v5752, %v5758
        %v5763 = vadd.f32 %v5749, %v5761
        %v5764 = vadd.f32 %v5750, %v5762
        %5767 = vrot.lane.b32.xlu0 %v5763, 96
        %v5768 = vpop.permute.xlu0 %5767
        %5769 = vrot.lane.b32.xlu0 %v5764, 96
        %v5770 = vpop.permute.xlu0 %5769
        %v5773 = vsel %vm745, %v5768, %v5344
        %v5774 = vsel %vm745, %v5770, %v5345
        %v5775 = vld [vmem:[#allocation4] sm:$0xff]
        %v5776 = vld [vmem:[#allocation4 + $0x8] sm:$0xff]
        %v5777 = vld [vmem:[#allocation4 + $0x10] sm:$0xff]
        %v5778 = vld [vmem:[#allocation4 + $0x18] sm:$0xff]
        %v5779 = vld [vmem:[#allocation4 + $0x20] sm:$0xff]
        %v5780 = vld [vmem:[#allocation4 + $0x28] sm:$0xff]
        %v5781 = vld [vmem:[#allocation4 + $0x30] sm:$0xff]
        %v5782 = vld [vmem:[#allocation4 + $0x38] sm:$0xff]
        %5783 = vmatpush.msra.mxu0 0.0
        %5784 = vmatpush.msra.mxu0 0.0
        %5785 = vmatpush.msra.mxu0 0.0
        %5786 = vmatpush.msra.mxu0 0.0
        %5787 = vmatpush.msra.mxu0 0.0
        %5788 = vmatpush.msra.mxu0 0.0
        %5789 = vmatpush.msra.mxu0 0.0
        %5790 = vmatpush.msra.mxu0 0.0
        %5791 = vmatpush.msra.mxu0 0.0
        %5792 = vmatpush.msra.mxu0 0.0
        %5793 = vmatpush.msra.mxu0 0.0
        %5794 = vmatpush.msra.mxu0 0.0
        %5795 = vmatpush.msra.mxu0 0.0
        %5796 = vmatpush.msra.mxu0 0.0
        %5797 = vmatpush.msra.mxu0 %v5774
        %5798 = vmatpush.msra.mxu0 %v5773
        %5799 = vmatmul.f32.gmra.mxu0 %v5379
        %v5800 = vpop.f32.mrf.mxu0
        %v5801 = vadd.f32 0.0, %v5800
        %5802 = vmatmul.f32.gmra.mxu0 %v5382
        %v5803 = vpop.f32.mrf.mxu0
        %v5804 = vadd.f32 0.0, %v5803
        %5805 = vdwg.mxu0
        %v5806 = vld [vmem:[%s948] sm:$0xff]
        %v5807 = vld [vmem:[%s948 + $0x8] sm:$0xff]
        %v5808 = vld [vmem:[%s948 + $0x10] sm:$0xff]
        %v5809 = vld [vmem:[%s948 + $0x18] sm:$0xff]
        %v5810 = vld [vmem:[%s948 + $0x20] sm:$0xff]
        %v5811 = vld [vmem:[%s948 + $0x28] sm:$0xff]
        %v5812 = vld [vmem:[%s948 + $0x30] sm:$0xff]
        %v5813 = vld [vmem:[%s948 + $0x38] sm:$0xff]
        %v5815 = vsel %vm957, %v5801, 0
        %v5818 = vsel %vm957, %v5804, 0
        %5820 = vmatpush.msra.mxu0 0.0
        %5821 = vmatpush.msra.mxu0 0.0
        %5822 = vmatpush.msra.mxu0 0.0
        %5823 = vmatpush.msra.mxu0 0.0
        %5824 = vmatpush.msra.mxu0 0.0
        %5825 = vmatpush.msra.mxu0 0.0
        %5826 = vmatpush.msra.mxu0 0.0
        %5827 = vmatpush.msra.mxu0 0.0
        %5828 = vmatpush.msra.mxu0 %v5813
        %5829 = vmatpush.msra.mxu0 %v5812
        %5830 = vmatpush.msra.mxu0 %v5811
        %5831 = vmatpush.msra.mxu0 %v5810
        %5832 = vmatpush.msra.mxu0 %v5809
        %5833 = vmatpush.msra.mxu0 %v5808
        %5834 = vmatpush.msra.mxu0 %v5807
        %5835 = vmatpush.msra.mxu0 %v5806
        %5836 = vmatmul.f32.gmra.mxu0 %v5815
        %v5837 = vpop.f32.mrf.mxu0
        %v5838 = vadd.f32 0.0, %v5837
        %5839 = vmatmul.f32.gmra.mxu0 %v5818
        %v5840 = vpop.f32.mrf.mxu0
        %v5841 = vadd.f32 0.0, %v5840
        %5842 = vdwg.mxu0
        %v5844 = vsel %vm957, %v5773, 0
        %v5847 = vsel %vm957, %v5774, 0
        %5849 = vmatpush.msra.mxu0 0.0
        %5850 = vmatpush.msra.mxu0 0.0
        %5851 = vmatpush.msra.mxu0 0.0
        %5852 = vmatpush.msra.mxu0 0.0
        %5853 = vmatpush.msra.mxu0 0.0
        %5854 = vmatpush.msra.mxu0 0.0
        %5855 = vmatpush.msra.mxu0 0.0
        %5856 = vmatpush.msra.mxu0 0.0
        %5857 = vmatpush.msra.mxu0 %v5782
        %5858 = vmatpush.msra.mxu0 %v5781
        %5859 = vmatpush.msra.mxu0 %v5780
        %5860 = vmatpush.msra.mxu0 %v5779
        %5861 = vmatpush.msra.mxu0 %v5778
        %5862 = vmatpush.msra.mxu0 %v5777
        %5863 = vmatpush.msra.mxu0 %v5776
        %5864 = vmatpush.msra.mxu0 %v5775
        %5865 = vmatmul.f32.gmra.mxu0 %v5844
        %v5866 = vpop.f32.mrf.mxu0
        %v5867 = vadd.f32 %v5838, %v5866
        %5868 = vmatmul.f32.gmra.mxu0 %v5847
        %v5869 = vpop.f32.mrf.mxu0
        %v5870 = vadd.f32 %v5841, %v5869
        %5871 = vdwg.mxu0
        %5872 = vmatpush.msra.mxu0 0.0
        %5873 = vmatpush.msra.mxu0 0.0
        %5874 = vmatpush.msra.mxu0 0.0
        %5875 = vmatpush.msra.mxu0 0.0
        %5876 = vmatpush.msra.mxu0 0.0
        %5877 = vmatpush.msra.mxu0 0.0
        %5878 = vmatpush.msra.mxu0 0.0
        %5879 = vmatpush.msra.mxu0 0.0
        %5880 = vmatpush.msra.mxu0 0.0
        %5881 = vmatpush.msra.mxu0 0.0
        %5882 = vmatpush.msra.mxu0 0.0
        %5883 = vmatpush.msra.mxu0 0.0
        %5884 = vmatpush.msra.mxu0 0.0
        %5885 = vmatpush.msra.mxu0 0.0
        %5886 = vmatpush.msra.mxu0 %v5804
        %5887 = vmatpush.msra.mxu0 %v5801
        %5888 = vmatmul.f32.gmra.mxu0 %v5477
        %v5889 = vpop.f32.mrf.mxu0
        %v5890 = vadd.f32 0.0, %v5889
        %5891 = vmatmul.f32.gmra.mxu0 %v5480
        %v5892 = vpop.f32.mrf.mxu0
        %v5893 = vadd.f32 0.0, %v5892
        %5894 = vdwg.mxu0
        %v5895 = vsub.f32 %v5890, %v5773
        %v5896 = vsub.f32 %v5893, %v5774
        %v5897 = vld [vmem:[%s1041] sm:$0xff]
        %v5898 = vld [vmem:[%s1041 + $0x8] sm:$0xff]
        %v5899 = vld [vmem:[%s1041 + $0x10] sm:$0xff]
        %v5900 = vld [vmem:[%s1041 + $0x18] sm:$0xff]
        %v5901 = vld [vmem:[%s1041 + $0x20] sm:$0xff]
        %v5902 = vld [vmem:[%s1041 + $0x28] sm:$0xff]
        %v5903 = vld [vmem:[%s1041 + $0x30] sm:$0xff]
        %v5904 = vld [vmem:[%s1041 + $0x38] sm:$0xff]
        %v5906 = vsel %vm957, %v5895, 0
        %v5909 = vsel %vm957, %v5896, 0
        %5911 = vmatpush.msra.mxu0 0.0
        %5912 = vmatpush.msra.mxu0 0.0
        %5913 = vmatpush.msra.mxu0 0.0
        %5914 = vmatpush.msra.mxu0 0.0
        %5915 = vmatpush.msra.mxu0 0.0
        %5916 = vmatpush.msra.mxu0 0.0
        %5917 = vmatpush.msra.mxu0 0.0
        %5918 = vmatpush.msra.mxu0 0.0
        %5919 = vmatpush.msra.mxu0 %v5904
        %5920 = vmatpush.msra.mxu0 %v5903
        %5921 = vmatpush.msra.mxu0 %v5902
        %5922 = vmatpush.msra.mxu0 %v5901
        %5923 = vmatpush.msra.mxu0 %v5900
        %5924 = vmatpush.msra.mxu0 %v5899
        %5925 = vmatpush.msra.mxu0 %v5898
        %5926 = vmatpush.msra.mxu0 %v5897
        %5927 = vmatmul.f32.gmra.mxu0 %v5906
        %v5928 = vpop.f32.mrf.mxu0
        %v5929 = vadd.f32 0.0, %v5928
        %5930 = vmatmul.f32.gmra.mxu0 %v5909
        %v5931 = vpop.f32.mrf.mxu0
        %v5932 = vadd.f32 0.0, %v5931
        %5933 = vdwg.mxu0
        %v5934 = vadd.f32 %v5867, %v5929
        %v5935 = vadd.f32 %v5870, %v5932
        %v5936 = vadd.f32 %v5934, %v469
        %v5937 = vadd.f32 %v5935, %v469
        %v5938 = vxor.u32 %v5936, 2147483648
        %v5939 = vxor.u32 %v5937, 2147483648
        %v5940 = vmul.f32 %v5938, 1.442695
        %v5941 = vpow.pop %v5940
        %v5942 = vmul.f32 %v5939, 1.442695
        %v5943 = vpow.pop %v5942
        %v5944 = vadd.f32 %v5941, 1.0
        %v5945 = vadd.f32 %v5943, 1.0
        %v5946 = vrcp.pop %v5944
        %v5947 = vmul.f32 %v5944, %v5946
        %v5948 = vsub.f32 1.0, %v5947
        %v5949 = vmul.f32 %v5946, %v5948
        %v5950 = vadd.f32 %v5946, %v5949
        %vm5951 = vweird.f32 %v5944
        %vm5952 = vweird.f32 %v5946
        %vm5953 = vmor %vm5951, %vm5952
        %v5954 = vsel %vm5953, %v5946, %v5950
        %v5955 = vand.u32 2147483647, %v5944
        %vm5956 = vcmp.eq.f32.partialorder %v5955, 8.507059e+37
        %v5957 = vand.u32 %v5944, 2147483648
        %v5958 = vor.u32 1.1754944e-38, %v5957
        %v5959 = vsel %vm5956, %v5958, %v5954
        %v5960 = vmul.f32 1.0, %v5959
        %v5961 = vrcp.pop %v5945
        %v5962 = vmul.f32 %v5945, %v5961
        %v5963 = vsub.f32 1.0, %v5962
        %v5964 = vmul.f32 %v5961, %v5963
        %v5965 = vadd.f32 %v5961, %v5964
        %vm5966 = vweird.f32 %v5945
        %vm5967 = vweird.f32 %v5961
        %vm5968 = vmor %vm5966, %vm5967
        %v5969 = vsel %vm5968, %v5961, %v5965
        %v5970 = vand.u32 2147483647, %v5945
        %vm5971 = vcmp.eq.f32.partialorder %v5970, 8.507059e+37
        %v5972 = vand.u32 %v5945, 2147483648
        %v5973 = vor.u32 1.1754944e-38, %v5972
        %v5974 = vsel %vm5971, %v5973, %v5969
        %v5975 = vmul.f32 1.0, %v5974
        %v5976 = vmul.f32 %v5960, %v5349
        %v5977 = vmul.f32 %v5975, %v5351
        %v5978 = vld [vmem:[#allocation6] sm:$0xff]
        %v5979 = vld [vmem:[#allocation6 + $0x8] sm:$0xff]
        %v5980 = vld [vmem:[#allocation6 + $0x10] sm:$0xff]
        %v5981 = vld [vmem:[#allocation6 + $0x18] sm:$0xff]
        %5982 = vmatpush.msra.mxu0 0.0
        %5983 = vmatpush.msra.mxu0 0.0
        %5984 = vmatpush.msra.mxu0 0.0
        %5985 = vmatpush.msra.mxu0 0.0
        %5986 = vmatpush.msra.mxu0 0.0
        %5987 = vmatpush.msra.mxu0 0.0
        %5988 = vmatpush.msra.mxu0 0.0
        %5989 = vmatpush.msra.mxu0 0.0
        %5990 = vmatpush.msra.mxu0 0.0
        %5991 = vmatpush.msra.mxu0 0.0
        %5992 = vmatpush.msra.mxu0 0.0
        %5993 = vmatpush.msra.mxu0 0.0
        %5994 = vmatpush.msra.mxu0 0.0
        %5995 = vmatpush.msra.mxu0 0.0
        %5996 = vmatpush.msra.mxu0 %v5977
        %5997 = vmatpush.msra.mxu0 %v5976
        %5998 = vmatmul.f32.gmra.mxu0 %v5379
        %v5999 = vpop.f32.mrf.mxu0
        %v6000 = vadd.f32 0.0, %v5999
        %6001 = vmatmul.f32.gmra.mxu0 %v5382
        %v6002 = vpop.f32.mrf.mxu0
        %v6003 = vadd.f32 0.0, %v6002
        %6004 = vdwg.mxu0
        %v6005 = vld [vmem:[%s1150] sm:$0xff]
        %v6006 = vld [vmem:[%s1150 + $0x8] sm:$0xff]
        %v6007 = vld [vmem:[%s1150 + $0x10] sm:$0xff]
        %v6008 = vld [vmem:[%s1150 + $0x18] sm:$0xff]
        %v6010 = vsel %vm745, %v6000, 0
        %v6013 = vsel %vm745, %v6003, 0
        %6015 = vmatpush.msra.mxu0 0.0
        %6016 = vmatpush.msra.mxu0 0.0
        %6017 = vmatpush.msra.mxu0 0.0
        %6018 = vmatpush.msra.mxu0 0.0
        %6019 = vmatpush.msra.mxu0 0.0
        %6020 = vmatpush.msra.mxu0 0.0
        %6021 = vmatpush.msra.mxu0 0.0
        %6022 = vmatpush.msra.mxu0 0.0
        %6023 = vmatpush.msra.mxu0 0.0
        %6024 = vmatpush.msra.mxu0 0.0
        %6025 = vmatpush.msra.mxu0 0.0
        %6026 = vmatpush.msra.mxu0 0.0
        %6027 = vmatpush.msra.mxu0 %v6008
        %6028 = vmatpush.msra.mxu0 %v6007
        %6029 = vmatpush.msra.mxu0 %v6006
        %6030 = vmatpush.msra.mxu0 %v6005
        %6031 = vmatmul.f32.gmra.mxu0 %v6010
        %v6032 = vpop.f32.mrf.mxu0
        %v6033 = vadd.f32 0.0, %v6032
        %6034 = vmatmul.f32.gmra.mxu0 %v6013
        %v6035 = vpop.f32.mrf.mxu0
        %v6036 = vadd.f32 0.0, %v6035
        %6037 = vdwg.mxu0
        %v6039 = vsel %vm745, %v5976, 0
        %v6042 = vsel %vm745, %v5977, 0
        %6044 = vmatpush.msra.mxu0 0.0
        %6045 = vmatpush.msra.mxu0 0.0
        %6046 = vmatpush.msra.mxu0 0.0
        %6047 = vmatpush.msra.mxu0 0.0
        %6048 = vmatpush.msra.mxu0 0.0
        %6049 = vmatpush.msra.mxu0 0.0
        %6050 = vmatpush.msra.mxu0 0.0
        %6051 = vmatpush.msra.mxu0 0.0
        %6052 = vmatpush.msra.mxu0 0.0
        %6053 = vmatpush.msra.mxu0 0.0
        %6054 = vmatpush.msra.mxu0 0.0
        %6055 = vmatpush.msra.mxu0 0.0
        %6056 = vmatpush.msra.mxu0 %v5981
        %6057 = vmatpush.msra.mxu0 %v5980
        %6058 = vmatpush.msra.mxu0 %v5979
        %6059 = vmatpush.msra.mxu0 %v5978
        %6060 = vmatmul.f32.gmra.mxu0 %v6039
        %v6061 = vpop.f32.mrf.mxu0
        %v6062 = vadd.f32 %v6033, %v6061
        %6063 = vmatmul.f32.gmra.mxu0 %v6042
        %v6064 = vpop.f32.mrf.mxu0
        %v6065 = vadd.f32 %v6036, %v6064
        %6066 = vdwg.mxu0
        %6067 = vmatpush.msra.mxu0 0.0
        %6068 = vmatpush.msra.mxu0 0.0
        %6069 = vmatpush.msra.mxu0 0.0
        %6070 = vmatpush.msra.mxu0 0.0
        %6071 = vmatpush.msra.mxu0 0.0
        %6072 = vmatpush.msra.mxu0 0.0
        %6073 = vmatpush.msra.mxu0 0.0
        %6074 = vmatpush.msra.mxu0 0.0
        %6075 = vmatpush.msra.mxu0 0.0
        %6076 = vmatpush.msra.mxu0 0.0
        %6077 = vmatpush.msra.mxu0 0.0
        %6078 = vmatpush.msra.mxu0 0.0
        %6079 = vmatpush.msra.mxu0 0.0
        %6080 = vmatpush.msra.mxu0 0.0
        %6081 = vmatpush.msra.mxu0 %v6003
        %6082 = vmatpush.msra.mxu0 %v6000
        %6083 = vmatmul.f32.gmra.mxu0 %v5477
        %v6084 = vpop.f32.mrf.mxu0
        %v6085 = vadd.f32 0.0, %v6084
        %6086 = vmatmul.f32.gmra.mxu0 %v5480
        %v6087 = vpop.f32.mrf.mxu0
        %v6088 = vadd.f32 0.0, %v6087
        %6089 = vdwg.mxu0
        %v6090 = vsub.f32 %v6085, %v5976
        %v6091 = vsub.f32 %v6088, %v5977
        %v6092 = vld [vmem:[%s1238] sm:$0xff]
        %v6093 = vld [vmem:[%s1238 + $0x8] sm:$0xff]
        %v6094 = vld [vmem:[%s1238 + $0x10] sm:$0xff]
        %v6095 = vld [vmem:[%s1238 + $0x18] sm:$0xff]
        %v6097 = vsel %vm745, %v6090, 0
        %v6100 = vsel %vm745, %v6091, 0
        %6102 = vmatpush.msra.mxu0 0.0
        %6103 = vmatpush.msra.mxu0 0.0
        %6104 = vmatpush.msra.mxu0 0.0
        %6105 = vmatpush.msra.mxu0 0.0
        %6106 = vmatpush.msra.mxu0 0.0
        %6107 = vmatpush.msra.mxu0 0.0
        %6108 = vmatpush.msra.mxu0 0.0
        %6109 = vmatpush.msra.mxu0 0.0
        %6110 = vmatpush.msra.mxu0 0.0
        %6111 = vmatpush.msra.mxu0 0.0
        %6112 = vmatpush.msra.mxu0 0.0
        %6113 = vmatpush.msra.mxu0 0.0
        %6114 = vmatpush.msra.mxu0 %v6095
        %6115 = vmatpush.msra.mxu0 %v6094
        %6116 = vmatpush.msra.mxu0 %v6093
        %6117 = vmatpush.msra.mxu0 %v6092
        %6118 = vmatmul.f32.gmra.mxu0 %v6097
        %v6119 = vpop.f32.mrf.mxu0
        %v6120 = vadd.f32 0.0, %v6119
        %6121 = vmatmul.f32.gmra.mxu0 %v6100
        %v6122 = vpop.f32.mrf.mxu0
        %v6123 = vadd.f32 0.0, %v6122
        %6124 = vdwg.mxu0
        %v6125 = vadd.f32 %v6062, %v6120
        %v6126 = vadd.f32 %v6065, %v6123
        %6129 = vrot.lane.b32.xlu0 %v6125, 64
        %v6130 = vpop.permute.xlu0 %6129
        %6131 = vrot.lane.b32.xlu0 %v6126, 64
        %v6132 = vpop.permute.xlu0 %6131
        %v6135 = vadd.f32 %v5936, %v6130
        %v6136 = vadd.f32 %v5937, %v6132
        %v6137 = vtanh.pop %v6135
        %v6138 = vtanh.pop %v6136
        %v6139 = vmul.f32 %v5960, %v5344
        %v6140 = vmul.f32 %v5975, %v5345
        %v6141 = vsub.f32 1.0, %v5960
        %v6142 = vsub.f32 1.0, %v5975
        %6145 = vrot.lane.b32.xlu0 %v6137, 96
        %v6146 = vpop.permute.xlu0 %6145
        %6147 = vrot.lane.b32.xlu0 %v6138, 96
        %v6148 = vpop.permute.xlu0 %6147
        %v6151 = vmul.f32 %v6141, %v6146
        %v6152 = vmul.f32 %v6142, %v6148
        %v6153 = vadd.f32 %v6139, %v6151
        %v6154 = vadd.f32 %v6140, %v6152
        %6157 = vrot.lane.b32.xlu0 %v6153, 96
        %v6158 = vpop.permute.xlu0 %6157
        %6159 = vrot.lane.b32.xlu0 %v6154, 96
        %v6160 = vpop.permute.xlu0 %6159
        %s6163 = scalar_lea.vmem %s457, 96
        %6164 = vst.msk [vmem:[%s6163] sm:$0xff] %vm745, %v6158
        %6165 = vst.msk [vmem:[%s6163 + $0x8] sm:$0xff] %vm745, %v6160
        %s6166 = scalar_lea.vmem %s442, 112
        %v6167 = vld [vmem:[%s6166] sm:$0xff]
        %v6168 = vld [vmem:[%s6166 + $0x8] sm:$0xff]
        %v6169 = vadd.f32 %v6167, %v6167
        %v6170 = vadd.f32 %v6168, %v6168
        %s6171 = scalar_lea.vmem %s447, 112
        %v6172 = vld [vmem:[%s6171] sm:$0xff]
        %v6173 = vld [vmem:[%s6171 + $0x8] sm:$0xff]
        %6174 = vrot.lane.b32.xlu0 %v5763, 100
        %v6175 = vpop.permute.xlu0 %6174
        %6176 = vrot.lane.b32.xlu0 %v5764, 100
        %v6177 = vpop.permute.xlu0 %6176
        %v6180 = vsel %vm490, %v6172, %v6175
        %v6181 = vsel %vm490, %v6173, %v6177
        %v6182 = vld [vmem:[%s3] sm:$0xff]
        %v6183 = vld [vmem:[%s3 + $0x8] sm:$0xff]
        %v6184 = vld [vmem:[%s3 + $0x10] sm:$0xff]
        %v6185 = vld [vmem:[%s3 + $0x18] sm:$0xff]
        %v6186 = vld [vmem:[%s3 + $0x20] sm:$0xf]
        %v6188 = vsel %vm498, %v6167, 0
        %v6191 = vsel %vm498, %v6168, 0
        %6193 = vmatpush.msra.mxu0 0.0
        %6194 = vmatpush.msra.mxu0 0.0
        %6195 = vmatpush.msra.mxu0 0.0
        %6196 = vmatpush.msra.mxu0 0.0
        %6197 = vmatpush.msra.mxu0 0.0
        %6198 = vmatpush.msra.mxu0 0.0
        %6199 = vmatpush.msra.mxu0 0.0
        %6200 = vmatpush.msra.mxu0 0.0
        %6201 = vmatpush.msra.mxu0 0.0
        %6202 = vmatpush.msra.mxu0 0.0
        %6203 = vmatpush.msra.mxu0 0.0
        %6204 = vmatpush.msra.mxu0 0.0
        %6205 = vmatpush.msra.mxu0 0.0
        %6206 = vmatpush.msra.mxu0 0.0
        %6207 = vmatpush.msra.mxu0 %v6181
        %6208 = vmatpush.msra.mxu0 %v6180
        %6209 = vmatmul.f32.gmra.mxu0 %v6188
        %v6210 = vpop.f32.mrf.mxu0
        %v6211 = vadd.f32 0.0, %v6210
        %6212 = vmatmul.f32.gmra.mxu0 %v6191
        %v6213 = vpop.f32.mrf.mxu0
        %v6214 = vadd.f32 0.0, %v6213
        %6215 = vdwg.mxu0
        %v6216 = vld [vmem:[%s528] sm:$0xff]
        %v6217 = vld [vmem:[%s528 + $0x8] sm:$0xff]
        %v6218 = vld [vmem:[%s528 + $0x10] sm:$0xff]
        %v6219 = vld [vmem:[%s528 + $0x18] sm:$0xff]
        %v6220 = vld [vmem:[%s528 + $0x20] sm:$0xf]
        %v6222 = vsel %vm534, %v6211, 0
        %v6225 = vsel %vm534, %v6214, 0
        %v6228 = vsel %vm541, %v6220, 0
        %6230 = vmatpush.msra.mxu0 0.0
        %6231 = vmatpush.msra.mxu0 0.0
        %6232 = vmatpush.msra.mxu0 0.0
        %6233 = vmatpush.msra.mxu0 0.0
        %6234 = vmatpush.msra.mxu0 0.0
        %6235 = vmatpush.msra.mxu0 0.0
        %6236 = vmatpush.msra.mxu0 0.0
        %6237 = vmatpush.msra.mxu0 0.0
        %6238 = vmatpush.msra.mxu0 0.0
        %6239 = vmatpush.msra.mxu0 0.0
        %6240 = vmatpush.msra.mxu0 0.0
        %6241 = vmatpush.msra.mxu0 %v6228
        %6242 = vmatpush.msra.mxu0 %v6219
        %6243 = vmatpush.msra.mxu0 %v6218
        %6244 = vmatpush.msra.mxu0 %v6217
        %6245 = vmatpush.msra.mxu0 %v6216
        %6246 = vmatmul.f32.gmra.mxu0 %v6222
        %v6247 = vpop.f32.mrf.mxu0
        %v6248 = vadd.f32 0.0, %v6247
        %6249 = vmatmul.f32.gmra.mxu0 %v6225
        %v6250 = vpop.f32.mrf.mxu0
        %v6251 = vadd.f32 0.0, %v6250
        %6252 = vdwg.mxu0
        %v6254 = vsel %vm534, %v6180, 0
        %v6257 = vsel %vm534, %v6181, 0
        %v6260 = vsel %vm541, %v6186, 0
        %6262 = vmatpush.msra.mxu0 0.0
        %6263 = vmatpush.msra.mxu0 0.0
        %6264 = vmatpush.msra.mxu0 0.0
        %6265 = vmatpush.msra.mxu0 0.0
        %6266 = vmatpush.msra.mxu0 0.0
        %6267 = vmatpush.msra.mxu0 0.0
        %6268 = vmatpush.msra.mxu0 0.0
        %6269 = vmatpush.msra.mxu0 0.0
        %6270 = vmatpush.msra.mxu0 0.0
        %6271 = vmatpush.msra.mxu0 0.0
        %6272 = vmatpush.msra.mxu0 0.0
        %6273 = vmatpush.msra.mxu0 %v6260
        %6274 = vmatpush.msra.mxu0 %v6185
        %6275 = vmatpush.msra.mxu0 %v6184
        %6276 = vmatpush.msra.mxu0 %v6183
        %6277 = vmatpush.msra.mxu0 %v6182
        %6278 = vmatmul.f32.gmra.mxu0 %v6254
        %v6279 = vpop.f32.mrf.mxu0
        %v6280 = vadd.f32 %v6248, %v6279
        %6281 = vmatmul.f32.gmra.mxu0 %v6257
        %v6282 = vpop.f32.mrf.mxu0
        %v6283 = vadd.f32 %v6251, %v6282
        %6284 = vdwg.mxu0
        %v6286 = vsel %vm498, %v6169, 0
        %v6289 = vsel %vm498, %v6170, 0
        %6291 = vmatpush.msra.mxu0 0.0
        %6292 = vmatpush.msra.mxu0 0.0
        %6293 = vmatpush.msra.mxu0 0.0
        %6294 = vmatpush.msra.mxu0 0.0
        %6295 = vmatpush.msra.mxu0 0.0
        %6296 = vmatpush.msra.mxu0 0.0
        %6297 = vmatpush.msra.mxu0 0.0
        %6298 = vmatpush.msra.mxu0 0.0
        %6299 = vmatpush.msra.mxu0 0.0
        %6300 = vmatpush.msra.mxu0 0.0
        %6301 = vmatpush.msra.mxu0 0.0
        %6302 = vmatpush.msra.mxu0 0.0
        %6303 = vmatpush.msra.mxu0 0.0
        %6304 = vmatpush.msra.mxu0 0.0
        %6305 = vmatpush.msra.mxu0 %v6214
        %6306 = vmatpush.msra.mxu0 %v6211
        %6307 = vmatmul.f32.gmra.mxu0 %v6286
        %v6308 = vpop.f32.mrf.mxu0
        %v6309 = vadd.f32 0.0, %v6308
        %6310 = vmatmul.f32.gmra.mxu0 %v6289
        %v6311 = vpop.f32.mrf.mxu0
        %v6312 = vadd.f32 0.0, %v6311
        %6313 = vdwg.mxu0
        %v6314 = vsub.f32 %v6309, %v6180
        %v6315 = vsub.f32 %v6312, %v6181
        %v6316 = vld [vmem:[%s631] sm:$0xff]
        %v6317 = vld [vmem:[%s631 + $0x8] sm:$0xff]
        %v6318 = vld [vmem:[%s631 + $0x10] sm:$0xff]
        %v6319 = vld [vmem:[%s631 + $0x18] sm:$0xff]
        %v6320 = vld [vmem:[%s631 + $0x20] sm:$0xf]
        %v6322 = vsel %vm534, %v6314, 0
        %v6325 = vsel %vm534, %v6315, 0
        %v6328 = vsel %vm541, %v6320, 0
        %6330 = vmatpush.msra.mxu0 0.0
        %6331 = vmatpush.msra.mxu0 0.0
        %6332 = vmatpush.msra.mxu0 0.0
        %6333 = vmatpush.msra.mxu0 0.0
        %6334 = vmatpush.msra.mxu0 0.0
        %6335 = vmatpush.msra.mxu0 0.0
        %6336 = vmatpush.msra.mxu0 0.0
        %6337 = vmatpush.msra.mxu0 0.0
        %6338 = vmatpush.msra.mxu0 0.0
        %6339 = vmatpush.msra.mxu0 0.0
        %6340 = vmatpush.msra.mxu0 0.0
        %6341 = vmatpush.msra.mxu0 %v6328
        %6342 = vmatpush.msra.mxu0 %v6319
        %6343 = vmatpush.msra.mxu0 %v6318
        %6344 = vmatpush.msra.mxu0 %v6317
        %6345 = vmatpush.msra.mxu0 %v6316
        %6346 = vmatmul.f32.gmra.mxu0 %v6322
        %v6347 = vpop.f32.mrf.mxu0
        %v6348 = vadd.f32 0.0, %v6347
        %6349 = vmatmul.f32.gmra.mxu0 %v6325
        %v6350 = vpop.f32.mrf.mxu0
        %v6351 = vadd.f32 0.0, %v6350
        %6352 = vdwg.mxu0
        %v6353 = vadd.f32 %v6280, %v6348
        %v6354 = vadd.f32 %v6283, %v6351
        %v6355 = vadd.f32 %v6353, %v465
        %v6356 = vadd.f32 %v6354, %v465
        %v6357 = vxor.u32 %v6355, 2147483648
        %v6358 = vxor.u32 %v6356, 2147483648
        %v6359 = vmul.f32 %v6357, 1.442695
        %v6360 = vpow.pop %v6359
        %v6361 = vmul.f32 %v6358, 1.442695
        %v6362 = vpow.pop %v6361
        %v6363 = vadd.f32 %v6360, 1.0
        %v6364 = vadd.f32 %v6362, 1.0
        %v6365 = vrcp.pop %v6363
        %v6366 = vmul.f32 %v6363, %v6365
        %v6367 = vsub.f32 1.0, %v6366
        %v6368 = vmul.f32 %v6365, %v6367
        %v6369 = vadd.f32 %v6365, %v6368
        %vm6370 = vweird.f32 %v6363
        %vm6371 = vweird.f32 %v6365
        %vm6372 = vmor %vm6370, %vm6371
        %v6373 = vsel %vm6372, %v6365, %v6369
        %v6374 = vand.u32 2147483647, %v6363
        %vm6375 = vcmp.eq.f32.partialorder %v6374, 8.507059e+37
        %v6376 = vand.u32 %v6363, 2147483648
        %v6377 = vor.u32 1.1754944e-38, %v6376
        %v6378 = vsel %vm6375, %v6377, %v6373
        %v6379 = vmul.f32 1.0, %v6378
        %v6380 = vrcp.pop %v6364
        %v6381 = vmul.f32 %v6364, %v6380
        %v6382 = vsub.f32 1.0, %v6381
        %v6383 = vmul.f32 %v6380, %v6382
        %v6384 = vadd.f32 %v6380, %v6383
        %vm6385 = vweird.f32 %v6364
        %vm6386 = vweird.f32 %v6380
        %vm6387 = vmor %vm6385, %vm6386
        %v6388 = vsel %vm6387, %v6380, %v6384
        %v6389 = vand.u32 2147483647, %v6364
        %vm6390 = vcmp.eq.f32.partialorder %v6389, 8.507059e+37
        %v6391 = vand.u32 %v6364, 2147483648
        %v6392 = vor.u32 1.1754944e-38, %v6391
        %v6393 = vsel %vm6390, %v6392, %v6388
        %v6394 = vmul.f32 1.0, %v6393
        %v6395 = vmul.f32 %v6379, %v5768
        %v6396 = vmul.f32 %v6394, %v5770
        %v6397 = vld [vmem:[#allocation2] sm:$0xff]
        %v6398 = vld [vmem:[#allocation2 + $0x8] sm:$0xff]
        %v6399 = vld [vmem:[#allocation2 + $0x10] sm:$0xff]
        %v6400 = vld [vmem:[#allocation2 + $0x18] sm:$0xff]
        %6401 = vmatpush.msra.mxu0 0.0
        %6402 = vmatpush.msra.mxu0 0.0
        %6403 = vmatpush.msra.mxu0 0.0
        %6404 = vmatpush.msra.mxu0 0.0
        %6405 = vmatpush.msra.mxu0 0.0
        %6406 = vmatpush.msra.mxu0 0.0
        %6407 = vmatpush.msra.mxu0 0.0
        %6408 = vmatpush.msra.mxu0 0.0
        %6409 = vmatpush.msra.mxu0 0.0
        %6410 = vmatpush.msra.mxu0 0.0
        %6411 = vmatpush.msra.mxu0 0.0
        %6412 = vmatpush.msra.mxu0 0.0
        %6413 = vmatpush.msra.mxu0 0.0
        %6414 = vmatpush.msra.mxu0 0.0
        %6415 = vmatpush.msra.mxu0 %v6396
        %6416 = vmatpush.msra.mxu0 %v6395
        %6417 = vmatmul.f32.gmra.mxu0 %v6188
        %v6418 = vpop.f32.mrf.mxu0
        %v6419 = vadd.f32 0.0, %v6418
        %6420 = vmatmul.f32.gmra.mxu0 %v6191
        %v6421 = vpop.f32.mrf.mxu0
        %v6422 = vadd.f32 0.0, %v6421
        %6423 = vdwg.mxu0
        %v6424 = vld [vmem:[%s740] sm:$0xff]
        %v6425 = vld [vmem:[%s740 + $0x8] sm:$0xff]
        %v6426 = vld [vmem:[%s740 + $0x10] sm:$0xff]
        %v6427 = vld [vmem:[%s740 + $0x18] sm:$0xff]
        %v6429 = vsel %vm745, %v6419, 0
        %v6432 = vsel %vm745, %v6422, 0
        %6434 = vmatpush.msra.mxu0 0.0
        %6435 = vmatpush.msra.mxu0 0.0
        %6436 = vmatpush.msra.mxu0 0.0
        %6437 = vmatpush.msra.mxu0 0.0
        %6438 = vmatpush.msra.mxu0 0.0
        %6439 = vmatpush.msra.mxu0 0.0
        %6440 = vmatpush.msra.mxu0 0.0
        %6441 = vmatpush.msra.mxu0 0.0
        %6442 = vmatpush.msra.mxu0 0.0
        %6443 = vmatpush.msra.mxu0 0.0
        %6444 = vmatpush.msra.mxu0 0.0
        %6445 = vmatpush.msra.mxu0 0.0
        %6446 = vmatpush.msra.mxu0 %v6427
        %6447 = vmatpush.msra.mxu0 %v6426
        %6448 = vmatpush.msra.mxu0 %v6425
        %6449 = vmatpush.msra.mxu0 %v6424
        %6450 = vmatmul.f32.gmra.mxu0 %v6429
        %v6451 = vpop.f32.mrf.mxu0
        %v6452 = vadd.f32 0.0, %v6451
        %6453 = vmatmul.f32.gmra.mxu0 %v6432
        %v6454 = vpop.f32.mrf.mxu0
        %v6455 = vadd.f32 0.0, %v6454
        %6456 = vdwg.mxu0
        %v6458 = vsel %vm745, %v6395, 0
        %v6461 = vsel %vm745, %v6396, 0
        %6463 = vmatpush.msra.mxu0 0.0
        %6464 = vmatpush.msra.mxu0 0.0
        %6465 = vmatpush.msra.mxu0 0.0
        %6466 = vmatpush.msra.mxu0 0.0
        %6467 = vmatpush.msra.mxu0 0.0
        %6468 = vmatpush.msra.mxu0 0.0
        %6469 = vmatpush.msra.mxu0 0.0
        %6470 = vmatpush.msra.mxu0 0.0
        %6471 = vmatpush.msra.mxu0 0.0
        %6472 = vmatpush.msra.mxu0 0.0
        %6473 = vmatpush.msra.mxu0 0.0
        %6474 = vmatpush.msra.mxu0 0.0
        %6475 = vmatpush.msra.mxu0 %v6400
        %6476 = vmatpush.msra.mxu0 %v6399
        %6477 = vmatpush.msra.mxu0 %v6398
        %6478 = vmatpush.msra.mxu0 %v6397
        %6479 = vmatmul.f32.gmra.mxu0 %v6458
        %v6480 = vpop.f32.mrf.mxu0
        %v6481 = vadd.f32 %v6452, %v6480
        %6482 = vmatmul.f32.gmra.mxu0 %v6461
        %v6483 = vpop.f32.mrf.mxu0
        %v6484 = vadd.f32 %v6455, %v6483
        %6485 = vdwg.mxu0
        %6486 = vmatpush.msra.mxu0 0.0
        %6487 = vmatpush.msra.mxu0 0.0
        %6488 = vmatpush.msra.mxu0 0.0
        %6489 = vmatpush.msra.mxu0 0.0
        %6490 = vmatpush.msra.mxu0 0.0
        %6491 = vmatpush.msra.mxu0 0.0
        %6492 = vmatpush.msra.mxu0 0.0
        %6493 = vmatpush.msra.mxu0 0.0
        %6494 = vmatpush.msra.mxu0 0.0
        %6495 = vmatpush.msra.mxu0 0.0
        %6496 = vmatpush.msra.mxu0 0.0
        %6497 = vmatpush.msra.mxu0 0.0
        %6498 = vmatpush.msra.mxu0 0.0
        %6499 = vmatpush.msra.mxu0 0.0
        %6500 = vmatpush.msra.mxu0 %v6422
        %6501 = vmatpush.msra.mxu0 %v6419
        %6502 = vmatmul.f32.gmra.mxu0 %v6286
        %v6503 = vpop.f32.mrf.mxu0
        %v6504 = vadd.f32 0.0, %v6503
        %6505 = vmatmul.f32.gmra.mxu0 %v6289
        %v6506 = vpop.f32.mrf.mxu0
        %v6507 = vadd.f32 0.0, %v6506
        %6508 = vdwg.mxu0
        %v6509 = vsub.f32 %v6504, %v6395
        %v6510 = vsub.f32 %v6507, %v6396
        %v6511 = vld [vmem:[%s829] sm:$0xff]
        %v6512 = vld [vmem:[%s829 + $0x8] sm:$0xff]
        %v6513 = vld [vmem:[%s829 + $0x10] sm:$0xff]
        %v6514 = vld [vmem:[%s829 + $0x18] sm:$0xff]
        %v6516 = vsel %vm745, %v6509, 0
        %v6519 = vsel %vm745, %v6510, 0
        %6521 = vmatpush.msra.mxu0 0.0
        %6522 = vmatpush.msra.mxu0 0.0
        %6523 = vmatpush.msra.mxu0 0.0
        %6524 = vmatpush.msra.mxu0 0.0
        %6525 = vmatpush.msra.mxu0 0.0
        %6526 = vmatpush.msra.mxu0 0.0
        %6527 = vmatpush.msra.mxu0 0.0
        %6528 = vmatpush.msra.mxu0 0.0
        %6529 = vmatpush.msra.mxu0 0.0
        %6530 = vmatpush.msra.mxu0 0.0
        %6531 = vmatpush.msra.mxu0 0.0
        %6532 = vmatpush.msra.mxu0 0.0
        %6533 = vmatpush.msra.mxu0 %v6514
        %6534 = vmatpush.msra.mxu0 %v6513
        %6535 = vmatpush.msra.mxu0 %v6512
        %6536 = vmatpush.msra.mxu0 %v6511
        %6537 = vmatmul.f32.gmra.mxu0 %v6516
        %v6538 = vpop.f32.mrf.mxu0
        %v6539 = vadd.f32 0.0, %v6538
        %6540 = vmatmul.f32.gmra.mxu0 %v6519
        %v6541 = vpop.f32.mrf.mxu0
        %v6542 = vadd.f32 0.0, %v6541
        %6543 = vdwg.mxu0
        %v6544 = vadd.f32 %v6481, %v6539
        %v6545 = vadd.f32 %v6484, %v6542
        %6548 = vrot.lane.b32.xlu0 %v6544, 64
        %v6549 = vpop.permute.xlu0 %6548
        %6550 = vrot.lane.b32.xlu0 %v6545, 64
        %v6551 = vpop.permute.xlu0 %6550
        %v6554 = vadd.f32 %v6355, %v6549
        %v6555 = vadd.f32 %v6356, %v6551
        %v6556 = vtanh.pop %v6554
        %v6557 = vtanh.pop %v6555
        %v6558 = vmul.f32 %v6379, %v5763
        %v6559 = vmul.f32 %v6394, %v5764
        %v6560 = vsub.f32 1.0, %v6379
        %v6561 = vsub.f32 1.0, %v6394
        %6564 = vrot.lane.b32.xlu0 %v6556, 96
        %v6565 = vpop.permute.xlu0 %6564
        %6566 = vrot.lane.b32.xlu0 %v6557, 96
        %v6567 = vpop.permute.xlu0 %6566
        %v6570 = vmul.f32 %v6560, %v6565
        %v6571 = vmul.f32 %v6561, %v6567
        %v6572 = vadd.f32 %v6558, %v6570
        %v6573 = vadd.f32 %v6559, %v6571
        %6576 = vrot.lane.b32.xlu0 %v6572, 96
        %v6577 = vpop.permute.xlu0 %6576
        %6578 = vrot.lane.b32.xlu0 %v6573, 96
        %v6579 = vpop.permute.xlu0 %6578
        %v6582 = vsel %vm745, %v6577, %v6153
        %v6583 = vsel %vm745, %v6579, %v6154
        %v6584 = vld [vmem:[#allocation4] sm:$0xff]
        %v6585 = vld [vmem:[#allocation4 + $0x8] sm:$0xff]
        %v6586 = vld [vmem:[#allocation4 + $0x10] sm:$0xff]
        %v6587 = vld [vmem:[#allocation4 + $0x18] sm:$0xff]
        %v6588 = vld [vmem:[#allocation4 + $0x20] sm:$0xff]
        %v6589 = vld [vmem:[#allocation4 + $0x28] sm:$0xff]
        %v6590 = vld [vmem:[#allocation4 + $0x30] sm:$0xff]
        %v6591 = vld [vmem:[#allocation4 + $0x38] sm:$0xff]
        %6592 = vmatpush.msra.mxu0 0.0
        %6593 = vmatpush.msra.mxu0 0.0
        %6594 = vmatpush.msra.mxu0 0.0
        %6595 = vmatpush.msra.mxu0 0.0
        %6596 = vmatpush.msra.mxu0 0.0
        %6597 = vmatpush.msra.mxu0 0.0
        %6598 = vmatpush.msra.mxu0 0.0
        %6599 = vmatpush.msra.mxu0 0.0
        %6600 = vmatpush.msra.mxu0 0.0
        %6601 = vmatpush.msra.mxu0 0.0
        %6602 = vmatpush.msra.mxu0 0.0
        %6603 = vmatpush.msra.mxu0 0.0
        %6604 = vmatpush.msra.mxu0 0.0
        %6605 = vmatpush.msra.mxu0 0.0
        %6606 = vmatpush.msra.mxu0 %v6583
        %6607 = vmatpush.msra.mxu0 %v6582
        %6608 = vmatmul.f32.gmra.mxu0 %v6188
        %v6609 = vpop.f32.mrf.mxu0
        %v6610 = vadd.f32 0.0, %v6609
        %6611 = vmatmul.f32.gmra.mxu0 %v6191
        %v6612 = vpop.f32.mrf.mxu0
        %v6613 = vadd.f32 0.0, %v6612
        %6614 = vdwg.mxu0
        %v6615 = vld [vmem:[%s948] sm:$0xff]
        %v6616 = vld [vmem:[%s948 + $0x8] sm:$0xff]
        %v6617 = vld [vmem:[%s948 + $0x10] sm:$0xff]
        %v6618 = vld [vmem:[%s948 + $0x18] sm:$0xff]
        %v6619 = vld [vmem:[%s948 + $0x20] sm:$0xff]
        %v6620 = vld [vmem:[%s948 + $0x28] sm:$0xff]
        %v6621 = vld [vmem:[%s948 + $0x30] sm:$0xff]
        %v6622 = vld [vmem:[%s948 + $0x38] sm:$0xff]
        %v6624 = vsel %vm957, %v6610, 0
        %v6627 = vsel %vm957, %v6613, 0
        %6629 = vmatpush.msra.mxu0 0.0
        %6630 = vmatpush.msra.mxu0 0.0
        %6631 = vmatpush.msra.mxu0 0.0
        %6632 = vmatpush.msra.mxu0 0.0
        %6633 = vmatpush.msra.mxu0 0.0
        %6634 = vmatpush.msra.mxu0 0.0
        %6635 = vmatpush.msra.mxu0 0.0
        %6636 = vmatpush.msra.mxu0 0.0
        %6637 = vmatpush.msra.mxu0 %v6622
        %6638 = vmatpush.msra.mxu0 %v6621
        %6639 = vmatpush.msra.mxu0 %v6620
        %6640 = vmatpush.msra.mxu0 %v6619
        %6641 = vmatpush.msra.mxu0 %v6618
        %6642 = vmatpush.msra.mxu0 %v6617
        %6643 = vmatpush.msra.mxu0 %v6616
        %6644 = vmatpush.msra.mxu0 %v6615
        %6645 = vmatmul.f32.gmra.mxu0 %v6624
        %v6646 = vpop.f32.mrf.mxu0
        %v6647 = vadd.f32 0.0, %v6646
        %6648 = vmatmul.f32.gmra.mxu0 %v6627
        %v6649 = vpop.f32.mrf.mxu0
        %v6650 = vadd.f32 0.0, %v6649
        %6651 = vdwg.mxu0
        %v6653 = vsel %vm957, %v6582, 0
        %v6656 = vsel %vm957, %v6583, 0
        %6658 = vmatpush.msra.mxu0 0.0
        %6659 = vmatpush.msra.mxu0 0.0
        %6660 = vmatpush.msra.mxu0 0.0
        %6661 = vmatpush.msra.mxu0 0.0
        %6662 = vmatpush.msra.mxu0 0.0
        %6663 = vmatpush.msra.mxu0 0.0
        %6664 = vmatpush.msra.mxu0 0.0
        %6665 = vmatpush.msra.mxu0 0.0
        %6666 = vmatpush.msra.mxu0 %v6591
        %6667 = vmatpush.msra.mxu0 %v6590
        %6668 = vmatpush.msra.mxu0 %v6589
        %6669 = vmatpush.msra.mxu0 %v6588
        %6670 = vmatpush.msra.mxu0 %v6587
        %6671 = vmatpush.msra.mxu0 %v6586
        %6672 = vmatpush.msra.mxu0 %v6585
        %6673 = vmatpush.msra.mxu0 %v6584
        %6674 = vmatmul.f32.gmra.mxu0 %v6653
        %v6675 = vpop.f32.mrf.mxu0
        %v6676 = vadd.f32 %v6647, %v6675
        %6677 = vmatmul.f32.gmra.mxu0 %v6656
        %v6678 = vpop.f32.mrf.mxu0
        %v6679 = vadd.f32 %v6650, %v6678
        %6680 = vdwg.mxu0
        %6681 = vmatpush.msra.mxu0 0.0
        %6682 = vmatpush.msra.mxu0 0.0
        %6683 = vmatpush.msra.mxu0 0.0
        %6684 = vmatpush.msra.mxu0 0.0
        %6685 = vmatpush.msra.mxu0 0.0
        %6686 = vmatpush.msra.mxu0 0.0
        %6687 = vmatpush.msra.mxu0 0.0
        %6688 = vmatpush.msra.mxu0 0.0
        %6689 = vmatpush.msra.mxu0 0.0
        %6690 = vmatpush.msra.mxu0 0.0
        %6691 = vmatpush.msra.mxu0 0.0
        %6692 = vmatpush.msra.mxu0 0.0
        %6693 = vmatpush.msra.mxu0 0.0
        %6694 = vmatpush.msra.mxu0 0.0
        %6695 = vmatpush.msra.mxu0 %v6613
        %6696 = vmatpush.msra.mxu0 %v6610
        %6697 = vmatmul.f32.gmra.mxu0 %v6286
        %v6698 = vpop.f32.mrf.mxu0
        %v6699 = vadd.f32 0.0, %v6698
        %6700 = vmatmul.f32.gmra.mxu0 %v6289
        %v6701 = vpop.f32.mrf.mxu0
        %v6702 = vadd.f32 0.0, %v6701
        %6703 = vdwg.mxu0
        %v6704 = vsub.f32 %v6699, %v6582
        %v6705 = vsub.f32 %v6702, %v6583
        %v6706 = vld [vmem:[%s1041] sm:$0xff]
        %v6707 = vld [vmem:[%s1041 + $0x8] sm:$0xff]
        %v6708 = vld [vmem:[%s1041 + $0x10] sm:$0xff]
        %v6709 = vld [vmem:[%s1041 + $0x18] sm:$0xff]
        %v6710 = vld [vmem:[%s1041 + $0x20] sm:$0xff]
        %v6711 = vld [vmem:[%s1041 + $0x28] sm:$0xff]
        %v6712 = vld [vmem:[%s1041 + $0x30] sm:$0xff]
        %v6713 = vld [vmem:[%s1041 + $0x38] sm:$0xff]
        %v6715 = vsel %vm957, %v6704, 0
        %v6718 = vsel %vm957, %v6705, 0
        %6720 = vmatpush.msra.mxu0 0.0
        %6721 = vmatpush.msra.mxu0 0.0
        %6722 = vmatpush.msra.mxu0 0.0
        %6723 = vmatpush.msra.mxu0 0.0
        %6724 = vmatpush.msra.mxu0 0.0
        %6725 = vmatpush.msra.mxu0 0.0
        %6726 = vmatpush.msra.mxu0 0.0
        %6727 = vmatpush.msra.mxu0 0.0
        %6728 = vmatpush.msra.mxu0 %v6713
        %6729 = vmatpush.msra.mxu0 %v6712
        %6730 = vmatpush.msra.mxu0 %v6711
        %6731 = vmatpush.msra.mxu0 %v6710
        %6732 = vmatpush.msra.mxu0 %v6709
        %6733 = vmatpush.msra.mxu0 %v6708
        %6734 = vmatpush.msra.mxu0 %v6707
        %6735 = vmatpush.msra.mxu0 %v6706
        %6736 = vmatmul.f32.gmra.mxu0 %v6715
        %v6737 = vpop.f32.mrf.mxu0
        %v6738 = vadd.f32 0.0, %v6737
        %6739 = vmatmul.f32.gmra.mxu0 %v6718
        %v6740 = vpop.f32.mrf.mxu0
        %v6741 = vadd.f32 0.0, %v6740
        %6742 = vdwg.mxu0
        %v6743 = vadd.f32 %v6676, %v6738
        %v6744 = vadd.f32 %v6679, %v6741
        %v6745 = vadd.f32 %v6743, %v469
        %v6746 = vadd.f32 %v6744, %v469
        %v6747 = vxor.u32 %v6745, 2147483648
        %v6748 = vxor.u32 %v6746, 2147483648
        %v6749 = vmul.f32 %v6747, 1.442695
        %v6750 = vpow.pop %v6749
        %v6751 = vmul.f32 %v6748, 1.442695
        %v6752 = vpow.pop %v6751
        %v6753 = vadd.f32 %v6750, 1.0
        %v6754 = vadd.f32 %v6752, 1.0
        %v6755 = vrcp.pop %v6753
        %v6756 = vmul.f32 %v6753, %v6755
        %v6757 = vsub.f32 1.0, %v6756
        %v6758 = vmul.f32 %v6755, %v6757
        %v6759 = vadd.f32 %v6755, %v6758
        %vm6760 = vweird.f32 %v6753
        %vm6761 = vweird.f32 %v6755
        %vm6762 = vmor %vm6760, %vm6761
        %v6763 = vsel %vm6762, %v6755, %v6759
        %v6764 = vand.u32 2147483647, %v6753
        %vm6765 = vcmp.eq.f32.partialorder %v6764, 8.507059e+37
        %v6766 = vand.u32 %v6753, 2147483648
        %v6767 = vor.u32 1.1754944e-38, %v6766
        %v6768 = vsel %vm6765, %v6767, %v6763
        %v6769 = vmul.f32 1.0, %v6768
        %v6770 = vrcp.pop %v6754
        %v6771 = vmul.f32 %v6754, %v6770
        %v6772 = vsub.f32 1.0, %v6771
        %v6773 = vmul.f32 %v6770, %v6772
        %v6774 = vadd.f32 %v6770, %v6773
        %vm6775 = vweird.f32 %v6754
        %vm6776 = vweird.f32 %v6770
        %vm6777 = vmor %vm6775, %vm6776
        %v6778 = vsel %vm6777, %v6770, %v6774
        %v6779 = vand.u32 2147483647, %v6754
        %vm6780 = vcmp.eq.f32.partialorder %v6779, 8.507059e+37
        %v6781 = vand.u32 %v6754, 2147483648
        %v6782 = vor.u32 1.1754944e-38, %v6781
        %v6783 = vsel %vm6780, %v6782, %v6778
        %v6784 = vmul.f32 1.0, %v6783
        %v6785 = vmul.f32 %v6769, %v6158
        %v6786 = vmul.f32 %v6784, %v6160
        %v6787 = vld [vmem:[#allocation6] sm:$0xff]
        %v6788 = vld [vmem:[#allocation6 + $0x8] sm:$0xff]
        %v6789 = vld [vmem:[#allocation6 + $0x10] sm:$0xff]
        %v6790 = vld [vmem:[#allocation6 + $0x18] sm:$0xff]
        %6791 = vmatpush.msra.mxu0 0.0
        %6792 = vmatpush.msra.mxu0 0.0
        %6793 = vmatpush.msra.mxu0 0.0
        %6794 = vmatpush.msra.mxu0 0.0
        %6795 = vmatpush.msra.mxu0 0.0
        %6796 = vmatpush.msra.mxu0 0.0
        %6797 = vmatpush.msra.mxu0 0.0
        %6798 = vmatpush.msra.mxu0 0.0
        %6799 = vmatpush.msra.mxu0 0.0
        %6800 = vmatpush.msra.mxu0 0.0
        %6801 = vmatpush.msra.mxu0 0.0
        %6802 = vmatpush.msra.mxu0 0.0
        %6803 = vmatpush.msra.mxu0 0.0
        %6804 = vmatpush.msra.mxu0 0.0
        %6805 = vmatpush.msra.mxu0 %v6786
        %6806 = vmatpush.msra.mxu0 %v6785
        %6807 = vmatmul.f32.gmra.mxu0 %v6188
        %v6808 = vpop.f32.mrf.mxu0
        %v6809 = vadd.f32 0.0, %v6808
        %6810 = vmatmul.f32.gmra.mxu0 %v6191
        %v6811 = vpop.f32.mrf.mxu0
        %v6812 = vadd.f32 0.0, %v6811
        %6813 = vdwg.mxu0
        %v6814 = vld [vmem:[%s1150] sm:$0xff]
        %v6815 = vld [vmem:[%s1150 + $0x8] sm:$0xff]
        %v6816 = vld [vmem:[%s1150 + $0x10] sm:$0xff]
        %v6817 = vld [vmem:[%s1150 + $0x18] sm:$0xff]
        %v6819 = vsel %vm745, %v6809, 0
        %v6822 = vsel %vm745, %v6812, 0
        %6824 = vmatpush.msra.mxu0 0.0
        %6825 = vmatpush.msra.mxu0 0.0
        %6826 = vmatpush.msra.mxu0 0.0
        %6827 = vmatpush.msra.mxu0 0.0
        %6828 = vmatpush.msra.mxu0 0.0
        %6829 = vmatpush.msra.mxu0 0.0
        %6830 = vmatpush.msra.mxu0 0.0
        %6831 = vmatpush.msra.mxu0 0.0
        %6832 = vmatpush.msra.mxu0 0.0
        %6833 = vmatpush.msra.mxu0 0.0
        %6834 = vmatpush.msra.mxu0 0.0
        %6835 = vmatpush.msra.mxu0 0.0
        %6836 = vmatpush.msra.mxu0 %v6817
        %6837 = vmatpush.msra.mxu0 %v6816
        %6838 = vmatpush.msra.mxu0 %v6815
        %6839 = vmatpush.msra.mxu0 %v6814
        %6840 = vmatmul.f32.gmra.mxu0 %v6819
        %v6841 = vpop.f32.mrf.mxu0
        %v6842 = vadd.f32 0.0, %v6841
        %6843 = vmatmul.f32.gmra.mxu0 %v6822
        %v6844 = vpop.f32.mrf.mxu0
        %v6845 = vadd.f32 0.0, %v6844
        %6846 = vdwg.mxu0
        %v6848 = vsel %vm745, %v6785, 0
        %v6851 = vsel %vm745, %v6786, 0
        %6853 = vmatpush.msra.mxu0 0.0
        %6854 = vmatpush.msra.mxu0 0.0
        %6855 = vmatpush.msra.mxu0 0.0
        %6856 = vmatpush.msra.mxu0 0.0
        %6857 = vmatpush.msra.mxu0 0.0
        %6858 = vmatpush.msra.mxu0 0.0
        %6859 = vmatpush.msra.mxu0 0.0
        %6860 = vmatpush.msra.mxu0 0.0
        %6861 = vmatpush.msra.mxu0 0.0
        %6862 = vmatpush.msra.mxu0 0.0
        %6863 = vmatpush.msra.mxu0 0.0
        %6864 = vmatpush.msra.mxu0 0.0
        %6865 = vmatpush.msra.mxu0 %v6790
        %6866 = vmatpush.msra.mxu0 %v6789
        %6867 = vmatpush.msra.mxu0 %v6788
        %6868 = vmatpush.msra.mxu0 %v6787
        %6869 = vmatmul.f32.gmra.mxu0 %v6848
        %v6870 = vpop.f32.mrf.mxu0
        %v6871 = vadd.f32 %v6842, %v6870
        %6872 = vmatmul.f32.gmra.mxu0 %v6851
        %v6873 = vpop.f32.mrf.mxu0
        %v6874 = vadd.f32 %v6845, %v6873
        %6875 = vdwg.mxu0
        %6876 = vmatpush.msra.mxu0 0.0
        %6877 = vmatpush.msra.mxu0 0.0
        %6878 = vmatpush.msra.mxu0 0.0
        %6879 = vmatpush.msra.mxu0 0.0
        %6880 = vmatpush.msra.mxu0 0.0
        %6881 = vmatpush.msra.mxu0 0.0
        %6882 = vmatpush.msra.mxu0 0.0
        %6883 = vmatpush.msra.mxu0 0.0
        %6884 = vmatpush.msra.mxu0 0.0
        %6885 = vmatpush.msra.mxu0 0.0
        %6886 = vmatpush.msra.mxu0 0.0
        %6887 = vmatpush.msra.mxu0 0.0
        %6888 = vmatpush.msra.mxu0 0.0
        %6889 = vmatpush.msra.mxu0 0.0
        %6890 = vmatpush.msra.mxu0 %v6812
        %6891 = vmatpush.msra.mxu0 %v6809
        %6892 = vmatmul.f32.gmra.mxu0 %v6286
        %v6893 = vpop.f32.mrf.mxu0
        %v6894 = vadd.f32 0.0, %v6893
        %6895 = vmatmul.f32.gmra.mxu0 %v6289
        %v6896 = vpop.f32.mrf.mxu0
        %v6897 = vadd.f32 0.0, %v6896
        %6898 = vdwg.mxu0
        %v6899 = vsub.f32 %v6894, %v6785
        %v6900 = vsub.f32 %v6897, %v6786
        %v6901 = vld [vmem:[%s1238] sm:$0xff]
        %v6902 = vld [vmem:[%s1238 + $0x8] sm:$0xff]
        %v6903 = vld [vmem:[%s1238 + $0x10] sm:$0xff]
        %v6904 = vld [vmem:[%s1238 + $0x18] sm:$0xff]
        %v6906 = vsel %vm745, %v6899, 0
        %v6909 = vsel %vm745, %v6900, 0
        %6911 = vmatpush.msra.mxu0 0.0
        %6912 = vmatpush.msra.mxu0 0.0
        %6913 = vmatpush.msra.mxu0 0.0
        %6914 = vmatpush.msra.mxu0 0.0
        %6915 = vmatpush.msra.mxu0 0.0
        %6916 = vmatpush.msra.mxu0 0.0
        %6917 = vmatpush.msra.mxu0 0.0
        %6918 = vmatpush.msra.mxu0 0.0
        %6919 = vmatpush.msra.mxu0 0.0
        %6920 = vmatpush.msra.mxu0 0.0
        %6921 = vmatpush.msra.mxu0 0.0
        %6922 = vmatpush.msra.mxu0 0.0
        %6923 = vmatpush.msra.mxu0 %v6904
        %6924 = vmatpush.msra.mxu0 %v6903
        %6925 = vmatpush.msra.mxu0 %v6902
        %6926 = vmatpush.msra.mxu0 %v6901
        %6927 = vmatmul.f32.gmra.mxu0 %v6906
        %v6928 = vpop.f32.mrf.mxu0
        %v6929 = vadd.f32 0.0, %v6928
        %6930 = vmatmul.f32.gmra.mxu0 %v6909
        %v6931 = vpop.f32.mrf.mxu0
        %v6932 = vadd.f32 0.0, %v6931
        %6933 = vdwg.mxu0
        %v6934 = vadd.f32 %v6871, %v6929
        %v6935 = vadd.f32 %v6874, %v6932
        %6938 = vrot.lane.b32.xlu0 %v6934, 64
        %v6939 = vpop.permute.xlu0 %6938
        %6940 = vrot.lane.b32.xlu0 %v6935, 64
        %v6941 = vpop.permute.xlu0 %6940
        %v6944 = vadd.f32 %v6745, %v6939
        %v6945 = vadd.f32 %v6746, %v6941
        %v6946 = vtanh.pop %v6944
        %v6947 = vtanh.pop %v6945
        %v6948 = vmul.f32 %v6769, %v6153
        %v6949 = vmul.f32 %v6784, %v6154
        %v6950 = vsub.f32 1.0, %v6769
        %v6951 = vsub.f32 1.0, %v6784
        %6954 = vrot.lane.b32.xlu0 %v6946, 96
        %v6955 = vpop.permute.xlu0 %6954
        %6956 = vrot.lane.b32.xlu0 %v6947, 96
        %v6957 = vpop.permute.xlu0 %6956
        %v6960 = vmul.f32 %v6950, %v6955
        %v6961 = vmul.f32 %v6951, %v6957
        %v6962 = vadd.f32 %v6948, %v6960
        %v6963 = vadd.f32 %v6949, %v6961
        %6966 = vrot.lane.b32.xlu0 %v6962, 96
        %v6967 = vpop.permute.xlu0 %6966
        %6968 = vrot.lane.b32.xlu0 %v6963, 96
        %v6969 = vpop.permute.xlu0 %6968
        %s6972 = scalar_lea.vmem %s457, 112
        %6973 = vst.msk [vmem:[%s6972] sm:$0xff] %vm745, %v6967
        %6974 = vst.msk [vmem:[%s6972 + $0x8] sm:$0xff] %vm745, %v6969
        %6975 = vst.msk [vmem:[%s462] sm:$0xff] %vm745, %v6577
        %6976 = vst.msk [vmem:[%s462 + $0x8] sm:$0xff] %vm745, %v6579
        %s6977 = scalar_lea.vmem %s462, 16
        %6978 = vst.msk [vmem:[%s6977] sm:$0xff] %vm745, %v6967
        %6979 = vst.msk [vmem:[%s6977 + $0x8] sm:$0xff] %vm745, %v6969
        %p6980 = scmp.lt.s32.totalorder %s24, 1
        %s6981 = scalar_select %p6980, %s24, 1
        %s6982 = smul.addr %s6981, 16
        %s6983 = smul.addr %s6982, 8
        %s6984 = scalar_lea.vmem %s9, %s6983
        %p6985 = scmp.lt.s32.totalorder %s24, 1
        %s6986 = scalar_select %p6985, %s24, 1
        %s6987 = smul.addr %s6986, 4
        %s6988 = smul.addr %s6987, 8
        %s6989 = scalar_lea.vmem %s10, %s6988
        // Predicated region
        $region69: #{_lambda_.1} parent=55 // pred_check
          %p6990 = pneg %p246
        $region70: #{_lambda_.1} parent=55 // pred_check_branch
          %6992 = sbr.rel (%p6990) target = $region72
        $region71: #{_lambda_.1} parent=55 // pred_region
          _
        $region72: #{_lambda_.1} parent=55 // pred_fallthru
          _
        // Predicated region
        $region73: #{_lambda_.1} parent=55 // pred_check
          %p6993 = pneg %p272
        $region74: #{_lambda_.1} parent=55 // pred_check_branch
          %6995 = sbr.rel (%p6993) target = $region76
        $region75: #{_lambda_.1} parent=55 // pred_region
          _
        $region76: #{_lambda_.1} parent=55 // pred_fallthru
          _
      $region56: #{_lambda_.1} parent=5 // pred_fallthru
        _
      %p6996 = scmp.le.s32.totalorder 2, %s19
      // Predicated region
      $region77: #{_lambda_.1} parent=5 // pred_check
        %p6997 = pneg %p6996
      $region78: #{_lambda_.1} parent=5 // pred_check_branch
        %6999 = sbr.rel (%p6997) target = $region80
      $region79: #{_lambda_.1} parent=5 // pred_region
        %s7000 = ssub.s32 %s19, 2
        // Predicated region
        $region81: #{_lambda_.1} parent=79 // pred_check
          %p7001 = pneg %p252
        $region82: #{_lambda_.1} parent=79 // pred_check_branch
          %7003 = sbr.rel (%p7001) target = $region84
        $region83: #{_lambda_.1} parent=79 // pred_region
          %p7004 = scmp.lt.s32.totalorder %s25, 1
          %s7005 = scalar_select %p7004, %s25, 1
          %s7006 = smul.addr %s7005, 16
          %s7007 = smul.addr %s7006, 8
          %s7008 = scalar_lea.vmem %s9, %s7007
        $region84: #{_lambda_.1} parent=79 // pred_fallthru
          _
        // Predicated region
        $region85: #{_lambda_.1} parent=79 // pred_check
          %p7009 = pneg %p278
        $region86: #{_lambda_.1} parent=79 // pred_check_branch
          %7011 = sbr.rel (%p7009) target = $region88
        $region87: #{_lambda_.1} parent=79 // pred_region
          %p7012 = scmp.lt.s32.totalorder %s25, 1
          %s7013 = scalar_select %p7012, %s25, 1
          %s7014 = smul.addr %s7013, 4
          %s7015 = smul.addr %s7014, 8
          %s7016 = scalar_lea.vmem %s10, %s7015
        $region88: #{_lambda_.1} parent=79 // pred_fallthru
          _
      $region80: #{_lambda_.1} parent=5 // pred_fallthru
        _
    $region6: #{_lambda_.1} parent=1 // loop_footer
      %s23 = sadd.s32 1, %s19
    $region7: #{_lambda_.1} parent=1 // loop_footer_branch
      %18 = sbr.rel target = $region3
    $region8: #{_lambda_.1} parent=1 // loop_exit
      _
    %7017 = vsyncpa [#allocation3], 1
    %s7018 = scalar_lea.sflag [#allocation3], 1
    %7019 = vsyncpa %s7018, 1
    %7020 = vsyncpa [#allocation5], 1

</llo_original>
